<compile_context>
chip_gen: v7x
topology: tpu7x:2x2x1
jax: 0.10.0
libtpu: 0.0.40
codegen_flags: <defaults>
</compile_context>

<pallas_src>
import numpy as np

import jax
import jax.numpy as jnp
from jax.experimental import pallas as pl
from jax.experimental.pallas import tpu as pltpu

EPS = 1e-5

# Zero-padded channel widths used inside the kernel.
CIN_P, C1_P, C2_P, C3_P, OUT_P = 8, 8, 16, 32, 128


# ---------------------------------------------------------------------------
# One-time parameter preparation (BN folding, FC folding, padding, selectors)
# ---------------------------------------------------------------------------
def _selectors(h_in, w_in, k, stride):
    """0/1 matrices S[k] with (S[k] @ X)[out_pos, :] = X[in_pos(k, out_pos), :]."""
    h_out = (h_in - k) // stride + 1
    w_out = (w_in - k) // stride + 1
    sel = np.zeros((k * k, h_out * w_out, h_in * w_in), np.float32)
    for i in range(k):
        for j in range(k):
            for a in range(h_out):
                for b in range(w_out):
                    sel[i * k + j, a * w_out + b,
                        (a * stride + i) * w_in + (b * stride + j)] = 1.0
    return jnp.asarray(sel)


def _fold_conv_bn(w, b, gamma, beta, mean, var, cin_p, cout_p):
    """Fold eval-mode BatchNorm into conv weight/bias and zero-pad channels."""
    kh, kw, cin, cout = w.shape
    scale = gamma / jnp.sqrt(var + EPS)                       # (cout,)
    w_f = (w * scale).reshape(kh * kw, cin, cout)
    b_f = (b - mean) * scale + beta
    w_p = jnp.zeros((kh * kw, cin_p, cout_p), jnp.float32).at[:, :cin, :cout].set(w_f)
    b_p = jnp.zeros((1, cout_p), jnp.float32).at[0, :cout].set(b_f)
    return w_p, b_p


def prepare_operands(p):
    """Done once per parameter set, outside the per-step forward."""
    w1, b1 = _fold_conv_bn(p["w1"], p["b1"], p["g1"], p["be1"], p["m1"], p["v1"], CIN_P, C1_P)
    w2, b2 = _fold_conv_bn(p["w2"], p["b2"], p["g2"], p["be2"], p["m2"], p["v2"], C1_P, C2_P)
    w3, b3 = _fold_conv_bn(p["w3"], p["b3"], p["g3"], p["be3"], p["m3"], p["v3"], C2_P, C3_P)

    # fc -> fc2 folded (no nonlinearity in between).  Rows permuted from torch's
    # NCHW flatten order (c*25 + s) to the kernel's (spatial, channel) order.
    wff = p["fcw"] @ p["fc2w"]                                # (500, 10)
    bff = p["fcb"] @ p["fc2w"] + p["fc2b"]                    # (10,)
    perm = (np.arange(20)[None, :] * 25 + np.arange(25)[:, None]).reshape(-1)
    wf3 = wff[perm].reshape(25, 20, 10)                       # [spatial, c, out]
    wf = jnp.zeros((25, C3_P, OUT_P), jnp.float32).at[:, :20, :10].set(wf3)
    bf = jnp.zeros((1, OUT_P), jnp.float32).at[0, :10].set(bff)

    return dict(
        sel1=_selectors(16, 16, 3, 1), w1=w1, b1=b1,          # (9,196,256)
        sel2=_selectors(14, 14, 2, 2), w2=w2, b2=b2,          # (4, 49,196)
        sel3=_selectors(7, 7, 2, 1),   w3=w3, b3=b3,          # (4, 36, 49)
        wf=wf, bf=bf)


# ---------------------------------------------------------------------------
# Fused forward kernel: 3 convs + maxpool + flatten + folded MLP, per sample
# ---------------------------------------------------------------------------
def _fused_forward_kernel(x_ref, sel1_ref, w1_ref, b1_ref, sel2_ref, w2_ref,
                          b2_ref, sel3_ref, w3_ref, b3_ref, wf_ref, bf_ref,
                          o_ref):
    f32 = jnp.float32
    x = x_ref[0]                                              # (256, CIN_P)

    def conv_bn_relu(sel_ref, w_ref, b_ref, y, taps):
        acc = None
        for k in range(taps):
            t = jnp.dot(jnp.dot(sel_ref[k], y, preferred_element_type=f32),
                        w_ref[k], preferred_element_type=f32)
            acc = t if acc is None else acc + t
        return jnp.maximum(acc + b_ref[...], 0.0)

    y1 = conv_bn_relu(sel1_ref, w1_ref, b1_ref, x, 9)         # (196, C1_P) 14x14
    y2 = conv_bn_relu(sel2_ref, w2_ref, b2_ref, y1, 4)        # (49,  C2_P)  7x7
    y3 = conv_bn_relu(sel3_ref, w3_ref, b3_ref, y2, 4)        # (36,  C3_P)  6x6

    # MaxPool2d(2, stride=1) on the 6x6 map, fused with flatten + (fc@fc2).
    logits = bf_ref[...]                                      # (1, OUT_P)
    for s in range(5):
        m = None
        for i in range(2):
            for j in range(2):
                blk = y3[(s + i) * 6 + j:(s + i) * 6 + j + 5, :]   # (5, C3_P)
                m = blk if m is None else jnp.maximum(m, blk)
        for t in range(5):
            logits = logits + jnp.dot(m[t:t + 1, :], wf_ref[s * 5 + t],
                                      preferred_element_type=f32)
    o_ref[0] = logits


def cnn_model_forward_prepared(x_nchw, ops):
    b = x_nchw.shape[0]
    # NCHW -> (B, H*W, C), channels zero-padded to CIN_P (tiny, one-time).
    x = jnp.transpose(x_nchw, (0, 2, 3, 1)).reshape(b, 256, 3)
    x = jnp.pad(x, ((0, 0), (0, 0), (0, CIN_P - 3)))

    def full(a):
        return pl.BlockSpec(a.shape, lambda i, _nd=a.ndim: (0,) * _nd)

    operands = (x, ops["sel1"], ops["w1"], ops["b1"], ops["sel2"], ops["w2"],
                ops["b2"], ops["sel3"], ops["w3"], ops["b3"], ops["wf"],
                ops["bf"])
    in_specs = [pl.BlockSpec((1, 256, CIN_P), lambda i: (i, 0, 0))]
    in_specs += [full(a) for a in operands[1:]]

    out = pl.pallas_call(
        _fused_forward_kernel,
        out_shape=jax.ShapeDtypeStruct((b, 1, OUT_P), jnp.float32),
        grid=(b,),
        in_specs=in_specs,
        out_specs=pl.BlockSpec((1, 1, OUT_P), lambda i: (i, 0, 0)),
        compiler_params=pltpu.CompilerParams(
            dimension_semantics=("parallel",)),
    )(*operands)
    return out.reshape(b, OUT_P)[:, :10]


def cnn_model_forward(x_nchw, params):
    return cnn_model_forward_prepared(x_nchw, prepare_operands(params))


# ---------------------------------------------------------------------------
# Deterministic parameter init (non-trivial BN running stats) + JAX reference
# ---------------------------------------------------------------------------
def init_params(key):
    ks = jax.random.split(key, 24)
    n = lambda k, s, sc=0.1: jax.random.normal(k, s, jnp.float32) * sc
    u = lambda k, s: jax.random.uniform(k, s, jnp.float32, 0.5, 1.5)
    p = {}
    p["w1"], p["b1"] = n(ks[0], (3, 3, 3, 8)), n(ks[1], (8,))
    p["g1"], p["be1"] = 1.0 + n(ks[2], (8,)), n(ks[3], (8,))
    p["m1"], p["v1"] = n(ks[4], (8,)), u(ks[5], (8,))
    p["w2"], p["b2"] = n(ks[6], (2, 2, 8, 15)), n(ks[7], (15,))
    p["g2"], p["be2"] = 1.0 + n(ks[8], (15,)), n(ks[9], (15,))
    p["m2"], p["v2"] = n(ks[10], (15,)), u(ks[11], (15,))
    p["w3"], p["b3"] = n(ks[12], (2, 2, 15, 20)), n(ks[13], (20,))
    p["g3"], p["be3"] = 1.0 + n(ks[14], (20,)), n(ks[15], (20,))
    p["m3"], p["v3"] = n(ks[16], (20,)), u(ks[17], (20,))
    p["fcw"], p["fcb"] = n(ks[18], (500, 40)), n(ks[19], (40,))
    p["fc2w"], p["fc2b"] = n(ks[20], (40, 10)), n(ks[21], (10,))
    return p


def ref_forward(x_nchw, p):
    def conv(x, w, b, stride):
        wt = jnp.transpose(w, (3, 2, 0, 1))  # (kh,kw,Cin,Cout) -> OIHW
        y = jax.lax.conv_general_dilated(
            x, wt, (stride, stride), "VALID",
            dimension_numbers=("NCHW", "OIHW", "NCHW"))
        return y + b.reshape(1, -1, 1, 1)

    def bnrelu(x, g, be, m, v):
        y = (x - m.reshape(1, -1, 1, 1)) / jnp.sqrt(v.reshape(1, -1, 1, 1) + EPS)
        return jnp.maximum(y * g.reshape(1, -1, 1, 1) + be.reshape(1, -1, 1, 1), 0.0)

    x = bnrelu(conv(x_nchw, p["w1"], p["b1"], 1), p["g1"], p["be1"], p["m1"], p["v1"])
    x = bnrelu(conv(x, p["w2"], p["b2"], 2), p["g2"], p["be2"], p["m2"], p["v2"])
    x = bnrelu(conv(x, p["w3"], p["b3"], 1), p["g3"], p["be3"], p["m3"], p["v3"])
    x = jnp.maximum(jnp.maximum(x[:, :, :-1, :-1], x[:, :, :-1, 1:]),
                    jnp.maximum(x[:, :, 1:, :-1], x[:, :, 1:, 1:]))
    x = jnp.maximum(x, 0.0)
    flat = x.reshape(x.shape[0], -1)
    return (flat @ p["fcw"] + p["fcb"]) @ p["fc2w"] + p["fc2b"]


if __name__ == "__main__":
    key = jax.random.PRNGKey(0)
    k_x, k_p = jax.random.split(key)
    x = jax.random.normal(k_x, (2, 3, 16, 16), jnp.float32)  # NCHW, like PyTorch
    params = init_params(k_p)

    ops = prepare_operands(params)          # one-time folding / padding
    fwd = jax.jit(cnn_model_forward_prepared)
    out = jax.block_until_ready(fwd(x, ops))
    assert out.shape == (2, 10), out.shape

    ref = ref_forward(x, params)
    max_err = float(jnp.max(jnp.abs(out - ref)))
    assert jnp.allclose(out, ref, atol=1e-3, rtol=1e-3), max_err

    print("KERNEL_OK")
</pallas_src>

<mosaic_0001>
module attributes {stable_mosaic.version = 11 : i64} {
  func.func @_fused_forward_kernel(%arg0: i32, %arg1: memref<1x256x8xf32, #tpu.memory_space<vmem>>, %arg2: memref<9x196x256xf32, #tpu.memory_space<vmem>>, %arg3: memref<9x8x8xf32, #tpu.memory_space<vmem>>, %arg4: memref<1x8xf32, #tpu.memory_space<vmem>>, %arg5: memref<4x49x196xf32, #tpu.memory_space<vmem>>, %arg6: memref<4x8x16xf32, #tpu.memory_space<vmem>>, %arg7: memref<1x16xf32, #tpu.memory_space<vmem>>, %arg8: memref<4x36x49xf32, #tpu.memory_space<vmem>>, %arg9: memref<4x16x32xf32, #tpu.memory_space<vmem>>, %arg10: memref<1x32xf32, #tpu.memory_space<vmem>>, %arg11: memref<25x32x128xf32, #tpu.memory_space<vmem>>, %arg12: memref<1x128xf32, #tpu.memory_space<vmem>>, %arg13: memref<1x1x128xf32, #tpu.memory_space<vmem>>) attributes {dimension_semantics = [#tpu.dimension_semantics<parallel>], iteration_bounds = array<i64: 2>, scalar_prefetch = 0 : i64, scratch_operands = 0 : i64, tpu.core_type = #tpu.core_type<tc>, window_params = [{transform_indices = @transform_0, window_bounds = array<i64: 1, 256, 8>}, {pipeline_mode = #tpu.pipeline_mode<synchronous>, transform_indices = @transform_1, window_bounds = array<i64: 9, 196, 256>}, {pipeline_mode = #tpu.pipeline_mode<synchronous>, transform_indices = @transform_2, window_bounds = array<i64: 9, 8, 8>}, {pipeline_mode = #tpu.pipeline_mode<synchronous>, transform_indices = @transform_3, window_bounds = array<i64: 1, 8>}, {pipeline_mode = #tpu.pipeline_mode<synchronous>, transform_indices = @transform_4, window_bounds = array<i64: 4, 49, 196>}, {pipeline_mode = #tpu.pipeline_mode<synchronous>, transform_indices = @transform_5, window_bounds = array<i64: 4, 8, 16>}, {pipeline_mode = #tpu.pipeline_mode<synchronous>, transform_indices = @transform_6, window_bounds = array<i64: 1, 16>}, {pipeline_mode = #tpu.pipeline_mode<synchronous>, transform_indices = @transform_7, window_bounds = array<i64: 4, 36, 49>}, {pipeline_mode = #tpu.pipeline_mode<synchronous>, transform_indices = @transform_8, window_bounds = array<i64: 4, 16, 32>}, {pipeline_mode = #tpu.pipeline_mode<synchronous>, transform_indices = @transform_9, window_bounds = array<i64: 1, 32>}, {pipeline_mode = #tpu.pipeline_mode<synchronous>, transform_indices = @transform_10, window_bounds = array<i64: 25, 32, 128>}, {pipeline_mode = #tpu.pipeline_mode<synchronous>, transform_indices = @transform_11, window_bounds = array<i64: 1, 128>}, {transform_indices = @transform_12, window_bounds = array<i64: 1, 1, 128>}]} {
    %c0 = arith.constant 0 : index
    %c0_0 = arith.constant 0 : index
    %c0_1 = arith.constant 0 : index
    %0 = vector.load %arg1[%c0, %c0_0, %c0_1] : memref<1x256x8xf32, #tpu.memory_space<vmem>>, vector<1x256x8xf32>
    %1 = vector.shape_cast %0 : vector<1x256x8xf32> to vector<256x8xf32>
    %c0_2 = arith.constant 0 : index
    %c0_3 = arith.constant 0 : index
    %c0_4 = arith.constant 0 : index
    %2 = vector.load %arg2[%c0_2, %c0_3, %c0_4] : memref<9x196x256xf32, #tpu.memory_space<vmem>>, vector<1x196x256xf32>
    %3 = vector.shape_cast %2 : vector<1x196x256xf32> to vector<196x256xf32>
    %cst = arith.constant dense<0.000000e+00> : vector<196x8xf32>
    %4 = tpu.matmul %3, %1, %cst {dimension_numbers = #tpu.dot_dimension_numbers<[1], [0], [0], [1], [0, 0, 1, 1], [], []>} : vector<196x256xf32>, vector<256x8xf32>, vector<196x8xf32> -> vector<196x8xf32>
    %c0_5 = arith.constant 0 : index
    %c0_6 = arith.constant 0 : index
    %c0_7 = arith.constant 0 : index
    %5 = vector.load %arg3[%c0_5, %c0_6, %c0_7] : memref<9x8x8xf32, #tpu.memory_space<vmem>>, vector<1x8x8xf32>
    %6 = vector.shape_cast %5 : vector<1x8x8xf32> to vector<8x8xf32>
    %cst_8 = arith.constant dense<0.000000e+00> : vector<196x8xf32>
    %7 = tpu.matmul %4, %6, %cst_8 {dimension_numbers = #tpu.dot_dimension_numbers<[1], [0], [0], [1], [0, 0, 1, 1], [], []>} : vector<196x8xf32>, vector<8x8xf32>, vector<196x8xf32> -> vector<196x8xf32>
    %c1 = arith.constant 1 : index
    %c0_9 = arith.constant 0 : index
    %c0_10 = arith.constant 0 : index
    %8 = vector.load %arg2[%c1, %c0_9, %c0_10] : memref<9x196x256xf32, #tpu.memory_space<vmem>>, vector<1x196x256xf32>
    %9 = vector.shape_cast %8 : vector<1x196x256xf32> to vector<196x256xf32>
    %cst_11 = arith.constant dense<0.000000e+00> : vector<196x8xf32>
    %10 = tpu.matmul %9, %1, %cst_11 {dimension_numbers = #tpu.dot_dimension_numbers<[1], [0], [0], [1], [0, 0, 1, 1], [], []>} : vector<196x256xf32>, vector<256x8xf32>, vector<196x8xf32> -> vector<196x8xf32>
    %c1_12 = arith.constant 1 : index
    %c0_13 = arith.constant 0 : index
    %c0_14 = arith.constant 0 : index
    %11 = vector.load %arg3[%c1_12, %c0_13, %c0_14] : memref<9x8x8xf32, #tpu.memory_space<vmem>>, vector<1x8x8xf32>
    %12 = vector.shape_cast %11 : vector<1x8x8xf32> to vector<8x8xf32>
    %cst_15 = arith.constant dense<0.000000e+00> : vector<196x8xf32>
    %13 = tpu.matmul %10, %12, %cst_15 {dimension_numbers = #tpu.dot_dimension_numbers<[1], [0], [0], [1], [0, 0, 1, 1], [], []>} : vector<196x8xf32>, vector<8x8xf32>, vector<196x8xf32> -> vector<196x8xf32>
    %14 = arith.addf %7, %13 : vector<196x8xf32>
    %c2 = arith.constant 2 : index
    %c0_16 = arith.constant 0 : index
    %c0_17 = arith.constant 0 : index
    %15 = vector.load %arg2[%c2, %c0_16, %c0_17] : memref<9x196x256xf32, #tpu.memory_space<vmem>>, vector<1x196x256xf32>
    %16 = vector.shape_cast %15 : vector<1x196x256xf32> to vector<196x256xf32>
    %cst_18 = arith.constant dense<0.000000e+00> : vector<196x8xf32>
    %17 = tpu.matmul %16, %1, %cst_18 {dimension_numbers = #tpu.dot_dimension_numbers<[1], [0], [0], [1], [0, 0, 1, 1], [], []>} : vector<196x256xf32>, vector<256x8xf32>, vector<196x8xf32> -> vector<196x8xf32>
    %c2_19 = arith.constant 2 : index
    %c0_20 = arith.constant 0 : index
    %c0_21 = arith.constant 0 : index
    %18 = vector.load %arg3[%c2_19, %c0_20, %c0_21] : memref<9x8x8xf32, #tpu.memory_space<vmem>>, vector<1x8x8xf32>
    %19 = vector.shape_cast %18 : vector<1x8x8xf32> to vector<8x8xf32>
    %cst_22 = arith.constant dense<0.000000e+00> : vector<196x8xf32>
    %20 = tpu.matmul %17, %19, %cst_22 {dimension_numbers = #tpu.dot_dimension_numbers<[1], [0], [0], [1], [0, 0, 1, 1], [], []>} : vector<196x8xf32>, vector<8x8xf32>, vector<196x8xf32> -> vector<196x8xf32>
    %21 = arith.addf %14, %20 : vector<196x8xf32>
    %c3 = arith.constant 3 : index
    %c0_23 = arith.constant 0 : index
    %c0_24 = arith.constant 0 : index
    %22 = vector.load %arg2[%c3, %c0_23, %c0_24] : memref<9x196x256xf32, #tpu.memory_space<vmem>>, vector<1x196x256xf32>
    %23 = vector.shape_cast %22 : vector<1x196x256xf32> to vector<196x256xf32>
    %cst_25 = arith.constant dense<0.000000e+00> : vector<196x8xf32>
    %24 = tpu.matmul %23, %1, %cst_25 {dimension_numbers = #tpu.dot_dimension_numbers<[1], [0], [0], [1], [0, 0, 1, 1], [], []>} : vector<196x256xf32>, vector<256x8xf32>, vector<196x8xf32> -> vector<196x8xf32>
    %c3_26 = arith.constant 3 : index
    %c0_27 = arith.constant 0 : index
    %c0_28 = arith.constant 0 : index
    %25 = vector.load %arg3[%c3_26, %c0_27, %c0_28] : memref<9x8x8xf32, #tpu.memory_space<vmem>>, vector<1x8x8xf32>
    %26 = vector.shape_cast %25 : vector<1x8x8xf32> to vector<8x8xf32>
    %cst_29 = arith.constant dense<0.000000e+00> : vector<196x8xf32>
    %27 = tpu.matmul %24, %26, %cst_29 {dimension_numbers = #tpu.dot_dimension_numbers<[1], [0], [0], [1], [0, 0, 1, 1], [], []>} : vector<196x8xf32>, vector<8x8xf32>, vector<196x8xf32> -> vector<196x8xf32>
    %28 = arith.addf %21, %27 : vector<196x8xf32>
    %c4 = arith.constant 4 : index
    %c0_30 = arith.constant 0 : index
    %c0_31 = arith.constant 0 : index
    %29 = vector.load %arg2[%c4, %c0_30, %c0_31] : memref<9x196x256xf32, #tpu.memory_space<vmem>>, vector<1x196x256xf32>
    %30 = vector.shape_cast %29 : vector<1x196x256xf32> to vector<196x256xf32>
    %cst_32 = arith.constant dense<0.000000e+00> : vector<196x8xf32>
    %31 = tpu.matmul %30, %1, %cst_32 {dimension_numbers = #tpu.dot_dimension_numbers<[1], [0], [0], [1], [0, 0, 1, 1], [], []>} : vector<196x256xf32>, vector<256x8xf32>, vector<196x8xf32> -> vector<196x8xf32>
    %c4_33 = arith.constant 4 : index
    %c0_34 = arith.constant 0 : index
    %c0_35 = arith.constant 0 : index
    %32 = vector.load %arg3[%c4_33, %c0_34, %c0_35] : memref<9x8x8xf32, #tpu.memory_space<vmem>>, vector<1x8x8xf32>
    %33 = vector.shape_cast %32 : vector<1x8x8xf32> to vector<8x8xf32>
    %cst_36 = arith.constant dense<0.000000e+00> : vector<196x8xf32>
    %34 = tpu.matmul %31, %33, %cst_36 {dimension_numbers = #tpu.dot_dimension_numbers<[1], [0], [0], [1], [0, 0, 1, 1], [], []>} : vector<196x8xf32>, vector<8x8xf32>, vector<196x8xf32> -> vector<196x8xf32>
    %35 = arith.addf %28, %34 : vector<196x8xf32>
    %c5 = arith.constant 5 : index
    %c0_37 = arith.constant 0 : index
    %c0_38 = arith.constant 0 : index
    %36 = vector.load %arg2[%c5, %c0_37, %c0_38] : memref<9x196x256xf32, #tpu.memory_space<vmem>>, vector<1x196x256xf32>
    %37 = vector.shape_cast %36 : vector<1x196x256xf32> to vector<196x256xf32>
    %cst_39 = arith.constant dense<0.000000e+00> : vector<196x8xf32>
    %38 = tpu.matmul %37, %1, %cst_39 {dimension_numbers = #tpu.dot_dimension_numbers<[1], [0], [0], [1], [0, 0, 1, 1], [], []>} : vector<196x256xf32>, vector<256x8xf32>, vector<196x8xf32> -> vector<196x8xf32>
    %c5_40 = arith.constant 5 : index
    %c0_41 = arith.constant 0 : index
    %c0_42 = arith.constant 0 : index
    %39 = vector.load %arg3[%c5_40, %c0_41, %c0_42] : memref<9x8x8xf32, #tpu.memory_space<vmem>>, vector<1x8x8xf32>
    %40 = vector.shape_cast %39 : vector<1x8x8xf32> to vector<8x8xf32>
    %cst_43 = arith.constant dense<0.000000e+00> : vector<196x8xf32>
    %41 = tpu.matmul %38, %40, %cst_43 {dimension_numbers = #tpu.dot_dimension_numbers<[1], [0], [0], [1], [0, 0, 1, 1], [], []>} : vector<196x8xf32>, vector<8x8xf32>, vector<196x8xf32> -> vector<196x8xf32>
    %42 = arith.addf %35, %41 : vector<196x8xf32>
    %c6 = arith.constant 6 : index
    %c0_44 = arith.constant 0 : index
    %c0_45 = arith.constant 0 : index
    %43 = vector.load %arg2[%c6, %c0_44, %c0_45] : memref<9x196x256xf32, #tpu.memory_space<vmem>>, vector<1x196x256xf32>
    %44 = vector.shape_cast %43 : vector<1x196x256xf32> to vector<196x256xf32>
    %cst_46 = arith.constant dense<0.000000e+00> : vector<196x8xf32>
    %45 = tpu.matmul %44, %1, %cst_46 {dimension_numbers = #tpu.dot_dimension_numbers<[1], [0], [0], [1], [0, 0, 1, 1], [], []>} : vector<196x256xf32>, vector<256x8xf32>, vector<196x8xf32> -> vector<196x8xf32>
    %c6_47 = arith.constant 6 : index
    %c0_48 = arith.constant 0 : index
    %c0_49 = arith.constant 0 : index
    %46 = vector.load %arg3[%c6_47, %c0_48, %c0_49] : memref<9x8x8xf32, #tpu.memory_space<vmem>>, vector<1x8x8xf32>
    %47 = vector.shape_cast %46 : vector<1x8x8xf32> to vector<8x8xf32>
    %cst_50 = arith.constant dense<0.000000e+00> : vector<196x8xf32>
    %48 = tpu.matmul %45, %47, %cst_50 {dimension_numbers = #tpu.dot_dimension_numbers<[1], [0], [0], [1], [0, 0, 1, 1], [], []>} : vector<196x8xf32>, vector<8x8xf32>, vector<196x8xf32> -> vector<196x8xf32>
    %49 = arith.addf %42, %48 : vector<196x8xf32>
    %c7 = arith.constant 7 : index
    %c0_51 = arith.constant 0 : index
    %c0_52 = arith.constant 0 : index
    %50 = vector.load %arg2[%c7, %c0_51, %c0_52] : memref<9x196x256xf32, #tpu.memory_space<vmem>>, vector<1x196x256xf32>
    %51 = vector.shape_cast %50 : vector<1x196x256xf32> to vector<196x256xf32>
    %cst_53 = arith.constant dense<0.000000e+00> : vector<196x8xf32>
    %52 = tpu.matmul %51, %1, %cst_53 {dimension_numbers = #tpu.dot_dimension_numbers<[1], [0], [0], [1], [0, 0, 1, 1], [], []>} : vector<196x256xf32>, vector<256x8xf32>, vector<196x8xf32> -> vector<196x8xf32>
    %c7_54 = arith.constant 7 : index
    %c0_55 = arith.constant 0 : index
    %c0_56 = arith.constant 0 : index
    %53 = vector.load %arg3[%c7_54, %c0_55, %c0_56] : memref<9x8x8xf32, #tpu.memory_space<vmem>>, vector<1x8x8xf32>
    %54 = vector.shape_cast %53 : vector<1x8x8xf32> to vector<8x8xf32>
    %cst_57 = arith.constant dense<0.000000e+00> : vector<196x8xf32>
    %55 = tpu.matmul %52, %54, %cst_57 {dimension_numbers = #tpu.dot_dimension_numbers<[1], [0], [0], [1], [0, 0, 1, 1], [], []>} : vector<196x8xf32>, vector<8x8xf32>, vector<196x8xf32> -> vector<196x8xf32>
    %56 = arith.addf %49, %55 : vector<196x8xf32>
    %c8 = arith.constant 8 : index
    %c0_58 = arith.constant 0 : index
    %c0_59 = arith.constant 0 : index
    %57 = vector.load %arg2[%c8, %c0_58, %c0_59] : memref<9x196x256xf32, #tpu.memory_space<vmem>>, vector<1x196x256xf32>
    %58 = vector.shape_cast %57 : vector<1x196x256xf32> to vector<196x256xf32>
    %cst_60 = arith.constant dense<0.000000e+00> : vector<196x8xf32>
    %59 = tpu.matmul %58, %1, %cst_60 {dimension_numbers = #tpu.dot_dimension_numbers<[1], [0], [0], [1], [0, 0, 1, 1], [], []>} : vector<196x256xf32>, vector<256x8xf32>, vector<196x8xf32> -> vector<196x8xf32>
    %c8_61 = arith.constant 8 : index
    %c0_62 = arith.constant 0 : index
    %c0_63 = arith.constant 0 : index
    %60 = vector.load %arg3[%c8_61, %c0_62, %c0_63] : memref<9x8x8xf32, #tpu.memory_space<vmem>>, vector<1x8x8xf32>
    %61 = vector.shape_cast %60 : vector<1x8x8xf32> to vector<8x8xf32>
    %cst_64 = arith.constant dense<0.000000e+00> : vector<196x8xf32>
    %62 = tpu.matmul %59, %61, %cst_64 {dimension_numbers = #tpu.dot_dimension_numbers<[1], [0], [0], [1], [0, 0, 1, 1], [], []>} : vector<196x8xf32>, vector<8x8xf32>, vector<196x8xf32> -> vector<196x8xf32>
    %63 = arith.addf %56, %62 : vector<196x8xf32>
    %c0_65 = arith.constant 0 : index
    %c0_66 = arith.constant 0 : index
    %64 = vector.load %arg4[%c0_65, %c0_66] : memref<1x8xf32, #tpu.memory_space<vmem>>, vector<1x8xf32>
    %65 = vector.broadcast %64 : vector<1x8xf32> to vector<196x8xf32>
    %66 = arith.addf %63, %65 : vector<196x8xf32>
    %cst_67 = arith.constant 0.000000e+00 : f32
    %67 = vector.broadcast %cst_67 : f32 to vector<196x8xf32>
    %68 = arith.maximumf %66, %67 : vector<196x8xf32>
    %c0_68 = arith.constant 0 : index
    %c0_69 = arith.constant 0 : index
    %c0_70 = arith.constant 0 : index
    %69 = vector.load %arg5[%c0_68, %c0_69, %c0_70] : memref<4x49x196xf32, #tpu.memory_space<vmem>>, vector<1x49x196xf32>
    %70 = vector.shape_cast %69 : vector<1x49x196xf32> to vector<49x196xf32>
    %cst_71 = arith.constant dense<0.000000e+00> : vector<49x8xf32>
    %71 = tpu.matmul %70, %68, %cst_71 {dimension_numbers = #tpu.dot_dimension_numbers<[1], [0], [0], [1], [0, 0, 1, 1], [], []>} : vector<49x196xf32>, vector<196x8xf32>, vector<49x8xf32> -> vector<49x8xf32>
    %c0_72 = arith.constant 0 : index
    %c0_73 = arith.constant 0 : index
    %c0_74 = arith.constant 0 : index
    %72 = vector.load %arg6[%c0_72, %c0_73, %c0_74] : memref<4x8x16xf32, #tpu.memory_space<vmem>>, vector<1x8x16xf32>
    %73 = vector.shape_cast %72 : vector<1x8x16xf32> to vector<8x16xf32>
    %cst_75 = arith.constant dense<0.000000e+00> : vector<49x16xf32>
    %74 = tpu.matmul %71, %73, %cst_75 {dimension_numbers = #tpu.dot_dimension_numbers<[1], [0], [0], [1], [0, 0, 1, 1], [], []>} : vector<49x8xf32>, vector<8x16xf32>, vector<49x16xf32> -> vector<49x16xf32>
    %c1_76 = arith.constant 1 : index
    %c0_77 = arith.constant 0 : index
    %c0_78 = arith.constant 0 : index
    %75 = vector.load %arg5[%c1_76, %c0_77, %c0_78] : memref<4x49x196xf32, #tpu.memory_space<vmem>>, vector<1x49x196xf32>
    %76 = vector.shape_cast %75 : vector<1x49x196xf32> to vector<49x196xf32>
    %cst_79 = arith.constant dense<0.000000e+00> : vector<49x8xf32>
    %77 = tpu.matmul %76, %68, %cst_79 {dimension_numbers = #tpu.dot_dimension_numbers<[1], [0], [0], [1], [0, 0, 1, 1], [], []>} : vector<49x196xf32>, vector<196x8xf32>, vector<49x8xf32> -> vector<49x8xf32>
    %c1_80 = arith.constant 1 : index
    %c0_81 = arith.constant 0 : index
    %c0_82 = arith.constant 0 : index
    %78 = vector.load %arg6[%c1_80, %c0_81, %c0_82] : memref<4x8x16xf32, #tpu.memory_space<vmem>>, vector<1x8x16xf32>
    %79 = vector.shape_cast %78 : vector<1x8x16xf32> to vector<8x16xf32>
    %cst_83 = arith.constant dense<0.000000e+00> : vector<49x16xf32>
    %80 = tpu.matmul %77, %79, %cst_83 {dimension_numbers = #tpu.dot_dimension_numbers<[1], [0], [0], [1], [0, 0, 1, 1], [], []>} : vector<49x8xf32>, vector<8x16xf32>, vector<49x16xf32> -> vector<49x16xf32>
    %81 = arith.addf %74, %80 : vector<49x16xf32>
    %c2_84 = arith.constant 2 : index
    %c0_85 = arith.constant 0 : index
    %c0_86 = arith.constant 0 : index
    %82 = vector.load %arg5[%c2_84, %c0_85, %c0_86] : memref<4x49x196xf32, #tpu.memory_space<vmem>>, vector<1x49x196xf32>
    %83 = vector.shape_cast %82 : vector<1x49x196xf32> to vector<49x196xf32>
    %cst_87 = arith.constant dense<0.000000e+00> : vector<49x8xf32>
    %84 = tpu.matmul %83, %68, %cst_87 {dimension_numbers = #tpu.dot_dimension_numbers<[1], [0], [0], [1], [0, 0, 1, 1], [], []>} : vector<49x196xf32>, vector<196x8xf32>, vector<49x8xf32> -> vector<49x8xf32>
    %c2_88 = arith.constant 2 : index
    %c0_89 = arith.constant 0 : index
    %c0_90 = arith.constant 0 : index
    %85 = vector.load %arg6[%c2_88, %c0_89, %c0_90] : memref<4x8x16xf32, #tpu.memory_space<vmem>>, vector<1x8x16xf32>
    %86 = vector.shape_cast %85 : vector<1x8x16xf32> to vector<8x16xf32>
    %cst_91 = arith.constant dense<0.000000e+00> : vector<49x16xf32>
    %87 = tpu.matmul %84, %86, %cst_91 {dimension_numbers = #tpu.dot_dimension_numbers<[1], [0], [0], [1], [0, 0, 1, 1], [], []>} : vector<49x8xf32>, vector<8x16xf32>, vector<49x16xf32> -> vector<49x16xf32>
    %88 = arith.addf %81, %87 : vector<49x16xf32>
    %c3_92 = arith.constant 3 : index
    %c0_93 = arith.constant 0 : index
    %c0_94 = arith.constant 0 : index
    %89 = vector.load %arg5[%c3_92, %c0_93, %c0_94] : memref<4x49x196xf32, #tpu.memory_space<vmem>>, vector<1x49x196xf32>
    %90 = vector.shape_cast %89 : vector<1x49x196xf32> to vector<49x196xf32>
    %cst_95 = arith.constant dense<0.000000e+00> : vector<49x8xf32>
    %91 = tpu.matmul %90, %68, %cst_95 {dimension_numbers = #tpu.dot_dimension_numbers<[1], [0], [0], [1], [0, 0, 1, 1], [], []>} : vector<49x196xf32>, vector<196x8xf32>, vector<49x8xf32> -> vector<49x8xf32>
    %c3_96 = arith.constant 3 : index
    %c0_97 = arith.constant 0 : index
    %c0_98 = arith.constant 0 : index
    %92 = vector.load %arg6[%c3_96, %c0_97, %c0_98] : memref<4x8x16xf32, #tpu.memory_space<vmem>>, vector<1x8x16xf32>
    %93 = vector.shape_cast %92 : vector<1x8x16xf32> to vector<8x16xf32>
    %cst_99 = arith.constant dense<0.000000e+00> : vector<49x16xf32>
    %94 = tpu.matmul %91, %93, %cst_99 {dimension_numbers = #tpu.dot_dimension_numbers<[1], [0], [0], [1], [0, 0, 1, 1], [], []>} : vector<49x8xf32>, vector<8x16xf32>, vector<49x16xf32> -> vector<49x16xf32>
    %95 = arith.addf %88, %94 : vector<49x16xf32>
    %c0_100 = arith.constant 0 : index
    %c0_101 = arith.constant 0 : index
    %96 = vector.load %arg7[%c0_100, %c0_101] : memref<1x16xf32, #tpu.memory_space<vmem>>, vector<1x16xf32>
    %97 = vector.broadcast %96 : vector<1x16xf32> to vector<49x16xf32>
    %98 = arith.addf %95, %97 : vector<49x16xf32>
    %cst_102 = arith.constant 0.000000e+00 : f32
    %99 = vector.broadcast %cst_102 : f32 to vector<49x16xf32>
    %100 = arith.maximumf %98, %99 : vector<49x16xf32>
    %c0_103 = arith.constant 0 : index
    %c0_104 = arith.constant 0 : index
    %c0_105 = arith.constant 0 : index
    %101 = vector.load %arg8[%c0_103, %c0_104, %c0_105] : memref<4x36x49xf32, #tpu.memory_space<vmem>>, vector<1x36x49xf32>
    %102 = vector.shape_cast %101 : vector<1x36x49xf32> to vector<36x49xf32>
    %cst_106 = arith.constant dense<0.000000e+00> : vector<36x16xf32>
    %103 = tpu.matmul %102, %100, %cst_106 {dimension_numbers = #tpu.dot_dimension_numbers<[1], [0], [0], [1], [0, 0, 1, 1], [], []>} : vector<36x49xf32>, vector<49x16xf32>, vector<36x16xf32> -> vector<36x16xf32>
    %c0_107 = arith.constant 0 : index
    %c0_108 = arith.constant 0 : index
    %c0_109 = arith.constant 0 : index
    %104 = vector.load %arg9[%c0_107, %c0_108, %c0_109] : memref<4x16x32xf32, #tpu.memory_space<vmem>>, vector<1x16x32xf32>
    %105 = vector.shape_cast %104 : vector<1x16x32xf32> to vector<16x32xf32>
    %cst_110 = arith.constant dense<0.000000e+00> : vector<36x32xf32>
    %106 = tpu.matmul %103, %105, %cst_110 {dimension_numbers = #tpu.dot_dimension_numbers<[1], [0], [0], [1], [0, 0, 1, 1], [], []>} : vector<36x16xf32>, vector<16x32xf32>, vector<36x32xf32> -> vector<36x32xf32>
    %c1_111 = arith.constant 1 : index
    %c0_112 = arith.constant 0 : index
    %c0_113 = arith.constant 0 : index
    %107 = vector.load %arg8[%c1_111, %c0_112, %c0_113] : memref<4x36x49xf32, #tpu.memory_space<vmem>>, vector<1x36x49xf32>
    %108 = vector.shape_cast %107 : vector<1x36x49xf32> to vector<36x49xf32>
    %cst_114 = arith.constant dense<0.000000e+00> : vector<36x16xf32>
    %109 = tpu.matmul %108, %100, %cst_114 {dimension_numbers = #tpu.dot_dimension_numbers<[1], [0], [0], [1], [0, 0, 1, 1], [], []>} : vector<36x49xf32>, vector<49x16xf32>, vector<36x16xf32> -> vector<36x16xf32>
    %c1_115 = arith.constant 1 : index
    %c0_116 = arith.constant 0 : index
    %c0_117 = arith.constant 0 : index
    %110 = vector.load %arg9[%c1_115, %c0_116, %c0_117] : memref<4x16x32xf32, #tpu.memory_space<vmem>>, vector<1x16x32xf32>
    %111 = vector.shape_cast %110 : vector<1x16x32xf32> to vector<16x32xf32>
    %cst_118 = arith.constant dense<0.000000e+00> : vector<36x32xf32>
    %112 = tpu.matmul %109, %111, %cst_118 {dimension_numbers = #tpu.dot_dimension_numbers<[1], [0], [0], [1], [0, 0, 1, 1], [], []>} : vector<36x16xf32>, vector<16x32xf32>, vector<36x32xf32> -> vector<36x32xf32>
    %113 = arith.addf %106, %112 : vector<36x32xf32>
    %c2_119 = arith.constant 2 : index
    %c0_120 = arith.constant 0 : index
    %c0_121 = arith.constant 0 : index
    %114 = vector.load %arg8[%c2_119, %c0_120, %c0_121] : memref<4x36x49xf32, #tpu.memory_space<vmem>>, vector<1x36x49xf32>
    %115 = vector.shape_cast %114 : vector<1x36x49xf32> to vector<36x49xf32>
    %cst_122 = arith.constant dense<0.000000e+00> : vector<36x16xf32>
    %116 = tpu.matmul %115, %100, %cst_122 {dimension_numbers = #tpu.dot_dimension_numbers<[1], [0], [0], [1], [0, 0, 1, 1], [], []>} : vector<36x49xf32>, vector<49x16xf32>, vector<36x16xf32> -> vector<36x16xf32>
    %c2_123 = arith.constant 2 : index
    %c0_124 = arith.constant 0 : index
    %c0_125 = arith.constant 0 : index
    %117 = vector.load %arg9[%c2_123, %c0_124, %c0_125] : memref<4x16x32xf32, #tpu.memory_space<vmem>>, vector<1x16x32xf32>
    %118 = vector.shape_cast %117 : vector<1x16x32xf32> to vector<16x32xf32>
    %cst_126 = arith.constant dense<0.000000e+00> : vector<36x32xf32>
    %119 = tpu.matmul %116, %118, %cst_126 {dimension_numbers = #tpu.dot_dimension_numbers<[1], [0], [0], [1], [0, 0, 1, 1], [], []>} : vector<36x16xf32>, vector<16x32xf32>, vector<36x32xf32> -> vector<36x32xf32>
    %120 = arith.addf %113, %119 : vector<36x32xf32>
    %c3_127 = arith.constant 3 : index
    %c0_128 = arith.constant 0 : index
    %c0_129 = arith.constant 0 : index
    %121 = vector.load %arg8[%c3_127, %c0_128, %c0_129] : memref<4x36x49xf32, #tpu.memory_space<vmem>>, vector<1x36x49xf32>
    %122 = vector.shape_cast %121 : vector<1x36x49xf32> to vector<36x49xf32>
    %cst_130 = arith.constant dense<0.000000e+00> : vector<36x16xf32>
    %123 = tpu.matmul %122, %100, %cst_130 {dimension_numbers = #tpu.dot_dimension_numbers<[1], [0], [0], [1], [0, 0, 1, 1], [], []>} : vector<36x49xf32>, vector<49x16xf32>, vector<36x16xf32> -> vector<36x16xf32>
    %c3_131 = arith.constant 3 : index
    %c0_132 = arith.constant 0 : index
    %c0_133 = arith.constant 0 : index
    %124 = vector.load %arg9[%c3_131, %c0_132, %c0_133] : memref<4x16x32xf32, #tpu.memory_space<vmem>>, vector<1x16x32xf32>
    %125 = vector.shape_cast %124 : vector<1x16x32xf32> to vector<16x32xf32>
    %cst_134 = arith.constant dense<0.000000e+00> : vector<36x32xf32>
    %126 = tpu.matmul %123, %125, %cst_134 {dimension_numbers = #tpu.dot_dimension_numbers<[1], [0], [0], [1], [0, 0, 1, 1], [], []>} : vector<36x16xf32>, vector<16x32xf32>, vector<36x32xf32> -> vector<36x32xf32>
    %127 = arith.addf %120, %126 : vector<36x32xf32>
    %c0_135 = arith.constant 0 : index
    %c0_136 = arith.constant 0 : index
    %128 = vector.load %arg10[%c0_135, %c0_136] : memref<1x32xf32, #tpu.memory_space<vmem>>, vector<1x32xf32>
    %129 = vector.broadcast %128 : vector<1x32xf32> to vector<36x32xf32>
    %130 = arith.addf %127, %129 : vector<36x32xf32>
    %cst_137 = arith.constant 0.000000e+00 : f32
    %131 = vector.broadcast %cst_137 : f32 to vector<36x32xf32>
    %132 = arith.maximumf %130, %131 : vector<36x32xf32>
    %c0_138 = arith.constant 0 : index
    %c0_139 = arith.constant 0 : index
    %133 = vector.load %arg12[%c0_138, %c0_139] : memref<1x128xf32, #tpu.memory_space<vmem>>, vector<1x128xf32>
    %134 = vector.extract_strided_slice %132 {offsets = [0, 0], sizes = [5, 32], strides = [1, 1]} : vector<36x32xf32> to vector<5x32xf32>
    %135 = vector.extract_strided_slice %132 {offsets = [1, 0], sizes = [5, 32], strides = [1, 1]} : vector<36x32xf32> to vector<5x32xf32>
    %136 = arith.maximumf %134, %135 : vector<5x32xf32>
    %137 = vector.extract_strided_slice %132 {offsets = [6, 0], sizes = [5, 32], strides = [1, 1]} : vector<36x32xf32> to vector<5x32xf32>
    %138 = arith.maximumf %136, %137 : vector<5x32xf32>
    %139 = vector.extract_strided_slice %132 {offsets = [7, 0], sizes = [5, 32], strides = [1, 1]} : vector<36x32xf32> to vector<5x32xf32>
    %140 = arith.maximumf %138, %139 : vector<5x32xf32>
    %141 = vector.extract_strided_slice %140 {offsets = [0, 0], sizes = [1, 32], strides = [1, 1]} : vector<5x32xf32> to vector<1x32xf32>
    %c0_140 = arith.constant 0 : index
    %c0_141 = arith.constant 0 : index
    %c0_142 = arith.constant 0 : index
    %142 = vector.load %arg11[%c0_140, %c0_141, %c0_142] : memref<25x32x128xf32, #tpu.memory_space<vmem>>, vector<1x32x128xf32>
    %143 = vector.shape_cast %142 : vector<1x32x128xf32> to vector<32x128xf32>
    %cst_143 = arith.constant dense<0.000000e+00> : vector<1x128xf32>
    %144 = tpu.matmul %141, %143, %cst_143 {dimension_numbers = #tpu.dot_dimension_numbers<[1], [0], [0], [1], [0, 0, 1, 1], [], []>} : vector<1x32xf32>, vector<32x128xf32>, vector<1x128xf32> -> vector<1x128xf32>
    %145 = arith.addf %133, %144 : vector<1x128xf32>
    %146 = vector.extract_strided_slice %140 {offsets = [1, 0], sizes = [1, 32], strides = [1, 1]} : vector<5x32xf32> to vector<1x32xf32>
    %c1_144 = arith.constant 1 : index
    %c0_145 = arith.constant 0 : index
    %c0_146 = arith.constant 0 : index
    %147 = vector.load %arg11[%c1_144, %c0_145, %c0_146] : memref<25x32x128xf32, #tpu.memory_space<vmem>>, vector<1x32x128xf32>
    %148 = vector.shape_cast %147 : vector<1x32x128xf32> to vector<32x128xf32>
    %cst_147 = arith.constant dense<0.000000e+00> : vector<1x128xf32>
    %149 = tpu.matmul %146, %148, %cst_147 {dimension_numbers = #tpu.dot_dimension_numbers<[1], [0], [0], [1], [0, 0, 1, 1], [], []>} : vector<1x32xf32>, vector<32x128xf32>, vector<1x128xf32> -> vector<1x128xf32>
    %150 = arith.addf %145, %149 : vector<1x128xf32>
    %151 = vector.extract_strided_slice %140 {offsets = [2, 0], sizes = [1, 32], strides = [1, 1]} : vector<5x32xf32> to vector<1x32xf32>
    %c2_148 = arith.constant 2 : index
    %c0_149 = arith.constant 0 : index
    %c0_150 = arith.constant 0 : index
    %152 = vector.load %arg11[%c2_148, %c0_149, %c0_150] : memref<25x32x128xf32, #tpu.memory_space<vmem>>, vector<1x32x128xf32>
    %153 = vector.shape_cast %152 : vector<1x32x128xf32> to vector<32x128xf32>
    %cst_151 = arith.constant dense<0.000000e+00> : vector<1x128xf32>
    %154 = tpu.matmul %151, %153, %cst_151 {dimension_numbers = #tpu.dot_dimension_numbers<[1], [0], [0], [1], [0, 0, 1, 1], [], []>} : vector<1x32xf32>, vector<32x128xf32>, vector<1x128xf32> -> vector<1x128xf32>
    %155 = arith.addf %150, %154 : vector<1x128xf32>
    %156 = vector.extract_strided_slice %140 {offsets = [3, 0], sizes = [1, 32], strides = [1, 1]} : vector<5x32xf32> to vector<1x32xf32>
    %c3_152 = arith.constant 3 : index
    %c0_153 = arith.constant 0 : index
    %c0_154 = arith.constant 0 : index
    %157 = vector.load %arg11[%c3_152, %c0_153, %c0_154] : memref<25x32x128xf32, #tpu.memory_space<vmem>>, vector<1x32x128xf32>
    %158 = vector.shape_cast %157 : vector<1x32x128xf32> to vector<32x128xf32>
    %cst_155 = arith.constant dense<0.000000e+00> : vector<1x128xf32>
    %159 = tpu.matmul %156, %158, %cst_155 {dimension_numbers = #tpu.dot_dimension_numbers<[1], [0], [0], [1], [0, 0, 1, 1], [], []>} : vector<1x32xf32>, vector<32x128xf32>, vector<1x128xf32> -> vector<1x128xf32>
    %160 = arith.addf %155, %159 : vector<1x128xf32>
    %161 = vector.extract_strided_slice %140 {offsets = [4, 0], sizes = [1, 32], strides = [1, 1]} : vector<5x32xf32> to vector<1x32xf32>
    %c4_156 = arith.constant 4 : index
    %c0_157 = arith.constant 0 : index
    %c0_158 = arith.constant 0 : index
    %162 = vector.load %arg11[%c4_156, %c0_157, %c0_158] : memref<25x32x128xf32, #tpu.memory_space<vmem>>, vector<1x32x128xf32>
    %163 = vector.shape_cast %162 : vector<1x32x128xf32> to vector<32x128xf32>
    %cst_159 = arith.constant dense<0.000000e+00> : vector<1x128xf32>
    %164 = tpu.matmul %161, %163, %cst_159 {dimension_numbers = #tpu.dot_dimension_numbers<[1], [0], [0], [1], [0, 0, 1, 1], [], []>} : vector<1x32xf32>, vector<32x128xf32>, vector<1x128xf32> -> vector<1x128xf32>
    %165 = arith.addf %160, %164 : vector<1x128xf32>
    %166 = vector.extract_strided_slice %132 {offsets = [6, 0], sizes = [5, 32], strides = [1, 1]} : vector<36x32xf32> to vector<5x32xf32>
    %167 = vector.extract_strided_slice %132 {offsets = [7, 0], sizes = [5, 32], strides = [1, 1]} : vector<36x32xf32> to vector<5x32xf32>
    %168 = arith.maximumf %166, %167 : vector<5x32xf32>
    %169 = vector.extract_strided_slice %132 {offsets = [12, 0], sizes = [5, 32], strides = [1, 1]} : vector<36x32xf32> to vector<5x32xf32>
    %170 = arith.maximumf %168, %169 : vector<5x32xf32>
    %171 = vector.extract_strided_slice %132 {offsets = [13, 0], sizes = [5, 32], strides = [1, 1]} : vector<36x32xf32> to vector<5x32xf32>
    %172 = arith.maximumf %170, %171 : vector<5x32xf32>
    %173 = vector.extract_strided_slice %172 {offsets = [0, 0], sizes = [1, 32], strides = [1, 1]} : vector<5x32xf32> to vector<1x32xf32>
    %c5_160 = arith.constant 5 : index
    %c0_161 = arith.constant 0 : index
    %c0_162 = arith.constant 0 : index
    %174 = vector.load %arg11[%c5_160, %c0_161, %c0_162] : memref<25x32x128xf32, #tpu.memory_space<vmem>>, vector<1x32x128xf32>
    %175 = vector.shape_cast %174 : vector<1x32x128xf32> to vector<32x128xf32>
    %cst_163 = arith.constant dense<0.000000e+00> : vector<1x128xf32>
    %176 = tpu.matmul %173, %175, %cst_163 {dimension_numbers = #tpu.dot_dimension_numbers<[1], [0], [0], [1], [0, 0, 1, 1], [], []>} : vector<1x32xf32>, vector<32x128xf32>, vector<1x128xf32> -> vector<1x128xf32>
    %177 = arith.addf %165, %176 : vector<1x128xf32>
    %178 = vector.extract_strided_slice %172 {offsets = [1, 0], sizes = [1, 32], strides = [1, 1]} : vector<5x32xf32> to vector<1x32xf32>
    %c6_164 = arith.constant 6 : index
    %c0_165 = arith.constant 0 : index
    %c0_166 = arith.constant 0 : index
    %179 = vector.load %arg11[%c6_164, %c0_165, %c0_166] : memref<25x32x128xf32, #tpu.memory_space<vmem>>, vector<1x32x128xf32>
    %180 = vector.shape_cast %179 : vector<1x32x128xf32> to vector<32x128xf32>
    %cst_167 = arith.constant dense<0.000000e+00> : vector<1x128xf32>
    %181 = tpu.matmul %178, %180, %cst_167 {dimension_numbers = #tpu.dot_dimension_numbers<[1], [0], [0], [1], [0, 0, 1, 1], [], []>} : vector<1x32xf32>, vector<32x128xf32>, vector<1x128xf32> -> vector<1x128xf32>
    %182 = arith.addf %177, %181 : vector<1x128xf32>
    %183 = vector.extract_strided_slice %172 {offsets = [2, 0], sizes = [1, 32], strides = [1, 1]} : vector<5x32xf32> to vector<1x32xf32>
    %c7_168 = arith.constant 7 : index
    %c0_169 = arith.constant 0 : index
    %c0_170 = arith.constant 0 : index
    %184 = vector.load %arg11[%c7_168, %c0_169, %c0_170] : memref<25x32x128xf32, #tpu.memory_space<vmem>>, vector<1x32x128xf32>
    %185 = vector.shape_cast %184 : vector<1x32x128xf32> to vector<32x128xf32>
    %cst_171 = arith.constant dense<0.000000e+00> : vector<1x128xf32>
    %186 = tpu.matmul %183, %185, %cst_171 {dimension_numbers = #tpu.dot_dimension_numbers<[1], [0], [0], [1], [0, 0, 1, 1], [], []>} : vector<1x32xf32>, vector<32x128xf32>, vector<1x128xf32> -> vector<1x128xf32>
    %187 = arith.addf %182, %186 : vector<1x128xf32>
    %188 = vector.extract_strided_slice %172 {offsets = [3, 0], sizes = [1, 32], strides = [1, 1]} : vector<5x32xf32> to vector<1x32xf32>
    %c8_172 = arith.constant 8 : index
    %c0_173 = arith.constant 0 : index
    %c0_174 = arith.constant 0 : index
    %189 = vector.load %arg11[%c8_172, %c0_173, %c0_174] : memref<25x32x128xf32, #tpu.memory_space<vmem>>, vector<1x32x128xf32>
    %190 = vector.shape_cast %189 : vector<1x32x128xf32> to vector<32x128xf32>
    %cst_175 = arith.constant dense<0.000000e+00> : vector<1x128xf32>
    %191 = tpu.matmul %188, %190, %cst_175 {dimension_numbers = #tpu.dot_dimension_numbers<[1], [0], [0], [1], [0, 0, 1, 1], [], []>} : vector<1x32xf32>, vector<32x128xf32>, vector<1x128xf32> -> vector<1x128xf32>
    %192 = arith.addf %187, %191 : vector<1x128xf32>
    %193 = vector.extract_strided_slice %172 {offsets = [4, 0], sizes = [1, 32], strides = [1, 1]} : vector<5x32xf32> to vector<1x32xf32>
    %c9 = arith.constant 9 : index
    %c0_176 = arith.constant 0 : index
    %c0_177 = arith.constant 0 : index
    %194 = vector.load %arg11[%c9, %c0_176, %c0_177] : memref<25x32x128xf32, #tpu.memory_space<vmem>>, vector<1x32x128xf32>
    %195 = vector.shape_cast %194 : vector<1x32x128xf32> to vector<32x128xf32>
    %cst_178 = arith.constant dense<0.000000e+00> : vector<1x128xf32>
    %196 = tpu.matmul %193, %195, %cst_178 {dimension_numbers = #tpu.dot_dimension_numbers<[1], [0], [0], [1], [0, 0, 1, 1], [], []>} : vector<1x32xf32>, vector<32x128xf32>, vector<1x128xf32> -> vector<1x128xf32>
    %197 = arith.addf %192, %196 : vector<1x128xf32>
    %198 = vector.extract_strided_slice %132 {offsets = [12, 0], sizes = [5, 32], strides = [1, 1]} : vector<36x32xf32> to vector<5x32xf32>
    %199 = vector.extract_strided_slice %132 {offsets = [13, 0], sizes = [5, 32], strides = [1, 1]} : vector<36x32xf32> to vector<5x32xf32>
    %200 = arith.maximumf %198, %199 : vector<5x32xf32>
    %201 = vector.extract_strided_slice %132 {offsets = [18, 0], sizes = [5, 32], strides = [1, 1]} : vector<36x32xf32> to vector<5x32xf32>
    %202 = arith.maximumf %200, %201 : vector<5x32xf32>
    %203 = vector.extract_strided_slice %132 {offsets = [19, 0], sizes = [5, 32], strides = [1, 1]} : vector<36x32xf32> to vector<5x32xf32>
    %204 = arith.maximumf %202, %203 : vector<5x32xf32>
    %205 = vector.extract_strided_slice %204 {offsets = [0, 0], sizes = [1, 32], strides = [1, 1]} : vector<5x32xf32> to vector<1x32xf32>
    %c10 = arith.constant 10 : index
    %c0_179 = arith.constant 0 : index
    %c0_180 = arith.constant 0 : index
    %206 = vector.load %arg11[%c10, %c0_179, %c0_180] : memref<25x32x128xf32, #tpu.memory_space<vmem>>, vector<1x32x128xf32>
    %207 = vector.shape_cast %206 : vector<1x32x128xf32> to vector<32x128xf32>
    %cst_181 = arith.constant dense<0.000000e+00> : vector<1x128xf32>
    %208 = tpu.matmul %205, %207, %cst_181 {dimension_numbers = #tpu.dot_dimension_numbers<[1], [0], [0], [1], [0, 0, 1, 1], [], []>} : vector<1x32xf32>, vector<32x128xf32>, vector<1x128xf32> -> vector<1x128xf32>
    %209 = arith.addf %197, %208 : vector<1x128xf32>
    %210 = vector.extract_strided_slice %204 {offsets = [1, 0], sizes = [1, 32], strides = [1, 1]} : vector<5x32xf32> to vector<1x32xf32>
    %c11 = arith.constant 11 : index
    %c0_182 = arith.constant 0 : index
    %c0_183 = arith.constant 0 : index
    %211 = vector.load %arg11[%c11, %c0_182, %c0_183] : memref<25x32x128xf32, #tpu.memory_space<vmem>>, vector<1x32x128xf32>
    %212 = vector.shape_cast %211 : vector<1x32x128xf32> to vector<32x128xf32>
    %cst_184 = arith.constant dense<0.000000e+00> : vector<1x128xf32>
    %213 = tpu.matmul %210, %212, %cst_184 {dimension_numbers = #tpu.dot_dimension_numbers<[1], [0], [0], [1], [0, 0, 1, 1], [], []>} : vector<1x32xf32>, vector<32x128xf32>, vector<1x128xf32> -> vector<1x128xf32>
    %214 = arith.addf %209, %213 : vector<1x128xf32>
    %215 = vector.extract_strided_slice %204 {offsets = [2, 0], sizes = [1, 32], strides = [1, 1]} : vector<5x32xf32> to vector<1x32xf32>
    %c12 = arith.constant 12 : index
    %c0_185 = arith.constant 0 : index
    %c0_186 = arith.constant 0 : index
    %216 = vector.load %arg11[%c12, %c0_185, %c0_186] : memref<25x32x128xf32, #tpu.memory_space<vmem>>, vector<1x32x128xf32>
    %217 = vector.shape_cast %216 : vector<1x32x128xf32> to vector<32x128xf32>
    %cst_187 = arith.constant dense<0.000000e+00> : vector<1x128xf32>
    %218 = tpu.matmul %215, %217, %cst_187 {dimension_numbers = #tpu.dot_dimension_numbers<[1], [0], [0], [1], [0, 0, 1, 1], [], []>} : vector<1x32xf32>, vector<32x128xf32>, vector<1x128xf32> -> vector<1x128xf32>
    %219 = arith.addf %214, %218 : vector<1x128xf32>
    %220 = vector.extract_strided_slice %204 {offsets = [3, 0], sizes = [1, 32], strides = [1, 1]} : vector<5x32xf32> to vector<1x32xf32>
    %c13 = arith.constant 13 : index
    %c0_188 = arith.constant 0 : index
    %c0_189 = arith.constant 0 : index
    %221 = vector.load %arg11[%c13, %c0_188, %c0_189] : memref<25x32x128xf32, #tpu.memory_space<vmem>>, vector<1x32x128xf32>
    %222 = vector.shape_cast %221 : vector<1x32x128xf32> to vector<32x128xf32>
    %cst_190 = arith.constant dense<0.000000e+00> : vector<1x128xf32>
    %223 = tpu.matmul %220, %222, %cst_190 {dimension_numbers = #tpu.dot_dimension_numbers<[1], [0], [0], [1], [0, 0, 1, 1], [], []>} : vector<1x32xf32>, vector<32x128xf32>, vector<1x128xf32> -> vector<1x128xf32>
    %224 = arith.addf %219, %223 : vector<1x128xf32>
    %225 = vector.extract_strided_slice %204 {offsets = [4, 0], sizes = [1, 32], strides = [1, 1]} : vector<5x32xf32> to vector<1x32xf32>
    %c14 = arith.constant 14 : index
    %c0_191 = arith.constant 0 : index
    %c0_192 = arith.constant 0 : index
    %226 = vector.load %arg11[%c14, %c0_191, %c0_192] : memref<25x32x128xf32, #tpu.memory_space<vmem>>, vector<1x32x128xf32>
    %227 = vector.shape_cast %226 : vector<1x32x128xf32> to vector<32x128xf32>
    %cst_193 = arith.constant dense<0.000000e+00> : vector<1x128xf32>
    %228 = tpu.matmul %225, %227, %cst_193 {dimension_numbers = #tpu.dot_dimension_numbers<[1], [0], [0], [1], [0, 0, 1, 1], [], []>} : vector<1x32xf32>, vector<32x128xf32>, vector<1x128xf32> -> vector<1x128xf32>
    %229 = arith.addf %224, %228 : vector<1x128xf32>
    %230 = vector.extract_strided_slice %132 {offsets = [18, 0], sizes = [5, 32], strides = [1, 1]} : vector<36x32xf32> to vector<5x32xf32>
    %231 = vector.extract_strided_slice %132 {offsets = [19, 0], sizes = [5, 32], strides = [1, 1]} : vector<36x32xf32> to vector<5x32xf32>
    %232 = arith.maximumf %230, %231 : vector<5x32xf32>
    %233 = vector.extract_strided_slice %132 {offsets = [24, 0], sizes = [5, 32], strides = [1, 1]} : vector<36x32xf32> to vector<5x32xf32>
    %234 = arith.maximumf %232, %233 : vector<5x32xf32>
    %235 = vector.extract_strided_slice %132 {offsets = [25, 0], sizes = [5, 32], strides = [1, 1]} : vector<36x32xf32> to vector<5x32xf32>
    %236 = arith.maximumf %234, %235 : vector<5x32xf32>
    %237 = vector.extract_strided_slice %236 {offsets = [0, 0], sizes = [1, 32], strides = [1, 1]} : vector<5x32xf32> to vector<1x32xf32>
    %c15 = arith.constant 15 : index
    %c0_194 = arith.constant 0 : index
    %c0_195 = arith.constant 0 : index
    %238 = vector.load %arg11[%c15, %c0_194, %c0_195] : memref<25x32x128xf32, #tpu.memory_space<vmem>>, vector<1x32x128xf32>
    %239 = vector.shape_cast %238 : vector<1x32x128xf32> to vector<32x128xf32>
    %cst_196 = arith.constant dense<0.000000e+00> : vector<1x128xf32>
    %240 = tpu.matmul %237, %239, %cst_196 {dimension_numbers = #tpu.dot_dimension_numbers<[1], [0], [0], [1], [0, 0, 1, 1], [], []>} : vector<1x32xf32>, vector<32x128xf32>, vector<1x128xf32> -> vector<1x128xf32>
    %241 = arith.addf %229, %240 : vector<1x128xf32>
    %242 = vector.extract_strided_slice %236 {offsets = [1, 0], sizes = [1, 32], strides = [1, 1]} : vector<5x32xf32> to vector<1x32xf32>
    %c16 = arith.constant 16 : index
    %c0_197 = arith.constant 0 : index
    %c0_198 = arith.constant 0 : index
    %243 = vector.load %arg11[%c16, %c0_197, %c0_198] : memref<25x32x128xf32, #tpu.memory_space<vmem>>, vector<1x32x128xf32>
    %244 = vector.shape_cast %243 : vector<1x32x128xf32> to vector<32x128xf32>
    %cst_199 = arith.constant dense<0.000000e+00> : vector<1x128xf32>
    %245 = tpu.matmul %242, %244, %cst_199 {dimension_numbers = #tpu.dot_dimension_numbers<[1], [0], [0], [1], [0, 0, 1, 1], [], []>} : vector<1x32xf32>, vector<32x128xf32>, vector<1x128xf32> -> vector<1x128xf32>
    %246 = arith.addf %241, %245 : vector<1x128xf32>
    %247 = vector.extract_strided_slice %236 {offsets = [2, 0], sizes = [1, 32], strides = [1, 1]} : vector<5x32xf32> to vector<1x32xf32>
    %c17 = arith.constant 17 : index
    %c0_200 = arith.constant 0 : index
    %c0_201 = arith.constant 0 : index
    %248 = vector.load %arg11[%c17, %c0_200, %c0_201] : memref<25x32x128xf32, #tpu.memory_space<vmem>>, vector<1x32x128xf32>
    %249 = vector.shape_cast %248 : vector<1x32x128xf32> to vector<32x128xf32>
    %cst_202 = arith.constant dense<0.000000e+00> : vector<1x128xf32>
    %250 = tpu.matmul %247, %249, %cst_202 {dimension_numbers = #tpu.dot_dimension_numbers<[1], [0], [0], [1], [0, 0, 1, 1], [], []>} : vector<1x32xf32>, vector<32x128xf32>, vector<1x128xf32> -> vector<1x128xf32>
    %251 = arith.addf %246, %250 : vector<1x128xf32>
    %252 = vector.extract_strided_slice %236 {offsets = [3, 0], sizes = [1, 32], strides = [1, 1]} : vector<5x32xf32> to vector<1x32xf32>
    %c18 = arith.constant 18 : index
    %c0_203 = arith.constant 0 : index
    %c0_204 = arith.constant 0 : index
    %253 = vector.load %arg11[%c18, %c0_203, %c0_204] : memref<25x32x128xf32, #tpu.memory_space<vmem>>, vector<1x32x128xf32>
    %254 = vector.shape_cast %253 : vector<1x32x128xf32> to vector<32x128xf32>
    %cst_205 = arith.constant dense<0.000000e+00> : vector<1x128xf32>
    %255 = tpu.matmul %252, %254, %cst_205 {dimension_numbers = #tpu.dot_dimension_numbers<[1], [0], [0], [1], [0, 0, 1, 1], [], []>} : vector<1x32xf32>, vector<32x128xf32>, vector<1x128xf32> -> vector<1x128xf32>
    %256 = arith.addf %251, %255 : vector<1x128xf32>
    %257 = vector.extract_strided_slice %236 {offsets = [4, 0], sizes = [1, 32], strides = [1, 1]} : vector<5x32xf32> to vector<1x32xf32>
    %c19 = arith.constant 19 : index
    %c0_206 = arith.constant 0 : index
    %c0_207 = arith.constant 0 : index
    %258 = vector.load %arg11[%c19, %c0_206, %c0_207] : memref<25x32x128xf32, #tpu.memory_space<vmem>>, vector<1x32x128xf32>
    %259 = vector.shape_cast %258 : vector<1x32x128xf32> to vector<32x128xf32>
    %cst_208 = arith.constant dense<0.000000e+00> : vector<1x128xf32>
    %260 = tpu.matmul %257, %259, %cst_208 {dimension_numbers = #tpu.dot_dimension_numbers<[1], [0], [0], [1], [0, 0, 1, 1], [], []>} : vector<1x32xf32>, vector<32x128xf32>, vector<1x128xf32> -> vector<1x128xf32>
    %261 = arith.addf %256, %260 : vector<1x128xf32>
    %262 = vector.extract_strided_slice %132 {offsets = [24, 0], sizes = [5, 32], strides = [1, 1]} : vector<36x32xf32> to vector<5x32xf32>
    %263 = vector.extract_strided_slice %132 {offsets = [25, 0], sizes = [5, 32], strides = [1, 1]} : vector<36x32xf32> to vector<5x32xf32>
    %264 = arith.maximumf %262, %263 : vector<5x32xf32>
    %265 = vector.extract_strided_slice %132 {offsets = [30, 0], sizes = [5, 32], strides = [1, 1]} : vector<36x32xf32> to vector<5x32xf32>
    %266 = arith.maximumf %264, %265 : vector<5x32xf32>
    %267 = vector.extract_strided_slice %132 {offsets = [31, 0], sizes = [5, 32], strides = [1, 1]} : vector<36x32xf32> to vector<5x32xf32>
    %268 = arith.maximumf %266, %267 : vector<5x32xf32>
    %269 = vector.extract_strided_slice %268 {offsets = [0, 0], sizes = [1, 32], strides = [1, 1]} : vector<5x32xf32> to vector<1x32xf32>
    %c20 = arith.constant 20 : index
    %c0_209 = arith.constant 0 : index
    %c0_210 = arith.constant 0 : index
    %270 = vector.load %arg11[%c20, %c0_209, %c0_210] : memref<25x32x128xf32, #tpu.memory_space<vmem>>, vector<1x32x128xf32>
    %271 = vector.shape_cast %270 : vector<1x32x128xf32> to vector<32x128xf32>
    %cst_211 = arith.constant dense<0.000000e+00> : vector<1x128xf32>
    %272 = tpu.matmul %269, %271, %cst_211 {dimension_numbers = #tpu.dot_dimension_numbers<[1], [0], [0], [1], [0, 0, 1, 1], [], []>} : vector<1x32xf32>, vector<32x128xf32>, vector<1x128xf32> -> vector<1x128xf32>
    %273 = arith.addf %261, %272 : vector<1x128xf32>
    %274 = vector.extract_strided_slice %268 {offsets = [1, 0], sizes = [1, 32], strides = [1, 1]} : vector<5x32xf32> to vector<1x32xf32>
    %c21 = arith.constant 21 : index
    %c0_212 = arith.constant 0 : index
    %c0_213 = arith.constant 0 : index
    %275 = vector.load %arg11[%c21, %c0_212, %c0_213] : memref<25x32x128xf32, #tpu.memory_space<vmem>>, vector<1x32x128xf32>
    %276 = vector.shape_cast %275 : vector<1x32x128xf32> to vector<32x128xf32>
    %cst_214 = arith.constant dense<0.000000e+00> : vector<1x128xf32>
    %277 = tpu.matmul %274, %276, %cst_214 {dimension_numbers = #tpu.dot_dimension_numbers<[1], [0], [0], [1], [0, 0, 1, 1], [], []>} : vector<1x32xf32>, vector<32x128xf32>, vector<1x128xf32> -> vector<1x128xf32>
    %278 = arith.addf %273, %277 : vector<1x128xf32>
    %279 = vector.extract_strided_slice %268 {offsets = [2, 0], sizes = [1, 32], strides = [1, 1]} : vector<5x32xf32> to vector<1x32xf32>
    %c22 = arith.constant 22 : index
    %c0_215 = arith.constant 0 : index
    %c0_216 = arith.constant 0 : index
    %280 = vector.load %arg11[%c22, %c0_215, %c0_216] : memref<25x32x128xf32, #tpu.memory_space<vmem>>, vector<1x32x128xf32>
    %281 = vector.shape_cast %280 : vector<1x32x128xf32> to vector<32x128xf32>
    %cst_217 = arith.constant dense<0.000000e+00> : vector<1x128xf32>
    %282 = tpu.matmul %279, %281, %cst_217 {dimension_numbers = #tpu.dot_dimension_numbers<[1], [0], [0], [1], [0, 0, 1, 1], [], []>} : vector<1x32xf32>, vector<32x128xf32>, vector<1x128xf32> -> vector<1x128xf32>
    %283 = arith.addf %278, %282 : vector<1x128xf32>
    %284 = vector.extract_strided_slice %268 {offsets = [3, 0], sizes = [1, 32], strides = [1, 1]} : vector<5x32xf32> to vector<1x32xf32>
    %c23 = arith.constant 23 : index
    %c0_218 = arith.constant 0 : index
    %c0_219 = arith.constant 0 : index
    %285 = vector.load %arg11[%c23, %c0_218, %c0_219] : memref<25x32x128xf32, #tpu.memory_space<vmem>>, vector<1x32x128xf32>
    %286 = vector.shape_cast %285 : vector<1x32x128xf32> to vector<32x128xf32>
    %cst_220 = arith.constant dense<0.000000e+00> : vector<1x128xf32>
    %287 = tpu.matmul %284, %286, %cst_220 {dimension_numbers = #tpu.dot_dimension_numbers<[1], [0], [0], [1], [0, 0, 1, 1], [], []>} : vector<1x32xf32>, vector<32x128xf32>, vector<1x128xf32> -> vector<1x128xf32>
    %288 = arith.addf %283, %287 : vector<1x128xf32>
    %289 = vector.extract_strided_slice %268 {offsets = [4, 0], sizes = [1, 32], strides = [1, 1]} : vector<5x32xf32> to vector<1x32xf32>
    %c24 = arith.constant 24 : index
    %c0_221 = arith.constant 0 : index
    %c0_222 = arith.constant 0 : index
    %290 = vector.load %arg11[%c24, %c0_221, %c0_222] : memref<25x32x128xf32, #tpu.memory_space<vmem>>, vector<1x32x128xf32>
    %291 = vector.shape_cast %290 : vector<1x32x128xf32> to vector<32x128xf32>
    %cst_223 = arith.constant dense<0.000000e+00> : vector<1x128xf32>
    %292 = tpu.matmul %289, %291, %cst_223 {dimension_numbers = #tpu.dot_dimension_numbers<[1], [0], [0], [1], [0, 0, 1, 1], [], []>} : vector<1x32xf32>, vector<32x128xf32>, vector<1x128xf32> -> vector<1x128xf32>
    %293 = arith.addf %288, %292 : vector<1x128xf32>
    %c0_224 = arith.constant 0 : index
    %c0_225 = arith.constant 0 : index
    %c0_226 = arith.constant 0 : index
    %294 = vector.load %arg13[%c0_224, %c0_225, %c0_226] : memref<1x1x128xf32, #tpu.memory_space<vmem>>, vector<1x1x128xf32>
    %295 = vector.shape_cast %294 : vector<1x1x128xf32> to vector<1x128xf32>
    %296 = vector.shape_cast %293 : vector<1x128xf32> to vector<1x1x128xf32>
    tpu.vector_store %arg13[%c0_224, %c0_225, %c0_226], %296 {strides = array<i32>} : memref<1x1x128xf32, #tpu.memory_space<vmem>>, vector<1x1x128xf32>,
    return
  }
  func.func @transform_0(%arg0: i32) -> (i32, i32, i32) {
    %c0_i32 = arith.constant 0 : i32
    %c0_i32_0 = arith.constant 0 : i32
    %c0_i32_1 = arith.constant 0 : i32
    return %arg0, %c0_i32, %c0_i32_0 : i32, i32, i32
  }
  func.func @transform_1(%arg0: i32) -> (i32, i32, i32) {
    %c0_i32 = arith.constant 0 : i32
    %c0_i32_0 = arith.constant 0 : i32
    %c0_i32_1 = arith.constant 0 : i32
    %c0_i32_2 = arith.constant 0 : i32
    return %c0_i32, %c0_i32_0, %c0_i32_1 : i32, i32, i32
  }
  func.func @transform_2(%arg0: i32) -> (i32, i32, i32) {
    %c0_i32 = arith.constant 0 : i32
    %c0_i32_0 = arith.constant 0 : i32
    %c0_i32_1 = arith.constant 0 : i32
    %c0_i32_2 = arith.constant 0 : i32
    return %c0_i32, %c0_i32_0, %c0_i32_1 : i32, i32, i32
  }
  func.func @transform_3(%arg0: i32) -> (i32, i32) {
    %c0_i32 = arith.constant 0 : i32
    %c0_i32_0 = arith.constant 0 : i32
    %c0_i32_1 = arith.constant 0 : i32
    return %c0_i32, %c0_i32_0 : i32, i32
  }
  func.func @transform_4(%arg0: i32) -> (i32, i32, i32) {
    %c0_i32 = arith.constant 0 : i32
    %c0_i32_0 = arith.constant 0 : i32
    %c0_i32_1 = arith.constant 0 : i32
    %c0_i32_2 = arith.constant 0 : i32
    return %c0_i32, %c0_i32_0, %c0_i32_1 : i32, i32, i32
  }
  func.func @transform_5(%arg0: i32) -> (i32, i32, i32) {
    %c0_i32 = arith.constant 0 : i32
    %c0_i32_0 = arith.constant 0 : i32
    %c0_i32_1 = arith.constant 0 : i32
    %c0_i32_2 = arith.constant 0 : i32
    return %c0_i32, %c0_i32_0, %c0_i32_1 : i32, i32, i32
  }
  func.func @transform_6(%arg0: i32) -> (i32, i32) {
    %c0_i32 = arith.constant 0 : i32
    %c0_i32_0 = arith.constant 0 : i32
    %c0_i32_1 = arith.constant 0 : i32
    return %c0_i32, %c0_i32_0 : i32, i32
  }
  func.func @transform_7(%arg0: i32) -> (i32, i32, i32) {
    %c0_i32 = arith.constant 0 : i32
    %c0_i32_0 = arith.constant 0 : i32
    %c0_i32_1 = arith.constant 0 : i32
    %c0_i32_2 = arith.constant 0 : i32
    return %c0_i32, %c0_i32_0, %c0_i32_1 : i32, i32, i32
  }
  func.func @transform_8(%arg0: i32) -> (i32, i32, i32) {
    %c0_i32 = arith.constant 0 : i32
    %c0_i32_0 = arith.constant 0 : i32
    %c0_i32_1 = arith.constant 0 : i32
    %c0_i32_2 = arith.constant 0 : i32
    return %c0_i32, %c0_i32_0, %c0_i32_1 : i32, i32, i32
  }
  func.func @transform_9(%arg0: i32) -> (i32, i32) {
    %c0_i32 = arith.constant 0 : i32
    %c0_i32_0 = arith.constant 0 : i32
    %c0_i32_1 = arith.constant 0 : i32
    return %c0_i32, %c0_i32_0 : i32, i32
  }
  func.func @transform_10(%arg0: i32) -> (i32, i32, i32) {
    %c0_i32 = arith.constant 0 : i32
    %c0_i32_0 = arith.constant 0 : i32
    %c0_i32_1 = arith.constant 0 : i32
    %c0_i32_2 = arith.constant 0 : i32
    return %c0_i32, %c0_i32_0, %c0_i32_1 : i32, i32, i32
  }
  func.func @transform_11(%arg0: i32) -> (i32, i32) {
    %c0_i32 = arith.constant 0 : i32
    %c0_i32_0 = arith.constant 0 : i32
    %c0_i32_1 = arith.constant 0 : i32
    return %c0_i32, %c0_i32_0 : i32, i32
  }
  func.func @transform_12(%arg0: i32) -> (i32, i32, i32) {
    %c0_i32 = arith.constant 0 : i32
    %c0_i32_0 = arith.constant 0 : i32
    %c0_i32_1 = arith.constant 0 : i32
    return %arg0, %c0_i32, %c0_i32_0 : i32, i32, i32
  }
}

</mosaic_0001>

<llo_original>
// kernel: cnn_model_forward_prepared.1
$region0: #{cnn_model_forward_prepared.1}
  #allocation0 [shape = 'u32[]', space=smem, size = 0x4, offset = 0x4, fixed_abs, tag = 'smem constant byte address 0x4 - core index']
  #allocation1 [shape = 'u32[144,128]{1,0:T(1,128)}', space=vmem, size = 0x12000, scoped, tag = 'internal scratch']
  %s0 = inlined_call_operand.vmem [shape: f32[2,256,8], index: 0, kind: input, shape index: {}]
  %s1 = inlined_call_operand.hbm [shape: f32[9,196,256], index: 1, kind: input, shape index: {}]
  %s2 = inlined_call_operand.vmem [shape: f32[9,8,8], index: 2, kind: input, shape index: {}]
  %s3 = inlined_call_operand.hbm [shape: f32[1,8], index: 3, kind: input, shape index: {}]
  %s4 = inlined_call_operand.vmem [shape: f32[4,49,196], index: 4, kind: input, shape index: {}]
  %s5 = inlined_call_operand.hbm [shape: f32[4,8,16], index: 5, kind: input, shape index: {}]
  %s6 = inlined_call_operand.hbm [shape: f32[1,16], index: 6, kind: input, shape index: {}]
  %s7 = inlined_call_operand.vmem [shape: f32[4,36,49], index: 7, kind: input, shape index: {}]
  %s8 = inlined_call_operand.hbm [shape: f32[4,16,32], index: 8, kind: input, shape index: {}]
  %s9 = inlined_call_operand.hbm [shape: f32[1,32], index: 9, kind: input, shape index: {}]
  %s10 = inlined_call_operand.hbm [shape: f32[25,32,128], index: 10, kind: input, shape index: {}]
  %s11 = inlined_call_operand.hbm [shape: f32[1,128], index: 11, kind: input, shape index: {}]
  %s12 = inlined_call_operand.hbm [shape: f32[2,1,128], index: 12, kind: output, shape index: {}]
  %s13 = sld [smem:[#allocation0]]
  $region113: #{cnn_model_forward_prepared.1} parent=0
    _
  %s15 = ssub.s32 1, %s13
  %s16 = scalar_select 0, %s15, %s13
  $region1: #{cnn_model_forward_prepared.1} parent=0
    #allocation2 [shape = 'u8[1843200]{0}', space=vmem, size = 0x1c2000, scoped, tag = 'input window, operand 1, single buffered']
    #allocation3 [shape = 's32[2]{0}', space=sflag, size = 0x8, scoped, tag = 'scoped memory for cnn_model_forward_prepared.1']
    #allocation4 [shape = 's32[2]{0}', space=sflag, size = 0x8, scoped, tag = 'scoped memory for cnn_model_forward_prepared.1']
    #allocation5 [shape = 'u8[512]{0}', space=vmem, size = 0x400, scoped, tag = 'input window, operand 3, single buffered']
    #allocation6 [shape = 's32[1]{0}', space=sflag, size = 0x4, scoped, tag = 'scoped memory for cnn_model_forward_prepared.1']
    #allocation7 [shape = 'u8[16384]{0}', space=vmem, size = 0x4000, scoped, tag = 'input window, operand 5, single buffered']
    #allocation8 [shape = 'u8[512]{0}', space=vmem, size = 0x400, scoped, tag = 'input window, operand 6, single buffered']
    #allocation9 [shape = 's32[1]{0}', space=sflag, size = 0x4, scoped, tag = 'scoped memory for cnn_model_forward_prepared.1']
    #allocation10 [shape = 'u8[32768]{0}', space=vmem, size = 0x8000, scoped, tag = 'input window, operand 8, single buffered']
    #allocation11 [shape = 'u8[512]{0}', space=vmem, size = 0x400, scoped, tag = 'input window, operand 9, single buffered']
    #allocation12 [shape = 's32[1]{0}', space=sflag, size = 0x4, scoped, tag = 'scoped memory for cnn_model_forward_prepared.1']
    #allocation13 [shape = 'u8[409600]{0}', space=vmem, size = 0x64000, scoped, tag = 'input window, operand 10, single buffered']
    #allocation14 [shape = 'u8[512]{0}', space=vmem, size = 0x400, scoped, tag = 'input window, operand 11, single buffered']
    #allocation15 [shape = 's32[1]{0}', space=sflag, size = 0x4, scoped, tag = 'scoped memory for cnn_model_forward_prepared.1']
    #allocation16 [shape = 'u8[1024]{0}', space=vmem, size = 0x400, scoped, tag = 'output window, operand 0']
    %17 = vsyncpa [#allocation3], 0
    %18 = vsyncpa [#allocation6], 0
    %19 = vsyncpa [#allocation9], 0
    %20 = vsyncpa [#allocation12], 0
    %21 = vsyncpa [#allocation15], 0
    %22 = vsyncpa [#allocation4], 0
    %s23 = scalar_lea.sflag [#allocation4], 1
    %24 = vsyncpa %s23, 0
    loop: start=0, step=1, limit=4
    $region2: #{cnn_model_forward_prepared.1} parent=1 // loop_pre_header
      _
    $region3: #{cnn_model_forward_prepared.1} parent=1 // loop_header
      %s26 = sphi 0, %s30
      %p27 = scmp.ge.s32.totalorder %s26, 4
      %s36 = sphi 0, %s38
      %s39 = sphi 0, %s36
      %s40 = sphi 0, %s39
      %s56 = sphi 0, %s40
      %s60 = sphi 0, %s60
      %s62 = sphi 0, %s60
      %s63 = sphi 0, %s62
      %s77 = sphi 0, %s63
      %s81 = sphi 0, %s81
      %s83 = sphi 0, %s81
      %s84 = sphi 0, %s83
      %s98 = sphi 0, %s84
      %s102 = sphi 0, %s102
      %s104 = sphi 0, %s102
      %s105 = sphi 0, %s104
      %s119 = sphi 0, %s105
      %s123 = sphi 0, %s123
      %s125 = sphi 0, %s123
      %s126 = sphi 0, %s125
      %s140 = sphi 0, %s126
      %s144 = sphi 0, %s144
      %s146 = sphi 0, %s144
      %s147 = sphi 0, %s146
      %s161 = sphi 0, %s147
      %s165 = sphi 0, %s165
      %s167 = sphi 0, %s165
      %s168 = sphi 0, %s167
      %s182 = sphi 0, %s168
      %s186 = sphi 0, %s186
      %s188 = sphi 0, %s186
      %s189 = sphi 0, %s188
      %s203 = sphi 0, %s189
      %s207 = sphi 0, %s207
      %s209 = sphi 0, %s207
      %s210 = sphi 0, %s209
      %s224 = sphi 0, %s210
      %s228 = sphi 0, %s228
      %s230 = sphi 0, %s228
      %s231 = sphi 0, %s230
      %s245 = sphi 0, %s231
      %s249 = sphi 0, %s249
      %s251 = sphi 0, %s249
      %s252 = sphi 0, %s251
      %s266 = sphi 0, %s252
      %s270 = sphi 0, %s270
      %s272 = sphi 0, %s270
      %s273 = sphi 0, %s272
      %s287 = sphi 0, %s273
      %s293 = sphi 0, %s295
      %s296 = sphi 0, %s293
      %s297 = sphi 0, %s296
      %s313 = sphi 0, %s297
    $region4: #{cnn_model_forward_prepared.1} parent=1 // loop_header_branch
      %29 = sbr.rel (%p27) target = $region8
    $region5: #{cnn_model_forward_prepared.1} parent=1 // loop_body
      %s31 = ssub.s32 %s26, 1
      %s32 = ssub.s32 %s26, 2
      %s33 = sadd.s32 %s26, 1
      %s34 = ssub.s32 %s26, %s33
      %p35 = scmp.eq.s32.totalorder %s34, 0
      %s37 = sadd.s32 %s36, 1
      %s38 = scalar_select %p35, %s36, %s37
      %p41 = pneg %p35
      %p42 = scmp.eq.s32.totalorder %s26, 1
      %p43 = por %p41, %p42
      %p44 = scmp.ne.s32.totalorder %s36, %s39
      %p45 = scmp.eq.s32.totalorder %s26, 0
      %p46 = por %p44, %p45
      %p47 = scmp.ne.s32.totalorder %s36, %s39
      %p48 = scmp.eq.s32.totalorder %s31, 1
      %p49 = por %p47, %p48
      %p50 = scmp.ne.s32.totalorder %s39, %s40
      %p51 = scmp.eq.s32.totalorder %s31, 0
      %p52 = por %p50, %p51
      %p53 = scmp.ne.s32.totalorder %s39, %s40
      %p54 = scmp.eq.s32.totalorder %s32, 1
      %p55 = por %p53, %p54
      %p57 = scmp.ne.s32.totalorder %s40, %s56
      %p58 = scmp.eq.s32.totalorder %s32, 0
      %p59 = por %p57, %p58
      %s61 = sadd.s32 %s60, 1
      %p64 = scmp.eq.s32.totalorder %s26, 1
      %p65 = scmp.ne.s32.totalorder %s60, %s62
      %p66 = scmp.eq.s32.totalorder %s26, 0
      %p67 = por %p65, %p66
      %p68 = scmp.ne.s32.totalorder %s60, %s62
      %p69 = scmp.eq.s32.totalorder %s31, 1
      %p70 = por %p68, %p69
      %p71 = scmp.ne.s32.totalorder %s62, %s63
      %p72 = scmp.eq.s32.totalorder %s31, 0
      %p73 = por %p71, %p72
      %p74 = scmp.ne.s32.totalorder %s62, %s63
      %p75 = scmp.eq.s32.totalorder %s32, 1
      %p76 = por %p74, %p75
      %p78 = scmp.ne.s32.totalorder %s63, %s77
      %p79 = scmp.eq.s32.totalorder %s32, 0
      %p80 = por %p78, %p79
      %s82 = sadd.s32 %s81, 1
      %p85 = scmp.eq.s32.totalorder %s26, 1
      %p86 = scmp.ne.s32.totalorder %s81, %s83
      %p87 = scmp.eq.s32.totalorder %s26, 0
      %p88 = por %p86, %p87
      %p89 = scmp.ne.s32.totalorder %s81, %s83
      %p90 = scmp.eq.s32.totalorder %s31, 1
      %p91 = por %p89, %p90
      %p92 = scmp.ne.s32.totalorder %s83, %s84
      %p93 = scmp.eq.s32.totalorder %s31, 0
      %p94 = por %p92, %p93
      %p95 = scmp.ne.s32.totalorder %s83, %s84
      %p96 = scmp.eq.s32.totalorder %s32, 1
      %p97 = por %p95, %p96
      %p99 = scmp.ne.s32.totalorder %s84, %s98
      %p100 = scmp.eq.s32.totalorder %s32, 0
      %p101 = por %p99, %p100
      %s103 = sadd.s32 %s102, 1
      %p106 = scmp.eq.s32.totalorder %s26, 1
      %p107 = scmp.ne.s32.totalorder %s102, %s104
      %p108 = scmp.eq.s32.totalorder %s26, 0
      %p109 = por %p107, %p108
      %p110 = scmp.ne.s32.totalorder %s102, %s104
      %p111 = scmp.eq.s32.totalorder %s31, 1
      %p112 = por %p110, %p111
      %p113 = scmp.ne.s32.totalorder %s104, %s105
      %p114 = scmp.eq.s32.totalorder %s31, 0
      %p115 = por %p113, %p114
      %p116 = scmp.ne.s32.totalorder %s104, %s105
      %p117 = scmp.eq.s32.totalorder %s32, 1
      %p118 = por %p116, %p117
      %p120 = scmp.ne.s32.totalorder %s105, %s119
      %p121 = scmp.eq.s32.totalorder %s32, 0
      %p122 = por %p120, %p121
      %s124 = sadd.s32 %s123, 1
      %p127 = scmp.eq.s32.totalorder %s26, 1
      %p128 = scmp.ne.s32.totalorder %s123, %s125
      %p129 = scmp.eq.s32.totalorder %s26, 0
      %p130 = por %p128, %p129
      %p131 = scmp.ne.s32.totalorder %s123, %s125
      %p132 = scmp.eq.s32.totalorder %s31, 1
      %p133 = por %p131, %p132
      %p134 = scmp.ne.s32.totalorder %s125, %s126
      %p135 = scmp.eq.s32.totalorder %s31, 0
      %p136 = por %p134, %p135
      %p137 = scmp.ne.s32.totalorder %s125, %s126
      %p138 = scmp.eq.s32.totalorder %s32, 1
      %p139 = por %p137, %p138
      %p141 = scmp.ne.s32.totalorder %s126, %s140
      %p142 = scmp.eq.s32.totalorder %s32, 0
      %p143 = por %p141, %p142
      %s145 = sadd.s32 %s144, 1
      %p148 = scmp.eq.s32.totalorder %s26, 1
      %p149 = scmp.ne.s32.totalorder %s144, %s146
      %p150 = scmp.eq.s32.totalorder %s26, 0
      %p151 = por %p149, %p150
      %p152 = scmp.ne.s32.totalorder %s144, %s146
      %p153 = scmp.eq.s32.totalorder %s31, 1
      %p154 = por %p152, %p153
      %p155 = scmp.ne.s32.totalorder %s146, %s147
      %p156 = scmp.eq.s32.totalorder %s31, 0
      %p157 = por %p155, %p156
      %p158 = scmp.ne.s32.totalorder %s146, %s147
      %p159 = scmp.eq.s32.totalorder %s32, 1
      %p160 = por %p158, %p159
      %p162 = scmp.ne.s32.totalorder %s147, %s161
      %p163 = scmp.eq.s32.totalorder %s32, 0
      %p164 = por %p162, %p163
      %s166 = sadd.s32 %s165, 1
      %p169 = scmp.eq.s32.totalorder %s26, 1
      %p170 = scmp.ne.s32.totalorder %s165, %s167
      %p171 = scmp.eq.s32.totalorder %s26, 0
      %p172 = por %p170, %p171
      %p173 = scmp.ne.s32.totalorder %s165, %s167
      %p174 = scmp.eq.s32.totalorder %s31, 1
      %p175 = por %p173, %p174
      %p176 = scmp.ne.s32.totalorder %s167, %s168
      %p177 = scmp.eq.s32.totalorder %s31, 0
      %p178 = por %p176, %p177
      %p179 = scmp.ne.s32.totalorder %s167, %s168
      %p180 = scmp.eq.s32.totalorder %s32, 1
      %p181 = por %p179, %p180
      %p183 = scmp.ne.s32.totalorder %s168, %s182
      %p184 = scmp.eq.s32.totalorder %s32, 0
      %p185 = por %p183, %p184
      %s187 = sadd.s32 %s186, 1
      %p190 = scmp.eq.s32.totalorder %s26, 1
      %p191 = scmp.ne.s32.totalorder %s186, %s188
      %p192 = scmp.eq.s32.totalorder %s26, 0
      %p193 = por %p191, %p192
      %p194 = scmp.ne.s32.totalorder %s186, %s188
      %p195 = scmp.eq.s32.totalorder %s31, 1
      %p196 = por %p194, %p195
      %p197 = scmp.ne.s32.totalorder %s188, %s189
      %p198 = scmp.eq.s32.totalorder %s31, 0
      %p199 = por %p197, %p198
      %p200 = scmp.ne.s32.totalorder %s188, %s189
      %p201 = scmp.eq.s32.totalorder %s32, 1
      %p202 = por %p200, %p201
      %p204 = scmp.ne.s32.totalorder %s189, %s203
      %p205 = scmp.eq.s32.totalorder %s32, 0
      %p206 = por %p204, %p205
      %s208 = sadd.s32 %s207, 1
      %p211 = scmp.eq.s32.totalorder %s26, 1
      %p212 = scmp.ne.s32.totalorder %s207, %s209
      %p213 = scmp.eq.s32.totalorder %s26, 0
      %p214 = por %p212, %p213
      %p215 = scmp.ne.s32.totalorder %s207, %s209
      %p216 = scmp.eq.s32.totalorder %s31, 1
      %p217 = por %p215, %p216
      %p218 = scmp.ne.s32.totalorder %s209, %s210
      %p219 = scmp.eq.s32.totalorder %s31, 0
      %p220 = por %p218, %p219
      %p221 = scmp.ne.s32.totalorder %s209, %s210
      %p222 = scmp.eq.s32.totalorder %s32, 1
      %p223 = por %p221, %p222
      %p225 = scmp.ne.s32.totalorder %s210, %s224
      %p226 = scmp.eq.s32.totalorder %s32, 0
      %p227 = por %p225, %p226
      %s229 = sadd.s32 %s228, 1
      %p232 = scmp.eq.s32.totalorder %s26, 1
      %p233 = scmp.ne.s32.totalorder %s228, %s230
      %p234 = scmp.eq.s32.totalorder %s26, 0
      %p235 = por %p233, %p234
      %p236 = scmp.ne.s32.totalorder %s228, %s230
      %p237 = scmp.eq.s32.totalorder %s31, 1
      %p238 = por %p236, %p237
      %p239 = scmp.ne.s32.totalorder %s230, %s231
      %p240 = scmp.eq.s32.totalorder %s31, 0
      %p241 = por %p239, %p240
      %p242 = scmp.ne.s32.totalorder %s230, %s231
      %p243 = scmp.eq.s32.totalorder %s32, 1
      %p244 = por %p242, %p243
      %p246 = scmp.ne.s32.totalorder %s231, %s245
      %p247 = scmp.eq.s32.totalorder %s32, 0
      %p248 = por %p246, %p247
      %s250 = sadd.s32 %s249, 1
      %p253 = scmp.eq.s32.totalorder %s26, 1
      %p254 = scmp.ne.s32.totalorder %s249, %s251
      %p255 = scmp.eq.s32.totalorder %s26, 0
      %p256 = por %p254, %p255
      %p257 = scmp.ne.s32.totalorder %s249, %s251
      %p258 = scmp.eq.s32.totalorder %s31, 1
      %p259 = por %p257, %p258
      %p260 = scmp.ne.s32.totalorder %s251, %s252
      %p261 = scmp.eq.s32.totalorder %s31, 0
      %p262 = por %p260, %p261
      %p263 = scmp.ne.s32.totalorder %s251, %s252
      %p264 = scmp.eq.s32.totalorder %s32, 1
      %p265 = por %p263, %p264
      %p267 = scmp.ne.s32.totalorder %s252, %s266
      %p268 = scmp.eq.s32.totalorder %s32, 0
      %p269 = por %p267, %p268
      %s271 = sadd.s32 %s270, 1
      %p274 = scmp.eq.s32.totalorder %s26, 1
      %p275 = scmp.ne.s32.totalorder %s270, %s272
      %p276 = scmp.eq.s32.totalorder %s26, 0
      %p277 = por %p275, %p276
      %p278 = scmp.ne.s32.totalorder %s270, %s272
      %p279 = scmp.eq.s32.totalorder %s31, 1
      %p280 = por %p278, %p279
      %p281 = scmp.ne.s32.totalorder %s272, %s273
      %p282 = scmp.eq.s32.totalorder %s31, 0
      %p283 = por %p281, %p282
      %p284 = scmp.ne.s32.totalorder %s272, %s273
      %p285 = scmp.eq.s32.totalorder %s32, 1
      %p286 = por %p284, %p285
      %p288 = scmp.ne.s32.totalorder %s273, %s287
      %p289 = scmp.eq.s32.totalorder %s32, 0
      %p290 = por %p288, %p289
      %s291 = ssub.s32 %s26, %s33
      %p292 = scmp.eq.s32.totalorder %s291, 0
      %s294 = sadd.s32 %s293, 1
      %s295 = scalar_select %p292, %s293, %s294
      %p298 = pneg %p292
      %p299 = scmp.eq.s32.totalorder %s26, 1
      %p300 = por %p298, %p299
      %p301 = scmp.ne.s32.totalorder %s293, %s296
      %p302 = scmp.eq.s32.totalorder %s26, 0
      %p303 = por %p301, %p302
      %p304 = scmp.ne.s32.totalorder %s293, %s296
      %p305 = scmp.eq.s32.totalorder %s31, 1
      %p306 = por %p304, %p305
      %p307 = scmp.ne.s32.totalorder %s296, %s297
      %p308 = scmp.eq.s32.totalorder %s31, 0
      %p309 = por %p307, %p308
      %p310 = scmp.ne.s32.totalorder %s296, %s297
      %p311 = scmp.eq.s32.totalorder %s32, 1
      %p312 = por %p310, %p311
      %p314 = scmp.ne.s32.totalorder %s297, %s313
      %p315 = scmp.eq.s32.totalorder %s32, 0
      %p316 = por %p314, %p315
      %p317 = scmp.le.s32.totalorder 1, %s26
      %p318 = scmp.lt.s32.totalorder %s26, 3
      %p319 = pnand %p317, %p318
      %p320 = pneg %p319
      // Predicated region
      $region9: #{cnn_model_forward_prepared.1} parent=5 // pred_check
        _
      $region10: #{cnn_model_forward_prepared.1} parent=5 // pred_check_branch
        %322 = sbr.rel (%p319) target = $region12
      $region11: #{cnn_model_forward_prepared.1} parent=5 // pred_region
        %s323 = ssub.s32 %s26, 1
        // Predicated region
        $region13: #{cnn_model_forward_prepared.1} parent=11 // pred_check
          %p324 = pneg %p73
        $region14: #{cnn_model_forward_prepared.1} parent=11 // pred_check_branch
          %326 = sbr.rel (%p324) target = $region16
        $region15: #{cnn_model_forward_prepared.1} parent=11 // pred_region
          %s328 = ssub.s32 57600, 57600
          %329 = vsyncadd [#allocation3], %s328
          %s330 = sshll.u32 [#allocation2], 4
          %s331 = int_to_ptr.vmem [resolvable:$true] %s330
          %336 = dma.hbm_to_vmem [thread:$0]  %s1, 57600, %s331, [#allocation3], 256, 256, 16
        $region16: #{cnn_model_forward_prepared.1} parent=11 // pred_fallthru
          _
        // Predicated region
        $region17: #{cnn_model_forward_prepared.1} parent=11 // pred_check
          %p337 = pneg %p94
        $region18: #{cnn_model_forward_prepared.1} parent=11 // pred_check_branch
          %339 = sbr.rel (%p337) target = $region20
        $region19: #{cnn_model_forward_prepared.1} parent=11 // pred_region
          _
        $region20: #{cnn_model_forward_prepared.1} parent=11 // pred_fallthru
          _
        // Predicated region
        $region21: #{cnn_model_forward_prepared.1} parent=11 // pred_check
          %p340 = pneg %p115
        $region22: #{cnn_model_forward_prepared.1} parent=11 // pred_check_branch
          %342 = sbr.rel (%p340) target = $region24
        $region23: #{cnn_model_forward_prepared.1} parent=11 // pred_region
          %s344 = ssub.s32 16, 16
          %345 = vsyncadd [#allocation6], %s344
          %s347 = sshll.u32 [#allocation5], 4
          %s348 = int_to_ptr.vmem [resolvable:$true] %s347
          %350 = dma.hbm_to_vmem [thread:$0]  %s3, 16, %s348, [#allocation6]
        $region24: #{cnn_model_forward_prepared.1} parent=11 // pred_fallthru
          _
        // Predicated region
        $region25: #{cnn_model_forward_prepared.1} parent=11 // pred_check
          %p351 = pneg %p136
        $region26: #{cnn_model_forward_prepared.1} parent=11 // pred_check_branch
          %353 = sbr.rel (%p351) target = $region28
        $region27: #{cnn_model_forward_prepared.1} parent=11 // pred_region
          _
        $region28: #{cnn_model_forward_prepared.1} parent=11 // pred_fallthru
          _
        // Predicated region
        $region29: #{cnn_model_forward_prepared.1} parent=11 // pred_check
          %p354 = pneg %p157
        $region30: #{cnn_model_forward_prepared.1} parent=11 // pred_check_branch
          %356 = sbr.rel (%p354) target = $region32
        $region31: #{cnn_model_forward_prepared.1} parent=11 // pred_region
          %s358 = ssub.s32 512, 512
          %359 = vsyncadd [#allocation6], %s358
          %s360 = sshll.u32 [#allocation7], 4
          %s361 = int_to_ptr.vmem [resolvable:$true] %s360
          %366 = dma.hbm_to_vmem [thread:$0]  %s5, 512, %s361, [#allocation6], 128, 128, 8
        $region32: #{cnn_model_forward_prepared.1} parent=11 // pred_fallthru
          _
        // Predicated region
        $region33: #{cnn_model_forward_prepared.1} parent=11 // pred_check
          %p367 = pneg %p178
        $region34: #{cnn_model_forward_prepared.1} parent=11 // pred_check_branch
          %369 = sbr.rel (%p367) target = $region36
        $region35: #{cnn_model_forward_prepared.1} parent=11 // pred_region
          %s371 = ssub.s32 16, 16
          %372 = vsyncadd [#allocation9], %s371
          %s374 = sshll.u32 [#allocation8], 4
          %s375 = int_to_ptr.vmem [resolvable:$true] %s374
          %377 = dma.hbm_to_vmem [thread:$0]  %s6, 16, %s375, [#allocation9]
        $region36: #{cnn_model_forward_prepared.1} parent=11 // pred_fallthru
          _
        // Predicated region
        $region37: #{cnn_model_forward_prepared.1} parent=11 // pred_check
          %p378 = pneg %p199
        $region38: #{cnn_model_forward_prepared.1} parent=11 // pred_check_branch
          %380 = sbr.rel (%p378) target = $region40
        $region39: #{cnn_model_forward_prepared.1} parent=11 // pred_region
          _
        $region40: #{cnn_model_forward_prepared.1} parent=11 // pred_fallthru
          _
        // Predicated region
        $region41: #{cnn_model_forward_prepared.1} parent=11 // pred_check
          %p381 = pneg %p220
        $region42: #{cnn_model_forward_prepared.1} parent=11 // pred_check_branch
          %383 = sbr.rel (%p381) target = $region44
        $region43: #{cnn_model_forward_prepared.1} parent=11 // pred_region
          %s385 = ssub.s32 1024, 1024
          %386 = vsyncadd [#allocation9], %s385
          %s387 = sshll.u32 [#allocation10], 4
          %s388 = int_to_ptr.vmem [resolvable:$true] %s387
          %393 = dma.hbm_to_vmem [thread:$0]  %s8, 1024, %s388, [#allocation9], 128, 128, 8
        $region44: #{cnn_model_forward_prepared.1} parent=11 // pred_fallthru
          _
        // Predicated region
        $region45: #{cnn_model_forward_prepared.1} parent=11 // pred_check
          %p394 = pneg %p241
        $region46: #{cnn_model_forward_prepared.1} parent=11 // pred_check_branch
          %396 = sbr.rel (%p394) target = $region48
        $region47: #{cnn_model_forward_prepared.1} parent=11 // pred_region
          %s398 = ssub.s32 16, 16
          %399 = vsyncadd [#allocation12], %s398
          %s401 = sshll.u32 [#allocation11], 4
          %s402 = int_to_ptr.vmem [resolvable:$true] %s401
          %404 = dma.hbm_to_vmem [thread:$0]  %s9, 16, %s402, [#allocation12]
        $region48: #{cnn_model_forward_prepared.1} parent=11 // pred_fallthru
          _
        // Predicated region
        $region49: #{cnn_model_forward_prepared.1} parent=11 // pred_check
          %p405 = pneg %p262
        $region50: #{cnn_model_forward_prepared.1} parent=11 // pred_check_branch
          %407 = sbr.rel (%p405) target = $region52
        $region51: #{cnn_model_forward_prepared.1} parent=11 // pred_region
          %s409 = ssub.s32 12800, 12800
          %410 = vsyncadd [#allocation12], %s409
          %s411 = sshll.u32 [#allocation13], 4
          %s412 = int_to_ptr.vmem [resolvable:$true] %s411
          %417 = dma.hbm_to_vmem [thread:$0]  %s10, 12800, %s412, [#allocation12], 128, 128, 8
        $region52: #{cnn_model_forward_prepared.1} parent=11 // pred_fallthru
          _
        // Predicated region
        $region53: #{cnn_model_forward_prepared.1} parent=11 // pred_check
          %p418 = pneg %p283
        $region54: #{cnn_model_forward_prepared.1} parent=11 // pred_check_branch
          %420 = sbr.rel (%p418) target = $region56
        $region55: #{cnn_model_forward_prepared.1} parent=11 // pred_region
          %s422 = ssub.s32 16, 16
          %423 = vsyncadd [#allocation15], %s422
          %s425 = sshll.u32 [#allocation14], 4
          %s426 = int_to_ptr.vmem [resolvable:$true] %s425
          %428 = dma.hbm_to_vmem [thread:$0]  %s11, 16, %s426, [#allocation15]
        $region56: #{cnn_model_forward_prepared.1} parent=11 // pred_fallthru
          _
      $region12: #{cnn_model_forward_prepared.1} parent=5 // pred_fallthru
        _
      %p429 = scmp.lt.s32.totalorder %s26, 2
      // Predicated region
      $region57: #{cnn_model_forward_prepared.1} parent=5 // pred_check
        %p430 = pneg %p429
      $region58: #{cnn_model_forward_prepared.1} parent=5 // pred_check_branch
        %432 = sbr.rel (%p430) target = $region60
      $region59: #{cnn_model_forward_prepared.1} parent=5 // pred_region
        // Predicated region
        $region61: #{cnn_model_forward_prepared.1} parent=59 // pred_check
          %p433 = pneg %p46
        $region62: #{cnn_model_forward_prepared.1} parent=59 // pred_check_branch
          %435 = sbr.rel (%p433) target = $region64
        $region63: #{cnn_model_forward_prepared.1} parent=59 // pred_region
          %p436 = scmp.lt.s32.totalorder %s26, 1
          %s437 = scalar_select %p436, %s26, 1
          %s438 = smul.addr %s437, 32
          %s439 = smul.addr %s438, 8
          %s440 = scalar_lea.vmem %s0, %s439
        $region64: #{cnn_model_forward_prepared.1} parent=59 // pred_fallthru
          _
      $region60: #{cnn_model_forward_prepared.1} parent=5 // pred_fallthru
        _
      %p441 = scmp.le.s32.totalorder 1, %s26
      %p442 = scmp.lt.s32.totalorder %s26, 3
      %p443 = pnand %p441, %p442
      %p444 = pneg %p443
      // Predicated region
      $region65: #{cnn_model_forward_prepared.1} parent=5 // pred_check
        _
      $region66: #{cnn_model_forward_prepared.1} parent=5 // pred_check_branch
        %446 = sbr.rel (%p443) target = $region68
      $region67: #{cnn_model_forward_prepared.1} parent=5 // pred_region
        %s447 = ssub.s32 %s26, 1
        // Predicated region
        $region69: #{cnn_model_forward_prepared.1} parent=67 // pred_check
          %p448 = pneg %p73
        $region70: #{cnn_model_forward_prepared.1} parent=67 // pred_check_branch
          %450 = sbr.rel (%p448) target = $region72
        $region71: #{cnn_model_forward_prepared.1} parent=67 // pred_region
          %451 = dma.done [#allocation3], 57600
        $region72: #{cnn_model_forward_prepared.1} parent=67 // pred_fallthru
          _
        // Predicated region
        $region73: #{cnn_model_forward_prepared.1} parent=67 // pred_check
          %p452 = pneg %p115
        $region74: #{cnn_model_forward_prepared.1} parent=67 // pred_check_branch
          %454 = sbr.rel (%p452) target = $region76
        $region75: #{cnn_model_forward_prepared.1} parent=67 // pred_region
          %455 = dma.done [#allocation6], 16
        $region76: #{cnn_model_forward_prepared.1} parent=67 // pred_fallthru
          _
        // Predicated region
        $region77: #{cnn_model_forward_prepared.1} parent=67 // pred_check
          %p456 = pneg %p157
        $region78: #{cnn_model_forward_prepared.1} parent=67 // pred_check_branch
          %458 = sbr.rel (%p456) target = $region80
        $region79: #{cnn_model_forward_prepared.1} parent=67 // pred_region
          %459 = dma.done [#allocation6], 512
        $region80: #{cnn_model_forward_prepared.1} parent=67 // pred_fallthru
          _
        // Predicated region
        $region81: #{cnn_model_forward_prepared.1} parent=67 // pred_check
          %p460 = pneg %p178
        $region82: #{cnn_model_forward_prepared.1} parent=67 // pred_check_branch
          %462 = sbr.rel (%p460) target = $region84
        $region83: #{cnn_model_forward_prepared.1} parent=67 // pred_region
          %463 = dma.done [#allocation9], 16
        $region84: #{cnn_model_forward_prepared.1} parent=67 // pred_fallthru
          _
        // Predicated region
        $region85: #{cnn_model_forward_prepared.1} parent=67 // pred_check
          %p464 = pneg %p220
        $region86: #{cnn_model_forward_prepared.1} parent=67 // pred_check_branch
          %466 = sbr.rel (%p464) target = $region88
        $region87: #{cnn_model_forward_prepared.1} parent=67 // pred_region
          %467 = dma.done [#allocation9], 1024
        $region88: #{cnn_model_forward_prepared.1} parent=67 // pred_fallthru
          _
        // Predicated region
        $region89: #{cnn_model_forward_prepared.1} parent=67 // pred_check
          %p468 = pneg %p241
        $region90: #{cnn_model_forward_prepared.1} parent=67 // pred_check_branch
          %470 = sbr.rel (%p468) target = $region92
        $region91: #{cnn_model_forward_prepared.1} parent=67 // pred_region
          %471 = dma.done [#allocation12], 16
        $region92: #{cnn_model_forward_prepared.1} parent=67 // pred_fallthru
          _
        // Predicated region
        $region93: #{cnn_model_forward_prepared.1} parent=67 // pred_check
          %p472 = pneg %p262
        $region94: #{cnn_model_forward_prepared.1} parent=67 // pred_check_branch
          %474 = sbr.rel (%p472) target = $region96
        $region95: #{cnn_model_forward_prepared.1} parent=67 // pred_region
          %475 = dma.done [#allocation12], 12800
        $region96: #{cnn_model_forward_prepared.1} parent=67 // pred_fallthru
          _
        // Predicated region
        $region97: #{cnn_model_forward_prepared.1} parent=67 // pred_check
          %p476 = pneg %p283
        $region98: #{cnn_model_forward_prepared.1} parent=67 // pred_check_branch
          %478 = sbr.rel (%p476) target = $region100
        $region99: #{cnn_model_forward_prepared.1} parent=67 // pred_region
          %479 = dma.done [#allocation15], 16
        $region100: #{cnn_model_forward_prepared.1} parent=67 // pred_fallthru
          _
        %p480 = scmp.lt.s32.totalorder %s31, 1
        %s481 = scalar_select %p480, %s31, 1
        %s482 = smul.addr %s481, 32
        %s483 = smul.addr %s482, 8
        %s484 = scalar_lea.vmem %s0, %s483
        %p485 = pneg %p52
        %p486 = pneg %p49
        %p487 = pneg %p73
        %p488 = pneg %p70
        %p489 = pneg %p94
        %p490 = pneg %p91
        %p491 = pneg %p115
        %p492 = pneg %p112
        %p493 = pneg %p136
        %p494 = pneg %p133
        %p495 = pneg %p157
        %p496 = pneg %p154
        %p497 = pneg %p178
        %p498 = pneg %p175
        %p499 = pneg %p199
        %p500 = pneg %p196
        %p501 = pneg %p220
        %p502 = pneg %p217
        %p503 = pneg %p241
        %p504 = pneg %p238
        %p505 = pneg %p262
        %p506 = pneg %p259
        %p507 = pneg %p283
        %p508 = pneg %p280
        %p509 = pneg %p309
        %p510 = pneg %p306
        %s511 = sand.u32 %s296, 1
        %s512 = scalar_lea.sflag [#allocation4], %s511
        %s513 = sand.u32 %s296, 1
        %s514 = scalar_lea.vmem [#allocation16], %s513
        %p515 = scmp.lt.s32.totalorder %s31, 1
        %s516 = scalar_select %p515, %s31, 1
        %s517 = smul.addr %s516, 32
        %s518 = smul.addr %s517, 8
        %s519 = scalar_lea.vmem %s0, %s518
        %v520 = vld [vmem:[%s519] sm:$0xff]
        %v521 = vld [vmem:[%s519 + $0x8] sm:$0xff]
        %v522 = vld [vmem:[%s519 + $0x10] sm:$0xff]
        %v523 = vld [vmem:[%s519 + $0x18] sm:$0xff]
        %v524 = vld [vmem:[%s519 + $0x20] sm:$0xff]
        %v525 = vld [vmem:[%s519 + $0x28] sm:$0xff]
        %v526 = vld [vmem:[%s519 + $0x30] sm:$0xff]
        %v527 = vld [vmem:[%s519 + $0x38] sm:$0xff]
        %v528 = vld [vmem:[%s519 + $0x40] sm:$0xff]
        %v529 = vld [vmem:[%s519 + $0x48] sm:$0xff]
        %v530 = vld [vmem:[%s519 + $0x50] sm:$0xff]
        %v531 = vld [vmem:[%s519 + $0x58] sm:$0xff]
        %v532 = vld [vmem:[%s519 + $0x60] sm:$0xff]
        %v533 = vld [vmem:[%s519 + $0x68] sm:$0xff]
        %v534 = vld [vmem:[%s519 + $0x70] sm:$0xff]
        %v535 = vld [vmem:[%s519 + $0x78] sm:$0xff]
        %v536 = vld [vmem:[%s519 + $0x80] sm:$0xff]
        %v537 = vld [vmem:[%s519 + $0x88] sm:$0xff]
        %v538 = vld [vmem:[%s519 + $0x90] sm:$0xff]
        %v539 = vld [vmem:[%s519 + $0x98] sm:$0xff]
        %v540 = vld [vmem:[%s519 + $0xa0] sm:$0xff]
        %v541 = vld [vmem:[%s519 + $0xa8] sm:$0xff]
        %v542 = vld [vmem:[%s519 + $0xb0] sm:$0xff]
        %v543 = vld [vmem:[%s519 + $0xb8] sm:$0xff]
        %v544 = vld [vmem:[%s519 + $0xc0] sm:$0xff]
        %v545 = vld [vmem:[%s519 + $0xc8] sm:$0xff]
        %v546 = vld [vmem:[%s519 + $0xd0] sm:$0xff]
        %v547 = vld [vmem:[%s519 + $0xd8] sm:$0xff]
        %v548 = vld [vmem:[%s519 + $0xe0] sm:$0xff]
        %v549 = vld [vmem:[%s519 + $0xe8] sm:$0xff]
        %v550 = vld [vmem:[%s519 + $0xf0] sm:$0xff]
        %v551 = vld [vmem:[%s519 + $0xf8] sm:$0xff]
        %v552 = vld [vmem:[#allocation2] sm:$0xff]
        %v553 = vld [vmem:[#allocation2 + $0x8] sm:$0xff]
        %v554 = vld [vmem:[#allocation2 + $0x10] sm:$0xff]
        %v555 = vld [vmem:[#allocation2 + $0x18] sm:$0xff]
        %v556 = vld [vmem:[#allocation2 + $0x20] sm:$0xff]
        %v557 = vld [vmem:[#allocation2 + $0x28] sm:$0xff]
        %v558 = vld [vmem:[#allocation2 + $0x30] sm:$0xff]
        %v559 = vld [vmem:[#allocation2 + $0x38] sm:$0xff]
        %v560 = vld [vmem:[#allocation2 + $0x40] sm:$0xff]
        %v561 = vld [vmem:[#allocation2 + $0x48] sm:$0xff]
        %v562 = vld [vmem:[#allocation2 + $0x50] sm:$0xff]
        %v563 = vld [vmem:[#allocation2 + $0x58] sm:$0xff]
        %v564 = vld [vmem:[#allocation2 + $0x60] sm:$0xff]
        %v565 = vld [vmem:[#allocation2 + $0x68] sm:$0xff]
        %v566 = vld [vmem:[#allocation2 + $0x70] sm:$0xff]
        %v567 = vld [vmem:[#allocation2 + $0x78] sm:$0xff]
        %v568 = vld [vmem:[#allocation2 + $0x80] sm:$0xff]
        %v569 = vld [vmem:[#allocation2 + $0x88] sm:$0xff]
        %v570 = vld [vmem:[#allocation2 + $0x90] sm:$0xff]
        %v571 = vld [vmem:[#allocation2 + $0x98] sm:$0xff]
        %v572 = vld [vmem:[#allocation2 + $0xa0] sm:$0xff]
        %v573 = vld [vmem:[#allocation2 + $0xa8] sm:$0xff]
        %v574 = vld [vmem:[#allocation2 + $0xb0] sm:$0xff]
        %v575 = vld [vmem:[#allocation2 + $0xb8] sm:$0xff]
        %v576 = vld [vmem:[#allocation2 + $0xc0] sm:$0xff]
        %v577 = vld [vmem:[#allocation2 + $0xc8] sm:$0xff]
        %v578 = vld [vmem:[#allocation2 + $0xd0] sm:$0xff]
        %v579 = vld [vmem:[#allocation2 + $0xd8] sm:$0xff]
        %v580 = vld [vmem:[#allocation2 + $0xe0] sm:$0xff]
        %v581 = vld [vmem:[#allocation2 + $0xe8] sm:$0xff]
        %v582 = vld [vmem:[#allocation2 + $0xf0] sm:$0xff]
        %v583 = vld [vmem:[#allocation2 + $0xf8] sm:$0xff]
        %v584 = vld [vmem:[#allocation2 + $0x100] sm:$0xff]
        %v585 = vld [vmem:[#allocation2 + $0x108] sm:$0xff]
        %v586 = vld [vmem:[#allocation2 + $0x110] sm:$0xff]
        %v587 = vld [vmem:[#allocation2 + $0x118] sm:$0xff]
        %v588 = vld [vmem:[#allocation2 + $0x120] sm:$0xff]
        %v589 = vld [vmem:[#allocation2 + $0x128] sm:$0xff]
        %v590 = vld [vmem:[#allocation2 + $0x130] sm:$0xff]
        %v591 = vld [vmem:[#allocation2 + $0x138] sm:$0xff]
        %v592 = vld [vmem:[#allocation2 + $0x140] sm:$0xff]
        %v593 = vld [vmem:[#allocation2 + $0x148] sm:$0xff]
        %v594 = vld [vmem:[#allocation2 + $0x150] sm:$0xff]
        %v595 = vld [vmem:[#allocation2 + $0x158] sm:$0xff]
        %v596 = vld [vmem:[#allocation2 + $0x160] sm:$0xff]
        %v597 = vld [vmem:[#allocation2 + $0x168] sm:$0xff]
        %v598 = vld [vmem:[#allocation2 + $0x170] sm:$0xff]
        %v599 = vld [vmem:[#allocation2 + $0x178] sm:$0xff]
        %v600 = vld [vmem:[#allocation2 + $0x180] sm:$0xf]
        %v601 = vld [vmem:[#allocation2 + $0x188] sm:$0xf]
        %602 = vmatprep.subr.mxu0 0.0
        %603 = vmatpush1.msra.mxu0 %v520
        %604 = vmatprep.subr.mxu0 0.0
        %605 = vmatpush1.msra.mxu0 %v521
        %606 = vmatprep.subr.mxu0 0.0
        %607 = vmatpush1.msra.mxu0 %v522
        %608 = vmatprep.subr.mxu0 0.0
        %609 = vmatpush1.msra.mxu0 %v523
        %610 = vmatprep.subr.mxu0 0.0
        %611 = vmatpush1.msra.mxu0 %v524
        %612 = vmatprep.subr.mxu0 0.0
        %613 = vmatpush1.msra.mxu0 %v525
        %614 = vmatprep.subr.mxu0 0.0
        %615 = vmatpush1.msra.mxu0 %v526
        %616 = vmatprep.subr.mxu0 0.0
        %617 = vmatpush1.msra.mxu0 %v527
        %618 = vmatprep.subr.mxu0 0.0
        %619 = vmatpush1.msra.mxu0 %v528
        %620 = vmatprep.subr.mxu0 0.0
        %621 = vmatpush1.msra.mxu0 %v529
        %622 = vmatprep.subr.mxu0 0.0
        %623 = vmatpush1.msra.mxu0 %v530
        %624 = vmatprep.subr.mxu0 0.0
        %625 = vmatpush1.msra.mxu0 %v531
        %626 = vmatprep.subr.mxu0 0.0
        %627 = vmatpush1.msra.mxu0 %v532
        %628 = vmatprep.subr.mxu0 0.0
        %629 = vmatpush1.msra.mxu0 %v533
        %630 = vmatprep.subr.mxu0 0.0
        %631 = vmatpush1.msra.mxu0 %v534
        %632 = vmatprep.subr.mxu0 0.0
        %633 = vmatpush1.msra.mxu0 %v535
        %634 = vmatprep.subr.mxu0 0.0
        %635 = vmatpush1.msra.mxu0 %v536
        %636 = vmatprep.subr.mxu0 0.0
        %637 = vmatpush1.msra.mxu0 %v537
        %638 = vmatprep.subr.mxu0 0.0
        %639 = vmatpush1.msra.mxu0 %v538
        %640 = vmatprep.subr.mxu0 0.0
        %641 = vmatpush1.msra.mxu0 %v539
        %642 = vmatprep.subr.mxu0 0.0
        %643 = vmatpush1.msra.mxu0 %v540
        %644 = vmatprep.subr.mxu0 0.0
        %645 = vmatpush1.msra.mxu0 %v541
        %646 = vmatprep.subr.mxu0 0.0
        %647 = vmatpush1.msra.mxu0 %v542
        %648 = vmatprep.subr.mxu0 0.0
        %649 = vmatpush1.msra.mxu0 %v543
        %650 = vmatprep.subr.mxu0 0.0
        %651 = vmatpush1.msra.mxu0 %v544
        %652 = vmatprep.subr.mxu0 0.0
        %653 = vmatpush1.msra.mxu0 %v545
        %654 = vmatprep.subr.mxu0 0.0
        %655 = vmatpush1.msra.mxu0 %v546
        %656 = vmatprep.subr.mxu0 0.0
        %657 = vmatpush1.msra.mxu0 %v547
        %658 = vmatprep.subr.mxu0 0.0
        %659 = vmatpush1.msra.mxu0 %v548
        %660 = vmatprep.subr.mxu0 0.0
        %661 = vmatpush1.msra.mxu0 %v549
        %662 = vmatprep.subr.mxu0 0.0
        %663 = vmatpush1.msra.mxu0 %v550
        %664 = vmatprep.subr.mxu0 0.0
        %665 = vmatpush1.msra.mxu0 %v551
        %666 = vmatprep.mubr.f32.mxu0 %v553
        %667 = vmatmul.mubr.f32.gmra.mrb[0].mxu0 %v552
        %v668 = vpop.f32.mrb[0].mxu0
        %v669 = vadd.f32 0.0, %v668
        %v670 = vpop.f32.mrb[0].mxu0
        %671 = vmatprep.mubr.f32.mxu0 %v555
        %672 = vmatmul.mubr.f32.gmra.mrb[0].mxu0 %v554
        %v673 = vpop.f32.mrb[0].mxu0
        %v674 = vadd.f32 0.0, %v673
        %v675 = vpop.f32.mrb[0].mxu0
        %676 = vmatprep.mubr.f32.mxu0 %v557
        %677 = vmatmul.mubr.f32.gmra.mrb[0].mxu0 %v556
        %v678 = vpop.f32.mrb[0].mxu0
        %v679 = vadd.f32 0.0, %v678
        %v680 = vpop.f32.mrb[0].mxu0
        %681 = vmatprep.mubr.f32.mxu0 %v559
        %682 = vmatmul.mubr.f32.gmra.mrb[0].mxu0 %v558
        %v683 = vpop.f32.mrb[0].mxu0
        %v684 = vadd.f32 0.0, %v683
        %v685 = vpop.f32.mrb[0].mxu0
        %686 = vmatprep.mubr.f32.mxu0 %v561
        %687 = vmatmul.mubr.f32.gmra.mrb[0].mxu0 %v560
        %v688 = vpop.f32.mrb[0].mxu0
        %v689 = vadd.f32 0.0, %v688
        %v690 = vpop.f32.mrb[0].mxu0
        %691 = vmatprep.mubr.f32.mxu0 %v563
        %692 = vmatmul.mubr.f32.gmra.mrb[0].mxu0 %v562
        %v693 = vpop.f32.mrb[0].mxu0
        %v694 = vadd.f32 0.0, %v693
        %v695 = vpop.f32.mrb[0].mxu0
        %696 = vmatprep.mubr.f32.mxu0 %v565
        %697 = vmatmul.mubr.f32.gmra.mrb[0].mxu0 %v564
        %v698 = vpop.f32.mrb[0].mxu0
        %v699 = vadd.f32 0.0, %v698
        %v700 = vpop.f32.mrb[0].mxu0
        %701 = vmatprep.mubr.f32.mxu0 %v567
        %702 = vmatmul.mubr.f32.gmra.mrb[0].mxu0 %v566
        %v703 = vpop.f32.mrb[0].mxu0
        %v704 = vadd.f32 0.0, %v703
        %v705 = vpop.f32.mrb[0].mxu0
        %706 = vmatprep.mubr.f32.mxu0 %v569
        %707 = vmatmul.mubr.f32.gmra.mrb[0].mxu0 %v568
        %v708 = vpop.f32.mrb[0].mxu0
        %v709 = vadd.f32 0.0, %v708
        %v710 = vpop.f32.mrb[0].mxu0
        %711 = vmatprep.mubr.f32.mxu0 %v571
        %712 = vmatmul.mubr.f32.gmra.mrb[0].mxu0 %v570
        %v713 = vpop.f32.mrb[0].mxu0
        %v714 = vadd.f32 0.0, %v713
        %v715 = vpop.f32.mrb[0].mxu0
        %716 = vmatprep.mubr.f32.mxu0 %v573
        %717 = vmatmul.mubr.f32.gmra.mrb[0].mxu0 %v572
        %v718 = vpop.f32.mrb[0].mxu0
        %v719 = vadd.f32 0.0, %v718
        %v720 = vpop.f32.mrb[0].mxu0
        %721 = vmatprep.mubr.f32.mxu0 %v575
        %722 = vmatmul.mubr.f32.gmra.mrb[0].mxu0 %v574
        %v723 = vpop.f32.mrb[0].mxu0
        %v724 = vadd.f32 0.0, %v723
        %v725 = vpop.f32.mrb[0].mxu0
        %726 = vmatprep.mubr.f32.mxu0 %v577
        %727 = vmatmul.mubr.f32.gmra.mrb[0].mxu0 %v576
        %v728 = vpop.f32.mrb[0].mxu0
        %v729 = vadd.f32 0.0, %v728
        %v730 = vpop.f32.mrb[0].mxu0
        %731 = vmatprep.mubr.f32.mxu0 %v579
        %732 = vmatmul.mubr.f32.gmra.mrb[0].mxu0 %v578
        %v733 = vpop.f32.mrb[0].mxu0
        %v734 = vadd.f32 0.0, %v733
        %v735 = vpop.f32.mrb[0].mxu0
        %736 = vmatprep.mubr.f32.mxu0 %v581
        %737 = vmatmul.mubr.f32.gmra.mrb[0].mxu0 %v580
        %v738 = vpop.f32.mrb[0].mxu0
        %v739 = vadd.f32 0.0, %v738
        %v740 = vpop.f32.mrb[0].mxu0
        %741 = vmatprep.mubr.f32.mxu0 %v583
        %742 = vmatmul.mubr.f32.gmra.mrb[0].mxu0 %v582
        %v743 = vpop.f32.mrb[0].mxu0
        %v744 = vadd.f32 0.0, %v743
        %v745 = vpop.f32.mrb[0].mxu0
        %746 = vmatprep.mubr.f32.mxu0 %v585
        %747 = vmatmul.mubr.f32.gmra.mrb[0].mxu0 %v584
        %v748 = vpop.f32.mrb[0].mxu0
        %v749 = vadd.f32 0.0, %v748
        %v750 = vpop.f32.mrb[0].mxu0
        %751 = vmatprep.mubr.f32.mxu0 %v587
        %752 = vmatmul.mubr.f32.gmra.mrb[0].mxu0 %v586
        %v753 = vpop.f32.mrb[0].mxu0
        %v754 = vadd.f32 0.0, %v753
        %v755 = vpop.f32.mrb[0].mxu0
        %756 = vmatprep.mubr.f32.mxu0 %v589
        %757 = vmatmul.mubr.f32.gmra.mrb[0].mxu0 %v588
        %v758 = vpop.f32.mrb[0].mxu0
        %v759 = vadd.f32 0.0, %v758
        %v760 = vpop.f32.mrb[0].mxu0
        %761 = vmatprep.mubr.f32.mxu0 %v591
        %762 = vmatmul.mubr.f32.gmra.mrb[0].mxu0 %v590
        %v763 = vpop.f32.mrb[0].mxu0
        %v764 = vadd.f32 0.0, %v763
        %v765 = vpop.f32.mrb[0].mxu0
        %766 = vmatprep.mubr.f32.mxu0 %v593
        %767 = vmatmul.mubr.f32.gmra.mrb[0].mxu0 %v592
        %v768 = vpop.f32.mrb[0].mxu0
        %v769 = vadd.f32 0.0, %v768
        %v770 = vpop.f32.mrb[0].mxu0
        %771 = vmatprep.mubr.f32.mxu0 %v595
        %772 = vmatmul.mubr.f32.gmra.mrb[0].mxu0 %v594
        %v773 = vpop.f32.mrb[0].mxu0
        %v774 = vadd.f32 0.0, %v773
        %v775 = vpop.f32.mrb[0].mxu0
        %776 = vmatprep.mubr.f32.mxu0 %v597
        %777 = vmatmul.mubr.f32.gmra.mrb[0].mxu0 %v596
        %v778 = vpop.f32.mrb[0].mxu0
        %v779 = vadd.f32 0.0, %v778
        %v780 = vpop.f32.mrb[0].mxu0
        %781 = vmatprep.mubr.f32.mxu0 %v599
        %782 = vmatmul.mubr.f32.gmra.mrb[0].mxu0 %v598
        %v783 = vpop.f32.mrb[0].mxu0
        %v784 = vadd.f32 0.0, %v783
        %v785 = vpop.f32.mrb[0].mxu0
        %786 = vmatprep.mubr.f32.mxu0 %v601
        %787 = vmatmul.mubr.f32.gmra.mrb[0].mxu0 %v600
        %v788 = vpop.f32.mrb[0].mxu0
        %v789 = vadd.f32 0.0, %v788
        %v790 = vpop.f32.mrb[0].mxu0
        %791 = vdwg.mxu0
        %v792 = vld [vmem:[%s2] sm:$0xff]
        %s793 = scalar_lea.vmem [#allocation2], 400
        %v794 = vld [vmem:[%s793] sm:$0xff]
        %v795 = vld [vmem:[%s793 + $0x8] sm:$0xff]
        %v796 = vld [vmem:[%s793 + $0x10] sm:$0xff]
        %v797 = vld [vmem:[%s793 + $0x18] sm:$0xff]
        %v798 = vld [vmem:[%s793 + $0x20] sm:$0xff]
        %v799 = vld [vmem:[%s793 + $0x28] sm:$0xff]
        %v800 = vld [vmem:[%s793 + $0x30] sm:$0xff]
        %v801 = vld [vmem:[%s793 + $0x38] sm:$0xff]
        %v802 = vld [vmem:[%s793 + $0x40] sm:$0xff]
        %v803 = vld [vmem:[%s793 + $0x48] sm:$0xff]
        %v804 = vld [vmem:[%s793 + $0x50] sm:$0xff]
        %v805 = vld [vmem:[%s793 + $0x58] sm:$0xff]
        %v806 = vld [vmem:[%s793 + $0x60] sm:$0xff]
        %v807 = vld [vmem:[%s793 + $0x68] sm:$0xff]
        %v808 = vld [vmem:[%s793 + $0x70] sm:$0xff]
        %v809 = vld [vmem:[%s793 + $0x78] sm:$0xff]
        %v810 = vld [vmem:[%s793 + $0x80] sm:$0xff]
        %v811 = vld [vmem:[%s793 + $0x88] sm:$0xff]
        %v812 = vld [vmem:[%s793 + $0x90] sm:$0xff]
        %v813 = vld [vmem:[%s793 + $0x98] sm:$0xff]
        %v814 = vld [vmem:[%s793 + $0xa0] sm:$0xff]
        %v815 = vld [vmem:[%s793 + $0xa8] sm:$0xff]
        %v816 = vld [vmem:[%s793 + $0xb0] sm:$0xff]
        %v817 = vld [vmem:[%s793 + $0xb8] sm:$0xff]
        %v818 = vld [vmem:[%s793 + $0xc0] sm:$0xff]
        %v819 = vld [vmem:[%s793 + $0xc8] sm:$0xff]
        %v820 = vld [vmem:[%s793 + $0xd0] sm:$0xff]
        %v821 = vld [vmem:[%s793 + $0xd8] sm:$0xff]
        %v822 = vld [vmem:[%s793 + $0xe0] sm:$0xff]
        %v823 = vld [vmem:[%s793 + $0xe8] sm:$0xff]
        %v824 = vld [vmem:[%s793 + $0xf0] sm:$0xff]
        %v825 = vld [vmem:[%s793 + $0xf8] sm:$0xff]
        %v826 = vld [vmem:[%s793 + $0x100] sm:$0xff]
        %v827 = vld [vmem:[%s793 + $0x108] sm:$0xff]
        %v828 = vld [vmem:[%s793 + $0x110] sm:$0xff]
        %v829 = vld [vmem:[%s793 + $0x118] sm:$0xff]
        %v830 = vld [vmem:[%s793 + $0x120] sm:$0xff]
        %v831 = vld [vmem:[%s793 + $0x128] sm:$0xff]
        %v832 = vld [vmem:[%s793 + $0x130] sm:$0xff]
        %v833 = vld [vmem:[%s793 + $0x138] sm:$0xff]
        %v834 = vld [vmem:[%s793 + $0x140] sm:$0xff]
        %v835 = vld [vmem:[%s793 + $0x148] sm:$0xff]
        %v836 = vld [vmem:[%s793 + $0x150] sm:$0xff]
        %v837 = vld [vmem:[%s793 + $0x158] sm:$0xff]
        %v838 = vld [vmem:[%s793 + $0x160] sm:$0xff]
        %v839 = vld [vmem:[%s793 + $0x168] sm:$0xff]
        %v840 = vld [vmem:[%s793 + $0x170] sm:$0xff]
        %v841 = vld [vmem:[%s793 + $0x178] sm:$0xff]
        %v842 = vld [vmem:[%s793 + $0x180] sm:$0xf]
        %v843 = vld [vmem:[%s793 + $0x188] sm:$0xf]
        %844 = vmatprep.subr.mxu0 0.0
        %845 = vmatpush1.msra.mxu0 %v520
        %846 = vmatprep.subr.mxu0 0.0
        %847 = vmatpush1.msra.mxu0 %v521
        %848 = vmatprep.subr.mxu0 0.0
        %849 = vmatpush1.msra.mxu0 %v522
        %850 = vmatprep.subr.mxu0 0.0
        %851 = vmatpush1.msra.mxu0 %v523
        %852 = vmatprep.subr.mxu0 0.0
        %853 = vmatpush1.msra.mxu0 %v524
        %854 = vmatprep.subr.mxu0 0.0
        %855 = vmatpush1.msra.mxu0 %v525
        %856 = vmatprep.subr.mxu0 0.0
        %857 = vmatpush1.msra.mxu0 %v526
        %858 = vmatprep.subr.mxu0 0.0
        %859 = vmatpush1.msra.mxu0 %v527
        %860 = vmatprep.subr.mxu0 0.0
        %861 = vmatpush1.msra.mxu0 %v528
        %862 = vmatprep.subr.mxu0 0.0
        %863 = vmatpush1.msra.mxu0 %v529
        %864 = vmatprep.subr.mxu0 0.0
        %865 = vmatpush1.msra.mxu0 %v530
        %866 = vmatprep.subr.mxu0 0.0
        %867 = vmatpush1.msra.mxu0 %v531
        %868 = vmatprep.subr.mxu0 0.0
        %869 = vmatpush1.msra.mxu0 %v532
        %870 = vmatprep.subr.mxu0 0.0
        %871 = vmatpush1.msra.mxu0 %v533
        %872 = vmatprep.subr.mxu0 0.0
        %873 = vmatpush1.msra.mxu0 %v534
        %874 = vmatprep.subr.mxu0 0.0
        %875 = vmatpush1.msra.mxu0 %v535
        %876 = vmatprep.subr.mxu0 0.0
        %877 = vmatpush1.msra.mxu0 %v536
        %878 = vmatprep.subr.mxu0 0.0
        %879 = vmatpush1.msra.mxu0 %v537
        %880 = vmatprep.subr.mxu0 0.0
        %881 = vmatpush1.msra.mxu0 %v538
        %882 = vmatprep.subr.mxu0 0.0
        %883 = vmatpush1.msra.mxu0 %v539
        %884 = vmatprep.subr.mxu0 0.0
        %885 = vmatpush1.msra.mxu0 %v540
        %886 = vmatprep.subr.mxu0 0.0
        %887 = vmatpush1.msra.mxu0 %v541
        %888 = vmatprep.subr.mxu0 0.0
        %889 = vmatpush1.msra.mxu0 %v542
        %890 = vmatprep.subr.mxu0 0.0
        %891 = vmatpush1.msra.mxu0 %v543
        %892 = vmatprep.subr.mxu0 0.0
        %893 = vmatpush1.msra.mxu0 %v544
        %894 = vmatprep.subr.mxu0 0.0
        %895 = vmatpush1.msra.mxu0 %v545
        %896 = vmatprep.subr.mxu0 0.0
        %897 = vmatpush1.msra.mxu0 %v546
        %898 = vmatprep.subr.mxu0 0.0
        %899 = vmatpush1.msra.mxu0 %v547
        %900 = vmatprep.subr.mxu0 0.0
        %901 = vmatpush1.msra.mxu0 %v548
        %902 = vmatprep.subr.mxu0 0.0
        %903 = vmatpush1.msra.mxu0 %v549
        %904 = vmatprep.subr.mxu0 0.0
        %905 = vmatpush1.msra.mxu0 %v550
        %906 = vmatprep.subr.mxu0 0.0
        %907 = vmatpush1.msra.mxu0 %v551
        %908 = vmatprep.mubr.f32.mxu0 %v795
        %909 = vmatmul.mubr.f32.gmra.mrb[0].mxu0 %v794
        %v910 = vpop.f32.mrb[0].mxu0
        %v911 = vadd.f32 0.0, %v910
        %v912 = vpop.f32.mrb[0].mxu0
        %913 = vmatprep.mubr.f32.mxu0 %v797
        %914 = vmatmul.mubr.f32.gmra.mrb[0].mxu0 %v796
        %v915 = vpop.f32.mrb[0].mxu0
        %v916 = vadd.f32 0.0, %v915
        %v917 = vpop.f32.mrb[0].mxu0
        %918 = vmatprep.mubr.f32.mxu0 %v799
        %919 = vmatmul.mubr.f32.gmra.mrb[0].mxu0 %v798
        %v920 = vpop.f32.mrb[0].mxu0
        %v921 = vadd.f32 0.0, %v920
        %v922 = vpop.f32.mrb[0].mxu0
        %923 = vmatprep.mubr.f32.mxu0 %v801
        %924 = vmatmul.mubr.f32.gmra.mrb[0].mxu0 %v800
        %v925 = vpop.f32.mrb[0].mxu0
        %v926 = vadd.f32 0.0, %v925
        %v927 = vpop.f32.mrb[0].mxu0
        %928 = vmatprep.mubr.f32.mxu0 %v803
        %929 = vmatmul.mubr.f32.gmra.mrb[0].mxu0 %v802
        %v930 = vpop.f32.mrb[0].mxu0
        %v931 = vadd.f32 0.0, %v930
        %v932 = vpop.f32.mrb[0].mxu0
        %933 = vmatprep.mubr.f32.mxu0 %v805
        %934 = vmatmul.mubr.f32.gmra.mrb[0].mxu0 %v804
        %v935 = vpop.f32.mrb[0].mxu0
        %v936 = vadd.f32 0.0, %v935
        %v937 = vpop.f32.mrb[0].mxu0
        %938 = vmatprep.mubr.f32.mxu0 %v807
        %939 = vmatmul.mubr.f32.gmra.mrb[0].mxu0 %v806
        %v940 = vpop.f32.mrb[0].mxu0
        %v941 = vadd.f32 0.0, %v940
        %v942 = vpop.f32.mrb[0].mxu0
        %943 = vmatprep.mubr.f32.mxu0 %v809
        %944 = vmatmul.mubr.f32.gmra.mrb[0].mxu0 %v808
        %v945 = vpop.f32.mrb[0].mxu0
        %v946 = vadd.f32 0.0, %v945
        %v947 = vpop.f32.mrb[0].mxu0
        %948 = vmatprep.mubr.f32.mxu0 %v811
        %949 = vmatmul.mubr.f32.gmra.mrb[0].mxu0 %v810
        %v950 = vpop.f32.mrb[0].mxu0
        %v951 = vadd.f32 0.0, %v950
        %v952 = vpop.f32.mrb[0].mxu0
        %953 = vmatprep.mubr.f32.mxu0 %v813
        %954 = vmatmul.mubr.f32.gmra.mrb[0].mxu0 %v812
        %v955 = vpop.f32.mrb[0].mxu0
        %v956 = vadd.f32 0.0, %v955
        %v957 = vpop.f32.mrb[0].mxu0
        %958 = vmatprep.mubr.f32.mxu0 %v815
        %959 = vmatmul.mubr.f32.gmra.mrb[0].mxu0 %v814
        %v960 = vpop.f32.mrb[0].mxu0
        %v961 = vadd.f32 0.0, %v960
        %v962 = vpop.f32.mrb[0].mxu0
        %963 = vmatprep.mubr.f32.mxu0 %v817
        %964 = vmatmul.mubr.f32.gmra.mrb[0].mxu0 %v816
        %v965 = vpop.f32.mrb[0].mxu0
        %v966 = vadd.f32 0.0, %v965
        %v967 = vpop.f32.mrb[0].mxu0
        %968 = vmatprep.mubr.f32.mxu0 %v819
        %969 = vmatmul.mubr.f32.gmra.mrb[0].mxu0 %v818
        %v970 = vpop.f32.mrb[0].mxu0
        %v971 = vadd.f32 0.0, %v970
        %v972 = vpop.f32.mrb[0].mxu0
        %973 = vmatprep.mubr.f32.mxu0 %v821
        %974 = vmatmul.mubr.f32.gmra.mrb[0].mxu0 %v820
        %v975 = vpop.f32.mrb[0].mxu0
        %v976 = vadd.f32 0.0, %v975
        %v977 = vpop.f32.mrb[0].mxu0
        %978 = vmatprep.mubr.f32.mxu0 %v823
        %979 = vmatmul.mubr.f32.gmra.mrb[0].mxu0 %v822
        %v980 = vpop.f32.mrb[0].mxu0
        %v981 = vadd.f32 0.0, %v980
        %v982 = vpop.f32.mrb[0].mxu0
        %983 = vmatprep.mubr.f32.mxu0 %v825
        %984 = vmatmul.mubr.f32.gmra.mrb[0].mxu0 %v824
        %v985 = vpop.f32.mrb[0].mxu0
        %v986 = vadd.f32 0.0, %v985
        %v987 = vpop.f32.mrb[0].mxu0
        %988 = vmatprep.mubr.f32.mxu0 %v827
        %989 = vmatmul.mubr.f32.gmra.mrb[0].mxu0 %v826
        %v990 = vpop.f32.mrb[0].mxu0
        %v991 = vadd.f32 0.0, %v990
        %v992 = vpop.f32.mrb[0].mxu0
        %993 = vmatprep.mubr.f32.mxu0 %v829
        %994 = vmatmul.mubr.f32.gmra.mrb[0].mxu0 %v828
        %v995 = vpop.f32.mrb[0].mxu0
        %v996 = vadd.f32 0.0, %v995
        %v997 = vpop.f32.mrb[0].mxu0
        %998 = vmatprep.mubr.f32.mxu0 %v831
        %999 = vmatmul.mubr.f32.gmra.mrb[0].mxu0 %v830
        %v1000 = vpop.f32.mrb[0].mxu0
        %v1001 = vadd.f32 0.0, %v1000
        %v1002 = vpop.f32.mrb[0].mxu0
        %1003 = vmatprep.mubr.f32.mxu0 %v833
        %1004 = vmatmul.mubr.f32.gmra.mrb[0].mxu0 %v832
        %v1005 = vpop.f32.mrb[0].mxu0
        %v1006 = vadd.f32 0.0, %v1005
        %v1007 = vpop.f32.mrb[0].mxu0
        %1008 = vmatprep.mubr.f32.mxu0 %v835
        %1009 = vmatmul.mubr.f32.gmra.mrb[0].mxu0 %v834
        %v1010 = vpop.f32.mrb[0].mxu0
        %v1011 = vadd.f32 0.0, %v1010
        %v1012 = vpop.f32.mrb[0].mxu0
        %1013 = vmatprep.mubr.f32.mxu0 %v837
        %1014 = vmatmul.mubr.f32.gmra.mrb[0].mxu0 %v836
        %v1015 = vpop.f32.mrb[0].mxu0
        %v1016 = vadd.f32 0.0, %v1015
        %v1017 = vpop.f32.mrb[0].mxu0
        %1018 = vmatprep.mubr.f32.mxu0 %v839
        %1019 = vmatmul.mubr.f32.gmra.mrb[0].mxu0 %v838
        %v1020 = vpop.f32.mrb[0].mxu0
        %v1021 = vadd.f32 0.0, %v1020
        %v1022 = vpop.f32.mrb[0].mxu0
        %1023 = vmatprep.mubr.f32.mxu0 %v841
        %1024 = vmatmul.mubr.f32.gmra.mrb[0].mxu0 %v840
        %v1025 = vpop.f32.mrb[0].mxu0
        %v1026 = vadd.f32 0.0, %v1025
        %v1027 = vpop.f32.mrb[0].mxu0
        %1028 = vmatprep.mubr.f32.mxu0 %v843
        %1029 = vmatmul.mubr.f32.gmra.mrb[0].mxu0 %v842
        %v1030 = vpop.f32.mrb[0].mxu0
        %v1031 = vadd.f32 0.0, %v1030
        %v1032 = vpop.f32.mrb[0].mxu0
        %1033 = vdwg.mxu0
        %s1034 = scalar_lea.vmem %s2, 8
        %v1035 = vld [vmem:[%s1034] sm:$0xff]
        %vm1036 = vcmask 64512
        %v1038 = vsel %vm1036, %v911, 0
        %v1041 = vsel %vm1036, %v916, 0
        %v1044 = vsel %vm1036, %v921, 0
        %v1047 = vsel %vm1036, %v926, 0
        %v1050 = vsel %vm1036, %v931, 0
        %v1053 = vsel %vm1036, %v936, 0
        %v1056 = vsel %vm1036, %v941, 0
        %v1059 = vsel %vm1036, %v946, 0
        %v1062 = vsel %vm1036, %v951, 0
        %v1065 = vsel %vm1036, %v956, 0
        %v1068 = vsel %vm1036, %v961, 0
        %v1071 = vsel %vm1036, %v966, 0
        %v1074 = vsel %vm1036, %v971, 0
        %v1077 = vsel %vm1036, %v976, 0
        %v1080 = vsel %vm1036, %v981, 0
        %v1083 = vsel %vm1036, %v986, 0
        %v1086 = vsel %vm1036, %v991, 0
        %v1089 = vsel %vm1036, %v996, 0
        %v1092 = vsel %vm1036, %v1001, 0
        %v1095 = vsel %vm1036, %v1006, 0
        %v1098 = vsel %vm1036, %v1011, 0
        %v1101 = vsel %vm1036, %v1016, 0
        %v1104 = vsel %vm1036, %v1021, 0
        %v1107 = vsel %vm1036, %v1026, 0
        %v1110 = vsel %vm1036, %v1031, 0
        %1112 = vmatprep.subr.mxu0 0.0
        %1113 = vmatpush1.msra.mxu0 %v1035
        %1114 = vmatprep.subr.mxu0 0.0
        %1115 = vmatpush1.msra.mxu0 0.0
        %1116 = vmatprep.subr.mxu0 0.0
        %1117 = vmatpush1.msra.mxu0 0.0
        %1118 = vmatprep.subr.mxu0 0.0
        %1119 = vmatpush1.msra.mxu0 0.0
        %1120 = vmatprep.subr.mxu0 0.0
        %1121 = vmatpush1.msra.mxu0 0.0
        %1122 = vmatprep.subr.mxu0 0.0
        %1123 = vmatpush1.msra.mxu0 0.0
        %1124 = vmatprep.subr.mxu0 0.0
        %1125 = vmatpush1.msra.mxu0 0.0
        %1126 = vmatprep.subr.mxu0 0.0
        %1127 = vmatpush1.msra.mxu0 0.0
        %1128 = vmatprep.subr.mxu0 0.0
        %1129 = vmatpush1.msra.mxu0 0.0
        %1130 = vmatprep.subr.mxu0 0.0
        %1131 = vmatpush1.msra.mxu0 0.0
        %1132 = vmatprep.subr.mxu0 0.0
        %1133 = vmatpush1.msra.mxu0 0.0
        %1134 = vmatprep.subr.mxu0 0.0
        %1135 = vmatpush1.msra.mxu0 0.0
        %1136 = vmatprep.subr.mxu0 0.0
        %1137 = vmatpush1.msra.mxu0 0.0
        %1138 = vmatprep.subr.mxu0 0.0
        %1139 = vmatpush1.msra.mxu0 0.0
        %1140 = vmatprep.subr.mxu0 0.0
        %1141 = vmatpush1.msra.mxu0 0.0
        %1142 = vmatprep.subr.mxu0 0.0
        %1143 = vmatpush1.msra.mxu0 0.0
        %1144 = vmatprep.subr.mxu0 0.0
        %1145 = vmatpush1.msra.mxu0 0.0
        %1146 = vmatprep.subr.mxu0 0.0
        %1147 = vmatpush1.msra.mxu0 0.0
        %1148 = vmatprep.subr.mxu0 0.0
        %1149 = vmatpush1.msra.mxu0 0.0
        %1150 = vmatprep.subr.mxu0 0.0
        %1151 = vmatpush1.msra.mxu0 0.0
        %1152 = vmatprep.subr.mxu0 0.0
        %1153 = vmatpush1.msra.mxu0 0.0
        %1154 = vmatprep.subr.mxu0 0.0
        %1155 = vmatpush1.msra.mxu0 0.0
        %1156 = vmatprep.subr.mxu0 0.0
        %1157 = vmatpush1.msra.mxu0 0.0
        %1158 = vmatprep.subr.mxu0 0.0
        %1159 = vmatpush1.msra.mxu0 0.0
        %1160 = vmatprep.subr.mxu0 0.0
        %1161 = vmatpush1.msra.mxu0 0.0
        %1162 = vmatprep.subr.mxu0 0.0
        %1163 = vmatpush1.msra.mxu0 0.0
        %1164 = vmatprep.subr.mxu0 0.0
        %1165 = vmatpush1.msra.mxu0 0.0
        %1166 = vmatprep.subr.mxu0 0.0
        %1167 = vmatpush1.msra.mxu0 0.0
        %1168 = vmatprep.subr.mxu0 0.0
        %1169 = vmatpush1.msra.mxu0 0.0
        %1170 = vmatprep.subr.mxu0 0.0
        %1171 = vmatpush1.msra.mxu0 0.0
        %1172 = vmatprep.subr.mxu0 0.0
        %1173 = vmatpush1.msra.mxu0 0.0
        %1174 = vmatprep.subr.mxu0 0.0
        %1175 = vmatpush1.msra.mxu0 0.0
        %1176 = vmatprep.mubr.f32.mxu0 0.0
        %1177 = vmatmul.mubr.f32.gmra.mrb[0].mxu0 %v1038
        %v1178 = vpop.f32.mrb[0].mxu0
        %v1179 = vadd.f32 0.0, %v1178
        %v1180 = vpop.f32.mrb[0].mxu0
        %1181 = vmatprep.mubr.f32.mxu0 0.0
        %1182 = vmatmul.mubr.f32.gmra.mrb[0].mxu0 %v1041
        %v1183 = vpop.f32.mrb[0].mxu0
        %v1184 = vadd.f32 0.0, %v1183
        %v1185 = vpop.f32.mrb[0].mxu0
        %1186 = vmatprep.mubr.f32.mxu0 0.0
        %1187 = vmatmul.mubr.f32.gmra.mrb[0].mxu0 %v1044
        %v1188 = vpop.f32.mrb[0].mxu0
        %v1189 = vadd.f32 0.0, %v1188
        %v1190 = vpop.f32.mrb[0].mxu0
        %1191 = vmatprep.mubr.f32.mxu0 0.0
        %1192 = vmatmul.mubr.f32.gmra.mrb[0].mxu0 %v1047
        %v1193 = vpop.f32.mrb[0].mxu0
        %v1194 = vadd.f32 0.0, %v1193
        %v1195 = vpop.f32.mrb[0].mxu0
        %1196 = vmatprep.mubr.f32.mxu0 0.0
        %1197 = vmatmul.mubr.f32.gmra.mrb[0].mxu0 %v1050
        %v1198 = vpop.f32.mrb[0].mxu0
        %v1199 = vadd.f32 0.0, %v1198
        %v1200 = vpop.f32.mrb[0].mxu0
        %1201 = vmatprep.mubr.f32.mxu0 0.0
        %1202 = vmatmul.mubr.f32.gmra.mrb[0].mxu0 %v1053
        %v1203 = vpop.f32.mrb[0].mxu0
        %v1204 = vadd.f32 0.0, %v1203
        %v1205 = vpop.f32.mrb[0].mxu0
        %1206 = vmatprep.mubr.f32.mxu0 0.0
        %1207 = vmatmul.mubr.f32.gmra.mrb[0].mxu0 %v1056
        %v1208 = vpop.f32.mrb[0].mxu0
        %v1209 = vadd.f32 0.0, %v1208
        %v1210 = vpop.f32.mrb[0].mxu0
        %1211 = vmatprep.mubr.f32.mxu0 0.0
        %1212 = vmatmul.mubr.f32.gmra.mrb[0].mxu0 %v1059
        %v1213 = vpop.f32.mrb[0].mxu0
        %v1214 = vadd.f32 0.0, %v1213
        %v1215 = vpop.f32.mrb[0].mxu0
        %1216 = vmatprep.mubr.f32.mxu0 0.0
        %1217 = vmatmul.mubr.f32.gmra.mrb[0].mxu0 %v1062
        %v1218 = vpop.f32.mrb[0].mxu0
        %v1219 = vadd.f32 0.0, %v1218
        %v1220 = vpop.f32.mrb[0].mxu0
        %1221 = vmatprep.mubr.f32.mxu0 0.0
        %1222 = vmatmul.mubr.f32.gmra.mrb[0].mxu0 %v1065
        %v1223 = vpop.f32.mrb[0].mxu0
        %v1224 = vadd.f32 0.0, %v1223
        %v1225 = vpop.f32.mrb[0].mxu0
        %1226 = vmatprep.mubr.f32.mxu0 0.0
        %1227 = vmatmul.mubr.f32.gmra.mrb[0].mxu0 %v1068
        %v1228 = vpop.f32.mrb[0].mxu0
        %v1229 = vadd.f32 0.0, %v1228
        %v1230 = vpop.f32.mrb[0].mxu0
        %1231 = vmatprep.mubr.f32.mxu0 0.0
        %1232 = vmatmul.mubr.f32.gmra.mrb[0].mxu0 %v1071
        %v1233 = vpop.f32.mrb[0].mxu0
        %v1234 = vadd.f32 0.0, %v1233
        %v1235 = vpop.f32.mrb[0].mxu0
        %1236 = vmatprep.mubr.f32.mxu0 0.0
        %1237 = vmatmul.mubr.f32.gmra.mrb[0].mxu0 %v1074
        %v1238 = vpop.f32.mrb[0].mxu0
        %v1239 = vadd.f32 0.0, %v1238
        %v1240 = vpop.f32.mrb[0].mxu0
        %1241 = vmatprep.mubr.f32.mxu0 0.0
        %1242 = vmatmul.mubr.f32.gmra.mrb[0].mxu0 %v1077
        %v1243 = vpop.f32.mrb[0].mxu0
        %v1244 = vadd.f32 0.0, %v1243
        %v1245 = vpop.f32.mrb[0].mxu0
        %1246 = vmatprep.mubr.f32.mxu0 0.0
        %1247 = vmatmul.mubr.f32.gmra.mrb[0].mxu0 %v1080
        %v1248 = vpop.f32.mrb[0].mxu0
        %v1249 = vadd.f32 0.0, %v1248
        %v1250 = vpop.f32.mrb[0].mxu0
        %1251 = vmatprep.mubr.f32.mxu0 0.0
        %1252 = vmatmul.mubr.f32.gmra.mrb[0].mxu0 %v1083
        %v1253 = vpop.f32.mrb[0].mxu0
        %v1254 = vadd.f32 0.0, %v1253
        %v1255 = vpop.f32.mrb[0].mxu0
        %1256 = vmatprep.mubr.f32.mxu0 0.0
        %1257 = vmatmul.mubr.f32.gmra.mrb[0].mxu0 %v1086
        %v1258 = vpop.f32.mrb[0].mxu0
        %v1259 = vadd.f32 0.0, %v1258
        %v1260 = vpop.f32.mrb[0].mxu0
        %1261 = vmatprep.mubr.f32.mxu0 0.0
        %1262 = vmatmul.mubr.f32.gmra.mrb[0].mxu0 %v1089
        %v1263 = vpop.f32.mrb[0].mxu0
        %v1264 = vadd.f32 0.0, %v1263
        %v1265 = vpop.f32.mrb[0].mxu0
        %1266 = vmatprep.mubr.f32.mxu0 0.0
        %1267 = vmatmul.mubr.f32.gmra.mrb[0].mxu0 %v1092
        %v1268 = vpop.f32.mrb[0].mxu0
        %v1269 = vadd.f32 0.0, %v1268
        %v1270 = vpop.f32.mrb[0].mxu0
        %1271 = vmatprep.mubr.f32.mxu0 0.0
        %1272 = vmatmul.mubr.f32.gmra.mrb[0].mxu0 %v1095
        %v1273 = vpop.f32.mrb[0].mxu0
        %v1274 = vadd.f32 0.0, %v1273
        %v1275 = vpop.f32.mrb[0].mxu0
        %1276 = vmatprep.mubr.f32.mxu0 0.0
        %1277 = vmatmul.mubr.f32.gmra.mrb[0].mxu0 %v1098
        %v1278 = vpop.f32.mrb[0].mxu0
        %v1279 = vadd.f32 0.0, %v1278
        %v1280 = vpop.f32.mrb[0].mxu0
        %1281 = vmatprep.mubr.f32.mxu0 0.0
        %1282 = vmatmul.mubr.f32.gmra.mrb[0].mxu0 %v1101
        %v1283 = vpop.f32.mrb[0].mxu0
        %v1284 = vadd.f32 0.0, %v1283
        %v1285 = vpop.f32.mrb[0].mxu0
        %1286 = vmatprep.mubr.f32.mxu0 0.0
        %1287 = vmatmul.mubr.f32.gmra.mrb[0].mxu0 %v1104
        %v1288 = vpop.f32.mrb[0].mxu0
        %v1289 = vadd.f32 0.0, %v1288
        %v1290 = vpop.f32.mrb[0].mxu0
        %1291 = vmatprep.mubr.f32.mxu0 0.0
        %1292 = vmatmul.mubr.f32.gmra.mrb[0].mxu0 %v1107
        %v1293 = vpop.f32.mrb[0].mxu0
        %v1294 = vadd.f32 0.0, %v1293
        %v1295 = vpop.f32.mrb[0].mxu0
        %1296 = vmatprep.mubr.f32.mxu0 0.0
        %1297 = vmatmul.mubr.f32.gmra.mrb[0].mxu0 %v1110
        %v1298 = vpop.f32.mrb[0].mxu0
        %v1299 = vadd.f32 0.0, %v1298
        %v1300 = vpop.f32.mrb[0].mxu0
        %1301 = vdwg.mxu0
        %v1303 = vsel %vm1036, %v669, 0
        %v1306 = vsel %vm1036, %v674, 0
        %v1309 = vsel %vm1036, %v679, 0
        %v1312 = vsel %vm1036, %v684, 0
        %v1315 = vsel %vm1036, %v689, 0
        %v1318 = vsel %vm1036, %v694, 0
        %v1321 = vsel %vm1036, %v699, 0
        %v1324 = vsel %vm1036, %v704, 0
        %v1327 = vsel %vm1036, %v709, 0
        %v1330 = vsel %vm1036, %v714, 0
        %v1333 = vsel %vm1036, %v719, 0
        %v1336 = vsel %vm1036, %v724, 0
        %v1339 = vsel %vm1036, %v729, 0
        %v1342 = vsel %vm1036, %v734, 0
        %v1345 = vsel %vm1036, %v739, 0
        %v1348 = vsel %vm1036, %v744, 0
        %v1351 = vsel %vm1036, %v749, 0
        %v1354 = vsel %vm1036, %v754, 0
        %v1357 = vsel %vm1036, %v759, 0
        %v1360 = vsel %vm1036, %v764, 0
        %v1363 = vsel %vm1036, %v769, 0
        %v1366 = vsel %vm1036, %v774, 0
        %v1369 = vsel %vm1036, %v779, 0
        %v1372 = vsel %vm1036, %v784, 0
        %v1375 = vsel %vm1036, %v789, 0
        %1377 = vmatprep.subr.mxu0 0.0
        %1378 = vmatpush1.msra.mxu0 %v792
        %1379 = vmatprep.subr.mxu0 0.0
        %1380 = vmatpush1.msra.mxu0 0.0
        %1381 = vmatprep.subr.mxu0 0.0
        %1382 = vmatpush1.msra.mxu0 0.0
        %1383 = vmatprep.subr.mxu0 0.0
        %1384 = vmatpush1.msra.mxu0 0.0
        %1385 = vmatprep.subr.mxu0 0.0
        %1386 = vmatpush1.msra.mxu0 0.0
        %1387 = vmatprep.subr.mxu0 0.0
        %1388 = vmatpush1.msra.mxu0 0.0
        %1389 = vmatprep.subr.mxu0 0.0
        %1390 = vmatpush1.msra.mxu0 0.0
        %1391 = vmatprep.subr.mxu0 0.0
        %1392 = vmatpush1.msra.mxu0 0.0
        %1393 = vmatprep.subr.mxu0 0.0
        %1394 = vmatpush1.msra.mxu0 0.0
        %1395 = vmatprep.subr.mxu0 0.0
        %1396 = vmatpush1.msra.mxu0 0.0
        %1397 = vmatprep.subr.mxu0 0.0
        %1398 = vmatpush1.msra.mxu0 0.0
        %1399 = vmatprep.subr.mxu0 0.0
        %1400 = vmatpush1.msra.mxu0 0.0
        %1401 = vmatprep.subr.mxu0 0.0
        %1402 = vmatpush1.msra.mxu0 0.0
        %1403 = vmatprep.subr.mxu0 0.0
        %1404 = vmatpush1.msra.mxu0 0.0
        %1405 = vmatprep.subr.mxu0 0.0
        %1406 = vmatpush1.msra.mxu0 0.0
        %1407 = vmatprep.subr.mxu0 0.0
        %1408 = vmatpush1.msra.mxu0 0.0
        %1409 = vmatprep.subr.mxu0 0.0
        %1410 = vmatpush1.msra.mxu0 0.0
        %1411 = vmatprep.subr.mxu0 0.0
        %1412 = vmatpush1.msra.mxu0 0.0
        %1413 = vmatprep.subr.mxu0 0.0
        %1414 = vmatpush1.msra.mxu0 0.0
        %1415 = vmatprep.subr.mxu0 0.0
        %1416 = vmatpush1.msra.mxu0 0.0
        %1417 = vmatprep.subr.mxu0 0.0
        %1418 = vmatpush1.msra.mxu0 0.0
        %1419 = vmatprep.subr.mxu0 0.0
        %1420 = vmatpush1.msra.mxu0 0.0
        %1421 = vmatprep.subr.mxu0 0.0
        %1422 = vmatpush1.msra.mxu0 0.0
        %1423 = vmatprep.subr.mxu0 0.0
        %1424 = vmatpush1.msra.mxu0 0.0
        %1425 = vmatprep.subr.mxu0 0.0
        %1426 = vmatpush1.msra.mxu0 0.0
        %1427 = vmatprep.subr.mxu0 0.0
        %1428 = vmatpush1.msra.mxu0 0.0
        %1429 = vmatprep.subr.mxu0 0.0
        %1430 = vmatpush1.msra.mxu0 0.0
        %1431 = vmatprep.subr.mxu0 0.0
        %1432 = vmatpush1.msra.mxu0 0.0
        %1433 = vmatprep.subr.mxu0 0.0
        %1434 = vmatpush1.msra.mxu0 0.0
        %1435 = vmatprep.subr.mxu0 0.0
        %1436 = vmatpush1.msra.mxu0 0.0
        %1437 = vmatprep.subr.mxu0 0.0
        %1438 = vmatpush1.msra.mxu0 0.0
        %1439 = vmatprep.subr.mxu0 0.0
        %1440 = vmatpush1.msra.mxu0 0.0
        %1441 = vmatprep.mubr.f32.mxu0 0.0
        %1442 = vmatmul.mubr.f32.gmra.mrb[0].mxu0 %v1303
        %v1443 = vpop.f32.mrb[0].mxu0
        %v1444 = vadd.f32 %v1179, %v1443
        %v1445 = vpop.f32.mrb[0].mxu0
        %1446 = vmatprep.mubr.f32.mxu0 0.0
        %1447 = vmatmul.mubr.f32.gmra.mrb[0].mxu0 %v1306
        %v1448 = vpop.f32.mrb[0].mxu0
        %v1449 = vadd.f32 %v1184, %v1448
        %v1450 = vpop.f32.mrb[0].mxu0
        %1451 = vmatprep.mubr.f32.mxu0 0.0
        %1452 = vmatmul.mubr.f32.gmra.mrb[0].mxu0 %v1309
        %v1453 = vpop.f32.mrb[0].mxu0
        %v1454 = vadd.f32 %v1189, %v1453
        %v1455 = vpop.f32.mrb[0].mxu0
        %1456 = vmatprep.mubr.f32.mxu0 0.0
        %1457 = vmatmul.mubr.f32.gmra.mrb[0].mxu0 %v1312
        %v1458 = vpop.f32.mrb[0].mxu0
        %v1459 = vadd.f32 %v1194, %v1458
        %v1460 = vpop.f32.mrb[0].mxu0
        %1461 = vmatprep.mubr.f32.mxu0 0.0
        %1462 = vmatmul.mubr.f32.gmra.mrb[0].mxu0 %v1315
        %v1463 = vpop.f32.mrb[0].mxu0
        %v1464 = vadd.f32 %v1199, %v1463
        %v1465 = vpop.f32.mrb[0].mxu0
        %1466 = vmatprep.mubr.f32.mxu0 0.0
        %1467 = vmatmul.mubr.f32.gmra.mrb[0].mxu0 %v1318
        %v1468 = vpop.f32.mrb[0].mxu0
        %v1469 = vadd.f32 %v1204, %v1468
        %v1470 = vpop.f32.mrb[0].mxu0
        %1471 = vmatprep.mubr.f32.mxu0 0.0
        %1472 = vmatmul.mubr.f32.gmra.mrb[0].mxu0 %v1321
        %v1473 = vpop.f32.mrb[0].mxu0
        %v1474 = vadd.f32 %v1209, %v1473
        %v1475 = vpop.f32.mrb[0].mxu0
        %1476 = vmatprep.mubr.f32.mxu0 0.0
        %1477 = vmatmul.mubr.f32.gmra.mrb[0].mxu0 %v1324
        %v1478 = vpop.f32.mrb[0].mxu0
        %v1479 = vadd.f32 %v1214, %v1478
        %v1480 = vpop.f32.mrb[0].mxu0
        %1481 = vmatprep.mubr.f32.mxu0 0.0
        %1482 = vmatmul.mubr.f32.gmra.mrb[0].mxu0 %v1327
        %v1483 = vpop.f32.mrb[0].mxu0
        %v1484 = vadd.f32 %v1219, %v1483
        %v1485 = vpop.f32.mrb[0].mxu0
        %1486 = vmatprep.mubr.f32.mxu0 0.0
        %1487 = vmatmul.mubr.f32.gmra.mrb[0].mxu0 %v1330
        %v1488 = vpop.f32.mrb[0].mxu0
        %v1489 = vadd.f32 %v1224, %v1488
        %v1490 = vpop.f32.mrb[0].mxu0
        %1491 = vmatprep.mubr.f32.mxu0 0.0
        %1492 = vmatmul.mubr.f32.gmra.mrb[0].mxu0 %v1333
        %v1493 = vpop.f32.mrb[0].mxu0
        %v1494 = vadd.f32 %v1229, %v1493
        %v1495 = vpop.f32.mrb[0].mxu0
        %1496 = vmatprep.mubr.f32.mxu0 0.0
        %1497 = vmatmul.mubr.f32.gmra.mrb[0].mxu0 %v1336
        %v1498 = vpop.f32.mrb[0].mxu0
        %v1499 = vadd.f32 %v1234, %v1498
        %v1500 = vpop.f32.mrb[0].mxu0
        %1501 = vmatprep.mubr.f32.mxu0 0.0
        %1502 = vmatmul.mubr.f32.gmra.mrb[0].mxu0 %v1339
        %v1503 = vpop.f32.mrb[0].mxu0
        %v1504 = vadd.f32 %v1239, %v1503
        %v1505 = vpop.f32.mrb[0].mxu0
        %1506 = vmatprep.mubr.f32.mxu0 0.0
        %1507 = vmatmul.mubr.f32.gmra.mrb[0].mxu0 %v1342
        %v1508 = vpop.f32.mrb[0].mxu0
        %v1509 = vadd.f32 %v1244, %v1508
        %v1510 = vpop.f32.mrb[0].mxu0
        %1511 = vmatprep.mubr.f32.mxu0 0.0
        %1512 = vmatmul.mubr.f32.gmra.mrb[0].mxu0 %v1345
        %v1513 = vpop.f32.mrb[0].mxu0
        %v1514 = vadd.f32 %v1249, %v1513
        %v1515 = vpop.f32.mrb[0].mxu0
        %1516 = vmatprep.mubr.f32.mxu0 0.0
        %1517 = vmatmul.mubr.f32.gmra.mrb[0].mxu0 %v1348
        %v1518 = vpop.f32.mrb[0].mxu0
        %v1519 = vadd.f32 %v1254, %v1518
        %v1520 = vpop.f32.mrb[0].mxu0
        %1521 = vmatprep.mubr.f32.mxu0 0.0
        %1522 = vmatmul.mubr.f32.gmra.mrb[0].mxu0 %v1351
        %v1523 = vpop.f32.mrb[0].mxu0
        %v1524 = vadd.f32 %v1259, %v1523
        %v1525 = vpop.f32.mrb[0].mxu0
        %1526 = vmatprep.mubr.f32.mxu0 0.0
        %1527 = vmatmul.mubr.f32.gmra.mrb[0].mxu0 %v1354
        %v1528 = vpop.f32.mrb[0].mxu0
        %v1529 = vadd.f32 %v1264, %v1528
        %v1530 = vpop.f32.mrb[0].mxu0
        %1531 = vmatprep.mubr.f32.mxu0 0.0
        %1532 = vmatmul.mubr.f32.gmra.mrb[0].mxu0 %v1357
        %v1533 = vpop.f32.mrb[0].mxu0
        %v1534 = vadd.f32 %v1269, %v1533
        %v1535 = vpop.f32.mrb[0].mxu0
        %1536 = vmatprep.mubr.f32.mxu0 0.0
        %1537 = vmatmul.mubr.f32.gmra.mrb[0].mxu0 %v1360
        %v1538 = vpop.f32.mrb[0].mxu0
        %v1539 = vadd.f32 %v1274, %v1538
        %v1540 = vpop.f32.mrb[0].mxu0
        %1541 = vmatprep.mubr.f32.mxu0 0.0
        %1542 = vmatmul.mubr.f32.gmra.mrb[0].mxu0 %v1363
        %v1543 = vpop.f32.mrb[0].mxu0
        %v1544 = vadd.f32 %v1279, %v1543
        %v1545 = vpop.f32.mrb[0].mxu0
        %1546 = vmatprep.mubr.f32.mxu0 0.0
        %1547 = vmatmul.mubr.f32.gmra.mrb[0].mxu0 %v1366
        %v1548 = vpop.f32.mrb[0].mxu0
        %v1549 = vadd.f32 %v1284, %v1548
        %v1550 = vpop.f32.mrb[0].mxu0
        %1551 = vmatprep.mubr.f32.mxu0 0.0
        %1552 = vmatmul.mubr.f32.gmra.mrb[0].mxu0 %v1369
        %v1553 = vpop.f32.mrb[0].mxu0
        %v1554 = vadd.f32 %v1289, %v1553
        %v1555 = vpop.f32.mrb[0].mxu0
        %1556 = vmatprep.mubr.f32.mxu0 0.0
        %1557 = vmatmul.mubr.f32.gmra.mrb[0].mxu0 %v1372
        %v1558 = vpop.f32.mrb[0].mxu0
        %v1559 = vadd.f32 %v1294, %v1558
        %v1560 = vpop.f32.mrb[0].mxu0
        %1561 = vmatprep.mubr.f32.mxu0 0.0
        %1562 = vmatmul.mubr.f32.gmra.mrb[0].mxu0 %v1375
        %v1563 = vpop.f32.mrb[0].mxu0
        %v1564 = vadd.f32 %v1299, %v1563
        %v1565 = vpop.f32.mrb[0].mxu0
        %1566 = vdwg.mxu0
        %s1567 = scalar_lea.vmem [#allocation2], 800
        %v1568 = vld [vmem:[%s1567] sm:$0xff]
        %v1569 = vld [vmem:[%s1567 + $0x8] sm:$0xff]
        %v1570 = vld [vmem:[%s1567 + $0x10] sm:$0xff]
        %v1571 = vld [vmem:[%s1567 + $0x18] sm:$0xff]
        %v1572 = vld [vmem:[%s1567 + $0x20] sm:$0xff]
        %v1573 = vld [vmem:[%s1567 + $0x28] sm:$0xff]
        %v1574 = vld [vmem:[%s1567 + $0x30] sm:$0xff]
        %v1575 = vld [vmem:[%s1567 + $0x38] sm:$0xff]
        %v1576 = vld [vmem:[%s1567 + $0x40] sm:$0xff]
        %v1577 = vld [vmem:[%s1567 + $0x48] sm:$0xff]
        %v1578 = vld [vmem:[%s1567 + $0x50] sm:$0xff]
        %v1579 = vld [vmem:[%s1567 + $0x58] sm:$0xff]
        %v1580 = vld [vmem:[%s1567 + $0x60] sm:$0xff]
        %v1581 = vld [vmem:[%s1567 + $0x68] sm:$0xff]
        %v1582 = vld [vmem:[%s1567 + $0x70] sm:$0xff]
        %v1583 = vld [vmem:[%s1567 + $0x78] sm:$0xff]
        %v1584 = vld [vmem:[%s1567 + $0x80] sm:$0xff]
        %v1585 = vld [vmem:[%s1567 + $0x88] sm:$0xff]
        %v1586 = vld [vmem:[%s1567 + $0x90] sm:$0xff]
        %v1587 = vld [vmem:[%s1567 + $0x98] sm:$0xff]
        %v1588 = vld [vmem:[%s1567 + $0xa0] sm:$0xff]
        %v1589 = vld [vmem:[%s1567 + $0xa8] sm:$0xff]
        %v1590 = vld [vmem:[%s1567 + $0xb0] sm:$0xff]
        %v1591 = vld [vmem:[%s1567 + $0xb8] sm:$0xff]
        %v1592 = vld [vmem:[%s1567 + $0xc0] sm:$0xff]
        %v1593 = vld [vmem:[%s1567 + $0xc8] sm:$0xff]
        %v1594 = vld [vmem:[%s1567 + $0xd0] sm:$0xff]
        %v1595 = vld [vmem:[%s1567 + $0xd8] sm:$0xff]
        %v1596 = vld [vmem:[%s1567 + $0xe0] sm:$0xff]
        %v1597 = vld [vmem:[%s1567 + $0xe8] sm:$0xff]
        %v1598 = vld [vmem:[%s1567 + $0xf0] sm:$0xff]
        %v1599 = vld [vmem:[%s1567 + $0xf8] sm:$0xff]
        %v1600 = vld [vmem:[%s1567 + $0x100] sm:$0xff]
        %v1601 = vld [vmem:[%s1567 + $0x108] sm:$0xff]
        %v1602 = vld [vmem:[%s1567 + $0x110] sm:$0xff]
        %v1603 = vld [vmem:[%s1567 + $0x118] sm:$0xff]
        %v1604 = vld [vmem:[%s1567 + $0x120] sm:$0xff]
        %v1605 = vld [vmem:[%s1567 + $0x128] sm:$0xff]
        %v1606 = vld [vmem:[%s1567 + $0x130] sm:$0xff]
        %v1607 = vld [vmem:[%s1567 + $0x138] sm:$0xff]
        %v1608 = vld [vmem:[%s1567 + $0x140] sm:$0xff]
        %v1609 = vld [vmem:[%s1567 + $0x148] sm:$0xff]
        %v1610 = vld [vmem:[%s1567 + $0x150] sm:$0xff]
        %v1611 = vld [vmem:[%s1567 + $0x158] sm:$0xff]
        %v1612 = vld [vmem:[%s1567 + $0x160] sm:$0xff]
        %v1613 = vld [vmem:[%s1567 + $0x168] sm:$0xff]
        %v1614 = vld [vmem:[%s1567 + $0x170] sm:$0xff]
        %v1615 = vld [vmem:[%s1567 + $0x178] sm:$0xff]
        %v1616 = vld [vmem:[%s1567 + $0x180] sm:$0xf]
        %v1617 = vld [vmem:[%s1567 + $0x188] sm:$0xf]
        %1618 = vmatprep.subr.mxu0 0.0
        %1619 = vmatpush1.msra.mxu0 %v520
        %1620 = vmatprep.subr.mxu0 0.0
        %1621 = vmatpush1.msra.mxu0 %v521
        %1622 = vmatprep.subr.mxu0 0.0
        %1623 = vmatpush1.msra.mxu0 %v522
        %1624 = vmatprep.subr.mxu0 0.0
        %1625 = vmatpush1.msra.mxu0 %v523
        %1626 = vmatprep.subr.mxu0 0.0
        %1627 = vmatpush1.msra.mxu0 %v524
        %1628 = vmatprep.subr.mxu0 0.0
        %1629 = vmatpush1.msra.mxu0 %v525
        %1630 = vmatprep.subr.mxu0 0.0
        %1631 = vmatpush1.msra.mxu0 %v526
        %1632 = vmatprep.subr.mxu0 0.0
        %1633 = vmatpush1.msra.mxu0 %v527
        %1634 = vmatprep.subr.mxu0 0.0
        %1635 = vmatpush1.msra.mxu0 %v528
        %1636 = vmatprep.subr.mxu0 0.0
        %1637 = vmatpush1.msra.mxu0 %v529
        %1638 = vmatprep.subr.mxu0 0.0
        %1639 = vmatpush1.msra.mxu0 %v530
        %1640 = vmatprep.subr.mxu0 0.0
        %1641 = vmatpush1.msra.mxu0 %v531
        %1642 = vmatprep.subr.mxu0 0.0
        %1643 = vmatpush1.msra.mxu0 %v532
        %1644 = vmatprep.subr.mxu0 0.0
        %1645 = vmatpush1.msra.mxu0 %v533
        %1646 = vmatprep.subr.mxu0 0.0
        %1647 = vmatpush1.msra.mxu0 %v534
        %1648 = vmatprep.subr.mxu0 0.0
        %1649 = vmatpush1.msra.mxu0 %v535
        %1650 = vmatprep.subr.mxu0 0.0
        %1651 = vmatpush1.msra.mxu0 %v536
        %1652 = vmatprep.subr.mxu0 0.0
        %1653 = vmatpush1.msra.mxu0 %v537
        %1654 = vmatprep.subr.mxu0 0.0
        %1655 = vmatpush1.msra.mxu0 %v538
        %1656 = vmatprep.subr.mxu0 0.0
        %1657 = vmatpush1.msra.mxu0 %v539
        %1658 = vmatprep.subr.mxu0 0.0
        %1659 = vmatpush1.msra.mxu0 %v540
        %1660 = vmatprep.subr.mxu0 0.0
        %1661 = vmatpush1.msra.mxu0 %v541
        %1662 = vmatprep.subr.mxu0 0.0
        %1663 = vmatpush1.msra.mxu0 %v542
        %1664 = vmatprep.subr.mxu0 0.0
        %1665 = vmatpush1.msra.mxu0 %v543
        %1666 = vmatprep.subr.mxu0 0.0
        %1667 = vmatpush1.msra.mxu0 %v544
        %1668 = vmatprep.subr.mxu0 0.0
        %1669 = vmatpush1.msra.mxu0 %v545
        %1670 = vmatprep.subr.mxu0 0.0
        %1671 = vmatpush1.msra.mxu0 %v546
        %1672 = vmatprep.subr.mxu0 0.0
        %1673 = vmatpush1.msra.mxu0 %v547
        %1674 = vmatprep.subr.mxu0 0.0
        %1675 = vmatpush1.msra.mxu0 %v548
        %1676 = vmatprep.subr.mxu0 0.0
        %1677 = vmatpush1.msra.mxu0 %v549
        %1678 = vmatprep.subr.mxu0 0.0
        %1679 = vmatpush1.msra.mxu0 %v550
        %1680 = vmatprep.subr.mxu0 0.0
        %1681 = vmatpush1.msra.mxu0 %v551
        %1682 = vmatprep.mubr.f32.mxu0 %v1569
        %1683 = vmatmul.mubr.f32.gmra.mrb[0].mxu0 %v1568
        %v1684 = vpop.f32.mrb[0].mxu0
        %v1685 = vadd.f32 0.0, %v1684
        %v1686 = vpop.f32.mrb[0].mxu0
        %1687 = vmatprep.mubr.f32.mxu0 %v1571
        %1688 = vmatmul.mubr.f32.gmra.mrb[0].mxu0 %v1570
        %v1689 = vpop.f32.mrb[0].mxu0
        %v1690 = vadd.f32 0.0, %v1689
        %v1691 = vpop.f32.mrb[0].mxu0
        %1692 = vmatprep.mubr.f32.mxu0 %v1573
        %1693 = vmatmul.mubr.f32.gmra.mrb[0].mxu0 %v1572
        %v1694 = vpop.f32.mrb[0].mxu0
        %v1695 = vadd.f32 0.0, %v1694
        %v1696 = vpop.f32.mrb[0].mxu0
        %1697 = vmatprep.mubr.f32.mxu0 %v1575
        %1698 = vmatmul.mubr.f32.gmra.mrb[0].mxu0 %v1574
        %v1699 = vpop.f32.mrb[0].mxu0
        %v1700 = vadd.f32 0.0, %v1699
        %v1701 = vpop.f32.mrb[0].mxu0
        %1702 = vmatprep.mubr.f32.mxu0 %v1577
        %1703 = vmatmul.mubr.f32.gmra.mrb[0].mxu0 %v1576
        %v1704 = vpop.f32.mrb[0].mxu0
        %v1705 = vadd.f32 0.0, %v1704
        %v1706 = vpop.f32.mrb[0].mxu0
        %1707 = vmatprep.mubr.f32.mxu0 %v1579
        %1708 = vmatmul.mubr.f32.gmra.mrb[0].mxu0 %v1578
        %v1709 = vpop.f32.mrb[0].mxu0
        %v1710 = vadd.f32 0.0, %v1709
        %v1711 = vpop.f32.mrb[0].mxu0
        %1712 = vmatprep.mubr.f32.mxu0 %v1581
        %1713 = vmatmul.mubr.f32.gmra.mrb[0].mxu0 %v1580
        %v1714 = vpop.f32.mrb[0].mxu0
        %v1715 = vadd.f32 0.0, %v1714
        %v1716 = vpop.f32.mrb[0].mxu0
        %1717 = vmatprep.mubr.f32.mxu0 %v1583
        %1718 = vmatmul.mubr.f32.gmra.mrb[0].mxu0 %v1582
        %v1719 = vpop.f32.mrb[0].mxu0
        %v1720 = vadd.f32 0.0, %v1719
        %v1721 = vpop.f32.mrb[0].mxu0
        %1722 = vmatprep.mubr.f32.mxu0 %v1585
        %1723 = vmatmul.mubr.f32.gmra.mrb[0].mxu0 %v1584
        %v1724 = vpop.f32.mrb[0].mxu0
        %v1725 = vadd.f32 0.0, %v1724
        %v1726 = vpop.f32.mrb[0].mxu0
        %1727 = vmatprep.mubr.f32.mxu0 %v1587
        %1728 = vmatmul.mubr.f32.gmra.mrb[0].mxu0 %v1586
        %v1729 = vpop.f32.mrb[0].mxu0
        %v1730 = vadd.f32 0.0, %v1729
        %v1731 = vpop.f32.mrb[0].mxu0
        %1732 = vmatprep.mubr.f32.mxu0 %v1589
        %1733 = vmatmul.mubr.f32.gmra.mrb[0].mxu0 %v1588
        %v1734 = vpop.f32.mrb[0].mxu0
        %v1735 = vadd.f32 0.0, %v1734
        %v1736 = vpop.f32.mrb[0].mxu0
        %1737 = vmatprep.mubr.f32.mxu0 %v1591
        %1738 = vmatmul.mubr.f32.gmra.mrb[0].mxu0 %v1590
        %v1739 = vpop.f32.mrb[0].mxu0
        %v1740 = vadd.f32 0.0, %v1739
        %v1741 = vpop.f32.mrb[0].mxu0
        %1742 = vmatprep.mubr.f32.mxu0 %v1593
        %1743 = vmatmul.mubr.f32.gmra.mrb[0].mxu0 %v1592
        %v1744 = vpop.f32.mrb[0].mxu0
        %v1745 = vadd.f32 0.0, %v1744
        %v1746 = vpop.f32.mrb[0].mxu0
        %1747 = vmatprep.mubr.f32.mxu0 %v1595
        %1748 = vmatmul.mubr.f32.gmra.mrb[0].mxu0 %v1594
        %v1749 = vpop.f32.mrb[0].mxu0
        %v1750 = vadd.f32 0.0, %v1749
        %v1751 = vpop.f32.mrb[0].mxu0
        %1752 = vmatprep.mubr.f32.mxu0 %v1597
        %1753 = vmatmul.mubr.f32.gmra.mrb[0].mxu0 %v1596
        %v1754 = vpop.f32.mrb[0].mxu0
        %v1755 = vadd.f32 0.0, %v1754
        %v1756 = vpop.f32.mrb[0].mxu0
        %1757 = vmatprep.mubr.f32.mxu0 %v1599
        %1758 = vmatmul.mubr.f32.gmra.mrb[0].mxu0 %v1598
        %v1759 = vpop.f32.mrb[0].mxu0
        %v1760 = vadd.f32 0.0, %v1759
        %v1761 = vpop.f32.mrb[0].mxu0
        %1762 = vmatprep.mubr.f32.mxu0 %v1601
        %1763 = vmatmul.mubr.f32.gmra.mrb[0].mxu0 %v1600
        %v1764 = vpop.f32.mrb[0].mxu0
        %v1765 = vadd.f32 0.0, %v1764
        %v1766 = vpop.f32.mrb[0].mxu0
        %1767 = vmatprep.mubr.f32.mxu0 %v1603
        %1768 = vmatmul.mubr.f32.gmra.mrb[0].mxu0 %v1602
        %v1769 = vpop.f32.mrb[0].mxu0
        %v1770 = vadd.f32 0.0, %v1769
        %v1771 = vpop.f32.mrb[0].mxu0
        %1772 = vmatprep.mubr.f32.mxu0 %v1605
        %1773 = vmatmul.mubr.f32.gmra.mrb[0].mxu0 %v1604
        %v1774 = vpop.f32.mrb[0].mxu0
        %v1775 = vadd.f32 0.0, %v1774
        %v1776 = vpop.f32.mrb[0].mxu0
        %1777 = vmatprep.mubr.f32.mxu0 %v1607
        %1778 = vmatmul.mubr.f32.gmra.mrb[0].mxu0 %v1606
        %v1779 = vpop.f32.mrb[0].mxu0
        %v1780 = vadd.f32 0.0, %v1779
        %v1781 = vpop.f32.mrb[0].mxu0
        %1782 = vmatprep.mubr.f32.mxu0 %v1609
        %1783 = vmatmul.mubr.f32.gmra.mrb[0].mxu0 %v1608
        %v1784 = vpop.f32.mrb[0].mxu0
        %v1785 = vadd.f32 0.0, %v1784
        %v1786 = vpop.f32.mrb[0].mxu0
        %1787 = vmatprep.mubr.f32.mxu0 %v1611
        %1788 = vmatmul.mubr.f32.gmra.mrb[0].mxu0 %v1610
        %v1789 = vpop.f32.mrb[0].mxu0
        %v1790 = vadd.f32 0.0, %v1789
        %v1791 = vpop.f32.mrb[0].mxu0
        %1792 = vmatprep.mubr.f32.mxu0 %v1613
        %1793 = vmatmul.mubr.f32.gmra.mrb[0].mxu0 %v1612
        %v1794 = vpop.f32.mrb[0].mxu0
        %v1795 = vadd.f32 0.0, %v1794
        %v1796 = vpop.f32.mrb[0].mxu0
        %1797 = vmatprep.mubr.f32.mxu0 %v1615
        %1798 = vmatmul.mubr.f32.gmra.mrb[0].mxu0 %v1614
        %v1799 = vpop.f32.mrb[0].mxu0
        %v1800 = vadd.f32 0.0, %v1799
        %v1801 = vpop.f32.mrb[0].mxu0
        %1802 = vmatprep.mubr.f32.mxu0 %v1617
        %1803 = vmatmul.mubr.f32.gmra.mrb[0].mxu0 %v1616
        %v1804 = vpop.f32.mrb[0].mxu0
        %v1805 = vadd.f32 0.0, %v1804
        %v1806 = vpop.f32.mrb[0].mxu0
        %1807 = vdwg.mxu0
        %s1808 = scalar_lea.vmem %s2, 16
        %v1809 = vld [vmem:[%s1808] sm:$0xff]
        %v1811 = vsel %vm1036, %v1685, 0
        %v1814 = vsel %vm1036, %v1690, 0
        %v1817 = vsel %vm1036, %v1695, 0
        %v1820 = vsel %vm1036, %v1700, 0
        %v1823 = vsel %vm1036, %v1705, 0
        %v1826 = vsel %vm1036, %v1710, 0
        %v1829 = vsel %vm1036, %v1715, 0
        %v1832 = vsel %vm1036, %v1720, 0
        %v1835 = vsel %vm1036, %v1725, 0
        %v1838 = vsel %vm1036, %v1730, 0
        %v1841 = vsel %vm1036, %v1735, 0
        %v1844 = vsel %vm1036, %v1740, 0
        %v1847 = vsel %vm1036, %v1745, 0
        %v1850 = vsel %vm1036, %v1750, 0
        %v1853 = vsel %vm1036, %v1755, 0
        %v1856 = vsel %vm1036, %v1760, 0
        %v1859 = vsel %vm1036, %v1765, 0
        %v1862 = vsel %vm1036, %v1770, 0
        %v1865 = vsel %vm1036, %v1775, 0
        %v1868 = vsel %vm1036, %v1780, 0
        %v1871 = vsel %vm1036, %v1785, 0
        %v1874 = vsel %vm1036, %v1790, 0
        %v1877 = vsel %vm1036, %v1795, 0
        %v1880 = vsel %vm1036, %v1800, 0
        %v1883 = vsel %vm1036, %v1805, 0
        %1885 = vmatprep.subr.mxu0 0.0
        %1886 = vmatpush1.msra.mxu0 %v1809
        %1887 = vmatprep.subr.mxu0 0.0
        %1888 = vmatpush1.msra.mxu0 0.0
        %1889 = vmatprep.subr.mxu0 0.0
        %1890 = vmatpush1.msra.mxu0 0.0
        %1891 = vmatprep.subr.mxu0 0.0
        %1892 = vmatpush1.msra.mxu0 0.0
        %1893 = vmatprep.subr.mxu0 0.0
        %1894 = vmatpush1.msra.mxu0 0.0
        %1895 = vmatprep.subr.mxu0 0.0
        %1896 = vmatpush1.msra.mxu0 0.0
        %1897 = vmatprep.subr.mxu0 0.0
        %1898 = vmatpush1.msra.mxu0 0.0
        %1899 = vmatprep.subr.mxu0 0.0
        %1900 = vmatpush1.msra.mxu0 0.0
        %1901 = vmatprep.subr.mxu0 0.0
        %1902 = vmatpush1.msra.mxu0 0.0
        %1903 = vmatprep.subr.mxu0 0.0
        %1904 = vmatpush1.msra.mxu0 0.0
        %1905 = vmatprep.subr.mxu0 0.0
        %1906 = vmatpush1.msra.mxu0 0.0
        %1907 = vmatprep.subr.mxu0 0.0
        %1908 = vmatpush1.msra.mxu0 0.0
        %1909 = vmatprep.subr.mxu0 0.0
        %1910 = vmatpush1.msra.mxu0 0.0
        %1911 = vmatprep.subr.mxu0 0.0
        %1912 = vmatpush1.msra.mxu0 0.0
        %1913 = vmatprep.subr.mxu0 0.0
        %1914 = vmatpush1.msra.mxu0 0.0
        %1915 = vmatprep.subr.mxu0 0.0
        %1916 = vmatpush1.msra.mxu0 0.0
        %1917 = vmatprep.subr.mxu0 0.0
        %1918 = vmatpush1.msra.mxu0 0.0
        %1919 = vmatprep.subr.mxu0 0.0
        %1920 = vmatpush1.msra.mxu0 0.0
        %1921 = vmatprep.subr.mxu0 0.0
        %1922 = vmatpush1.msra.mxu0 0.0
        %1923 = vmatprep.subr.mxu0 0.0
        %1924 = vmatpush1.msra.mxu0 0.0
        %1925 = vmatprep.subr.mxu0 0.0
        %1926 = vmatpush1.msra.mxu0 0.0
        %1927 = vmatprep.subr.mxu0 0.0
        %1928 = vmatpush1.msra.mxu0 0.0
        %1929 = vmatprep.subr.mxu0 0.0
        %1930 = vmatpush1.msra.mxu0 0.0
        %1931 = vmatprep.subr.mxu0 0.0
        %1932 = vmatpush1.msra.mxu0 0.0
        %1933 = vmatprep.subr.mxu0 0.0
        %1934 = vmatpush1.msra.mxu0 0.0
        %1935 = vmatprep.subr.mxu0 0.0
        %1936 = vmatpush1.msra.mxu0 0.0
        %1937 = vmatprep.subr.mxu0 0.0
        %1938 = vmatpush1.msra.mxu0 0.0
        %1939 = vmatprep.subr.mxu0 0.0
        %1940 = vmatpush1.msra.mxu0 0.0
        %1941 = vmatprep.subr.mxu0 0.0
        %1942 = vmatpush1.msra.mxu0 0.0
        %1943 = vmatprep.subr.mxu0 0.0
        %1944 = vmatpush1.msra.mxu0 0.0
        %1945 = vmatprep.subr.mxu0 0.0
        %1946 = vmatpush1.msra.mxu0 0.0
        %1947 = vmatprep.subr.mxu0 0.0
        %1948 = vmatpush1.msra.mxu0 0.0
        %1949 = vmatprep.mubr.f32.mxu0 0.0
        %1950 = vmatmul.mubr.f32.gmra.mrb[0].mxu0 %v1811
        %v1951 = vpop.f32.mrb[0].mxu0
        %v1952 = vadd.f32 0.0, %v1951
        %v1953 = vpop.f32.mrb[0].mxu0
        %1954 = vmatprep.mubr.f32.mxu0 0.0
        %1955 = vmatmul.mubr.f32.gmra.mrb[0].mxu0 %v1814
        %v1956 = vpop.f32.mrb[0].mxu0
        %v1957 = vadd.f32 0.0, %v1956
        %v1958 = vpop.f32.mrb[0].mxu0
        %1959 = vmatprep.mubr.f32.mxu0 0.0
        %1960 = vmatmul.mubr.f32.gmra.mrb[0].mxu0 %v1817
        %v1961 = vpop.f32.mrb[0].mxu0
        %v1962 = vadd.f32 0.0, %v1961
        %v1963 = vpop.f32.mrb[0].mxu0
        %1964 = vmatprep.mubr.f32.mxu0 0.0
        %1965 = vmatmul.mubr.f32.gmra.mrb[0].mxu0 %v1820
        %v1966 = vpop.f32.mrb[0].mxu0
        %v1967 = vadd.f32 0.0, %v1966
        %v1968 = vpop.f32.mrb[0].mxu0
        %1969 = vmatprep.mubr.f32.mxu0 0.0
        %1970 = vmatmul.mubr.f32.gmra.mrb[0].mxu0 %v1823
        %v1971 = vpop.f32.mrb[0].mxu0
        %v1972 = vadd.f32 0.0, %v1971
        %v1973 = vpop.f32.mrb[0].mxu0
        %1974 = vmatprep.mubr.f32.mxu0 0.0
        %1975 = vmatmul.mubr.f32.gmra.mrb[0].mxu0 %v1826
        %v1976 = vpop.f32.mrb[0].mxu0
        %v1977 = vadd.f32 0.0, %v1976
        %v1978 = vpop.f32.mrb[0].mxu0
        %1979 = vmatprep.mubr.f32.mxu0 0.0
        %1980 = vmatmul.mubr.f32.gmra.mrb[0].mxu0 %v1829
        %v1981 = vpop.f32.mrb[0].mxu0
        %v1982 = vadd.f32 0.0, %v1981
        %v1983 = vpop.f32.mrb[0].mxu0
        %1984 = vmatprep.mubr.f32.mxu0 0.0
        %1985 = vmatmul.mubr.f32.gmra.mrb[0].mxu0 %v1832
        %v1986 = vpop.f32.mrb[0].mxu0
        %v1987 = vadd.f32 0.0, %v1986
        %v1988 = vpop.f32.mrb[0].mxu0
        %1989 = vmatprep.mubr.f32.mxu0 0.0
        %1990 = vmatmul.mubr.f32.gmra.mrb[0].mxu0 %v1835
        %v1991 = vpop.f32.mrb[0].mxu0
        %v1992 = vadd.f32 0.0, %v1991
        %v1993 = vpop.f32.mrb[0].mxu0
        %1994 = vmatprep.mubr.f32.mxu0 0.0
        %1995 = vmatmul.mubr.f32.gmra.mrb[0].mxu0 %v1838
        %v1996 = vpop.f32.mrb[0].mxu0
        %v1997 = vadd.f32 0.0, %v1996
        %v1998 = vpop.f32.mrb[0].mxu0
        %1999 = vmatprep.mubr.f32.mxu0 0.0
        %2000 = vmatmul.mubr.f32.gmra.mrb[0].mxu0 %v1841
        %v2001 = vpop.f32.mrb[0].mxu0
        %v2002 = vadd.f32 0.0, %v2001
        %v2003 = vpop.f32.mrb[0].mxu0
        %2004 = vmatprep.mubr.f32.mxu0 0.0
        %2005 = vmatmul.mubr.f32.gmra.mrb[0].mxu0 %v1844
        %v2006 = vpop.f32.mrb[0].mxu0
        %v2007 = vadd.f32 0.0, %v2006
        %v2008 = vpop.f32.mrb[0].mxu0
        %2009 = vmatprep.mubr.f32.mxu0 0.0
        %2010 = vmatmul.mubr.f32.gmra.mrb[0].mxu0 %v1847
        %v2011 = vpop.f32.mrb[0].mxu0
        %v2012 = vadd.f32 0.0, %v2011
        %v2013 = vpop.f32.mrb[0].mxu0
        %2014 = vmatprep.mubr.f32.mxu0 0.0
        %2015 = vmatmul.mubr.f32.gmra.mrb[0].mxu0 %v1850
        %v2016 = vpop.f32.mrb[0].mxu0
        %v2017 = vadd.f32 0.0, %v2016
        %v2018 = vpop.f32.mrb[0].mxu0
        %2019 = vmatprep.mubr.f32.mxu0 0.0
        %2020 = vmatmul.mubr.f32.gmra.mrb[0].mxu0 %v1853
        %v2021 = vpop.f32.mrb[0].mxu0
        %v2022 = vadd.f32 0.0, %v2021
        %v2023 = vpop.f32.mrb[0].mxu0
        %2024 = vmatprep.mubr.f32.mxu0 0.0
        %2025 = vmatmul.mubr.f32.gmra.mrb[0].mxu0 %v1856
        %v2026 = vpop.f32.mrb[0].mxu0
        %v2027 = vadd.f32 0.0, %v2026
        %v2028 = vpop.f32.mrb[0].mxu0
        %2029 = vmatprep.mubr.f32.mxu0 0.0
        %2030 = vmatmul.mubr.f32.gmra.mrb[0].mxu0 %v1859
        %v2031 = vpop.f32.mrb[0].mxu0
        %v2032 = vadd.f32 0.0, %v2031
        %v2033 = vpop.f32.mrb[0].mxu0
        %2034 = vmatprep.mubr.f32.mxu0 0.0
        %2035 = vmatmul.mubr.f32.gmra.mrb[0].mxu0 %v1862
        %v2036 = vpop.f32.mrb[0].mxu0
        %v2037 = vadd.f32 0.0, %v2036
        %v2038 = vpop.f32.mrb[0].mxu0
        %2039 = vmatprep.mubr.f32.mxu0 0.0
        %2040 = vmatmul.mubr.f32.gmra.mrb[0].mxu0 %v1865
        %v2041 = vpop.f32.mrb[0].mxu0
        %v2042 = vadd.f32 0.0, %v2041
        %v2043 = vpop.f32.mrb[0].mxu0
        %2044 = vmatprep.mubr.f32.mxu0 0.0
        %2045 = vmatmul.mubr.f32.gmra.mrb[0].mxu0 %v1868
        %v2046 = vpop.f32.mrb[0].mxu0
        %v2047 = vadd.f32 0.0, %v2046
        %v2048 = vpop.f32.mrb[0].mxu0
        %2049 = vmatprep.mubr.f32.mxu0 0.0
        %2050 = vmatmul.mubr.f32.gmra.mrb[0].mxu0 %v1871
        %v2051 = vpop.f32.mrb[0].mxu0
        %v2052 = vadd.f32 0.0, %v2051
        %v2053 = vpop.f32.mrb[0].mxu0
        %2054 = vmatprep.mubr.f32.mxu0 0.0
        %2055 = vmatmul.mubr.f32.gmra.mrb[0].mxu0 %v1874
        %v2056 = vpop.f32.mrb[0].mxu0
        %v2057 = vadd.f32 0.0, %v2056
        %v2058 = vpop.f32.mrb[0].mxu0
        %2059 = vmatprep.mubr.f32.mxu0 0.0
        %2060 = vmatmul.mubr.f32.gmra.mrb[0].mxu0 %v1877
        %v2061 = vpop.f32.mrb[0].mxu0
        %v2062 = vadd.f32 0.0, %v2061
        %v2063 = vpop.f32.mrb[0].mxu0
        %2064 = vmatprep.mubr.f32.mxu0 0.0
        %2065 = vmatmul.mubr.f32.gmra.mrb[0].mxu0 %v1880
        %v2066 = vpop.f32.mrb[0].mxu0
        %v2067 = vadd.f32 0.0, %v2066
        %v2068 = vpop.f32.mrb[0].mxu0
        %2069 = vmatprep.mubr.f32.mxu0 0.0
        %2070 = vmatmul.mubr.f32.gmra.mrb[0].mxu0 %v1883
        %v2071 = vpop.f32.mrb[0].mxu0
        %v2072 = vadd.f32 0.0, %v2071
        %v2073 = vpop.f32.mrb[0].mxu0
        %2074 = vdwg.mxu0
        %v2075 = vadd.f32 %v1444, %v1952
        %v2076 = vadd.f32 %v1449, %v1957
        %v2077 = vadd.f32 %v1454, %v1962
        %v2078 = vadd.f32 %v1459, %v1967
        %v2079 = vadd.f32 %v1464, %v1972
        %v2080 = vadd.f32 %v1469, %v1977
        %v2081 = vadd.f32 %v1474, %v1982
        %v2082 = vadd.f32 %v1479, %v1987
        %v2083 = vadd.f32 %v1484, %v1992
        %v2084 = vadd.f32 %v1489, %v1997
        %v2085 = vadd.f32 %v1494, %v2002
        %v2086 = vadd.f32 %v1499, %v2007
        %v2087 = vadd.f32 %v1504, %v2012
        %v2088 = vadd.f32 %v1509, %v2017
        %v2089 = vadd.f32 %v1514, %v2022
        %v2090 = vadd.f32 %v1519, %v2027
        %v2091 = vadd.f32 %v1524, %v2032
        %v2092 = vadd.f32 %v1529, %v2037
        %v2093 = vadd.f32 %v1534, %v2042
        %v2094 = vadd.f32 %v1539, %v2047
        %v2095 = vadd.f32 %v1544, %v2052
        %v2096 = vadd.f32 %v1549, %v2057
        %v2097 = vadd.f32 %v1554, %v2062
        %v2098 = vadd.f32 %v1559, %v2067
        %v2099 = vadd.f32 %v1564, %v2072
        %s2100 = scalar_lea.vmem [#allocation2], 1200
        %v2101 = vld [vmem:[%s2100] sm:$0xff]
        %v2102 = vld [vmem:[%s2100 + $0x8] sm:$0xff]
        %v2103 = vld [vmem:[%s2100 + $0x10] sm:$0xff]
        %v2104 = vld [vmem:[%s2100 + $0x18] sm:$0xff]
        %v2105 = vld [vmem:[%s2100 + $0x20] sm:$0xff]
        %v2106 = vld [vmem:[%s2100 + $0x28] sm:$0xff]
        %v2107 = vld [vmem:[%s2100 + $0x30] sm:$0xff]
        %v2108 = vld [vmem:[%s2100 + $0x38] sm:$0xff]
        %v2109 = vld [vmem:[%s2100 + $0x40] sm:$0xff]
        %v2110 = vld [vmem:[%s2100 + $0x48] sm:$0xff]
        %v2111 = vld [vmem:[%s2100 + $0x50] sm:$0xff]
        %v2112 = vld [vmem:[%s2100 + $0x58] sm:$0xff]
        %v2113 = vld [vmem:[%s2100 + $0x60] sm:$0xff]
        %v2114 = vld [vmem:[%s2100 + $0x68] sm:$0xff]
        %v2115 = vld [vmem:[%s2100 + $0x70] sm:$0xff]
        %v2116 = vld [vmem:[%s2100 + $0x78] sm:$0xff]
        %v2117 = vld [vmem:[%s2100 + $0x80] sm:$0xff]
        %v2118 = vld [vmem:[%s2100 + $0x88] sm:$0xff]
        %v2119 = vld [vmem:[%s2100 + $0x90] sm:$0xff]
        %v2120 = vld [vmem:[%s2100 + $0x98] sm:$0xff]
        %v2121 = vld [vmem:[%s2100 + $0xa0] sm:$0xff]
        %v2122 = vld [vmem:[%s2100 + $0xa8] sm:$0xff]
        %v2123 = vld [vmem:[%s2100 + $0xb0] sm:$0xff]
        %v2124 = vld [vmem:[%s2100 + $0xb8] sm:$0xff]
        %v2125 = vld [vmem:[%s2100 + $0xc0] sm:$0xff]
        %v2126 = vld [vmem:[%s2100 + $0xc8] sm:$0xff]
        %v2127 = vld [vmem:[%s2100 + $0xd0] sm:$0xff]
        %v2128 = vld [vmem:[%s2100 + $0xd8] sm:$0xff]
        %v2129 = vld [vmem:[%s2100 + $0xe0] sm:$0xff]
        %v2130 = vld [vmem:[%s2100 + $0xe8] sm:$0xff]
        %v2131 = vld [vmem:[%s2100 + $0xf0] sm:$0xff]
        %v2132 = vld [vmem:[%s2100 + $0xf8] sm:$0xff]
        %v2133 = vld [vmem:[%s2100 + $0x100] sm:$0xff]
        %v2134 = vld [vmem:[%s2100 + $0x108] sm:$0xff]
        %v2135 = vld [vmem:[%s2100 + $0x110] sm:$0xff]
        %v2136 = vld [vmem:[%s2100 + $0x118] sm:$0xff]
        %v2137 = vld [vmem:[%s2100 + $0x120] sm:$0xff]
        %v2138 = vld [vmem:[%s2100 + $0x128] sm:$0xff]
        %v2139 = vld [vmem:[%s2100 + $0x130] sm:$0xff]
        %v2140 = vld [vmem:[%s2100 + $0x138] sm:$0xff]
        %v2141 = vld [vmem:[%s2100 + $0x140] sm:$0xff]
        %v2142 = vld [vmem:[%s2100 + $0x148] sm:$0xff]
        %v2143 = vld [vmem:[%s2100 + $0x150] sm:$0xff]
        %v2144 = vld [vmem:[%s2100 + $0x158] sm:$0xff]
        %v2145 = vld [vmem:[%s2100 + $0x160] sm:$0xff]
        %v2146 = vld [vmem:[%s2100 + $0x168] sm:$0xff]
        %v2147 = vld [vmem:[%s2100 + $0x170] sm:$0xff]
        %v2148 = vld [vmem:[%s2100 + $0x178] sm:$0xff]
        %v2149 = vld [vmem:[%s2100 + $0x180] sm:$0xf]
        %v2150 = vld [vmem:[%s2100 + $0x188] sm:$0xf]
        %2151 = vmatprep.subr.mxu0 0.0
        %2152 = vmatpush1.msra.mxu0 %v520
        %2153 = vmatprep.subr.mxu0 0.0
        %2154 = vmatpush1.msra.mxu0 %v521
        %2155 = vmatprep.subr.mxu0 0.0
        %2156 = vmatpush1.msra.mxu0 %v522
        %2157 = vmatprep.subr.mxu0 0.0
        %2158 = vmatpush1.msra.mxu0 %v523
        %2159 = vmatprep.subr.mxu0 0.0
        %2160 = vmatpush1.msra.mxu0 %v524
        %2161 = vmatprep.subr.mxu0 0.0
        %2162 = vmatpush1.msra.mxu0 %v525
        %2163 = vmatprep.subr.mxu0 0.0
        %2164 = vmatpush1.msra.mxu0 %v526
        %2165 = vmatprep.subr.mxu0 0.0
        %2166 = vmatpush1.msra.mxu0 %v527
        %2167 = vmatprep.subr.mxu0 0.0
        %2168 = vmatpush1.msra.mxu0 %v528
        %2169 = vmatprep.subr.mxu0 0.0
        %2170 = vmatpush1.msra.mxu0 %v529
        %2171 = vmatprep.subr.mxu0 0.0
        %2172 = vmatpush1.msra.mxu0 %v530
        %2173 = vmatprep.subr.mxu0 0.0
        %2174 = vmatpush1.msra.mxu0 %v531
        %2175 = vmatprep.subr.mxu0 0.0
        %2176 = vmatpush1.msra.mxu0 %v532
        %2177 = vmatprep.subr.mxu0 0.0
        %2178 = vmatpush1.msra.mxu0 %v533
        %2179 = vmatprep.subr.mxu0 0.0
        %2180 = vmatpush1.msra.mxu0 %v534
        %2181 = vmatprep.subr.mxu0 0.0
        %2182 = vmatpush1.msra.mxu0 %v535
        %2183 = vmatprep.subr.mxu0 0.0
        %2184 = vmatpush1.msra.mxu0 %v536
        %2185 = vmatprep.subr.mxu0 0.0
        %2186 = vmatpush1.msra.mxu0 %v537
        %2187 = vmatprep.subr.mxu0 0.0
        %2188 = vmatpush1.msra.mxu0 %v538
        %2189 = vmatprep.subr.mxu0 0.0
        %2190 = vmatpush1.msra.mxu0 %v539
        %2191 = vmatprep.subr.mxu0 0.0
        %2192 = vmatpush1.msra.mxu0 %v540
        %2193 = vmatprep.subr.mxu0 0.0
        %2194 = vmatpush1.msra.mxu0 %v541
        %2195 = vmatprep.subr.mxu0 0.0
        %2196 = vmatpush1.msra.mxu0 %v542
        %2197 = vmatprep.subr.mxu0 0.0
        %2198 = vmatpush1.msra.mxu0 %v543
        %2199 = vmatprep.subr.mxu0 0.0
        %2200 = vmatpush1.msra.mxu0 %v544
        %2201 = vmatprep.subr.mxu0 0.0
        %2202 = vmatpush1.msra.mxu0 %v545
        %2203 = vmatprep.subr.mxu0 0.0
        %2204 = vmatpush1.msra.mxu0 %v546
        %2205 = vmatprep.subr.mxu0 0.0
        %2206 = vmatpush1.msra.mxu0 %v547
        %2207 = vmatprep.subr.mxu0 0.0
        %2208 = vmatpush1.msra.mxu0 %v548
        %2209 = vmatprep.subr.mxu0 0.0
        %2210 = vmatpush1.msra.mxu0 %v549
        %2211 = vmatprep.subr.mxu0 0.0
        %2212 = vmatpush1.msra.mxu0 %v550
        %2213 = vmatprep.subr.mxu0 0.0
        %2214 = vmatpush1.msra.mxu0 %v551
        %2215 = vmatprep.mubr.f32.mxu0 %v2102
        %2216 = vmatmul.mubr.f32.gmra.mrb[0].mxu0 %v2101
        %v2217 = vpop.f32.mrb[0].mxu0
        %v2218 = vadd.f32 0.0, %v2217
        %v2219 = vpop.f32.mrb[0].mxu0
        %2220 = vmatprep.mubr.f32.mxu0 %v2104
        %2221 = vmatmul.mubr.f32.gmra.mrb[0].mxu0 %v2103
        %v2222 = vpop.f32.mrb[0].mxu0
        %v2223 = vadd.f32 0.0, %v2222
        %v2224 = vpop.f32.mrb[0].mxu0
        %2225 = vmatprep.mubr.f32.mxu0 %v2106
        %2226 = vmatmul.mubr.f32.gmra.mrb[0].mxu0 %v2105
        %v2227 = vpop.f32.mrb[0].mxu0
        %v2228 = vadd.f32 0.0, %v2227
        %v2229 = vpop.f32.mrb[0].mxu0
        %2230 = vmatprep.mubr.f32.mxu0 %v2108
        %2231 = vmatmul.mubr.f32.gmra.mrb[0].mxu0 %v2107
        %v2232 = vpop.f32.mrb[0].mxu0
        %v2233 = vadd.f32 0.0, %v2232
        %v2234 = vpop.f32.mrb[0].mxu0
        %2235 = vmatprep.mubr.f32.mxu0 %v2110
        %2236 = vmatmul.mubr.f32.gmra.mrb[0].mxu0 %v2109
        %v2237 = vpop.f32.mrb[0].mxu0
        %v2238 = vadd.f32 0.0, %v2237
        %v2239 = vpop.f32.mrb[0].mxu0
        %2240 = vmatprep.mubr.f32.mxu0 %v2112
        %2241 = vmatmul.mubr.f32.gmra.mrb[0].mxu0 %v2111
        %v2242 = vpop.f32.mrb[0].mxu0
        %v2243 = vadd.f32 0.0, %v2242
        %v2244 = vpop.f32.mrb[0].mxu0
        %2245 = vmatprep.mubr.f32.mxu0 %v2114
        %2246 = vmatmul.mubr.f32.gmra.mrb[0].mxu0 %v2113
        %v2247 = vpop.f32.mrb[0].mxu0
        %v2248 = vadd.f32 0.0, %v2247
        %v2249 = vpop.f32.mrb[0].mxu0
        %2250 = vmatprep.mubr.f32.mxu0 %v2116
        %2251 = vmatmul.mubr.f32.gmra.mrb[0].mxu0 %v2115
        %v2252 = vpop.f32.mrb[0].mxu0
        %v2253 = vadd.f32 0.0, %v2252
        %v2254 = vpop.f32.mrb[0].mxu0
        %2255 = vmatprep.mubr.f32.mxu0 %v2118
        %2256 = vmatmul.mubr.f32.gmra.mrb[0].mxu0 %v2117
        %v2257 = vpop.f32.mrb[0].mxu0
        %v2258 = vadd.f32 0.0, %v2257
        %v2259 = vpop.f32.mrb[0].mxu0
        %2260 = vmatprep.mubr.f32.mxu0 %v2120
        %2261 = vmatmul.mubr.f32.gmra.mrb[0].mxu0 %v2119
        %v2262 = vpop.f32.mrb[0].mxu0
        %v2263 = vadd.f32 0.0, %v2262
        %v2264 = vpop.f32.mrb[0].mxu0
        %2265 = vmatprep.mubr.f32.mxu0 %v2122
        %2266 = vmatmul.mubr.f32.gmra.mrb[0].mxu0 %v2121
        %v2267 = vpop.f32.mrb[0].mxu0
        %v2268 = vadd.f32 0.0, %v2267
        %v2269 = vpop.f32.mrb[0].mxu0
        %2270 = vmatprep.mubr.f32.mxu0 %v2124
        %2271 = vmatmul.mubr.f32.gmra.mrb[0].mxu0 %v2123
        %v2272 = vpop.f32.mrb[0].mxu0
        %v2273 = vadd.f32 0.0, %v2272
        %v2274 = vpop.f32.mrb[0].mxu0
        %2275 = vmatprep.mubr.f32.mxu0 %v2126
        %2276 = vmatmul.mubr.f32.gmra.mrb[0].mxu0 %v2125
        %v2277 = vpop.f32.mrb[0].mxu0
        %v2278 = vadd.f32 0.0, %v2277
        %v2279 = vpop.f32.mrb[0].mxu0
        %2280 = vmatprep.mubr.f32.mxu0 %v2128
        %2281 = vmatmul.mubr.f32.gmra.mrb[0].mxu0 %v2127
        %v2282 = vpop.f32.mrb[0].mxu0
        %v2283 = vadd.f32 0.0, %v2282
        %v2284 = vpop.f32.mrb[0].mxu0
        %2285 = vmatprep.mubr.f32.mxu0 %v2130
        %2286 = vmatmul.mubr.f32.gmra.mrb[0].mxu0 %v2129
        %v2287 = vpop.f32.mrb[0].mxu0
        %v2288 = vadd.f32 0.0, %v2287
        %v2289 = vpop.f32.mrb[0].mxu0
        %2290 = vmatprep.mubr.f32.mxu0 %v2132
        %2291 = vmatmul.mubr.f32.gmra.mrb[0].mxu0 %v2131
        %v2292 = vpop.f32.mrb[0].mxu0
        %v2293 = vadd.f32 0.0, %v2292
        %v2294 = vpop.f32.mrb[0].mxu0
        %2295 = vmatprep.mubr.f32.mxu0 %v2134
        %2296 = vmatmul.mubr.f32.gmra.mrb[0].mxu0 %v2133
        %v2297 = vpop.f32.mrb[0].mxu0
        %v2298 = vadd.f32 0.0, %v2297
        %v2299 = vpop.f32.mrb[0].mxu0
        %2300 = vmatprep.mubr.f32.mxu0 %v2136
        %2301 = vmatmul.mubr.f32.gmra.mrb[0].mxu0 %v2135
        %v2302 = vpop.f32.mrb[0].mxu0
        %v2303 = vadd.f32 0.0, %v2302
        %v2304 = vpop.f32.mrb[0].mxu0
        %2305 = vmatprep.mubr.f32.mxu0 %v2138
        %2306 = vmatmul.mubr.f32.gmra.mrb[0].mxu0 %v2137
        %v2307 = vpop.f32.mrb[0].mxu0
        %v2308 = vadd.f32 0.0, %v2307
        %v2309 = vpop.f32.mrb[0].mxu0
        %2310 = vmatprep.mubr.f32.mxu0 %v2140
        %2311 = vmatmul.mubr.f32.gmra.mrb[0].mxu0 %v2139
        %v2312 = vpop.f32.mrb[0].mxu0
        %v2313 = vadd.f32 0.0, %v2312
        %v2314 = vpop.f32.mrb[0].mxu0
        %2315 = vmatprep.mubr.f32.mxu0 %v2142
        %2316 = vmatmul.mubr.f32.gmra.mrb[0].mxu0 %v2141
        %v2317 = vpop.f32.mrb[0].mxu0
        %v2318 = vadd.f32 0.0, %v2317
        %v2319 = vpop.f32.mrb[0].mxu0
        %2320 = vmatprep.mubr.f32.mxu0 %v2144
        %2321 = vmatmul.mubr.f32.gmra.mrb[0].mxu0 %v2143
        %v2322 = vpop.f32.mrb[0].mxu0
        %v2323 = vadd.f32 0.0, %v2322
        %v2324 = vpop.f32.mrb[0].mxu0
        %2325 = vmatprep.mubr.f32.mxu0 %v2146
        %2326 = vmatmul.mubr.f32.gmra.mrb[0].mxu0 %v2145
        %v2327 = vpop.f32.mrb[0].mxu0
        %v2328 = vadd.f32 0.0, %v2327
        %v2329 = vpop.f32.mrb[0].mxu0
        %2330 = vmatprep.mubr.f32.mxu0 %v2148
        %2331 = vmatmul.mubr.f32.gmra.mrb[0].mxu0 %v2147
        %v2332 = vpop.f32.mrb[0].mxu0
        %v2333 = vadd.f32 0.0, %v2332
        %v2334 = vpop.f32.mrb[0].mxu0
        %2335 = vmatprep.mubr.f32.mxu0 %v2150
        %2336 = vmatmul.mubr.f32.gmra.mrb[0].mxu0 %v2149
        %v2337 = vpop.f32.mrb[0].mxu0
        %v2338 = vadd.f32 0.0, %v2337
        %v2339 = vpop.f32.mrb[0].mxu0
        %2340 = vdwg.mxu0
        %s2341 = scalar_lea.vmem %s2, 24
        %v2342 = vld [vmem:[%s2341] sm:$0xff]
        %v2344 = vsel %vm1036, %v2218, 0
        %v2347 = vsel %vm1036, %v2223, 0
        %v2350 = vsel %vm1036, %v2228, 0
        %v2353 = vsel %vm1036, %v2233, 0
        %v2356 = vsel %vm1036, %v2238, 0
        %v2359 = vsel %vm1036, %v2243, 0
        %v2362 = vsel %vm1036, %v2248, 0
        %v2365 = vsel %vm1036, %v2253, 0
        %v2368 = vsel %vm1036, %v2258, 0
        %v2371 = vsel %vm1036, %v2263, 0
        %v2374 = vsel %vm1036, %v2268, 0
        %v2377 = vsel %vm1036, %v2273, 0
        %v2380 = vsel %vm1036, %v2278, 0
        %v2383 = vsel %vm1036, %v2283, 0
        %v2386 = vsel %vm1036, %v2288, 0
        %v2389 = vsel %vm1036, %v2293, 0
        %v2392 = vsel %vm1036, %v2298, 0
        %v2395 = vsel %vm1036, %v2303, 0
        %v2398 = vsel %vm1036, %v2308, 0
        %v2401 = vsel %vm1036, %v2313, 0
        %v2404 = vsel %vm1036, %v2318, 0
        %v2407 = vsel %vm1036, %v2323, 0
        %v2410 = vsel %vm1036, %v2328, 0
        %v2413 = vsel %vm1036, %v2333, 0
        %v2416 = vsel %vm1036, %v2338, 0
        %2418 = vmatprep.subr.mxu0 0.0
        %2419 = vmatpush1.msra.mxu0 %v2342
        %2420 = vmatprep.subr.mxu0 0.0
        %2421 = vmatpush1.msra.mxu0 0.0
        %2422 = vmatprep.subr.mxu0 0.0
        %2423 = vmatpush1.msra.mxu0 0.0
        %2424 = vmatprep.subr.mxu0 0.0
        %2425 = vmatpush1.msra.mxu0 0.0
        %2426 = vmatprep.subr.mxu0 0.0
        %2427 = vmatpush1.msra.mxu0 0.0
        %2428 = vmatprep.subr.mxu0 0.0
        %2429 = vmatpush1.msra.mxu0 0.0
        %2430 = vmatprep.subr.mxu0 0.0
        %2431 = vmatpush1.msra.mxu0 0.0
        %2432 = vmatprep.subr.mxu0 0.0
        %2433 = vmatpush1.msra.mxu0 0.0
        %2434 = vmatprep.subr.mxu0 0.0
        %2435 = vmatpush1.msra.mxu0 0.0
        %2436 = vmatprep.subr.mxu0 0.0
        %2437 = vmatpush1.msra.mxu0 0.0
        %2438 = vmatprep.subr.mxu0 0.0
        %2439 = vmatpush1.msra.mxu0 0.0
        %2440 = vmatprep.subr.mxu0 0.0
        %2441 = vmatpush1.msra.mxu0 0.0
        %2442 = vmatprep.subr.mxu0 0.0
        %2443 = vmatpush1.msra.mxu0 0.0
        %2444 = vmatprep.subr.mxu0 0.0
        %2445 = vmatpush1.msra.mxu0 0.0
        %2446 = vmatprep.subr.mxu0 0.0
        %2447 = vmatpush1.msra.mxu0 0.0
        %2448 = vmatprep.subr.mxu0 0.0
        %2449 = vmatpush1.msra.mxu0 0.0
        %2450 = vmatprep.subr.mxu0 0.0
        %2451 = vmatpush1.msra.mxu0 0.0
        %2452 = vmatprep.subr.mxu0 0.0
        %2453 = vmatpush1.msra.mxu0 0.0
        %2454 = vmatprep.subr.mxu0 0.0
        %2455 = vmatpush1.msra.mxu0 0.0
        %2456 = vmatprep.subr.mxu0 0.0
        %2457 = vmatpush1.msra.mxu0 0.0
        %2458 = vmatprep.subr.mxu0 0.0
        %2459 = vmatpush1.msra.mxu0 0.0
        %2460 = vmatprep.subr.mxu0 0.0
        %2461 = vmatpush1.msra.mxu0 0.0
        %2462 = vmatprep.subr.mxu0 0.0
        %2463 = vmatpush1.msra.mxu0 0.0
        %2464 = vmatprep.subr.mxu0 0.0
        %2465 = vmatpush1.msra.mxu0 0.0
        %2466 = vmatprep.subr.mxu0 0.0
        %2467 = vmatpush1.msra.mxu0 0.0
        %2468 = vmatprep.subr.mxu0 0.0
        %2469 = vmatpush1.msra.mxu0 0.0
        %2470 = vmatprep.subr.mxu0 0.0
        %2471 = vmatpush1.msra.mxu0 0.0
        %2472 = vmatprep.subr.mxu0 0.0
        %2473 = vmatpush1.msra.mxu0 0.0
        %2474 = vmatprep.subr.mxu0 0.0
        %2475 = vmatpush1.msra.mxu0 0.0
        %2476 = vmatprep.subr.mxu0 0.0
        %2477 = vmatpush1.msra.mxu0 0.0
        %2478 = vmatprep.subr.mxu0 0.0
        %2479 = vmatpush1.msra.mxu0 0.0
        %2480 = vmatprep.subr.mxu0 0.0
        %2481 = vmatpush1.msra.mxu0 0.0
        %2482 = vmatprep.mubr.f32.mxu0 0.0
        %2483 = vmatmul.mubr.f32.gmra.mrb[0].mxu0 %v2344
        %v2484 = vpop.f32.mrb[0].mxu0
        %v2485 = vadd.f32 0.0, %v2484
        %v2486 = vpop.f32.mrb[0].mxu0
        %2487 = vmatprep.mubr.f32.mxu0 0.0
        %2488 = vmatmul.mubr.f32.gmra.mrb[0].mxu0 %v2347
        %v2489 = vpop.f32.mrb[0].mxu0
        %v2490 = vadd.f32 0.0, %v2489
        %v2491 = vpop.f32.mrb[0].mxu0
        %2492 = vmatprep.mubr.f32.mxu0 0.0
        %2493 = vmatmul.mubr.f32.gmra.mrb[0].mxu0 %v2350
        %v2494 = vpop.f32.mrb[0].mxu0
        %v2495 = vadd.f32 0.0, %v2494
        %v2496 = vpop.f32.mrb[0].mxu0
        %2497 = vmatprep.mubr.f32.mxu0 0.0
        %2498 = vmatmul.mubr.f32.gmra.mrb[0].mxu0 %v2353
        %v2499 = vpop.f32.mrb[0].mxu0
        %v2500 = vadd.f32 0.0, %v2499
        %v2501 = vpop.f32.mrb[0].mxu0
        %2502 = vmatprep.mubr.f32.mxu0 0.0
        %2503 = vmatmul.mubr.f32.gmra.mrb[0].mxu0 %v2356
        %v2504 = vpop.f32.mrb[0].mxu0
        %v2505 = vadd.f32 0.0, %v2504
        %v2506 = vpop.f32.mrb[0].mxu0
        %2507 = vmatprep.mubr.f32.mxu0 0.0
        %2508 = vmatmul.mubr.f32.gmra.mrb[0].mxu0 %v2359
        %v2509 = vpop.f32.mrb[0].mxu0
        %v2510 = vadd.f32 0.0, %v2509
        %v2511 = vpop.f32.mrb[0].mxu0
        %2512 = vmatprep.mubr.f32.mxu0 0.0
        %2513 = vmatmul.mubr.f32.gmra.mrb[0].mxu0 %v2362
        %v2514 = vpop.f32.mrb[0].mxu0
        %v2515 = vadd.f32 0.0, %v2514
        %v2516 = vpop.f32.mrb[0].mxu0
        %2517 = vmatprep.mubr.f32.mxu0 0.0
        %2518 = vmatmul.mubr.f32.gmra.mrb[0].mxu0 %v2365
        %v2519 = vpop.f32.mrb[0].mxu0
        %v2520 = vadd.f32 0.0, %v2519
        %v2521 = vpop.f32.mrb[0].mxu0
        %2522 = vmatprep.mubr.f32.mxu0 0.0
        %2523 = vmatmul.mubr.f32.gmra.mrb[0].mxu0 %v2368
        %v2524 = vpop.f32.mrb[0].mxu0
        %v2525 = vadd.f32 0.0, %v2524
        %v2526 = vpop.f32.mrb[0].mxu0
        %2527 = vmatprep.mubr.f32.mxu0 0.0
        %2528 = vmatmul.mubr.f32.gmra.mrb[0].mxu0 %v2371
        %v2529 = vpop.f32.mrb[0].mxu0
        %v2530 = vadd.f32 0.0, %v2529
        %v2531 = vpop.f32.mrb[0].mxu0
        %2532 = vmatprep.mubr.f32.mxu0 0.0
        %2533 = vmatmul.mubr.f32.gmra.mrb[0].mxu0 %v2374
        %v2534 = vpop.f32.mrb[0].mxu0
        %v2535 = vadd.f32 0.0, %v2534
        %v2536 = vpop.f32.mrb[0].mxu0
        %2537 = vmatprep.mubr.f32.mxu0 0.0
        %2538 = vmatmul.mubr.f32.gmra.mrb[0].mxu0 %v2377
        %v2539 = vpop.f32.mrb[0].mxu0
        %v2540 = vadd.f32 0.0, %v2539
        %v2541 = vpop.f32.mrb[0].mxu0
        %2542 = vmatprep.mubr.f32.mxu0 0.0
        %2543 = vmatmul.mubr.f32.gmra.mrb[0].mxu0 %v2380
        %v2544 = vpop.f32.mrb[0].mxu0
        %v2545 = vadd.f32 0.0, %v2544
        %v2546 = vpop.f32.mrb[0].mxu0
        %2547 = vmatprep.mubr.f32.mxu0 0.0
        %2548 = vmatmul.mubr.f32.gmra.mrb[0].mxu0 %v2383
        %v2549 = vpop.f32.mrb[0].mxu0
        %v2550 = vadd.f32 0.0, %v2549
        %v2551 = vpop.f32.mrb[0].mxu0
        %2552 = vmatprep.mubr.f32.mxu0 0.0
        %2553 = vmatmul.mubr.f32.gmra.mrb[0].mxu0 %v2386
        %v2554 = vpop.f32.mrb[0].mxu0
        %v2555 = vadd.f32 0.0, %v2554
        %v2556 = vpop.f32.mrb[0].mxu0
        %2557 = vmatprep.mubr.f32.mxu0 0.0
        %2558 = vmatmul.mubr.f32.gmra.mrb[0].mxu0 %v2389
        %v2559 = vpop.f32.mrb[0].mxu0
        %v2560 = vadd.f32 0.0, %v2559
        %v2561 = vpop.f32.mrb[0].mxu0
        %2562 = vmatprep.mubr.f32.mxu0 0.0
        %2563 = vmatmul.mubr.f32.gmra.mrb[0].mxu0 %v2392
        %v2564 = vpop.f32.mrb[0].mxu0
        %v2565 = vadd.f32 0.0, %v2564
        %v2566 = vpop.f32.mrb[0].mxu0
        %2567 = vmatprep.mubr.f32.mxu0 0.0
        %2568 = vmatmul.mubr.f32.gmra.mrb[0].mxu0 %v2395
        %v2569 = vpop.f32.mrb[0].mxu0
        %v2570 = vadd.f32 0.0, %v2569
        %v2571 = vpop.f32.mrb[0].mxu0
        %2572 = vmatprep.mubr.f32.mxu0 0.0
        %2573 = vmatmul.mubr.f32.gmra.mrb[0].mxu0 %v2398
        %v2574 = vpop.f32.mrb[0].mxu0
        %v2575 = vadd.f32 0.0, %v2574
        %v2576 = vpop.f32.mrb[0].mxu0
        %2577 = vmatprep.mubr.f32.mxu0 0.0
        %2578 = vmatmul.mubr.f32.gmra.mrb[0].mxu0 %v2401
        %v2579 = vpop.f32.mrb[0].mxu0
        %v2580 = vadd.f32 0.0, %v2579
        %v2581 = vpop.f32.mrb[0].mxu0
        %2582 = vmatprep.mubr.f32.mxu0 0.0
        %2583 = vmatmul.mubr.f32.gmra.mrb[0].mxu0 %v2404
        %v2584 = vpop.f32.mrb[0].mxu0
        %v2585 = vadd.f32 0.0, %v2584
        %v2586 = vpop.f32.mrb[0].mxu0
        %2587 = vmatprep.mubr.f32.mxu0 0.0
        %2588 = vmatmul.mubr.f32.gmra.mrb[0].mxu0 %v2407
        %v2589 = vpop.f32.mrb[0].mxu0
        %v2590 = vadd.f32 0.0, %v2589
        %v2591 = vpop.f32.mrb[0].mxu0
        %2592 = vmatprep.mubr.f32.mxu0 0.0
        %2593 = vmatmul.mubr.f32.gmra.mrb[0].mxu0 %v2410
        %v2594 = vpop.f32.mrb[0].mxu0
        %v2595 = vadd.f32 0.0, %v2594
        %v2596 = vpop.f32.mrb[0].mxu0
        %2597 = vmatprep.mubr.f32.mxu0 0.0
        %2598 = vmatmul.mubr.f32.gmra.mrb[0].mxu0 %v2413
        %v2599 = vpop.f32.mrb[0].mxu0
        %v2600 = vadd.f32 0.0, %v2599
        %v2601 = vpop.f32.mrb[0].mxu0
        %2602 = vmatprep.mubr.f32.mxu0 0.0
        %2603 = vmatmul.mubr.f32.gmra.mrb[0].mxu0 %v2416
        %v2604 = vpop.f32.mrb[0].mxu0
        %v2605 = vadd.f32 0.0, %v2604
        %v2606 = vpop.f32.mrb[0].mxu0
        %2607 = vdwg.mxu0
        %v2608 = vadd.f32 %v2075, %v2485
        %v2609 = vadd.f32 %v2076, %v2490
        %v2610 = vadd.f32 %v2077, %v2495
        %v2611 = vadd.f32 %v2078, %v2500
        %v2612 = vadd.f32 %v2079, %v2505
        %v2613 = vadd.f32 %v2080, %v2510
        %v2614 = vadd.f32 %v2081, %v2515
        %v2615 = vadd.f32 %v2082, %v2520
        %v2616 = vadd.f32 %v2083, %v2525
        %v2617 = vadd.f32 %v2084, %v2530
        %v2618 = vadd.f32 %v2085, %v2535
        %v2619 = vadd.f32 %v2086, %v2540
        %v2620 = vadd.f32 %v2087, %v2545
        %v2621 = vadd.f32 %v2088, %v2550
        %v2622 = vadd.f32 %v2089, %v2555
        %v2623 = vadd.f32 %v2090, %v2560
        %v2624 = vadd.f32 %v2091, %v2565
        %v2625 = vadd.f32 %v2092, %v2570
        %v2626 = vadd.f32 %v2093, %v2575
        %v2627 = vadd.f32 %v2094, %v2580
        %v2628 = vadd.f32 %v2095, %v2585
        %v2629 = vadd.f32 %v2096, %v2590
        %v2630 = vadd.f32 %v2097, %v2595
        %v2631 = vadd.f32 %v2098, %v2600
        %v2632 = vadd.f32 %v2099, %v2605
        %s2633 = scalar_lea.vmem [#allocation2], 1600
        %v2634 = vld [vmem:[%s2633] sm:$0xff]
        %v2635 = vld [vmem:[%s2633 + $0x8] sm:$0xff]
        %v2636 = vld [vmem:[%s2633 + $0x10] sm:$0xff]
        %v2637 = vld [vmem:[%s2633 + $0x18] sm:$0xff]
        %v2638 = vld [vmem:[%s2633 + $0x20] sm:$0xff]
        %v2639 = vld [vmem:[%s2633 + $0x28] sm:$0xff]
        %v2640 = vld [vmem:[%s2633 + $0x30] sm:$0xff]
        %v2641 = vld [vmem:[%s2633 + $0x38] sm:$0xff]
        %v2642 = vld [vmem:[%s2633 + $0x40] sm:$0xff]
        %v2643 = vld [vmem:[%s2633 + $0x48] sm:$0xff]
        %v2644 = vld [vmem:[%s2633 + $0x50] sm:$0xff]
        %v2645 = vld [vmem:[%s2633 + $0x58] sm:$0xff]
        %v2646 = vld [vmem:[%s2633 + $0x60] sm:$0xff]
        %v2647 = vld [vmem:[%s2633 + $0x68] sm:$0xff]
        %v2648 = vld [vmem:[%s2633 + $0x70] sm:$0xff]
        %v2649 = vld [vmem:[%s2633 + $0x78] sm:$0xff]
        %v2650 = vld [vmem:[%s2633 + $0x80] sm:$0xff]
        %v2651 = vld [vmem:[%s2633 + $0x88] sm:$0xff]
        %v2652 = vld [vmem:[%s2633 + $0x90] sm:$0xff]
        %v2653 = vld [vmem:[%s2633 + $0x98] sm:$0xff]
        %v2654 = vld [vmem:[%s2633 + $0xa0] sm:$0xff]
        %v2655 = vld [vmem:[%s2633 + $0xa8] sm:$0xff]
        %v2656 = vld [vmem:[%s2633 + $0xb0] sm:$0xff]
        %v2657 = vld [vmem:[%s2633 + $0xb8] sm:$0xff]
        %v2658 = vld [vmem:[%s2633 + $0xc0] sm:$0xff]
        %v2659 = vld [vmem:[%s2633 + $0xc8] sm:$0xff]
        %v2660 = vld [vmem:[%s2633 + $0xd0] sm:$0xff]
        %v2661 = vld [vmem:[%s2633 + $0xd8] sm:$0xff]
        %v2662 = vld [vmem:[%s2633 + $0xe0] sm:$0xff]
        %v2663 = vld [vmem:[%s2633 + $0xe8] sm:$0xff]
        %v2664 = vld [vmem:[%s2633 + $0xf0] sm:$0xff]
        %v2665 = vld [vmem:[%s2633 + $0xf8] sm:$0xff]
        %v2666 = vld [vmem:[%s2633 + $0x100] sm:$0xff]
        %v2667 = vld [vmem:[%s2633 + $0x108] sm:$0xff]
        %v2668 = vld [vmem:[%s2633 + $0x110] sm:$0xff]
        %v2669 = vld [vmem:[%s2633 + $0x118] sm:$0xff]
        %v2670 = vld [vmem:[%s2633 + $0x120] sm:$0xff]
        %v2671 = vld [vmem:[%s2633 + $0x128] sm:$0xff]
        %v2672 = vld [vmem:[%s2633 + $0x130] sm:$0xff]
        %v2673 = vld [vmem:[%s2633 + $0x138] sm:$0xff]
        %v2674 = vld [vmem:[%s2633 + $0x140] sm:$0xff]
        %v2675 = vld [vmem:[%s2633 + $0x148] sm:$0xff]
        %v2676 = vld [vmem:[%s2633 + $0x150] sm:$0xff]
        %v2677 = vld [vmem:[%s2633 + $0x158] sm:$0xff]
        %v2678 = vld [vmem:[%s2633 + $0x160] sm:$0xff]
        %v2679 = vld [vmem:[%s2633 + $0x168] sm:$0xff]
        %v2680 = vld [vmem:[%s2633 + $0x170] sm:$0xff]
        %v2681 = vld [vmem:[%s2633 + $0x178] sm:$0xff]
        %v2682 = vld [vmem:[%s2633 + $0x180] sm:$0xf]
        %v2683 = vld [vmem:[%s2633 + $0x188] sm:$0xf]
        %2684 = vmatprep.subr.mxu0 0.0
        %2685 = vmatpush1.msra.mxu0 %v520
        %2686 = vmatprep.subr.mxu0 0.0
        %2687 = vmatpush1.msra.mxu0 %v521
        %2688 = vmatprep.subr.mxu0 0.0
        %2689 = vmatpush1.msra.mxu0 %v522
        %2690 = vmatprep.subr.mxu0 0.0
        %2691 = vmatpush1.msra.mxu0 %v523
        %2692 = vmatprep.subr.mxu0 0.0
        %2693 = vmatpush1.msra.mxu0 %v524
        %2694 = vmatprep.subr.mxu0 0.0
        %2695 = vmatpush1.msra.mxu0 %v525
        %2696 = vmatprep.subr.mxu0 0.0
        %2697 = vmatpush1.msra.mxu0 %v526
        %2698 = vmatprep.subr.mxu0 0.0
        %2699 = vmatpush1.msra.mxu0 %v527
        %2700 = vmatprep.subr.mxu0 0.0
        %2701 = vmatpush1.msra.mxu0 %v528
        %2702 = vmatprep.subr.mxu0 0.0
        %2703 = vmatpush1.msra.mxu0 %v529
        %2704 = vmatprep.subr.mxu0 0.0
        %2705 = vmatpush1.msra.mxu0 %v530
        %2706 = vmatprep.subr.mxu0 0.0
        %2707 = vmatpush1.msra.mxu0 %v531
        %2708 = vmatprep.subr.mxu0 0.0
        %2709 = vmatpush1.msra.mxu0 %v532
        %2710 = vmatprep.subr.mxu0 0.0
        %2711 = vmatpush1.msra.mxu0 %v533
        %2712 = vmatprep.subr.mxu0 0.0
        %2713 = vmatpush1.msra.mxu0 %v534
        %2714 = vmatprep.subr.mxu0 0.0
        %2715 = vmatpush1.msra.mxu0 %v535
        %2716 = vmatprep.subr.mxu0 0.0
        %2717 = vmatpush1.msra.mxu0 %v536
        %2718 = vmatprep.subr.mxu0 0.0
        %2719 = vmatpush1.msra.mxu0 %v537
        %2720 = vmatprep.subr.mxu0 0.0
        %2721 = vmatpush1.msra.mxu0 %v538
        %2722 = vmatprep.subr.mxu0 0.0
        %2723 = vmatpush1.msra.mxu0 %v539
        %2724 = vmatprep.subr.mxu0 0.0
        %2725 = vmatpush1.msra.mxu0 %v540
        %2726 = vmatprep.subr.mxu0 0.0
        %2727 = vmatpush1.msra.mxu0 %v541
        %2728 = vmatprep.subr.mxu0 0.0
        %2729 = vmatpush1.msra.mxu0 %v542
        %2730 = vmatprep.subr.mxu0 0.0
        %2731 = vmatpush1.msra.mxu0 %v543
        %2732 = vmatprep.subr.mxu0 0.0
        %2733 = vmatpush1.msra.mxu0 %v544
        %2734 = vmatprep.subr.mxu0 0.0
        %2735 = vmatpush1.msra.mxu0 %v545
        %2736 = vmatprep.subr.mxu0 0.0
        %2737 = vmatpush1.msra.mxu0 %v546
        %2738 = vmatprep.subr.mxu0 0.0
        %2739 = vmatpush1.msra.mxu0 %v547
        %2740 = vmatprep.subr.mxu0 0.0
        %2741 = vmatpush1.msra.mxu0 %v548
        %2742 = vmatprep.subr.mxu0 0.0
        %2743 = vmatpush1.msra.mxu0 %v549
        %2744 = vmatprep.subr.mxu0 0.0
        %2745 = vmatpush1.msra.mxu0 %v550
        %2746 = vmatprep.subr.mxu0 0.0
        %2747 = vmatpush1.msra.mxu0 %v551
        %2748 = vmatprep.mubr.f32.mxu0 %v2635
        %2749 = vmatmul.mubr.f32.gmra.mrb[0].mxu0 %v2634
        %v2750 = vpop.f32.mrb[0].mxu0
        %v2751 = vadd.f32 0.0, %v2750
        %v2752 = vpop.f32.mrb[0].mxu0
        %2753 = vmatprep.mubr.f32.mxu0 %v2637
        %2754 = vmatmul.mubr.f32.gmra.mrb[0].mxu0 %v2636
        %v2755 = vpop.f32.mrb[0].mxu0
        %v2756 = vadd.f32 0.0, %v2755
        %v2757 = vpop.f32.mrb[0].mxu0
        %2758 = vmatprep.mubr.f32.mxu0 %v2639
        %2759 = vmatmul.mubr.f32.gmra.mrb[0].mxu0 %v2638
        %v2760 = vpop.f32.mrb[0].mxu0
        %v2761 = vadd.f32 0.0, %v2760
        %v2762 = vpop.f32.mrb[0].mxu0
        %2763 = vmatprep.mubr.f32.mxu0 %v2641
        %2764 = vmatmul.mubr.f32.gmra.mrb[0].mxu0 %v2640
        %v2765 = vpop.f32.mrb[0].mxu0
        %v2766 = vadd.f32 0.0, %v2765
        %v2767 = vpop.f32.mrb[0].mxu0
        %2768 = vmatprep.mubr.f32.mxu0 %v2643
        %2769 = vmatmul.mubr.f32.gmra.mrb[0].mxu0 %v2642
        %v2770 = vpop.f32.mrb[0].mxu0
        %v2771 = vadd.f32 0.0, %v2770
        %v2772 = vpop.f32.mrb[0].mxu0
        %2773 = vmatprep.mubr.f32.mxu0 %v2645
        %2774 = vmatmul.mubr.f32.gmra.mrb[0].mxu0 %v2644
        %v2775 = vpop.f32.mrb[0].mxu0
        %v2776 = vadd.f32 0.0, %v2775
        %v2777 = vpop.f32.mrb[0].mxu0
        %2778 = vmatprep.mubr.f32.mxu0 %v2647
        %2779 = vmatmul.mubr.f32.gmra.mrb[0].mxu0 %v2646
        %v2780 = vpop.f32.mrb[0].mxu0
        %v2781 = vadd.f32 0.0, %v2780
        %v2782 = vpop.f32.mrb[0].mxu0
        %2783 = vmatprep.mubr.f32.mxu0 %v2649
        %2784 = vmatmul.mubr.f32.gmra.mrb[0].mxu0 %v2648
        %v2785 = vpop.f32.mrb[0].mxu0
        %v2786 = vadd.f32 0.0, %v2785
        %v2787 = vpop.f32.mrb[0].mxu0
        %2788 = vmatprep.mubr.f32.mxu0 %v2651
        %2789 = vmatmul.mubr.f32.gmra.mrb[0].mxu0 %v2650
        %v2790 = vpop.f32.mrb[0].mxu0
        %v2791 = vadd.f32 0.0, %v2790
        %v2792 = vpop.f32.mrb[0].mxu0
        %2793 = vmatprep.mubr.f32.mxu0 %v2653
        %2794 = vmatmul.mubr.f32.gmra.mrb[0].mxu0 %v2652
        %v2795 = vpop.f32.mrb[0].mxu0
        %v2796 = vadd.f32 0.0, %v2795
        %v2797 = vpop.f32.mrb[0].mxu0
        %2798 = vmatprep.mubr.f32.mxu0 %v2655
        %2799 = vmatmul.mubr.f32.gmra.mrb[0].mxu0 %v2654
        %v2800 = vpop.f32.mrb[0].mxu0
        %v2801 = vadd.f32 0.0, %v2800
        %v2802 = vpop.f32.mrb[0].mxu0
        %2803 = vmatprep.mubr.f32.mxu0 %v2657
        %2804 = vmatmul.mubr.f32.gmra.mrb[0].mxu0 %v2656
        %v2805 = vpop.f32.mrb[0].mxu0
        %v2806 = vadd.f32 0.0, %v2805
        %v2807 = vpop.f32.mrb[0].mxu0
        %2808 = vmatprep.mubr.f32.mxu0 %v2659
        %2809 = vmatmul.mubr.f32.gmra.mrb[0].mxu0 %v2658
        %v2810 = vpop.f32.mrb[0].mxu0
        %v2811 = vadd.f32 0.0, %v2810
        %v2812 = vpop.f32.mrb[0].mxu0
        %2813 = vmatprep.mubr.f32.mxu0 %v2661
        %2814 = vmatmul.mubr.f32.gmra.mrb[0].mxu0 %v2660
        %v2815 = vpop.f32.mrb[0].mxu0
        %v2816 = vadd.f32 0.0, %v2815
        %v2817 = vpop.f32.mrb[0].mxu0
        %2818 = vmatprep.mubr.f32.mxu0 %v2663
        %2819 = vmatmul.mubr.f32.gmra.mrb[0].mxu0 %v2662
        %v2820 = vpop.f32.mrb[0].mxu0
        %v2821 = vadd.f32 0.0, %v2820
        %v2822 = vpop.f32.mrb[0].mxu0
        %2823 = vmatprep.mubr.f32.mxu0 %v2665
        %2824 = vmatmul.mubr.f32.gmra.mrb[0].mxu0 %v2664
        %v2825 = vpop.f32.mrb[0].mxu0
        %v2826 = vadd.f32 0.0, %v2825
        %v2827 = vpop.f32.mrb[0].mxu0
        %2828 = vmatprep.mubr.f32.mxu0 %v2667
        %2829 = vmatmul.mubr.f32.gmra.mrb[0].mxu0 %v2666
        %v2830 = vpop.f32.mrb[0].mxu0
        %v2831 = vadd.f32 0.0, %v2830
        %v2832 = vpop.f32.mrb[0].mxu0
        %2833 = vmatprep.mubr.f32.mxu0 %v2669
        %2834 = vmatmul.mubr.f32.gmra.mrb[0].mxu0 %v2668
        %v2835 = vpop.f32.mrb[0].mxu0
        %v2836 = vadd.f32 0.0, %v2835
        %v2837 = vpop.f32.mrb[0].mxu0
        %2838 = vmatprep.mubr.f32.mxu0 %v2671
        %2839 = vmatmul.mubr.f32.gmra.mrb[0].mxu0 %v2670
        %v2840 = vpop.f32.mrb[0].mxu0
        %v2841 = vadd.f32 0.0, %v2840
        %v2842 = vpop.f32.mrb[0].mxu0
        %2843 = vmatprep.mubr.f32.mxu0 %v2673
        %2844 = vmatmul.mubr.f32.gmra.mrb[0].mxu0 %v2672
        %v2845 = vpop.f32.mrb[0].mxu0
        %v2846 = vadd.f32 0.0, %v2845
        %v2847 = vpop.f32.mrb[0].mxu0
        %2848 = vmatprep.mubr.f32.mxu0 %v2675
        %2849 = vmatmul.mubr.f32.gmra.mrb[0].mxu0 %v2674
        %v2850 = vpop.f32.mrb[0].mxu0
        %v2851 = vadd.f32 0.0, %v2850
        %v2852 = vpop.f32.mrb[0].mxu0
        %2853 = vmatprep.mubr.f32.mxu0 %v2677
        %2854 = vmatmul.mubr.f32.gmra.mrb[0].mxu0 %v2676
        %v2855 = vpop.f32.mrb[0].mxu0
        %v2856 = vadd.f32 0.0, %v2855
        %v2857 = vpop.f32.mrb[0].mxu0
        %2858 = vmatprep.mubr.f32.mxu0 %v2679
        %2859 = vmatmul.mubr.f32.gmra.mrb[0].mxu0 %v2678
        %v2860 = vpop.f32.mrb[0].mxu0
        %v2861 = vadd.f32 0.0, %v2860
        %v2862 = vpop.f32.mrb[0].mxu0
        %2863 = vmatprep.mubr.f32.mxu0 %v2681
        %2864 = vmatmul.mubr.f32.gmra.mrb[0].mxu0 %v2680
        %v2865 = vpop.f32.mrb[0].mxu0
        %v2866 = vadd.f32 0.0, %v2865
        %v2867 = vpop.f32.mrb[0].mxu0
        %2868 = vmatprep.mubr.f32.mxu0 %v2683
        %2869 = vmatmul.mubr.f32.gmra.mrb[0].mxu0 %v2682
        %v2870 = vpop.f32.mrb[0].mxu0
        %v2871 = vadd.f32 0.0, %v2870
        %v2872 = vpop.f32.mrb[0].mxu0
        %2873 = vdwg.mxu0
        %s2874 = scalar_lea.vmem %s2, 32
        %v2875 = vld [vmem:[%s2874] sm:$0xff]
        %v2877 = vsel %vm1036, %v2751, 0
        %v2880 = vsel %vm1036, %v2756, 0
        %v2883 = vsel %vm1036, %v2761, 0
        %v2886 = vsel %vm1036, %v2766, 0
        %v2889 = vsel %vm1036, %v2771, 0
        %v2892 = vsel %vm1036, %v2776, 0
        %v2895 = vsel %vm1036, %v2781, 0
        %v2898 = vsel %vm1036, %v2786, 0
        %v2901 = vsel %vm1036, %v2791, 0
        %v2904 = vsel %vm1036, %v2796, 0
        %v2907 = vsel %vm1036, %v2801, 0
        %v2910 = vsel %vm1036, %v2806, 0
        %v2913 = vsel %vm1036, %v2811, 0
        %v2916 = vsel %vm1036, %v2816, 0
        %v2919 = vsel %vm1036, %v2821, 0
        %v2922 = vsel %vm1036, %v2826, 0
        %v2925 = vsel %vm1036, %v2831, 0
        %v2928 = vsel %vm1036, %v2836, 0
        %v2931 = vsel %vm1036, %v2841, 0
        %v2934 = vsel %vm1036, %v2846, 0
        %v2937 = vsel %vm1036, %v2851, 0
        %v2940 = vsel %vm1036, %v2856, 0
        %v2943 = vsel %vm1036, %v2861, 0
        %v2946 = vsel %vm1036, %v2866, 0
        %v2949 = vsel %vm1036, %v2871, 0
        %2951 = vmatprep.subr.mxu0 0.0
        %2952 = vmatpush1.msra.mxu0 %v2875
        %2953 = vmatprep.subr.mxu0 0.0
        %2954 = vmatpush1.msra.mxu0 0.0
        %2955 = vmatprep.subr.mxu0 0.0
        %2956 = vmatpush1.msra.mxu0 0.0
        %2957 = vmatprep.subr.mxu0 0.0
        %2958 = vmatpush1.msra.mxu0 0.0
        %2959 = vmatprep.subr.mxu0 0.0
        %2960 = vmatpush1.msra.mxu0 0.0
        %2961 = vmatprep.subr.mxu0 0.0
        %2962 = vmatpush1.msra.mxu0 0.0
        %2963 = vmatprep.subr.mxu0 0.0
        %2964 = vmatpush1.msra.mxu0 0.0
        %2965 = vmatprep.subr.mxu0 0.0
        %2966 = vmatpush1.msra.mxu0 0.0
        %2967 = vmatprep.subr.mxu0 0.0
        %2968 = vmatpush1.msra.mxu0 0.0
        %2969 = vmatprep.subr.mxu0 0.0
        %2970 = vmatpush1.msra.mxu0 0.0
        %2971 = vmatprep.subr.mxu0 0.0
        %2972 = vmatpush1.msra.mxu0 0.0
        %2973 = vmatprep.subr.mxu0 0.0
        %2974 = vmatpush1.msra.mxu0 0.0
        %2975 = vmatprep.subr.mxu0 0.0
        %2976 = vmatpush1.msra.mxu0 0.0
        %2977 = vmatprep.subr.mxu0 0.0
        %2978 = vmatpush1.msra.mxu0 0.0
        %2979 = vmatprep.subr.mxu0 0.0
        %2980 = vmatpush1.msra.mxu0 0.0
        %2981 = vmatprep.subr.mxu0 0.0
        %2982 = vmatpush1.msra.mxu0 0.0
        %2983 = vmatprep.subr.mxu0 0.0
        %2984 = vmatpush1.msra.mxu0 0.0
        %2985 = vmatprep.subr.mxu0 0.0
        %2986 = vmatpush1.msra.mxu0 0.0
        %2987 = vmatprep.subr.mxu0 0.0
        %2988 = vmatpush1.msra.mxu0 0.0
        %2989 = vmatprep.subr.mxu0 0.0
        %2990 = vmatpush1.msra.mxu0 0.0
        %2991 = vmatprep.subr.mxu0 0.0
        %2992 = vmatpush1.msra.mxu0 0.0
        %2993 = vmatprep.subr.mxu0 0.0
        %2994 = vmatpush1.msra.mxu0 0.0
        %2995 = vmatprep.subr.mxu0 0.0
        %2996 = vmatpush1.msra.mxu0 0.0
        %2997 = vmatprep.subr.mxu0 0.0
        %2998 = vmatpush1.msra.mxu0 0.0
        %2999 = vmatprep.subr.mxu0 0.0
        %3000 = vmatpush1.msra.mxu0 0.0
        %3001 = vmatprep.subr.mxu0 0.0
        %3002 = vmatpush1.msra.mxu0 0.0
        %3003 = vmatprep.subr.mxu0 0.0
        %3004 = vmatpush1.msra.mxu0 0.0
        %3005 = vmatprep.subr.mxu0 0.0
        %3006 = vmatpush1.msra.mxu0 0.0
        %3007 = vmatprep.subr.mxu0 0.0
        %3008 = vmatpush1.msra.mxu0 0.0
        %3009 = vmatprep.subr.mxu0 0.0
        %3010 = vmatpush1.msra.mxu0 0.0
        %3011 = vmatprep.subr.mxu0 0.0
        %3012 = vmatpush1.msra.mxu0 0.0
        %3013 = vmatprep.subr.mxu0 0.0
        %3014 = vmatpush1.msra.mxu0 0.0
        %3015 = vmatprep.mubr.f32.mxu0 0.0
        %3016 = vmatmul.mubr.f32.gmra.mrb[0].mxu0 %v2877
        %v3017 = vpop.f32.mrb[0].mxu0
        %v3018 = vadd.f32 0.0, %v3017
        %v3019 = vpop.f32.mrb[0].mxu0
        %3020 = vmatprep.mubr.f32.mxu0 0.0
        %3021 = vmatmul.mubr.f32.gmra.mrb[0].mxu0 %v2880
        %v3022 = vpop.f32.mrb[0].mxu0
        %v3023 = vadd.f32 0.0, %v3022
        %v3024 = vpop.f32.mrb[0].mxu0
        %3025 = vmatprep.mubr.f32.mxu0 0.0
        %3026 = vmatmul.mubr.f32.gmra.mrb[0].mxu0 %v2883
        %v3027 = vpop.f32.mrb[0].mxu0
        %v3028 = vadd.f32 0.0, %v3027
        %v3029 = vpop.f32.mrb[0].mxu0
        %3030 = vmatprep.mubr.f32.mxu0 0.0
        %3031 = vmatmul.mubr.f32.gmra.mrb[0].mxu0 %v2886
        %v3032 = vpop.f32.mrb[0].mxu0
        %v3033 = vadd.f32 0.0, %v3032
        %v3034 = vpop.f32.mrb[0].mxu0
        %3035 = vmatprep.mubr.f32.mxu0 0.0
        %3036 = vmatmul.mubr.f32.gmra.mrb[0].mxu0 %v2889
        %v3037 = vpop.f32.mrb[0].mxu0
        %v3038 = vadd.f32 0.0, %v3037
        %v3039 = vpop.f32.mrb[0].mxu0
        %3040 = vmatprep.mubr.f32.mxu0 0.0
        %3041 = vmatmul.mubr.f32.gmra.mrb[0].mxu0 %v2892
        %v3042 = vpop.f32.mrb[0].mxu0
        %v3043 = vadd.f32 0.0, %v3042
        %v3044 = vpop.f32.mrb[0].mxu0
        %3045 = vmatprep.mubr.f32.mxu0 0.0
        %3046 = vmatmul.mubr.f32.gmra.mrb[0].mxu0 %v2895
        %v3047 = vpop.f32.mrb[0].mxu0
        %v3048 = vadd.f32 0.0, %v3047
        %v3049 = vpop.f32.mrb[0].mxu0
        %3050 = vmatprep.mubr.f32.mxu0 0.0
        %3051 = vmatmul.mubr.f32.gmra.mrb[0].mxu0 %v2898
        %v3052 = vpop.f32.mrb[0].mxu0
        %v3053 = vadd.f32 0.0, %v3052
        %v3054 = vpop.f32.mrb[0].mxu0
        %3055 = vmatprep.mubr.f32.mxu0 0.0
        %3056 = vmatmul.mubr.f32.gmra.mrb[0].mxu0 %v2901
        %v3057 = vpop.f32.mrb[0].mxu0
        %v3058 = vadd.f32 0.0, %v3057
        %v3059 = vpop.f32.mrb[0].mxu0
        %3060 = vmatprep.mubr.f32.mxu0 0.0
        %3061 = vmatmul.mubr.f32.gmra.mrb[0].mxu0 %v2904
        %v3062 = vpop.f32.mrb[0].mxu0
        %v3063 = vadd.f32 0.0, %v3062
        %v3064 = vpop.f32.mrb[0].mxu0
        %3065 = vmatprep.mubr.f32.mxu0 0.0
        %3066 = vmatmul.mubr.f32.gmra.mrb[0].mxu0 %v2907
        %v3067 = vpop.f32.mrb[0].mxu0
        %v3068 = vadd.f32 0.0, %v3067
        %v3069 = vpop.f32.mrb[0].mxu0
        %3070 = vmatprep.mubr.f32.mxu0 0.0
        %3071 = vmatmul.mubr.f32.gmra.mrb[0].mxu0 %v2910
        %v3072 = vpop.f32.mrb[0].mxu0
        %v3073 = vadd.f32 0.0, %v3072
        %v3074 = vpop.f32.mrb[0].mxu0
        %3075 = vmatprep.mubr.f32.mxu0 0.0
        %3076 = vmatmul.mubr.f32.gmra.mrb[0].mxu0 %v2913
        %v3077 = vpop.f32.mrb[0].mxu0
        %v3078 = vadd.f32 0.0, %v3077
        %v3079 = vpop.f32.mrb[0].mxu0
        %3080 = vmatprep.mubr.f32.mxu0 0.0
        %3081 = vmatmul.mubr.f32.gmra.mrb[0].mxu0 %v2916
        %v3082 = vpop.f32.mrb[0].mxu0
        %v3083 = vadd.f32 0.0, %v3082
        %v3084 = vpop.f32.mrb[0].mxu0
        %3085 = vmatprep.mubr.f32.mxu0 0.0
        %3086 = vmatmul.mubr.f32.gmra.mrb[0].mxu0 %v2919
        %v3087 = vpop.f32.mrb[0].mxu0
        %v3088 = vadd.f32 0.0, %v3087
        %v3089 = vpop.f32.mrb[0].mxu0
        %3090 = vmatprep.mubr.f32.mxu0 0.0
        %3091 = vmatmul.mubr.f32.gmra.mrb[0].mxu0 %v2922
        %v3092 = vpop.f32.mrb[0].mxu0
        %v3093 = vadd.f32 0.0, %v3092
        %v3094 = vpop.f32.mrb[0].mxu0
        %3095 = vmatprep.mubr.f32.mxu0 0.0
        %3096 = vmatmul.mubr.f32.gmra.mrb[0].mxu0 %v2925
        %v3097 = vpop.f32.mrb[0].mxu0
        %v3098 = vadd.f32 0.0, %v3097
        %v3099 = vpop.f32.mrb[0].mxu0
        %3100 = vmatprep.mubr.f32.mxu0 0.0
        %3101 = vmatmul.mubr.f32.gmra.mrb[0].mxu0 %v2928
        %v3102 = vpop.f32.mrb[0].mxu0
        %v3103 = vadd.f32 0.0, %v3102
        %v3104 = vpop.f32.mrb[0].mxu0
        %3105 = vmatprep.mubr.f32.mxu0 0.0
        %3106 = vmatmul.mubr.f32.gmra.mrb[0].mxu0 %v2931
        %v3107 = vpop.f32.mrb[0].mxu0
        %v3108 = vadd.f32 0.0, %v3107
        %v3109 = vpop.f32.mrb[0].mxu0
        %3110 = vmatprep.mubr.f32.mxu0 0.0
        %3111 = vmatmul.mubr.f32.gmra.mrb[0].mxu0 %v2934
        %v3112 = vpop.f32.mrb[0].mxu0
        %v3113 = vadd.f32 0.0, %v3112
        %v3114 = vpop.f32.mrb[0].mxu0
        %3115 = vmatprep.mubr.f32.mxu0 0.0
        %3116 = vmatmul.mubr.f32.gmra.mrb[0].mxu0 %v2937
        %v3117 = vpop.f32.mrb[0].mxu0
        %v3118 = vadd.f32 0.0, %v3117
        %v3119 = vpop.f32.mrb[0].mxu0
        %3120 = vmatprep.mubr.f32.mxu0 0.0
        %3121 = vmatmul.mubr.f32.gmra.mrb[0].mxu0 %v2940
        %v3122 = vpop.f32.mrb[0].mxu0
        %v3123 = vadd.f32 0.0, %v3122
        %v3124 = vpop.f32.mrb[0].mxu0
        %3125 = vmatprep.mubr.f32.mxu0 0.0
        %3126 = vmatmul.mubr.f32.gmra.mrb[0].mxu0 %v2943
        %v3127 = vpop.f32.mrb[0].mxu0
        %v3128 = vadd.f32 0.0, %v3127
        %v3129 = vpop.f32.mrb[0].mxu0
        %3130 = vmatprep.mubr.f32.mxu0 0.0
        %3131 = vmatmul.mubr.f32.gmra.mrb[0].mxu0 %v2946
        %v3132 = vpop.f32.mrb[0].mxu0
        %v3133 = vadd.f32 0.0, %v3132
        %v3134 = vpop.f32.mrb[0].mxu0
        %3135 = vmatprep.mubr.f32.mxu0 0.0
        %3136 = vmatmul.mubr.f32.gmra.mrb[0].mxu0 %v2949
        %v3137 = vpop.f32.mrb[0].mxu0
        %v3138 = vadd.f32 0.0, %v3137
        %v3139 = vpop.f32.mrb[0].mxu0
        %3140 = vdwg.mxu0
        %v3141 = vadd.f32 %v2608, %v3018
        %v3142 = vadd.f32 %v2609, %v3023
        %v3143 = vadd.f32 %v2610, %v3028
        %v3144 = vadd.f32 %v2611, %v3033
        %v3145 = vadd.f32 %v2612, %v3038
        %v3146 = vadd.f32 %v2613, %v3043
        %v3147 = vadd.f32 %v2614, %v3048
        %v3148 = vadd.f32 %v2615, %v3053
        %v3149 = vadd.f32 %v2616, %v3058
        %v3150 = vadd.f32 %v2617, %v3063
        %v3151 = vadd.f32 %v2618, %v3068
        %v3152 = vadd.f32 %v2619, %v3073
        %v3153 = vadd.f32 %v2620, %v3078
        %v3154 = vadd.f32 %v2621, %v3083
        %v3155 = vadd.f32 %v2622, %v3088
        %v3156 = vadd.f32 %v2623, %v3093
        %v3157 = vadd.f32 %v2624, %v3098
        %v3158 = vadd.f32 %v2625, %v3103
        %v3159 = vadd.f32 %v2626, %v3108
        %v3160 = vadd.f32 %v2627, %v3113
        %v3161 = vadd.f32 %v2628, %v3118
        %v3162 = vadd.f32 %v2629, %v3123
        %v3163 = vadd.f32 %v2630, %v3128
        %v3164 = vadd.f32 %v2631, %v3133
        %v3165 = vadd.f32 %v2632, %v3138
        %s3166 = scalar_lea.vmem [#allocation2], 2000
        %v3167 = vld [vmem:[%s3166] sm:$0xff]
        %v3168 = vld [vmem:[%s3166 + $0x8] sm:$0xff]
        %v3169 = vld [vmem:[%s3166 + $0x10] sm:$0xff]
        %v3170 = vld [vmem:[%s3166 + $0x18] sm:$0xff]
        %v3171 = vld [vmem:[%s3166 + $0x20] sm:$0xff]
        %v3172 = vld [vmem:[%s3166 + $0x28] sm:$0xff]
        %v3173 = vld [vmem:[%s3166 + $0x30] sm:$0xff]
        %v3174 = vld [vmem:[%s3166 + $0x38] sm:$0xff]
        %v3175 = vld [vmem:[%s3166 + $0x40] sm:$0xff]
        %v3176 = vld [vmem:[%s3166 + $0x48] sm:$0xff]
        %v3177 = vld [vmem:[%s3166 + $0x50] sm:$0xff]
        %v3178 = vld [vmem:[%s3166 + $0x58] sm:$0xff]
        %v3179 = vld [vmem:[%s3166 + $0x60] sm:$0xff]
        %v3180 = vld [vmem:[%s3166 + $0x68] sm:$0xff]
        %v3181 = vld [vmem:[%s3166 + $0x70] sm:$0xff]
        %v3182 = vld [vmem:[%s3166 + $0x78] sm:$0xff]
        %v3183 = vld [vmem:[%s3166 + $0x80] sm:$0xff]
        %v3184 = vld [vmem:[%s3166 + $0x88] sm:$0xff]
        %v3185 = vld [vmem:[%s3166 + $0x90] sm:$0xff]
        %v3186 = vld [vmem:[%s3166 + $0x98] sm:$0xff]
        %v3187 = vld [vmem:[%s3166 + $0xa0] sm:$0xff]
        %v3188 = vld [vmem:[%s3166 + $0xa8] sm:$0xff]
        %v3189 = vld [vmem:[%s3166 + $0xb0] sm:$0xff]
        %v3190 = vld [vmem:[%s3166 + $0xb8] sm:$0xff]
        %v3191 = vld [vmem:[%s3166 + $0xc0] sm:$0xff]
        %v3192 = vld [vmem:[%s3166 + $0xc8] sm:$0xff]
        %v3193 = vld [vmem:[%s3166 + $0xd0] sm:$0xff]
        %v3194 = vld [vmem:[%s3166 + $0xd8] sm:$0xff]
        %v3195 = vld [vmem:[%s3166 + $0xe0] sm:$0xff]
        %v3196 = vld [vmem:[%s3166 + $0xe8] sm:$0xff]
        %v3197 = vld [vmem:[%s3166 + $0xf0] sm:$0xff]
        %v3198 = vld [vmem:[%s3166 + $0xf8] sm:$0xff]
        %v3199 = vld [vmem:[%s3166 + $0x100] sm:$0xff]
        %v3200 = vld [vmem:[%s3166 + $0x108] sm:$0xff]
        %v3201 = vld [vmem:[%s3166 + $0x110] sm:$0xff]
        %v3202 = vld [vmem:[%s3166 + $0x118] sm:$0xff]
        %v3203 = vld [vmem:[%s3166 + $0x120] sm:$0xff]
        %v3204 = vld [vmem:[%s3166 + $0x128] sm:$0xff]
        %v3205 = vld [vmem:[%s3166 + $0x130] sm:$0xff]
        %v3206 = vld [vmem:[%s3166 + $0x138] sm:$0xff]
        %v3207 = vld [vmem:[%s3166 + $0x140] sm:$0xff]
        %v3208 = vld [vmem:[%s3166 + $0x148] sm:$0xff]
        %v3209 = vld [vmem:[%s3166 + $0x150] sm:$0xff]
        %v3210 = vld [vmem:[%s3166 + $0x158] sm:$0xff]
        %v3211 = vld [vmem:[%s3166 + $0x160] sm:$0xff]
        %v3212 = vld [vmem:[%s3166 + $0x168] sm:$0xff]
        %v3213 = vld [vmem:[%s3166 + $0x170] sm:$0xff]
        %v3214 = vld [vmem:[%s3166 + $0x178] sm:$0xff]
        %v3215 = vld [vmem:[%s3166 + $0x180] sm:$0xf]
        %v3216 = vld [vmem:[%s3166 + $0x188] sm:$0xf]
        %3217 = vmatprep.subr.mxu0 0.0
        %3218 = vmatpush1.msra.mxu0 %v520
        %3219 = vmatprep.subr.mxu0 0.0
        %3220 = vmatpush1.msra.mxu0 %v521
        %3221 = vmatprep.subr.mxu0 0.0
        %3222 = vmatpush1.msra.mxu0 %v522
        %3223 = vmatprep.subr.mxu0 0.0
        %3224 = vmatpush1.msra.mxu0 %v523
        %3225 = vmatprep.subr.mxu0 0.0
        %3226 = vmatpush1.msra.mxu0 %v524
        %3227 = vmatprep.subr.mxu0 0.0
        %3228 = vmatpush1.msra.mxu0 %v525
        %3229 = vmatprep.subr.mxu0 0.0
        %3230 = vmatpush1.msra.mxu0 %v526
        %3231 = vmatprep.subr.mxu0 0.0
        %3232 = vmatpush1.msra.mxu0 %v527
        %3233 = vmatprep.subr.mxu0 0.0
        %3234 = vmatpush1.msra.mxu0 %v528
        %3235 = vmatprep.subr.mxu0 0.0
        %3236 = vmatpush1.msra.mxu0 %v529
        %3237 = vmatprep.subr.mxu0 0.0
        %3238 = vmatpush1.msra.mxu0 %v530
        %3239 = vmatprep.subr.mxu0 0.0
        %3240 = vmatpush1.msra.mxu0 %v531
        %3241 = vmatprep.subr.mxu0 0.0
        %3242 = vmatpush1.msra.mxu0 %v532
        %3243 = vmatprep.subr.mxu0 0.0
        %3244 = vmatpush1.msra.mxu0 %v533
        %3245 = vmatprep.subr.mxu0 0.0
        %3246 = vmatpush1.msra.mxu0 %v534
        %3247 = vmatprep.subr.mxu0 0.0
        %3248 = vmatpush1.msra.mxu0 %v535
        %3249 = vmatprep.subr.mxu0 0.0
        %3250 = vmatpush1.msra.mxu0 %v536
        %3251 = vmatprep.subr.mxu0 0.0
        %3252 = vmatpush1.msra.mxu0 %v537
        %3253 = vmatprep.subr.mxu0 0.0
        %3254 = vmatpush1.msra.mxu0 %v538
        %3255 = vmatprep.subr.mxu0 0.0
        %3256 = vmatpush1.msra.mxu0 %v539
        %3257 = vmatprep.subr.mxu0 0.0
        %3258 = vmatpush1.msra.mxu0 %v540
        %3259 = vmatprep.subr.mxu0 0.0
        %3260 = vmatpush1.msra.mxu0 %v541
        %3261 = vmatprep.subr.mxu0 0.0
        %3262 = vmatpush1.msra.mxu0 %v542
        %3263 = vmatprep.subr.mxu0 0.0
        %3264 = vmatpush1.msra.mxu0 %v543
        %3265 = vmatprep.subr.mxu0 0.0
        %3266 = vmatpush1.msra.mxu0 %v544
        %3267 = vmatprep.subr.mxu0 0.0
        %3268 = vmatpush1.msra.mxu0 %v545
        %3269 = vmatprep.subr.mxu0 0.0
        %3270 = vmatpush1.msra.mxu0 %v546
        %3271 = vmatprep.subr.mxu0 0.0
        %3272 = vmatpush1.msra.mxu0 %v547
        %3273 = vmatprep.subr.mxu0 0.0
        %3274 = vmatpush1.msra.mxu0 %v548
        %3275 = vmatprep.subr.mxu0 0.0
        %3276 = vmatpush1.msra.mxu0 %v549
        %3277 = vmatprep.subr.mxu0 0.0
        %3278 = vmatpush1.msra.mxu0 %v550
        %3279 = vmatprep.subr.mxu0 0.0
        %3280 = vmatpush1.msra.mxu0 %v551
        %3281 = vmatprep.mubr.f32.mxu0 %v3168
        %3282 = vmatmul.mubr.f32.gmra.mrb[0].mxu0 %v3167
        %v3283 = vpop.f32.mrb[0].mxu0
        %v3284 = vadd.f32 0.0, %v3283
        %v3285 = vpop.f32.mrb[0].mxu0
        %3286 = vmatprep.mubr.f32.mxu0 %v3170
        %3287 = vmatmul.mubr.f32.gmra.mrb[0].mxu0 %v3169
        %v3288 = vpop.f32.mrb[0].mxu0
        %v3289 = vadd.f32 0.0, %v3288
        %v3290 = vpop.f32.mrb[0].mxu0
        %3291 = vmatprep.mubr.f32.mxu0 %v3172
        %3292 = vmatmul.mubr.f32.gmra.mrb[0].mxu0 %v3171
        %v3293 = vpop.f32.mrb[0].mxu0
        %v3294 = vadd.f32 0.0, %v3293
        %v3295 = vpop.f32.mrb[0].mxu0
        %3296 = vmatprep.mubr.f32.mxu0 %v3174
        %3297 = vmatmul.mubr.f32.gmra.mrb[0].mxu0 %v3173
        %v3298 = vpop.f32.mrb[0].mxu0
        %v3299 = vadd.f32 0.0, %v3298
        %v3300 = vpop.f32.mrb[0].mxu0
        %3301 = vmatprep.mubr.f32.mxu0 %v3176
        %3302 = vmatmul.mubr.f32.gmra.mrb[0].mxu0 %v3175
        %v3303 = vpop.f32.mrb[0].mxu0
        %v3304 = vadd.f32 0.0, %v3303
        %v3305 = vpop.f32.mrb[0].mxu0
        %3306 = vmatprep.mubr.f32.mxu0 %v3178
        %3307 = vmatmul.mubr.f32.gmra.mrb[0].mxu0 %v3177
        %v3308 = vpop.f32.mrb[0].mxu0
        %v3309 = vadd.f32 0.0, %v3308
        %v3310 = vpop.f32.mrb[0].mxu0
        %3311 = vmatprep.mubr.f32.mxu0 %v3180
        %3312 = vmatmul.mubr.f32.gmra.mrb[0].mxu0 %v3179
        %v3313 = vpop.f32.mrb[0].mxu0
        %v3314 = vadd.f32 0.0, %v3313
        %v3315 = vpop.f32.mrb[0].mxu0
        %3316 = vmatprep.mubr.f32.mxu0 %v3182
        %3317 = vmatmul.mubr.f32.gmra.mrb[0].mxu0 %v3181
        %v3318 = vpop.f32.mrb[0].mxu0
        %v3319 = vadd.f32 0.0, %v3318
        %v3320 = vpop.f32.mrb[0].mxu0
        %3321 = vmatprep.mubr.f32.mxu0 %v3184
        %3322 = vmatmul.mubr.f32.gmra.mrb[0].mxu0 %v3183
        %v3323 = vpop.f32.mrb[0].mxu0
        %v3324 = vadd.f32 0.0, %v3323
        %v3325 = vpop.f32.mrb[0].mxu0
        %3326 = vmatprep.mubr.f32.mxu0 %v3186
        %3327 = vmatmul.mubr.f32.gmra.mrb[0].mxu0 %v3185
        %v3328 = vpop.f32.mrb[0].mxu0
        %v3329 = vadd.f32 0.0, %v3328
        %v3330 = vpop.f32.mrb[0].mxu0
        %3331 = vmatprep.mubr.f32.mxu0 %v3188
        %3332 = vmatmul.mubr.f32.gmra.mrb[0].mxu0 %v3187
        %v3333 = vpop.f32.mrb[0].mxu0
        %v3334 = vadd.f32 0.0, %v3333
        %v3335 = vpop.f32.mrb[0].mxu0
        %3336 = vmatprep.mubr.f32.mxu0 %v3190
        %3337 = vmatmul.mubr.f32.gmra.mrb[0].mxu0 %v3189
        %v3338 = vpop.f32.mrb[0].mxu0
        %v3339 = vadd.f32 0.0, %v3338
        %v3340 = vpop.f32.mrb[0].mxu0
        %3341 = vmatprep.mubr.f32.mxu0 %v3192
        %3342 = vmatmul.mubr.f32.gmra.mrb[0].mxu0 %v3191
        %v3343 = vpop.f32.mrb[0].mxu0
        %v3344 = vadd.f32 0.0, %v3343
        %v3345 = vpop.f32.mrb[0].mxu0
        %3346 = vmatprep.mubr.f32.mxu0 %v3194
        %3347 = vmatmul.mubr.f32.gmra.mrb[0].mxu0 %v3193
        %v3348 = vpop.f32.mrb[0].mxu0
        %v3349 = vadd.f32 0.0, %v3348
        %v3350 = vpop.f32.mrb[0].mxu0
        %3351 = vmatprep.mubr.f32.mxu0 %v3196
        %3352 = vmatmul.mubr.f32.gmra.mrb[0].mxu0 %v3195
        %v3353 = vpop.f32.mrb[0].mxu0
        %v3354 = vadd.f32 0.0, %v3353
        %v3355 = vpop.f32.mrb[0].mxu0
        %3356 = vmatprep.mubr.f32.mxu0 %v3198
        %3357 = vmatmul.mubr.f32.gmra.mrb[0].mxu0 %v3197
        %v3358 = vpop.f32.mrb[0].mxu0
        %v3359 = vadd.f32 0.0, %v3358
        %v3360 = vpop.f32.mrb[0].mxu0
        %3361 = vmatprep.mubr.f32.mxu0 %v3200
        %3362 = vmatmul.mubr.f32.gmra.mrb[0].mxu0 %v3199
        %v3363 = vpop.f32.mrb[0].mxu0
        %v3364 = vadd.f32 0.0, %v3363
        %v3365 = vpop.f32.mrb[0].mxu0
        %3366 = vmatprep.mubr.f32.mxu0 %v3202
        %3367 = vmatmul.mubr.f32.gmra.mrb[0].mxu0 %v3201
        %v3368 = vpop.f32.mrb[0].mxu0
        %v3369 = vadd.f32 0.0, %v3368
        %v3370 = vpop.f32.mrb[0].mxu0
        %3371 = vmatprep.mubr.f32.mxu0 %v3204
        %3372 = vmatmul.mubr.f32.gmra.mrb[0].mxu0 %v3203
        %v3373 = vpop.f32.mrb[0].mxu0
        %v3374 = vadd.f32 0.0, %v3373
        %v3375 = vpop.f32.mrb[0].mxu0
        %3376 = vmatprep.mubr.f32.mxu0 %v3206
        %3377 = vmatmul.mubr.f32.gmra.mrb[0].mxu0 %v3205
        %v3378 = vpop.f32.mrb[0].mxu0
        %v3379 = vadd.f32 0.0, %v3378
        %v3380 = vpop.f32.mrb[0].mxu0
        %3381 = vmatprep.mubr.f32.mxu0 %v3208
        %3382 = vmatmul.mubr.f32.gmra.mrb[0].mxu0 %v3207
        %v3383 = vpop.f32.mrb[0].mxu0
        %v3384 = vadd.f32 0.0, %v3383
        %v3385 = vpop.f32.mrb[0].mxu0
        %3386 = vmatprep.mubr.f32.mxu0 %v3210
        %3387 = vmatmul.mubr.f32.gmra.mrb[0].mxu0 %v3209
        %v3388 = vpop.f32.mrb[0].mxu0
        %v3389 = vadd.f32 0.0, %v3388
        %v3390 = vpop.f32.mrb[0].mxu0
        %3391 = vmatprep.mubr.f32.mxu0 %v3212
        %3392 = vmatmul.mubr.f32.gmra.mrb[0].mxu0 %v3211
        %v3393 = vpop.f32.mrb[0].mxu0
        %v3394 = vadd.f32 0.0, %v3393
        %v3395 = vpop.f32.mrb[0].mxu0
        %3396 = vmatprep.mubr.f32.mxu0 %v3214
        %3397 = vmatmul.mubr.f32.gmra.mrb[0].mxu0 %v3213
        %v3398 = vpop.f32.mrb[0].mxu0
        %v3399 = vadd.f32 0.0, %v3398
        %v3400 = vpop.f32.mrb[0].mxu0
        %3401 = vmatprep.mubr.f32.mxu0 %v3216
        %3402 = vmatmul.mubr.f32.gmra.mrb[0].mxu0 %v3215
        %v3403 = vpop.f32.mrb[0].mxu0
        %v3404 = vadd.f32 0.0, %v3403
        %v3405 = vpop.f32.mrb[0].mxu0
        %3406 = vdwg.mxu0
        %s3407 = scalar_lea.vmem %s2, 40
        %v3408 = vld [vmem:[%s3407] sm:$0xff]
        %v3410 = vsel %vm1036, %v3284, 0
        %v3413 = vsel %vm1036, %v3289, 0
        %v3416 = vsel %vm1036, %v3294, 0
        %v3419 = vsel %vm1036, %v3299, 0
        %v3422 = vsel %vm1036, %v3304, 0
        %v3425 = vsel %vm1036, %v3309, 0
        %v3428 = vsel %vm1036, %v3314, 0
        %v3431 = vsel %vm1036, %v3319, 0
        %v3434 = vsel %vm1036, %v3324, 0
        %v3437 = vsel %vm1036, %v3329, 0
        %v3440 = vsel %vm1036, %v3334, 0
        %v3443 = vsel %vm1036, %v3339, 0
        %v3446 = vsel %vm1036, %v3344, 0
        %v3449 = vsel %vm1036, %v3349, 0
        %v3452 = vsel %vm1036, %v3354, 0
        %v3455 = vsel %vm1036, %v3359, 0
        %v3458 = vsel %vm1036, %v3364, 0
        %v3461 = vsel %vm1036, %v3369, 0
        %v3464 = vsel %vm1036, %v3374, 0
        %v3467 = vsel %vm1036, %v3379, 0
        %v3470 = vsel %vm1036, %v3384, 0
        %v3473 = vsel %vm1036, %v3389, 0
        %v3476 = vsel %vm1036, %v3394, 0
        %v3479 = vsel %vm1036, %v3399, 0
        %v3482 = vsel %vm1036, %v3404, 0
        %3484 = vmatprep.subr.mxu0 0.0
        %3485 = vmatpush1.msra.mxu0 %v3408
        %3486 = vmatprep.subr.mxu0 0.0
        %3487 = vmatpush1.msra.mxu0 0.0
        %3488 = vmatprep.subr.mxu0 0.0
        %3489 = vmatpush1.msra.mxu0 0.0
        %3490 = vmatprep.subr.mxu0 0.0
        %3491 = vmatpush1.msra.mxu0 0.0
        %3492 = vmatprep.subr.mxu0 0.0
        %3493 = vmatpush1.msra.mxu0 0.0
        %3494 = vmatprep.subr.mxu0 0.0
        %3495 = vmatpush1.msra.mxu0 0.0
        %3496 = vmatprep.subr.mxu0 0.0
        %3497 = vmatpush1.msra.mxu0 0.0
        %3498 = vmatprep.subr.mxu0 0.0
        %3499 = vmatpush1.msra.mxu0 0.0
        %3500 = vmatprep.subr.mxu0 0.0
        %3501 = vmatpush1.msra.mxu0 0.0
        %3502 = vmatprep.subr.mxu0 0.0
        %3503 = vmatpush1.msra.mxu0 0.0
        %3504 = vmatprep.subr.mxu0 0.0
        %3505 = vmatpush1.msra.mxu0 0.0
        %3506 = vmatprep.subr.mxu0 0.0
        %3507 = vmatpush1.msra.mxu0 0.0
        %3508 = vmatprep.subr.mxu0 0.0
        %3509 = vmatpush1.msra.mxu0 0.0
        %3510 = vmatprep.subr.mxu0 0.0
        %3511 = vmatpush1.msra.mxu0 0.0
        %3512 = vmatprep.subr.mxu0 0.0
        %3513 = vmatpush1.msra.mxu0 0.0
        %3514 = vmatprep.subr.mxu0 0.0
        %3515 = vmatpush1.msra.mxu0 0.0
        %3516 = vmatprep.subr.mxu0 0.0
        %3517 = vmatpush1.msra.mxu0 0.0
        %3518 = vmatprep.subr.mxu0 0.0
        %3519 = vmatpush1.msra.mxu0 0.0
        %3520 = vmatprep.subr.mxu0 0.0
        %3521 = vmatpush1.msra.mxu0 0.0
        %3522 = vmatprep.subr.mxu0 0.0
        %3523 = vmatpush1.msra.mxu0 0.0
        %3524 = vmatprep.subr.mxu0 0.0
        %3525 = vmatpush1.msra.mxu0 0.0
        %3526 = vmatprep.subr.mxu0 0.0
        %3527 = vmatpush1.msra.mxu0 0.0
        %3528 = vmatprep.subr.mxu0 0.0
        %3529 = vmatpush1.msra.mxu0 0.0
        %3530 = vmatprep.subr.mxu0 0.0
        %3531 = vmatpush1.msra.mxu0 0.0
        %3532 = vmatprep.subr.mxu0 0.0
        %3533 = vmatpush1.msra.mxu0 0.0
        %3534 = vmatprep.subr.mxu0 0.0
        %3535 = vmatpush1.msra.mxu0 0.0
        %3536 = vmatprep.subr.mxu0 0.0
        %3537 = vmatpush1.msra.mxu0 0.0
        %3538 = vmatprep.subr.mxu0 0.0
        %3539 = vmatpush1.msra.mxu0 0.0
        %3540 = vmatprep.subr.mxu0 0.0
        %3541 = vmatpush1.msra.mxu0 0.0
        %3542 = vmatprep.subr.mxu0 0.0
        %3543 = vmatpush1.msra.mxu0 0.0
        %3544 = vmatprep.subr.mxu0 0.0
        %3545 = vmatpush1.msra.mxu0 0.0
        %3546 = vmatprep.subr.mxu0 0.0
        %3547 = vmatpush1.msra.mxu0 0.0
        %3548 = vmatprep.mubr.f32.mxu0 0.0
        %3549 = vmatmul.mubr.f32.gmra.mrb[0].mxu0 %v3410
        %v3550 = vpop.f32.mrb[0].mxu0
        %v3551 = vadd.f32 0.0, %v3550
        %v3552 = vpop.f32.mrb[0].mxu0
        %3553 = vmatprep.mubr.f32.mxu0 0.0
        %3554 = vmatmul.mubr.f32.gmra.mrb[0].mxu0 %v3413
        %v3555 = vpop.f32.mrb[0].mxu0
        %v3556 = vadd.f32 0.0, %v3555
        %v3557 = vpop.f32.mrb[0].mxu0
        %3558 = vmatprep.mubr.f32.mxu0 0.0
        %3559 = vmatmul.mubr.f32.gmra.mrb[0].mxu0 %v3416
        %v3560 = vpop.f32.mrb[0].mxu0
        %v3561 = vadd.f32 0.0, %v3560
        %v3562 = vpop.f32.mrb[0].mxu0
        %3563 = vmatprep.mubr.f32.mxu0 0.0
        %3564 = vmatmul.mubr.f32.gmra.mrb[0].mxu0 %v3419
        %v3565 = vpop.f32.mrb[0].mxu0
        %v3566 = vadd.f32 0.0, %v3565
        %v3567 = vpop.f32.mrb[0].mxu0
        %3568 = vmatprep.mubr.f32.mxu0 0.0
        %3569 = vmatmul.mubr.f32.gmra.mrb[0].mxu0 %v3422
        %v3570 = vpop.f32.mrb[0].mxu0
        %v3571 = vadd.f32 0.0, %v3570
        %v3572 = vpop.f32.mrb[0].mxu0
        %3573 = vmatprep.mubr.f32.mxu0 0.0
        %3574 = vmatmul.mubr.f32.gmra.mrb[0].mxu0 %v3425
        %v3575 = vpop.f32.mrb[0].mxu0
        %v3576 = vadd.f32 0.0, %v3575
        %v3577 = vpop.f32.mrb[0].mxu0
        %3578 = vmatprep.mubr.f32.mxu0 0.0
        %3579 = vmatmul.mubr.f32.gmra.mrb[0].mxu0 %v3428
        %v3580 = vpop.f32.mrb[0].mxu0
        %v3581 = vadd.f32 0.0, %v3580
        %v3582 = vpop.f32.mrb[0].mxu0
        %3583 = vmatprep.mubr.f32.mxu0 0.0
        %3584 = vmatmul.mubr.f32.gmra.mrb[0].mxu0 %v3431
        %v3585 = vpop.f32.mrb[0].mxu0
        %v3586 = vadd.f32 0.0, %v3585
        %v3587 = vpop.f32.mrb[0].mxu0
        %3588 = vmatprep.mubr.f32.mxu0 0.0
        %3589 = vmatmul.mubr.f32.gmra.mrb[0].mxu0 %v3434
        %v3590 = vpop.f32.mrb[0].mxu0
        %v3591 = vadd.f32 0.0, %v3590
        %v3592 = vpop.f32.mrb[0].mxu0
        %3593 = vmatprep.mubr.f32.mxu0 0.0
        %3594 = vmatmul.mubr.f32.gmra.mrb[0].mxu0 %v3437
        %v3595 = vpop.f32.mrb[0].mxu0
        %v3596 = vadd.f32 0.0, %v3595
        %v3597 = vpop.f32.mrb[0].mxu0
        %3598 = vmatprep.mubr.f32.mxu0 0.0
        %3599 = vmatmul.mubr.f32.gmra.mrb[0].mxu0 %v3440
        %v3600 = vpop.f32.mrb[0].mxu0
        %v3601 = vadd.f32 0.0, %v3600
        %v3602 = vpop.f32.mrb[0].mxu0
        %3603 = vmatprep.mubr.f32.mxu0 0.0
        %3604 = vmatmul.mubr.f32.gmra.mrb[0].mxu0 %v3443
        %v3605 = vpop.f32.mrb[0].mxu0
        %v3606 = vadd.f32 0.0, %v3605
        %v3607 = vpop.f32.mrb[0].mxu0
        %3608 = vmatprep.mubr.f32.mxu0 0.0
        %3609 = vmatmul.mubr.f32.gmra.mrb[0].mxu0 %v3446
        %v3610 = vpop.f32.mrb[0].mxu0
        %v3611 = vadd.f32 0.0, %v3610
        %v3612 = vpop.f32.mrb[0].mxu0
        %3613 = vmatprep.mubr.f32.mxu0 0.0
        %3614 = vmatmul.mubr.f32.gmra.mrb[0].mxu0 %v3449
        %v3615 = vpop.f32.mrb[0].mxu0
        %v3616 = vadd.f32 0.0, %v3615
        %v3617 = vpop.f32.mrb[0].mxu0
        %3618 = vmatprep.mubr.f32.mxu0 0.0
        %3619 = vmatmul.mubr.f32.gmra.mrb[0].mxu0 %v3452
        %v3620 = vpop.f32.mrb[0].mxu0
        %v3621 = vadd.f32 0.0, %v3620
        %v3622 = vpop.f32.mrb[0].mxu0
        %3623 = vmatprep.mubr.f32.mxu0 0.0
        %3624 = vmatmul.mubr.f32.gmra.mrb[0].mxu0 %v3455
        %v3625 = vpop.f32.mrb[0].mxu0
        %v3626 = vadd.f32 0.0, %v3625
        %v3627 = vpop.f32.mrb[0].mxu0
        %3628 = vmatprep.mubr.f32.mxu0 0.0
        %3629 = vmatmul.mubr.f32.gmra.mrb[0].mxu0 %v3458
        %v3630 = vpop.f32.mrb[0].mxu0
        %v3631 = vadd.f32 0.0, %v3630
        %v3632 = vpop.f32.mrb[0].mxu0
        %3633 = vmatprep.mubr.f32.mxu0 0.0
        %3634 = vmatmul.mubr.f32.gmra.mrb[0].mxu0 %v3461
        %v3635 = vpop.f32.mrb[0].mxu0
        %v3636 = vadd.f32 0.0, %v3635
        %v3637 = vpop.f32.mrb[0].mxu0
        %3638 = vmatprep.mubr.f32.mxu0 0.0
        %3639 = vmatmul.mubr.f32.gmra.mrb[0].mxu0 %v3464
        %v3640 = vpop.f32.mrb[0].mxu0
        %v3641 = vadd.f32 0.0, %v3640
        %v3642 = vpop.f32.mrb[0].mxu0
        %3643 = vmatprep.mubr.f32.mxu0 0.0
        %3644 = vmatmul.mubr.f32.gmra.mrb[0].mxu0 %v3467
        %v3645 = vpop.f32.mrb[0].mxu0
        %v3646 = vadd.f32 0.0, %v3645
        %v3647 = vpop.f32.mrb[0].mxu0
        %3648 = vmatprep.mubr.f32.mxu0 0.0
        %3649 = vmatmul.mubr.f32.gmra.mrb[0].mxu0 %v3470
        %v3650 = vpop.f32.mrb[0].mxu0
        %v3651 = vadd.f32 0.0, %v3650
        %v3652 = vpop.f32.mrb[0].mxu0
        %3653 = vmatprep.mubr.f32.mxu0 0.0
        %3654 = vmatmul.mubr.f32.gmra.mrb[0].mxu0 %v3473
        %v3655 = vpop.f32.mrb[0].mxu0
        %v3656 = vadd.f32 0.0, %v3655
        %v3657 = vpop.f32.mrb[0].mxu0
        %3658 = vmatprep.mubr.f32.mxu0 0.0
        %3659 = vmatmul.mubr.f32.gmra.mrb[0].mxu0 %v3476
        %v3660 = vpop.f32.mrb[0].mxu0
        %v3661 = vadd.f32 0.0, %v3660
        %v3662 = vpop.f32.mrb[0].mxu0
        %3663 = vmatprep.mubr.f32.mxu0 0.0
        %3664 = vmatmul.mubr.f32.gmra.mrb[0].mxu0 %v3479
        %v3665 = vpop.f32.mrb[0].mxu0
        %v3666 = vadd.f32 0.0, %v3665
        %v3667 = vpop.f32.mrb[0].mxu0
        %3668 = vmatprep.mubr.f32.mxu0 0.0
        %3669 = vmatmul.mubr.f32.gmra.mrb[0].mxu0 %v3482
        %v3670 = vpop.f32.mrb[0].mxu0
        %v3671 = vadd.f32 0.0, %v3670
        %v3672 = vpop.f32.mrb[0].mxu0
        %3673 = vdwg.mxu0
        %v3674 = vadd.f32 %v3141, %v3551
        %v3675 = vadd.f32 %v3142, %v3556
        %v3676 = vadd.f32 %v3143, %v3561
        %v3677 = vadd.f32 %v3144, %v3566
        %v3678 = vadd.f32 %v3145, %v3571
        %v3679 = vadd.f32 %v3146, %v3576
        %v3680 = vadd.f32 %v3147, %v3581
        %v3681 = vadd.f32 %v3148, %v3586
        %v3682 = vadd.f32 %v3149, %v3591
        %v3683 = vadd.f32 %v3150, %v3596
        %v3684 = vadd.f32 %v3151, %v3601
        %v3685 = vadd.f32 %v3152, %v3606
        %v3686 = vadd.f32 %v3153, %v3611
        %v3687 = vadd.f32 %v3154, %v3616
        %v3688 = vadd.f32 %v3155, %v3621
        %v3689 = vadd.f32 %v3156, %v3626
        %v3690 = vadd.f32 %v3157, %v3631
        %v3691 = vadd.f32 %v3158, %v3636
        %v3692 = vadd.f32 %v3159, %v3641
        %v3693 = vadd.f32 %v3160, %v3646
        %v3694 = vadd.f32 %v3161, %v3651
        %v3695 = vadd.f32 %v3162, %v3656
        %v3696 = vadd.f32 %v3163, %v3661
        %v3697 = vadd.f32 %v3164, %v3666
        %v3698 = vadd.f32 %v3165, %v3671
        %s3699 = scalar_lea.vmem [#allocation2], 2400
        %v3700 = vld [vmem:[%s3699] sm:$0xff]
        %v3701 = vld [vmem:[%s3699 + $0x8] sm:$0xff]
        %v3702 = vld [vmem:[%s3699 + $0x10] sm:$0xff]
        %v3703 = vld [vmem:[%s3699 + $0x18] sm:$0xff]
        %v3704 = vld [vmem:[%s3699 + $0x20] sm:$0xff]
        %v3705 = vld [vmem:[%s3699 + $0x28] sm:$0xff]
        %v3706 = vld [vmem:[%s3699 + $0x30] sm:$0xff]
        %v3707 = vld [vmem:[%s3699 + $0x38] sm:$0xff]
        %v3708 = vld [vmem:[%s3699 + $0x40] sm:$0xff]
        %v3709 = vld [vmem:[%s3699 + $0x48] sm:$0xff]
        %v3710 = vld [vmem:[%s3699 + $0x50] sm:$0xff]
        %v3711 = vld [vmem:[%s3699 + $0x58] sm:$0xff]
        %v3712 = vld [vmem:[%s3699 + $0x60] sm:$0xff]
        %v3713 = vld [vmem:[%s3699 + $0x68] sm:$0xff]
        %v3714 = vld [vmem:[%s3699 + $0x70] sm:$0xff]
        %v3715 = vld [vmem:[%s3699 + $0x78] sm:$0xff]
        %v3716 = vld [vmem:[%s3699 + $0x80] sm:$0xff]
        %v3717 = vld [vmem:[%s3699 + $0x88] sm:$0xff]
        %v3718 = vld [vmem:[%s3699 + $0x90] sm:$0xff]
        %v3719 = vld [vmem:[%s3699 + $0x98] sm:$0xff]
        %v3720 = vld [vmem:[%s3699 + $0xa0] sm:$0xff]
        %v3721 = vld [vmem:[%s3699 + $0xa8] sm:$0xff]
        %v3722 = vld [vmem:[%s3699 + $0xb0] sm:$0xff]
        %v3723 = vld [vmem:[%s3699 + $0xb8] sm:$0xff]
        %v3724 = vld [vmem:[%s3699 + $0xc0] sm:$0xff]
        %v3725 = vld [vmem:[%s3699 + $0xc8] sm:$0xff]
        %v3726 = vld [vmem:[%s3699 + $0xd0] sm:$0xff]
        %v3727 = vld [vmem:[%s3699 + $0xd8] sm:$0xff]
        %v3728 = vld [vmem:[%s3699 + $0xe0] sm:$0xff]
        %v3729 = vld [vmem:[%s3699 + $0xe8] sm:$0xff]
        %v3730 = vld [vmem:[%s3699 + $0xf0] sm:$0xff]
        %v3731 = vld [vmem:[%s3699 + $0xf8] sm:$0xff]
        %v3732 = vld [vmem:[%s3699 + $0x100] sm:$0xff]
        %v3733 = vld [vmem:[%s3699 + $0x108] sm:$0xff]
        %v3734 = vld [vmem:[%s3699 + $0x110] sm:$0xff]
        %v3735 = vld [vmem:[%s3699 + $0x118] sm:$0xff]
        %v3736 = vld [vmem:[%s3699 + $0x120] sm:$0xff]
        %v3737 = vld [vmem:[%s3699 + $0x128] sm:$0xff]
        %v3738 = vld [vmem:[%s3699 + $0x130] sm:$0xff]
        %v3739 = vld [vmem:[%s3699 + $0x138] sm:$0xff]
        %v3740 = vld [vmem:[%s3699 + $0x140] sm:$0xff]
        %v3741 = vld [vmem:[%s3699 + $0x148] sm:$0xff]
        %v3742 = vld [vmem:[%s3699 + $0x150] sm:$0xff]
        %v3743 = vld [vmem:[%s3699 + $0x158] sm:$0xff]
        %v3744 = vld [vmem:[%s3699 + $0x160] sm:$0xff]
        %v3745 = vld [vmem:[%s3699 + $0x168] sm:$0xff]
        %v3746 = vld [vmem:[%s3699 + $0x170] sm:$0xff]
        %v3747 = vld [vmem:[%s3699 + $0x178] sm:$0xff]
        %v3748 = vld [vmem:[%s3699 + $0x180] sm:$0xf]
        %v3749 = vld [vmem:[%s3699 + $0x188] sm:$0xf]
        %3750 = vmatprep.subr.mxu0 0.0
        %3751 = vmatpush1.msra.mxu0 %v520
        %3752 = vmatprep.subr.mxu0 0.0
        %3753 = vmatpush1.msra.mxu0 %v521
        %3754 = vmatprep.subr.mxu0 0.0
        %3755 = vmatpush1.msra.mxu0 %v522
        %3756 = vmatprep.subr.mxu0 0.0
        %3757 = vmatpush1.msra.mxu0 %v523
        %3758 = vmatprep.subr.mxu0 0.0
        %3759 = vmatpush1.msra.mxu0 %v524
        %3760 = vmatprep.subr.mxu0 0.0
        %3761 = vmatpush1.msra.mxu0 %v525
        %3762 = vmatprep.subr.mxu0 0.0
        %3763 = vmatpush1.msra.mxu0 %v526
        %3764 = vmatprep.subr.mxu0 0.0
        %3765 = vmatpush1.msra.mxu0 %v527
        %3766 = vmatprep.subr.mxu0 0.0
        %3767 = vmatpush1.msra.mxu0 %v528
        %3768 = vmatprep.subr.mxu0 0.0
        %3769 = vmatpush1.msra.mxu0 %v529
        %3770 = vmatprep.subr.mxu0 0.0
        %3771 = vmatpush1.msra.mxu0 %v530
        %3772 = vmatprep.subr.mxu0 0.0
        %3773 = vmatpush1.msra.mxu0 %v531
        %3774 = vmatprep.subr.mxu0 0.0
        %3775 = vmatpush1.msra.mxu0 %v532
        %3776 = vmatprep.subr.mxu0 0.0
        %3777 = vmatpush1.msra.mxu0 %v533
        %3778 = vmatprep.subr.mxu0 0.0
        %3779 = vmatpush1.msra.mxu0 %v534
        %3780 = vmatprep.subr.mxu0 0.0
        %3781 = vmatpush1.msra.mxu0 %v535
        %3782 = vmatprep.subr.mxu0 0.0
        %3783 = vmatpush1.msra.mxu0 %v536
        %3784 = vmatprep.subr.mxu0 0.0
        %3785 = vmatpush1.msra.mxu0 %v537
        %3786 = vmatprep.subr.mxu0 0.0
        %3787 = vmatpush1.msra.mxu0 %v538
        %3788 = vmatprep.subr.mxu0 0.0
        %3789 = vmatpush1.msra.mxu0 %v539
        %3790 = vmatprep.subr.mxu0 0.0
        %3791 = vmatpush1.msra.mxu0 %v540
        %3792 = vmatprep.subr.mxu0 0.0
        %3793 = vmatpush1.msra.mxu0 %v541
        %3794 = vmatprep.subr.mxu0 0.0
        %3795 = vmatpush1.msra.mxu0 %v542
        %3796 = vmatprep.subr.mxu0 0.0
        %3797 = vmatpush1.msra.mxu0 %v543
        %3798 = vmatprep.subr.mxu0 0.0
        %3799 = vmatpush1.msra.mxu0 %v544
        %3800 = vmatprep.subr.mxu0 0.0
        %3801 = vmatpush1.msra.mxu0 %v545
        %3802 = vmatprep.subr.mxu0 0.0
        %3803 = vmatpush1.msra.mxu0 %v546
        %3804 = vmatprep.subr.mxu0 0.0
        %3805 = vmatpush1.msra.mxu0 %v547
        %3806 = vmatprep.subr.mxu0 0.0
        %3807 = vmatpush1.msra.mxu0 %v548
        %3808 = vmatprep.subr.mxu0 0.0
        %3809 = vmatpush1.msra.mxu0 %v549
        %3810 = vmatprep.subr.mxu0 0.0
        %3811 = vmatpush1.msra.mxu0 %v550
        %3812 = vmatprep.subr.mxu0 0.0
        %3813 = vmatpush1.msra.mxu0 %v551
        %3814 = vmatprep.mubr.f32.mxu0 %v3701
        %3815 = vmatmul.mubr.f32.gmra.mrb[0].mxu0 %v3700
        %v3816 = vpop.f32.mrb[0].mxu0
        %v3817 = vadd.f32 0.0, %v3816
        %v3818 = vpop.f32.mrb[0].mxu0
        %3819 = vmatprep.mubr.f32.mxu0 %v3703
        %3820 = vmatmul.mubr.f32.gmra.mrb[0].mxu0 %v3702
        %v3821 = vpop.f32.mrb[0].mxu0
        %v3822 = vadd.f32 0.0, %v3821
        %v3823 = vpop.f32.mrb[0].mxu0
        %3824 = vmatprep.mubr.f32.mxu0 %v3705
        %3825 = vmatmul.mubr.f32.gmra.mrb[0].mxu0 %v3704
        %v3826 = vpop.f32.mrb[0].mxu0
        %v3827 = vadd.f32 0.0, %v3826
        %v3828 = vpop.f32.mrb[0].mxu0
        %3829 = vmatprep.mubr.f32.mxu0 %v3707
        %3830 = vmatmul.mubr.f32.gmra.mrb[0].mxu0 %v3706
        %v3831 = vpop.f32.mrb[0].mxu0
        %v3832 = vadd.f32 0.0, %v3831
        %v3833 = vpop.f32.mrb[0].mxu0
        %3834 = vmatprep.mubr.f32.mxu0 %v3709
        %3835 = vmatmul.mubr.f32.gmra.mrb[0].mxu0 %v3708
        %v3836 = vpop.f32.mrb[0].mxu0
        %v3837 = vadd.f32 0.0, %v3836
        %v3838 = vpop.f32.mrb[0].mxu0
        %3839 = vmatprep.mubr.f32.mxu0 %v3711
        %3840 = vmatmul.mubr.f32.gmra.mrb[0].mxu0 %v3710
        %v3841 = vpop.f32.mrb[0].mxu0
        %v3842 = vadd.f32 0.0, %v3841
        %v3843 = vpop.f32.mrb[0].mxu0
        %3844 = vmatprep.mubr.f32.mxu0 %v3713
        %3845 = vmatmul.mubr.f32.gmra.mrb[0].mxu0 %v3712
        %v3846 = vpop.f32.mrb[0].mxu0
        %v3847 = vadd.f32 0.0, %v3846
        %v3848 = vpop.f32.mrb[0].mxu0
        %3849 = vmatprep.mubr.f32.mxu0 %v3715
        %3850 = vmatmul.mubr.f32.gmra.mrb[0].mxu0 %v3714
        %v3851 = vpop.f32.mrb[0].mxu0
        %v3852 = vadd.f32 0.0, %v3851
        %v3853 = vpop.f32.mrb[0].mxu0
        %3854 = vmatprep.mubr.f32.mxu0 %v3717
        %3855 = vmatmul.mubr.f32.gmra.mrb[0].mxu0 %v3716
        %v3856 = vpop.f32.mrb[0].mxu0
        %v3857 = vadd.f32 0.0, %v3856
        %v3858 = vpop.f32.mrb[0].mxu0
        %3859 = vmatprep.mubr.f32.mxu0 %v3719
        %3860 = vmatmul.mubr.f32.gmra.mrb[0].mxu0 %v3718
        %v3861 = vpop.f32.mrb[0].mxu0
        %v3862 = vadd.f32 0.0, %v3861
        %v3863 = vpop.f32.mrb[0].mxu0
        %3864 = vmatprep.mubr.f32.mxu0 %v3721
        %3865 = vmatmul.mubr.f32.gmra.mrb[0].mxu0 %v3720
        %v3866 = vpop.f32.mrb[0].mxu0
        %v3867 = vadd.f32 0.0, %v3866
        %v3868 = vpop.f32.mrb[0].mxu0
        %3869 = vmatprep.mubr.f32.mxu0 %v3723
        %3870 = vmatmul.mubr.f32.gmra.mrb[0].mxu0 %v3722
        %v3871 = vpop.f32.mrb[0].mxu0
        %v3872 = vadd.f32 0.0, %v3871
        %v3873 = vpop.f32.mrb[0].mxu0
        %3874 = vmatprep.mubr.f32.mxu0 %v3725
        %3875 = vmatmul.mubr.f32.gmra.mrb[0].mxu0 %v3724
        %v3876 = vpop.f32.mrb[0].mxu0
        %v3877 = vadd.f32 0.0, %v3876
        %v3878 = vpop.f32.mrb[0].mxu0
        %3879 = vmatprep.mubr.f32.mxu0 %v3727
        %3880 = vmatmul.mubr.f32.gmra.mrb[0].mxu0 %v3726
        %v3881 = vpop.f32.mrb[0].mxu0
        %v3882 = vadd.f32 0.0, %v3881
        %v3883 = vpop.f32.mrb[0].mxu0
        %3884 = vmatprep.mubr.f32.mxu0 %v3729
        %3885 = vmatmul.mubr.f32.gmra.mrb[0].mxu0 %v3728
        %v3886 = vpop.f32.mrb[0].mxu0
        %v3887 = vadd.f32 0.0, %v3886
        %v3888 = vpop.f32.mrb[0].mxu0
        %3889 = vmatprep.mubr.f32.mxu0 %v3731
        %3890 = vmatmul.mubr.f32.gmra.mrb[0].mxu0 %v3730
        %v3891 = vpop.f32.mrb[0].mxu0
        %v3892 = vadd.f32 0.0, %v3891
        %v3893 = vpop.f32.mrb[0].mxu0
        %3894 = vmatprep.mubr.f32.mxu0 %v3733
        %3895 = vmatmul.mubr.f32.gmra.mrb[0].mxu0 %v3732
        %v3896 = vpop.f32.mrb[0].mxu0
        %v3897 = vadd.f32 0.0, %v3896
        %v3898 = vpop.f32.mrb[0].mxu0
        %3899 = vmatprep.mubr.f32.mxu0 %v3735
        %3900 = vmatmul.mubr.f32.gmra.mrb[0].mxu0 %v3734
        %v3901 = vpop.f32.mrb[0].mxu0
        %v3902 = vadd.f32 0.0, %v3901
        %v3903 = vpop.f32.mrb[0].mxu0
        %3904 = vmatprep.mubr.f32.mxu0 %v3737
        %3905 = vmatmul.mubr.f32.gmra.mrb[0].mxu0 %v3736
        %v3906 = vpop.f32.mrb[0].mxu0
        %v3907 = vadd.f32 0.0, %v3906
        %v3908 = vpop.f32.mrb[0].mxu0
        %3909 = vmatprep.mubr.f32.mxu0 %v3739
        %3910 = vmatmul.mubr.f32.gmra.mrb[0].mxu0 %v3738
        %v3911 = vpop.f32.mrb[0].mxu0
        %v3912 = vadd.f32 0.0, %v3911
        %v3913 = vpop.f32.mrb[0].mxu0
        %3914 = vmatprep.mubr.f32.mxu0 %v3741
        %3915 = vmatmul.mubr.f32.gmra.mrb[0].mxu0 %v3740
        %v3916 = vpop.f32.mrb[0].mxu0
        %v3917 = vadd.f32 0.0, %v3916
        %v3918 = vpop.f32.mrb[0].mxu0
        %3919 = vmatprep.mubr.f32.mxu0 %v3743
        %3920 = vmatmul.mubr.f32.gmra.mrb[0].mxu0 %v3742
        %v3921 = vpop.f32.mrb[0].mxu0
        %v3922 = vadd.f32 0.0, %v3921
        %v3923 = vpop.f32.mrb[0].mxu0
        %3924 = vmatprep.mubr.f32.mxu0 %v3745
        %3925 = vmatmul.mubr.f32.gmra.mrb[0].mxu0 %v3744
        %v3926 = vpop.f32.mrb[0].mxu0
        %v3927 = vadd.f32 0.0, %v3926
        %v3928 = vpop.f32.mrb[0].mxu0
        %3929 = vmatprep.mubr.f32.mxu0 %v3747
        %3930 = vmatmul.mubr.f32.gmra.mrb[0].mxu0 %v3746
        %v3931 = vpop.f32.mrb[0].mxu0
        %v3932 = vadd.f32 0.0, %v3931
        %v3933 = vpop.f32.mrb[0].mxu0
        %3934 = vmatprep.mubr.f32.mxu0 %v3749
        %3935 = vmatmul.mubr.f32.gmra.mrb[0].mxu0 %v3748
        %v3936 = vpop.f32.mrb[0].mxu0
        %v3937 = vadd.f32 0.0, %v3936
        %v3938 = vpop.f32.mrb[0].mxu0
        %3939 = vdwg.mxu0
        %s3940 = scalar_lea.vmem %s2, 48
        %v3941 = vld [vmem:[%s3940] sm:$0xff]
        %v3943 = vsel %vm1036, %v3817, 0
        %v3946 = vsel %vm1036, %v3822, 0
        %v3949 = vsel %vm1036, %v3827, 0
        %v3952 = vsel %vm1036, %v3832, 0
        %v3955 = vsel %vm1036, %v3837, 0
        %v3958 = vsel %vm1036, %v3842, 0
        %v3961 = vsel %vm1036, %v3847, 0
        %v3964 = vsel %vm1036, %v3852, 0
        %v3967 = vsel %vm1036, %v3857, 0
        %v3970 = vsel %vm1036, %v3862, 0
        %v3973 = vsel %vm1036, %v3867, 0
        %v3976 = vsel %vm1036, %v3872, 0
        %v3979 = vsel %vm1036, %v3877, 0
        %v3982 = vsel %vm1036, %v3882, 0
        %v3985 = vsel %vm1036, %v3887, 0
        %v3988 = vsel %vm1036, %v3892, 0
        %v3991 = vsel %vm1036, %v3897, 0
        %v3994 = vsel %vm1036, %v3902, 0
        %v3997 = vsel %vm1036, %v3907, 0
        %v4000 = vsel %vm1036, %v3912, 0
        %v4003 = vsel %vm1036, %v3917, 0
        %v4006 = vsel %vm1036, %v3922, 0
        %v4009 = vsel %vm1036, %v3927, 0
        %v4012 = vsel %vm1036, %v3932, 0
        %v4015 = vsel %vm1036, %v3937, 0
        %4017 = vmatprep.subr.mxu0 0.0
        %4018 = vmatpush1.msra.mxu0 %v3941
        %4019 = vmatprep.subr.mxu0 0.0
        %4020 = vmatpush1.msra.mxu0 0.0
        %4021 = vmatprep.subr.mxu0 0.0
        %4022 = vmatpush1.msra.mxu0 0.0
        %4023 = vmatprep.subr.mxu0 0.0
        %4024 = vmatpush1.msra.mxu0 0.0
        %4025 = vmatprep.subr.mxu0 0.0
        %4026 = vmatpush1.msra.mxu0 0.0
        %4027 = vmatprep.subr.mxu0 0.0
        %4028 = vmatpush1.msra.mxu0 0.0
        %4029 = vmatprep.subr.mxu0 0.0
        %4030 = vmatpush1.msra.mxu0 0.0
        %4031 = vmatprep.subr.mxu0 0.0
        %4032 = vmatpush1.msra.mxu0 0.0
        %4033 = vmatprep.subr.mxu0 0.0
        %4034 = vmatpush1.msra.mxu0 0.0
        %4035 = vmatprep.subr.mxu0 0.0
        %4036 = vmatpush1.msra.mxu0 0.0
        %4037 = vmatprep.subr.mxu0 0.0
        %4038 = vmatpush1.msra.mxu0 0.0
        %4039 = vmatprep.subr.mxu0 0.0
        %4040 = vmatpush1.msra.mxu0 0.0
        %4041 = vmatprep.subr.mxu0 0.0
        %4042 = vmatpush1.msra.mxu0 0.0
        %4043 = vmatprep.subr.mxu0 0.0
        %4044 = vmatpush1.msra.mxu0 0.0
        %4045 = vmatprep.subr.mxu0 0.0
        %4046 = vmatpush1.msra.mxu0 0.0
        %4047 = vmatprep.subr.mxu0 0.0
        %4048 = vmatpush1.msra.mxu0 0.0
        %4049 = vmatprep.subr.mxu0 0.0
        %4050 = vmatpush1.msra.mxu0 0.0
        %4051 = vmatprep.subr.mxu0 0.0
        %4052 = vmatpush1.msra.mxu0 0.0
        %4053 = vmatprep.subr.mxu0 0.0
        %4054 = vmatpush1.msra.mxu0 0.0
        %4055 = vmatprep.subr.mxu0 0.0
        %4056 = vmatpush1.msra.mxu0 0.0
        %4057 = vmatprep.subr.mxu0 0.0
        %4058 = vmatpush1.msra.mxu0 0.0
        %4059 = vmatprep.subr.mxu0 0.0
        %4060 = vmatpush1.msra.mxu0 0.0
        %4061 = vmatprep.subr.mxu0 0.0
        %4062 = vmatpush1.msra.mxu0 0.0
        %4063 = vmatprep.subr.mxu0 0.0
        %4064 = vmatpush1.msra.mxu0 0.0
        %4065 = vmatprep.subr.mxu0 0.0
        %4066 = vmatpush1.msra.mxu0 0.0
        %4067 = vmatprep.subr.mxu0 0.0
        %4068 = vmatpush1.msra.mxu0 0.0
        %4069 = vmatprep.subr.mxu0 0.0
        %4070 = vmatpush1.msra.mxu0 0.0
        %4071 = vmatprep.subr.mxu0 0.0
        %4072 = vmatpush1.msra.mxu0 0.0
        %4073 = vmatprep.subr.mxu0 0.0
        %4074 = vmatpush1.msra.mxu0 0.0
        %4075 = vmatprep.subr.mxu0 0.0
        %4076 = vmatpush1.msra.mxu0 0.0
        %4077 = vmatprep.subr.mxu0 0.0
        %4078 = vmatpush1.msra.mxu0 0.0
        %4079 = vmatprep.subr.mxu0 0.0
        %4080 = vmatpush1.msra.mxu0 0.0
        %4081 = vmatprep.mubr.f32.mxu0 0.0
        %4082 = vmatmul.mubr.f32.gmra.mrb[0].mxu0 %v3943
        %v4083 = vpop.f32.mrb[0].mxu0
        %v4084 = vadd.f32 0.0, %v4083
        %v4085 = vpop.f32.mrb[0].mxu0
        %4086 = vmatprep.mubr.f32.mxu0 0.0
        %4087 = vmatmul.mubr.f32.gmra.mrb[0].mxu0 %v3946
        %v4088 = vpop.f32.mrb[0].mxu0
        %v4089 = vadd.f32 0.0, %v4088
        %v4090 = vpop.f32.mrb[0].mxu0
        %4091 = vmatprep.mubr.f32.mxu0 0.0
        %4092 = vmatmul.mubr.f32.gmra.mrb[0].mxu0 %v3949
        %v4093 = vpop.f32.mrb[0].mxu0
        %v4094 = vadd.f32 0.0, %v4093
        %v4095 = vpop.f32.mrb[0].mxu0
        %4096 = vmatprep.mubr.f32.mxu0 0.0
        %4097 = vmatmul.mubr.f32.gmra.mrb[0].mxu0 %v3952
        %v4098 = vpop.f32.mrb[0].mxu0
        %v4099 = vadd.f32 0.0, %v4098
        %v4100 = vpop.f32.mrb[0].mxu0
        %4101 = vmatprep.mubr.f32.mxu0 0.0
        %4102 = vmatmul.mubr.f32.gmra.mrb[0].mxu0 %v3955
        %v4103 = vpop.f32.mrb[0].mxu0
        %v4104 = vadd.f32 0.0, %v4103
        %v4105 = vpop.f32.mrb[0].mxu0
        %4106 = vmatprep.mubr.f32.mxu0 0.0
        %4107 = vmatmul.mubr.f32.gmra.mrb[0].mxu0 %v3958
        %v4108 = vpop.f32.mrb[0].mxu0
        %v4109 = vadd.f32 0.0, %v4108
        %v4110 = vpop.f32.mrb[0].mxu0
        %4111 = vmatprep.mubr.f32.mxu0 0.0
        %4112 = vmatmul.mubr.f32.gmra.mrb[0].mxu0 %v3961
        %v4113 = vpop.f32.mrb[0].mxu0
        %v4114 = vadd.f32 0.0, %v4113
        %v4115 = vpop.f32.mrb[0].mxu0
        %4116 = vmatprep.mubr.f32.mxu0 0.0
        %4117 = vmatmul.mubr.f32.gmra.mrb[0].mxu0 %v3964
        %v4118 = vpop.f32.mrb[0].mxu0
        %v4119 = vadd.f32 0.0, %v4118
        %v4120 = vpop.f32.mrb[0].mxu0
        %4121 = vmatprep.mubr.f32.mxu0 0.0
        %4122 = vmatmul.mubr.f32.gmra.mrb[0].mxu0 %v3967
        %v4123 = vpop.f32.mrb[0].mxu0
        %v4124 = vadd.f32 0.0, %v4123
        %v4125 = vpop.f32.mrb[0].mxu0
        %4126 = vmatprep.mubr.f32.mxu0 0.0
        %4127 = vmatmul.mubr.f32.gmra.mrb[0].mxu0 %v3970
        %v4128 = vpop.f32.mrb[0].mxu0
        %v4129 = vadd.f32 0.0, %v4128
        %v4130 = vpop.f32.mrb[0].mxu0
        %4131 = vmatprep.mubr.f32.mxu0 0.0
        %4132 = vmatmul.mubr.f32.gmra.mrb[0].mxu0 %v3973
        %v4133 = vpop.f32.mrb[0].mxu0
        %v4134 = vadd.f32 0.0, %v4133
        %v4135 = vpop.f32.mrb[0].mxu0
        %4136 = vmatprep.mubr.f32.mxu0 0.0
        %4137 = vmatmul.mubr.f32.gmra.mrb[0].mxu0 %v3976
        %v4138 = vpop.f32.mrb[0].mxu0
        %v4139 = vadd.f32 0.0, %v4138
        %v4140 = vpop.f32.mrb[0].mxu0
        %4141 = vmatprep.mubr.f32.mxu0 0.0
        %4142 = vmatmul.mubr.f32.gmra.mrb[0].mxu0 %v3979
        %v4143 = vpop.f32.mrb[0].mxu0
        %v4144 = vadd.f32 0.0, %v4143
        %v4145 = vpop.f32.mrb[0].mxu0
        %4146 = vmatprep.mubr.f32.mxu0 0.0
        %4147 = vmatmul.mubr.f32.gmra.mrb[0].mxu0 %v3982
        %v4148 = vpop.f32.mrb[0].mxu0
        %v4149 = vadd.f32 0.0, %v4148
        %v4150 = vpop.f32.mrb[0].mxu0
        %4151 = vmatprep.mubr.f32.mxu0 0.0
        %4152 = vmatmul.mubr.f32.gmra.mrb[0].mxu0 %v3985
        %v4153 = vpop.f32.mrb[0].mxu0
        %v4154 = vadd.f32 0.0, %v4153
        %v4155 = vpop.f32.mrb[0].mxu0
        %4156 = vmatprep.mubr.f32.mxu0 0.0
        %4157 = vmatmul.mubr.f32.gmra.mrb[0].mxu0 %v3988
        %v4158 = vpop.f32.mrb[0].mxu0
        %v4159 = vadd.f32 0.0, %v4158
        %v4160 = vpop.f32.mrb[0].mxu0
        %4161 = vmatprep.mubr.f32.mxu0 0.0
        %4162 = vmatmul.mubr.f32.gmra.mrb[0].mxu0 %v3991
        %v4163 = vpop.f32.mrb[0].mxu0
        %v4164 = vadd.f32 0.0, %v4163
        %v4165 = vpop.f32.mrb[0].mxu0
        %4166 = vmatprep.mubr.f32.mxu0 0.0
        %4167 = vmatmul.mubr.f32.gmra.mrb[0].mxu0 %v3994
        %v4168 = vpop.f32.mrb[0].mxu0
        %v4169 = vadd.f32 0.0, %v4168
        %v4170 = vpop.f32.mrb[0].mxu0
        %4171 = vmatprep.mubr.f32.mxu0 0.0
        %4172 = vmatmul.mubr.f32.gmra.mrb[0].mxu0 %v3997
        %v4173 = vpop.f32.mrb[0].mxu0
        %v4174 = vadd.f32 0.0, %v4173
        %v4175 = vpop.f32.mrb[0].mxu0
        %4176 = vmatprep.mubr.f32.mxu0 0.0
        %4177 = vmatmul.mubr.f32.gmra.mrb[0].mxu0 %v4000
        %v4178 = vpop.f32.mrb[0].mxu0
        %v4179 = vadd.f32 0.0, %v4178
        %v4180 = vpop.f32.mrb[0].mxu0
        %4181 = vmatprep.mubr.f32.mxu0 0.0
        %4182 = vmatmul.mubr.f32.gmra.mrb[0].mxu0 %v4003
        %v4183 = vpop.f32.mrb[0].mxu0
        %v4184 = vadd.f32 0.0, %v4183
        %v4185 = vpop.f32.mrb[0].mxu0
        %4186 = vmatprep.mubr.f32.mxu0 0.0
        %4187 = vmatmul.mubr.f32.gmra.mrb[0].mxu0 %v4006
        %v4188 = vpop.f32.mrb[0].mxu0
        %v4189 = vadd.f32 0.0, %v4188
        %v4190 = vpop.f32.mrb[0].mxu0
        %4191 = vmatprep.mubr.f32.mxu0 0.0
        %4192 = vmatmul.mubr.f32.gmra.mrb[0].mxu0 %v4009
        %v4193 = vpop.f32.mrb[0].mxu0
        %v4194 = vadd.f32 0.0, %v4193
        %v4195 = vpop.f32.mrb[0].mxu0
        %4196 = vmatprep.mubr.f32.mxu0 0.0
        %4197 = vmatmul.mubr.f32.gmra.mrb[0].mxu0 %v4012
        %v4198 = vpop.f32.mrb[0].mxu0
        %v4199 = vadd.f32 0.0, %v4198
        %v4200 = vpop.f32.mrb[0].mxu0
        %4201 = vmatprep.mubr.f32.mxu0 0.0
        %4202 = vmatmul.mubr.f32.gmra.mrb[0].mxu0 %v4015
        %v4203 = vpop.f32.mrb[0].mxu0
        %v4204 = vadd.f32 0.0, %v4203
        %v4205 = vpop.f32.mrb[0].mxu0
        %4206 = vdwg.mxu0
        %v4207 = vadd.f32 %v3674, %v4084
        %v4208 = vadd.f32 %v3675, %v4089
        %v4209 = vadd.f32 %v3676, %v4094
        %v4210 = vadd.f32 %v3677, %v4099
        %v4211 = vadd.f32 %v3678, %v4104
        %v4212 = vadd.f32 %v3679, %v4109
        %v4213 = vadd.f32 %v3680, %v4114
        %v4214 = vadd.f32 %v3681, %v4119
        %v4215 = vadd.f32 %v3682, %v4124
        %v4216 = vadd.f32 %v3683, %v4129
        %v4217 = vadd.f32 %v3684, %v4134
        %v4218 = vadd.f32 %v3685, %v4139
        %v4219 = vadd.f32 %v3686, %v4144
        %v4220 = vadd.f32 %v3687, %v4149
        %v4221 = vadd.f32 %v3688, %v4154
        %v4222 = vadd.f32 %v3689, %v4159
        %v4223 = vadd.f32 %v3690, %v4164
        %v4224 = vadd.f32 %v3691, %v4169
        %v4225 = vadd.f32 %v3692, %v4174
        %v4226 = vadd.f32 %v3693, %v4179
        %v4227 = vadd.f32 %v3694, %v4184
        %v4228 = vadd.f32 %v3695, %v4189
        %v4229 = vadd.f32 %v3696, %v4194
        %v4230 = vadd.f32 %v3697, %v4199
        %v4231 = vadd.f32 %v3698, %v4204
        %s4232 = scalar_lea.vmem [#allocation2], 2800
        %v4233 = vld [vmem:[%s4232] sm:$0xff]
        %v4234 = vld [vmem:[%s4232 + $0x8] sm:$0xff]
        %v4235 = vld [vmem:[%s4232 + $0x10] sm:$0xff]
        %v4236 = vld [vmem:[%s4232 + $0x18] sm:$0xff]
        %v4237 = vld [vmem:[%s4232 + $0x20] sm:$0xff]
        %v4238 = vld [vmem:[%s4232 + $0x28] sm:$0xff]
        %v4239 = vld [vmem:[%s4232 + $0x30] sm:$0xff]
        %v4240 = vld [vmem:[%s4232 + $0x38] sm:$0xff]
        %v4241 = vld [vmem:[%s4232 + $0x40] sm:$0xff]
        %v4242 = vld [vmem:[%s4232 + $0x48] sm:$0xff]
        %v4243 = vld [vmem:[%s4232 + $0x50] sm:$0xff]
        %v4244 = vld [vmem:[%s4232 + $0x58] sm:$0xff]
        %v4245 = vld [vmem:[%s4232 + $0x60] sm:$0xff]
        %v4246 = vld [vmem:[%s4232 + $0x68] sm:$0xff]
        %v4247 = vld [vmem:[%s4232 + $0x70] sm:$0xff]
        %v4248 = vld [vmem:[%s4232 + $0x78] sm:$0xff]
        %v4249 = vld [vmem:[%s4232 + $0x80] sm:$0xff]
        %v4250 = vld [vmem:[%s4232 + $0x88] sm:$0xff]
        %v4251 = vld [vmem:[%s4232 + $0x90] sm:$0xff]
        %v4252 = vld [vmem:[%s4232 + $0x98] sm:$0xff]
        %v4253 = vld [vmem:[%s4232 + $0xa0] sm:$0xff]
        %v4254 = vld [vmem:[%s4232 + $0xa8] sm:$0xff]
        %v4255 = vld [vmem:[%s4232 + $0xb0] sm:$0xff]
        %v4256 = vld [vmem:[%s4232 + $0xb8] sm:$0xff]
        %v4257 = vld [vmem:[%s4232 + $0xc0] sm:$0xff]
        %v4258 = vld [vmem:[%s4232 + $0xc8] sm:$0xff]
        %v4259 = vld [vmem:[%s4232 + $0xd0] sm:$0xff]
        %v4260 = vld [vmem:[%s4232 + $0xd8] sm:$0xff]
        %v4261 = vld [vmem:[%s4232 + $0xe0] sm:$0xff]
        %v4262 = vld [vmem:[%s4232 + $0xe8] sm:$0xff]
        %v4263 = vld [vmem:[%s4232 + $0xf0] sm:$0xff]
        %v4264 = vld [vmem:[%s4232 + $0xf8] sm:$0xff]
        %v4265 = vld [vmem:[%s4232 + $0x100] sm:$0xff]
        %v4266 = vld [vmem:[%s4232 + $0x108] sm:$0xff]
        %v4267 = vld [vmem:[%s4232 + $0x110] sm:$0xff]
        %v4268 = vld [vmem:[%s4232 + $0x118] sm:$0xff]
        %v4269 = vld [vmem:[%s4232 + $0x120] sm:$0xff]
        %v4270 = vld [vmem:[%s4232 + $0x128] sm:$0xff]
        %v4271 = vld [vmem:[%s4232 + $0x130] sm:$0xff]
        %v4272 = vld [vmem:[%s4232 + $0x138] sm:$0xff]
        %v4273 = vld [vmem:[%s4232 + $0x140] sm:$0xff]
        %v4274 = vld [vmem:[%s4232 + $0x148] sm:$0xff]
        %v4275 = vld [vmem:[%s4232 + $0x150] sm:$0xff]
        %v4276 = vld [vmem:[%s4232 + $0x158] sm:$0xff]
        %v4277 = vld [vmem:[%s4232 + $0x160] sm:$0xff]
        %v4278 = vld [vmem:[%s4232 + $0x168] sm:$0xff]
        %v4279 = vld [vmem:[%s4232 + $0x170] sm:$0xff]
        %v4280 = vld [vmem:[%s4232 + $0x178] sm:$0xff]
        %v4281 = vld [vmem:[%s4232 + $0x180] sm:$0xf]
        %v4282 = vld [vmem:[%s4232 + $0x188] sm:$0xf]
        %4283 = vmatprep.subr.mxu0 0.0
        %4284 = vmatpush1.msra.mxu0 %v520
        %4285 = vmatprep.subr.mxu0 0.0
        %4286 = vmatpush1.msra.mxu0 %v521
        %4287 = vmatprep.subr.mxu0 0.0
        %4288 = vmatpush1.msra.mxu0 %v522
        %4289 = vmatprep.subr.mxu0 0.0
        %4290 = vmatpush1.msra.mxu0 %v523
        %4291 = vmatprep.subr.mxu0 0.0
        %4292 = vmatpush1.msra.mxu0 %v524
        %4293 = vmatprep.subr.mxu0 0.0
        %4294 = vmatpush1.msra.mxu0 %v525
        %4295 = vmatprep.subr.mxu0 0.0
        %4296 = vmatpush1.msra.mxu0 %v526
        %4297 = vmatprep.subr.mxu0 0.0
        %4298 = vmatpush1.msra.mxu0 %v527
        %4299 = vmatprep.subr.mxu0 0.0
        %4300 = vmatpush1.msra.mxu0 %v528
        %4301 = vmatprep.subr.mxu0 0.0
        %4302 = vmatpush1.msra.mxu0 %v529
        %4303 = vmatprep.subr.mxu0 0.0
        %4304 = vmatpush1.msra.mxu0 %v530
        %4305 = vmatprep.subr.mxu0 0.0
        %4306 = vmatpush1.msra.mxu0 %v531
        %4307 = vmatprep.subr.mxu0 0.0
        %4308 = vmatpush1.msra.mxu0 %v532
        %4309 = vmatprep.subr.mxu0 0.0
        %4310 = vmatpush1.msra.mxu0 %v533
        %4311 = vmatprep.subr.mxu0 0.0
        %4312 = vmatpush1.msra.mxu0 %v534
        %4313 = vmatprep.subr.mxu0 0.0
        %4314 = vmatpush1.msra.mxu0 %v535
        %4315 = vmatprep.subr.mxu0 0.0
        %4316 = vmatpush1.msra.mxu0 %v536
        %4317 = vmatprep.subr.mxu0 0.0
        %4318 = vmatpush1.msra.mxu0 %v537
        %4319 = vmatprep.subr.mxu0 0.0
        %4320 = vmatpush1.msra.mxu0 %v538
        %4321 = vmatprep.subr.mxu0 0.0
        %4322 = vmatpush1.msra.mxu0 %v539
        %4323 = vmatprep.subr.mxu0 0.0
        %4324 = vmatpush1.msra.mxu0 %v540
        %4325 = vmatprep.subr.mxu0 0.0
        %4326 = vmatpush1.msra.mxu0 %v541
        %4327 = vmatprep.subr.mxu0 0.0
        %4328 = vmatpush1.msra.mxu0 %v542
        %4329 = vmatprep.subr.mxu0 0.0
        %4330 = vmatpush1.msra.mxu0 %v543
        %4331 = vmatprep.subr.mxu0 0.0
        %4332 = vmatpush1.msra.mxu0 %v544
        %4333 = vmatprep.subr.mxu0 0.0
        %4334 = vmatpush1.msra.mxu0 %v545
        %4335 = vmatprep.subr.mxu0 0.0
        %4336 = vmatpush1.msra.mxu0 %v546
        %4337 = vmatprep.subr.mxu0 0.0
        %4338 = vmatpush1.msra.mxu0 %v547
        %4339 = vmatprep.subr.mxu0 0.0
        %4340 = vmatpush1.msra.mxu0 %v548
        %4341 = vmatprep.subr.mxu0 0.0
        %4342 = vmatpush1.msra.mxu0 %v549
        %4343 = vmatprep.subr.mxu0 0.0
        %4344 = vmatpush1.msra.mxu0 %v550
        %4345 = vmatprep.subr.mxu0 0.0
        %4346 = vmatpush1.msra.mxu0 %v551
        %4347 = vmatprep.mubr.f32.mxu0 %v4234
        %4348 = vmatmul.mubr.f32.gmra.mrb[0].mxu0 %v4233
        %v4349 = vpop.f32.mrb[0].mxu0
        %v4350 = vadd.f32 0.0, %v4349
        %v4351 = vpop.f32.mrb[0].mxu0
        %4352 = vmatprep.mubr.f32.mxu0 %v4236
        %4353 = vmatmul.mubr.f32.gmra.mrb[0].mxu0 %v4235
        %v4354 = vpop.f32.mrb[0].mxu0
        %v4355 = vadd.f32 0.0, %v4354
        %v4356 = vpop.f32.mrb[0].mxu0
        %4357 = vmatprep.mubr.f32.mxu0 %v4238
        %4358 = vmatmul.mubr.f32.gmra.mrb[0].mxu0 %v4237
        %v4359 = vpop.f32.mrb[0].mxu0
        %v4360 = vadd.f32 0.0, %v4359
        %v4361 = vpop.f32.mrb[0].mxu0
        %4362 = vmatprep.mubr.f32.mxu0 %v4240
        %4363 = vmatmul.mubr.f32.gmra.mrb[0].mxu0 %v4239
        %v4364 = vpop.f32.mrb[0].mxu0
        %v4365 = vadd.f32 0.0, %v4364
        %v4366 = vpop.f32.mrb[0].mxu0
        %4367 = vmatprep.mubr.f32.mxu0 %v4242
        %4368 = vmatmul.mubr.f32.gmra.mrb[0].mxu0 %v4241
        %v4369 = vpop.f32.mrb[0].mxu0
        %v4370 = vadd.f32 0.0, %v4369
        %v4371 = vpop.f32.mrb[0].mxu0
        %4372 = vmatprep.mubr.f32.mxu0 %v4244
        %4373 = vmatmul.mubr.f32.gmra.mrb[0].mxu0 %v4243
        %v4374 = vpop.f32.mrb[0].mxu0
        %v4375 = vadd.f32 0.0, %v4374
        %v4376 = vpop.f32.mrb[0].mxu0
        %4377 = vmatprep.mubr.f32.mxu0 %v4246
        %4378 = vmatmul.mubr.f32.gmra.mrb[0].mxu0 %v4245
        %v4379 = vpop.f32.mrb[0].mxu0
        %v4380 = vadd.f32 0.0, %v4379
        %v4381 = vpop.f32.mrb[0].mxu0
        %4382 = vmatprep.mubr.f32.mxu0 %v4248
        %4383 = vmatmul.mubr.f32.gmra.mrb[0].mxu0 %v4247
        %v4384 = vpop.f32.mrb[0].mxu0
        %v4385 = vadd.f32 0.0, %v4384
        %v4386 = vpop.f32.mrb[0].mxu0
        %4387 = vmatprep.mubr.f32.mxu0 %v4250
        %4388 = vmatmul.mubr.f32.gmra.mrb[0].mxu0 %v4249
        %v4389 = vpop.f32.mrb[0].mxu0
        %v4390 = vadd.f32 0.0, %v4389
        %v4391 = vpop.f32.mrb[0].mxu0
        %4392 = vmatprep.mubr.f32.mxu0 %v4252
        %4393 = vmatmul.mubr.f32.gmra.mrb[0].mxu0 %v4251
        %v4394 = vpop.f32.mrb[0].mxu0
        %v4395 = vadd.f32 0.0, %v4394
        %v4396 = vpop.f32.mrb[0].mxu0
        %4397 = vmatprep.mubr.f32.mxu0 %v4254
        %4398 = vmatmul.mubr.f32.gmra.mrb[0].mxu0 %v4253
        %v4399 = vpop.f32.mrb[0].mxu0
        %v4400 = vadd.f32 0.0, %v4399
        %v4401 = vpop.f32.mrb[0].mxu0
        %4402 = vmatprep.mubr.f32.mxu0 %v4256
        %4403 = vmatmul.mubr.f32.gmra.mrb[0].mxu0 %v4255
        %v4404 = vpop.f32.mrb[0].mxu0
        %v4405 = vadd.f32 0.0, %v4404
        %v4406 = vpop.f32.mrb[0].mxu0
        %4407 = vmatprep.mubr.f32.mxu0 %v4258
        %4408 = vmatmul.mubr.f32.gmra.mrb[0].mxu0 %v4257
        %v4409 = vpop.f32.mrb[0].mxu0
        %v4410 = vadd.f32 0.0, %v4409
        %v4411 = vpop.f32.mrb[0].mxu0
        %4412 = vmatprep.mubr.f32.mxu0 %v4260
        %4413 = vmatmul.mubr.f32.gmra.mrb[0].mxu0 %v4259
        %v4414 = vpop.f32.mrb[0].mxu0
        %v4415 = vadd.f32 0.0, %v4414
        %v4416 = vpop.f32.mrb[0].mxu0
        %4417 = vmatprep.mubr.f32.mxu0 %v4262
        %4418 = vmatmul.mubr.f32.gmra.mrb[0].mxu0 %v4261
        %v4419 = vpop.f32.mrb[0].mxu0
        %v4420 = vadd.f32 0.0, %v4419
        %v4421 = vpop.f32.mrb[0].mxu0
        %4422 = vmatprep.mubr.f32.mxu0 %v4264
        %4423 = vmatmul.mubr.f32.gmra.mrb[0].mxu0 %v4263
        %v4424 = vpop.f32.mrb[0].mxu0
        %v4425 = vadd.f32 0.0, %v4424
        %v4426 = vpop.f32.mrb[0].mxu0
        %4427 = vmatprep.mubr.f32.mxu0 %v4266
        %4428 = vmatmul.mubr.f32.gmra.mrb[0].mxu0 %v4265
        %v4429 = vpop.f32.mrb[0].mxu0
        %v4430 = vadd.f32 0.0, %v4429
        %v4431 = vpop.f32.mrb[0].mxu0
        %4432 = vmatprep.mubr.f32.mxu0 %v4268
        %4433 = vmatmul.mubr.f32.gmra.mrb[0].mxu0 %v4267
        %v4434 = vpop.f32.mrb[0].mxu0
        %v4435 = vadd.f32 0.0, %v4434
        %v4436 = vpop.f32.mrb[0].mxu0
        %4437 = vmatprep.mubr.f32.mxu0 %v4270
        %4438 = vmatmul.mubr.f32.gmra.mrb[0].mxu0 %v4269
        %v4439 = vpop.f32.mrb[0].mxu0
        %v4440 = vadd.f32 0.0, %v4439
        %v4441 = vpop.f32.mrb[0].mxu0
        %4442 = vmatprep.mubr.f32.mxu0 %v4272
        %4443 = vmatmul.mubr.f32.gmra.mrb[0].mxu0 %v4271
        %v4444 = vpop.f32.mrb[0].mxu0
        %v4445 = vadd.f32 0.0, %v4444
        %v4446 = vpop.f32.mrb[0].mxu0
        %4447 = vmatprep.mubr.f32.mxu0 %v4274
        %4448 = vmatmul.mubr.f32.gmra.mrb[0].mxu0 %v4273
        %v4449 = vpop.f32.mrb[0].mxu0
        %v4450 = vadd.f32 0.0, %v4449
        %v4451 = vpop.f32.mrb[0].mxu0
        %4452 = vmatprep.mubr.f32.mxu0 %v4276
        %4453 = vmatmul.mubr.f32.gmra.mrb[0].mxu0 %v4275
        %v4454 = vpop.f32.mrb[0].mxu0
        %v4455 = vadd.f32 0.0, %v4454
        %v4456 = vpop.f32.mrb[0].mxu0
        %4457 = vmatprep.mubr.f32.mxu0 %v4278
        %4458 = vmatmul.mubr.f32.gmra.mrb[0].mxu0 %v4277
        %v4459 = vpop.f32.mrb[0].mxu0
        %v4460 = vadd.f32 0.0, %v4459
        %v4461 = vpop.f32.mrb[0].mxu0
        %4462 = vmatprep.mubr.f32.mxu0 %v4280
        %4463 = vmatmul.mubr.f32.gmra.mrb[0].mxu0 %v4279
        %v4464 = vpop.f32.mrb[0].mxu0
        %v4465 = vadd.f32 0.0, %v4464
        %v4466 = vpop.f32.mrb[0].mxu0
        %4467 = vmatprep.mubr.f32.mxu0 %v4282
        %4468 = vmatmul.mubr.f32.gmra.mrb[0].mxu0 %v4281
        %v4469 = vpop.f32.mrb[0].mxu0
        %v4470 = vadd.f32 0.0, %v4469
        %v4471 = vpop.f32.mrb[0].mxu0
        %4472 = vdwg.mxu0
        %s4473 = scalar_lea.vmem %s2, 56
        %v4474 = vld [vmem:[%s4473] sm:$0xff]
        %v4476 = vsel %vm1036, %v4350, 0
        %v4479 = vsel %vm1036, %v4355, 0
        %v4482 = vsel %vm1036, %v4360, 0
        %v4485 = vsel %vm1036, %v4365, 0
        %v4488 = vsel %vm1036, %v4370, 0
        %v4491 = vsel %vm1036, %v4375, 0
        %v4494 = vsel %vm1036, %v4380, 0
        %v4497 = vsel %vm1036, %v4385, 0
        %v4500 = vsel %vm1036, %v4390, 0
        %v4503 = vsel %vm1036, %v4395, 0
        %v4506 = vsel %vm1036, %v4400, 0
        %v4509 = vsel %vm1036, %v4405, 0
        %v4512 = vsel %vm1036, %v4410, 0
        %v4515 = vsel %vm1036, %v4415, 0
        %v4518 = vsel %vm1036, %v4420, 0
        %v4521 = vsel %vm1036, %v4425, 0
        %v4524 = vsel %vm1036, %v4430, 0
        %v4527 = vsel %vm1036, %v4435, 0
        %v4530 = vsel %vm1036, %v4440, 0
        %v4533 = vsel %vm1036, %v4445, 0
        %v4536 = vsel %vm1036, %v4450, 0
        %v4539 = vsel %vm1036, %v4455, 0
        %v4542 = vsel %vm1036, %v4460, 0
        %v4545 = vsel %vm1036, %v4465, 0
        %v4548 = vsel %vm1036, %v4470, 0
        %4550 = vmatprep.subr.mxu0 0.0
        %4551 = vmatpush1.msra.mxu0 %v4474
        %4552 = vmatprep.subr.mxu0 0.0
        %4553 = vmatpush1.msra.mxu0 0.0
        %4554 = vmatprep.subr.mxu0 0.0
        %4555 = vmatpush1.msra.mxu0 0.0
        %4556 = vmatprep.subr.mxu0 0.0
        %4557 = vmatpush1.msra.mxu0 0.0
        %4558 = vmatprep.subr.mxu0 0.0
        %4559 = vmatpush1.msra.mxu0 0.0
        %4560 = vmatprep.subr.mxu0 0.0
        %4561 = vmatpush1.msra.mxu0 0.0
        %4562 = vmatprep.subr.mxu0 0.0
        %4563 = vmatpush1.msra.mxu0 0.0
        %4564 = vmatprep.subr.mxu0 0.0
        %4565 = vmatpush1.msra.mxu0 0.0
        %4566 = vmatprep.subr.mxu0 0.0
        %4567 = vmatpush1.msra.mxu0 0.0
        %4568 = vmatprep.subr.mxu0 0.0
        %4569 = vmatpush1.msra.mxu0 0.0
        %4570 = vmatprep.subr.mxu0 0.0
        %4571 = vmatpush1.msra.mxu0 0.0
        %4572 = vmatprep.subr.mxu0 0.0
        %4573 = vmatpush1.msra.mxu0 0.0
        %4574 = vmatprep.subr.mxu0 0.0
        %4575 = vmatpush1.msra.mxu0 0.0
        %4576 = vmatprep.subr.mxu0 0.0
        %4577 = vmatpush1.msra.mxu0 0.0
        %4578 = vmatprep.subr.mxu0 0.0
        %4579 = vmatpush1.msra.mxu0 0.0
        %4580 = vmatprep.subr.mxu0 0.0
        %4581 = vmatpush1.msra.mxu0 0.0
        %4582 = vmatprep.subr.mxu0 0.0
        %4583 = vmatpush1.msra.mxu0 0.0
        %4584 = vmatprep.subr.mxu0 0.0
        %4585 = vmatpush1.msra.mxu0 0.0
        %4586 = vmatprep.subr.mxu0 0.0
        %4587 = vmatpush1.msra.mxu0 0.0
        %4588 = vmatprep.subr.mxu0 0.0
        %4589 = vmatpush1.msra.mxu0 0.0
        %4590 = vmatprep.subr.mxu0 0.0
        %4591 = vmatpush1.msra.mxu0 0.0
        %4592 = vmatprep.subr.mxu0 0.0
        %4593 = vmatpush1.msra.mxu0 0.0
        %4594 = vmatprep.subr.mxu0 0.0
        %4595 = vmatpush1.msra.mxu0 0.0
        %4596 = vmatprep.subr.mxu0 0.0
        %4597 = vmatpush1.msra.mxu0 0.0
        %4598 = vmatprep.subr.mxu0 0.0
        %4599 = vmatpush1.msra.mxu0 0.0
        %4600 = vmatprep.subr.mxu0 0.0
        %4601 = vmatpush1.msra.mxu0 0.0
        %4602 = vmatprep.subr.mxu0 0.0
        %4603 = vmatpush1.msra.mxu0 0.0
        %4604 = vmatprep.subr.mxu0 0.0
        %4605 = vmatpush1.msra.mxu0 0.0
        %4606 = vmatprep.subr.mxu0 0.0
        %4607 = vmatpush1.msra.mxu0 0.0
        %4608 = vmatprep.subr.mxu0 0.0
        %4609 = vmatpush1.msra.mxu0 0.0
        %4610 = vmatprep.subr.mxu0 0.0
        %4611 = vmatpush1.msra.mxu0 0.0
        %4612 = vmatprep.subr.mxu0 0.0
        %4613 = vmatpush1.msra.mxu0 0.0
        %4614 = vmatprep.mubr.f32.mxu0 0.0
        %4615 = vmatmul.mubr.f32.gmra.mrb[0].mxu0 %v4476
        %v4616 = vpop.f32.mrb[0].mxu0
        %v4617 = vadd.f32 0.0, %v4616
        %v4618 = vpop.f32.mrb[0].mxu0
        %4619 = vmatprep.mubr.f32.mxu0 0.0
        %4620 = vmatmul.mubr.f32.gmra.mrb[0].mxu0 %v4479
        %v4621 = vpop.f32.mrb[0].mxu0
        %v4622 = vadd.f32 0.0, %v4621
        %v4623 = vpop.f32.mrb[0].mxu0
        %4624 = vmatprep.mubr.f32.mxu0 0.0
        %4625 = vmatmul.mubr.f32.gmra.mrb[0].mxu0 %v4482
        %v4626 = vpop.f32.mrb[0].mxu0
        %v4627 = vadd.f32 0.0, %v4626
        %v4628 = vpop.f32.mrb[0].mxu0
        %4629 = vmatprep.mubr.f32.mxu0 0.0
        %4630 = vmatmul.mubr.f32.gmra.mrb[0].mxu0 %v4485
        %v4631 = vpop.f32.mrb[0].mxu0
        %v4632 = vadd.f32 0.0, %v4631
        %v4633 = vpop.f32.mrb[0].mxu0
        %4634 = vmatprep.mubr.f32.mxu0 0.0
        %4635 = vmatmul.mubr.f32.gmra.mrb[0].mxu0 %v4488
        %v4636 = vpop.f32.mrb[0].mxu0
        %v4637 = vadd.f32 0.0, %v4636
        %v4638 = vpop.f32.mrb[0].mxu0
        %4639 = vmatprep.mubr.f32.mxu0 0.0
        %4640 = vmatmul.mubr.f32.gmra.mrb[0].mxu0 %v4491
        %v4641 = vpop.f32.mrb[0].mxu0
        %v4642 = vadd.f32 0.0, %v4641
        %v4643 = vpop.f32.mrb[0].mxu0
        %4644 = vmatprep.mubr.f32.mxu0 0.0
        %4645 = vmatmul.mubr.f32.gmra.mrb[0].mxu0 %v4494
        %v4646 = vpop.f32.mrb[0].mxu0
        %v4647 = vadd.f32 0.0, %v4646
        %v4648 = vpop.f32.mrb[0].mxu0
        %4649 = vmatprep.mubr.f32.mxu0 0.0
        %4650 = vmatmul.mubr.f32.gmra.mrb[0].mxu0 %v4497
        %v4651 = vpop.f32.mrb[0].mxu0
        %v4652 = vadd.f32 0.0, %v4651
        %v4653 = vpop.f32.mrb[0].mxu0
        %4654 = vmatprep.mubr.f32.mxu0 0.0
        %4655 = vmatmul.mubr.f32.gmra.mrb[0].mxu0 %v4500
        %v4656 = vpop.f32.mrb[0].mxu0
        %v4657 = vadd.f32 0.0, %v4656
        %v4658 = vpop.f32.mrb[0].mxu0
        %4659 = vmatprep.mubr.f32.mxu0 0.0
        %4660 = vmatmul.mubr.f32.gmra.mrb[0].mxu0 %v4503
        %v4661 = vpop.f32.mrb[0].mxu0
        %v4662 = vadd.f32 0.0, %v4661
        %v4663 = vpop.f32.mrb[0].mxu0
        %4664 = vmatprep.mubr.f32.mxu0 0.0
        %4665 = vmatmul.mubr.f32.gmra.mrb[0].mxu0 %v4506
        %v4666 = vpop.f32.mrb[0].mxu0
        %v4667 = vadd.f32 0.0, %v4666
        %v4668 = vpop.f32.mrb[0].mxu0
        %4669 = vmatprep.mubr.f32.mxu0 0.0
        %4670 = vmatmul.mubr.f32.gmra.mrb[0].mxu0 %v4509
        %v4671 = vpop.f32.mrb[0].mxu0
        %v4672 = vadd.f32 0.0, %v4671
        %v4673 = vpop.f32.mrb[0].mxu0
        %4674 = vmatprep.mubr.f32.mxu0 0.0
        %4675 = vmatmul.mubr.f32.gmra.mrb[0].mxu0 %v4512
        %v4676 = vpop.f32.mrb[0].mxu0
        %v4677 = vadd.f32 0.0, %v4676
        %v4678 = vpop.f32.mrb[0].mxu0
        %4679 = vmatprep.mubr.f32.mxu0 0.0
        %4680 = vmatmul.mubr.f32.gmra.mrb[0].mxu0 %v4515
        %v4681 = vpop.f32.mrb[0].mxu0
        %v4682 = vadd.f32 0.0, %v4681
        %v4683 = vpop.f32.mrb[0].mxu0
        %4684 = vmatprep.mubr.f32.mxu0 0.0
        %4685 = vmatmul.mubr.f32.gmra.mrb[0].mxu0 %v4518
        %v4686 = vpop.f32.mrb[0].mxu0
        %v4687 = vadd.f32 0.0, %v4686
        %v4688 = vpop.f32.mrb[0].mxu0
        %4689 = vmatprep.mubr.f32.mxu0 0.0
        %4690 = vmatmul.mubr.f32.gmra.mrb[0].mxu0 %v4521
        %v4691 = vpop.f32.mrb[0].mxu0
        %v4692 = vadd.f32 0.0, %v4691
        %v4693 = vpop.f32.mrb[0].mxu0
        %4694 = vmatprep.mubr.f32.mxu0 0.0
        %4695 = vmatmul.mubr.f32.gmra.mrb[0].mxu0 %v4524
        %v4696 = vpop.f32.mrb[0].mxu0
        %v4697 = vadd.f32 0.0, %v4696
        %v4698 = vpop.f32.mrb[0].mxu0
        %4699 = vmatprep.mubr.f32.mxu0 0.0
        %4700 = vmatmul.mubr.f32.gmra.mrb[0].mxu0 %v4527
        %v4701 = vpop.f32.mrb[0].mxu0
        %v4702 = vadd.f32 0.0, %v4701
        %v4703 = vpop.f32.mrb[0].mxu0
        %4704 = vmatprep.mubr.f32.mxu0 0.0
        %4705 = vmatmul.mubr.f32.gmra.mrb[0].mxu0 %v4530
        %v4706 = vpop.f32.mrb[0].mxu0
        %v4707 = vadd.f32 0.0, %v4706
        %v4708 = vpop.f32.mrb[0].mxu0
        %4709 = vmatprep.mubr.f32.mxu0 0.0
        %4710 = vmatmul.mubr.f32.gmra.mrb[0].mxu0 %v4533
        %v4711 = vpop.f32.mrb[0].mxu0
        %v4712 = vadd.f32 0.0, %v4711
        %v4713 = vpop.f32.mrb[0].mxu0
        %4714 = vmatprep.mubr.f32.mxu0 0.0
        %4715 = vmatmul.mubr.f32.gmra.mrb[0].mxu0 %v4536
        %v4716 = vpop.f32.mrb[0].mxu0
        %v4717 = vadd.f32 0.0, %v4716
        %v4718 = vpop.f32.mrb[0].mxu0
        %4719 = vmatprep.mubr.f32.mxu0 0.0
        %4720 = vmatmul.mubr.f32.gmra.mrb[0].mxu0 %v4539
        %v4721 = vpop.f32.mrb[0].mxu0
        %v4722 = vadd.f32 0.0, %v4721
        %v4723 = vpop.f32.mrb[0].mxu0
        %4724 = vmatprep.mubr.f32.mxu0 0.0
        %4725 = vmatmul.mubr.f32.gmra.mrb[0].mxu0 %v4542
        %v4726 = vpop.f32.mrb[0].mxu0
        %v4727 = vadd.f32 0.0, %v4726
        %v4728 = vpop.f32.mrb[0].mxu0
        %4729 = vmatprep.mubr.f32.mxu0 0.0
        %4730 = vmatmul.mubr.f32.gmra.mrb[0].mxu0 %v4545
        %v4731 = vpop.f32.mrb[0].mxu0
        %v4732 = vadd.f32 0.0, %v4731
        %v4733 = vpop.f32.mrb[0].mxu0
        %4734 = vmatprep.mubr.f32.mxu0 0.0
        %4735 = vmatmul.mubr.f32.gmra.mrb[0].mxu0 %v4548
        %v4736 = vpop.f32.mrb[0].mxu0
        %v4737 = vadd.f32 0.0, %v4736
        %v4738 = vpop.f32.mrb[0].mxu0
        %4739 = vdwg.mxu0
        %v4740 = vadd.f32 %v4207, %v4617
        %v4741 = vadd.f32 %v4208, %v4622
        %v4742 = vadd.f32 %v4209, %v4627
        %v4743 = vadd.f32 %v4210, %v4632
        %v4744 = vadd.f32 %v4211, %v4637
        %v4745 = vadd.f32 %v4212, %v4642
        %v4746 = vadd.f32 %v4213, %v4647
        %v4747 = vadd.f32 %v4214, %v4652
        %v4748 = vadd.f32 %v4215, %v4657
        %v4749 = vadd.f32 %v4216, %v4662
        %v4750 = vadd.f32 %v4217, %v4667
        %v4751 = vadd.f32 %v4218, %v4672
        %v4752 = vadd.f32 %v4219, %v4677
        %v4753 = vadd.f32 %v4220, %v4682
        %v4754 = vadd.f32 %v4221, %v4687
        %v4755 = vadd.f32 %v4222, %v4692
        %v4756 = vadd.f32 %v4223, %v4697
        %v4757 = vadd.f32 %v4224, %v4702
        %v4758 = vadd.f32 %v4225, %v4707
        %v4759 = vadd.f32 %v4226, %v4712
        %v4760 = vadd.f32 %v4227, %v4717
        %v4761 = vadd.f32 %v4228, %v4722
        %v4762 = vadd.f32 %v4229, %v4727
        %v4763 = vadd.f32 %v4230, %v4732
        %v4764 = vadd.f32 %v4231, %v4737
        %s4765 = scalar_lea.vmem [#allocation2], 3200
        %v4766 = vld [vmem:[%s4765] sm:$0xff]
        %v4767 = vld [vmem:[%s4765 + $0x8] sm:$0xff]
        %v4768 = vld [vmem:[%s4765 + $0x10] sm:$0xff]
        %v4769 = vld [vmem:[%s4765 + $0x18] sm:$0xff]
        %v4770 = vld [vmem:[%s4765 + $0x20] sm:$0xff]
        %v4771 = vld [vmem:[%s4765 + $0x28] sm:$0xff]
        %v4772 = vld [vmem:[%s4765 + $0x30] sm:$0xff]
        %v4773 = vld [vmem:[%s4765 + $0x38] sm:$0xff]
        %v4774 = vld [vmem:[%s4765 + $0x40] sm:$0xff]
        %v4775 = vld [vmem:[%s4765 + $0x48] sm:$0xff]
        %v4776 = vld [vmem:[%s4765 + $0x50] sm:$0xff]
        %v4777 = vld [vmem:[%s4765 + $0x58] sm:$0xff]
        %v4778 = vld [vmem:[%s4765 + $0x60] sm:$0xff]
        %v4779 = vld [vmem:[%s4765 + $0x68] sm:$0xff]
        %v4780 = vld [vmem:[%s4765 + $0x70] sm:$0xff]
        %v4781 = vld [vmem:[%s4765 + $0x78] sm:$0xff]
        %v4782 = vld [vmem:[%s4765 + $0x80] sm:$0xff]
        %v4783 = vld [vmem:[%s4765 + $0x88] sm:$0xff]
        %v4784 = vld [vmem:[%s4765 + $0x90] sm:$0xff]
        %v4785 = vld [vmem:[%s4765 + $0x98] sm:$0xff]
        %v4786 = vld [vmem:[%s4765 + $0xa0] sm:$0xff]
        %v4787 = vld [vmem:[%s4765 + $0xa8] sm:$0xff]
        %v4788 = vld [vmem:[%s4765 + $0xb0] sm:$0xff]
        %v4789 = vld [vmem:[%s4765 + $0xb8] sm:$0xff]
        %v4790 = vld [vmem:[%s4765 + $0xc0] sm:$0xff]
        %v4791 = vld [vmem:[%s4765 + $0xc8] sm:$0xff]
        %v4792 = vld [vmem:[%s4765 + $0xd0] sm:$0xff]
        %v4793 = vld [vmem:[%s4765 + $0xd8] sm:$0xff]
        %v4794 = vld [vmem:[%s4765 + $0xe0] sm:$0xff]
        %v4795 = vld [vmem:[%s4765 + $0xe8] sm:$0xff]
        %v4796 = vld [vmem:[%s4765 + $0xf0] sm:$0xff]
        %v4797 = vld [vmem:[%s4765 + $0xf8] sm:$0xff]
        %v4798 = vld [vmem:[%s4765 + $0x100] sm:$0xff]
        %v4799 = vld [vmem:[%s4765 + $0x108] sm:$0xff]
        %v4800 = vld [vmem:[%s4765 + $0x110] sm:$0xff]
        %v4801 = vld [vmem:[%s4765 + $0x118] sm:$0xff]
        %v4802 = vld [vmem:[%s4765 + $0x120] sm:$0xff]
        %v4803 = vld [vmem:[%s4765 + $0x128] sm:$0xff]
        %v4804 = vld [vmem:[%s4765 + $0x130] sm:$0xff]
        %v4805 = vld [vmem:[%s4765 + $0x138] sm:$0xff]
        %v4806 = vld [vmem:[%s4765 + $0x140] sm:$0xff]
        %v4807 = vld [vmem:[%s4765 + $0x148] sm:$0xff]
        %v4808 = vld [vmem:[%s4765 + $0x150] sm:$0xff]
        %v4809 = vld [vmem:[%s4765 + $0x158] sm:$0xff]
        %v4810 = vld [vmem:[%s4765 + $0x160] sm:$0xff]
        %v4811 = vld [vmem:[%s4765 + $0x168] sm:$0xff]
        %v4812 = vld [vmem:[%s4765 + $0x170] sm:$0xff]
        %v4813 = vld [vmem:[%s4765 + $0x178] sm:$0xff]
        %v4814 = vld [vmem:[%s4765 + $0x180] sm:$0xf]
        %v4815 = vld [vmem:[%s4765 + $0x188] sm:$0xf]
        %4816 = vmatprep.subr.mxu0 0.0
        %4817 = vmatpush1.msra.mxu0 %v520
        %4818 = vmatprep.subr.mxu0 0.0
        %4819 = vmatpush1.msra.mxu0 %v521
        %4820 = vmatprep.subr.mxu0 0.0
        %4821 = vmatpush1.msra.mxu0 %v522
        %4822 = vmatprep.subr.mxu0 0.0
        %4823 = vmatpush1.msra.mxu0 %v523
        %4824 = vmatprep.subr.mxu0 0.0
        %4825 = vmatpush1.msra.mxu0 %v524
        %4826 = vmatprep.subr.mxu0 0.0
        %4827 = vmatpush1.msra.mxu0 %v525
        %4828 = vmatprep.subr.mxu0 0.0
        %4829 = vmatpush1.msra.mxu0 %v526
        %4830 = vmatprep.subr.mxu0 0.0
        %4831 = vmatpush1.msra.mxu0 %v527
        %4832 = vmatprep.subr.mxu0 0.0
        %4833 = vmatpush1.msra.mxu0 %v528
        %4834 = vmatprep.subr.mxu0 0.0
        %4835 = vmatpush1.msra.mxu0 %v529
        %4836 = vmatprep.subr.mxu0 0.0
        %4837 = vmatpush1.msra.mxu0 %v530
        %4838 = vmatprep.subr.mxu0 0.0
        %4839 = vmatpush1.msra.mxu0 %v531
        %4840 = vmatprep.subr.mxu0 0.0
        %4841 = vmatpush1.msra.mxu0 %v532
        %4842 = vmatprep.subr.mxu0 0.0
        %4843 = vmatpush1.msra.mxu0 %v533
        %4844 = vmatprep.subr.mxu0 0.0
        %4845 = vmatpush1.msra.mxu0 %v534
        %4846 = vmatprep.subr.mxu0 0.0
        %4847 = vmatpush1.msra.mxu0 %v535
        %4848 = vmatprep.subr.mxu0 0.0
        %4849 = vmatpush1.msra.mxu0 %v536
        %4850 = vmatprep.subr.mxu0 0.0
        %4851 = vmatpush1.msra.mxu0 %v537
        %4852 = vmatprep.subr.mxu0 0.0
        %4853 = vmatpush1.msra.mxu0 %v538
        %4854 = vmatprep.subr.mxu0 0.0
        %4855 = vmatpush1.msra.mxu0 %v539
        %4856 = vmatprep.subr.mxu0 0.0
        %4857 = vmatpush1.msra.mxu0 %v540
        %4858 = vmatprep.subr.mxu0 0.0
        %4859 = vmatpush1.msra.mxu0 %v541
        %4860 = vmatprep.subr.mxu0 0.0
        %4861 = vmatpush1.msra.mxu0 %v542
        %4862 = vmatprep.subr.mxu0 0.0
        %4863 = vmatpush1.msra.mxu0 %v543
        %4864 = vmatprep.subr.mxu0 0.0
        %4865 = vmatpush1.msra.mxu0 %v544
        %4866 = vmatprep.subr.mxu0 0.0
        %4867 = vmatpush1.msra.mxu0 %v545
        %4868 = vmatprep.subr.mxu0 0.0
        %4869 = vmatpush1.msra.mxu0 %v546
        %4870 = vmatprep.subr.mxu0 0.0
        %4871 = vmatpush1.msra.mxu0 %v547
        %4872 = vmatprep.subr.mxu0 0.0
        %4873 = vmatpush1.msra.mxu0 %v548
        %4874 = vmatprep.subr.mxu0 0.0
        %4875 = vmatpush1.msra.mxu0 %v549
        %4876 = vmatprep.subr.mxu0 0.0
        %4877 = vmatpush1.msra.mxu0 %v550
        %4878 = vmatprep.subr.mxu0 0.0
        %4879 = vmatpush1.msra.mxu0 %v551
        %4880 = vmatprep.mubr.f32.mxu0 %v4767
        %4881 = vmatmul.mubr.f32.gmra.mrb[0].mxu0 %v4766
        %v4882 = vpop.f32.mrb[0].mxu0
        %v4883 = vadd.f32 0.0, %v4882
        %v4884 = vpop.f32.mrb[0].mxu0
        %4885 = vmatprep.mubr.f32.mxu0 %v4769
        %4886 = vmatmul.mubr.f32.gmra.mrb[0].mxu0 %v4768
        %v4887 = vpop.f32.mrb[0].mxu0
        %v4888 = vadd.f32 0.0, %v4887
        %v4889 = vpop.f32.mrb[0].mxu0
        %4890 = vmatprep.mubr.f32.mxu0 %v4771
        %4891 = vmatmul.mubr.f32.gmra.mrb[0].mxu0 %v4770
        %v4892 = vpop.f32.mrb[0].mxu0
        %v4893 = vadd.f32 0.0, %v4892
        %v4894 = vpop.f32.mrb[0].mxu0
        %4895 = vmatprep.mubr.f32.mxu0 %v4773
        %4896 = vmatmul.mubr.f32.gmra.mrb[0].mxu0 %v4772
        %v4897 = vpop.f32.mrb[0].mxu0
        %v4898 = vadd.f32 0.0, %v4897
        %v4899 = vpop.f32.mrb[0].mxu0
        %4900 = vmatprep.mubr.f32.mxu0 %v4775
        %4901 = vmatmul.mubr.f32.gmra.mrb[0].mxu0 %v4774
        %v4902 = vpop.f32.mrb[0].mxu0
        %v4903 = vadd.f32 0.0, %v4902
        %v4904 = vpop.f32.mrb[0].mxu0
        %4905 = vmatprep.mubr.f32.mxu0 %v4777
        %4906 = vmatmul.mubr.f32.gmra.mrb[0].mxu0 %v4776
        %v4907 = vpop.f32.mrb[0].mxu0
        %v4908 = vadd.f32 0.0, %v4907
        %v4909 = vpop.f32.mrb[0].mxu0
        %4910 = vmatprep.mubr.f32.mxu0 %v4779
        %4911 = vmatmul.mubr.f32.gmra.mrb[0].mxu0 %v4778
        %v4912 = vpop.f32.mrb[0].mxu0
        %v4913 = vadd.f32 0.0, %v4912
        %v4914 = vpop.f32.mrb[0].mxu0
        %4915 = vmatprep.mubr.f32.mxu0 %v4781
        %4916 = vmatmul.mubr.f32.gmra.mrb[0].mxu0 %v4780
        %v4917 = vpop.f32.mrb[0].mxu0
        %v4918 = vadd.f32 0.0, %v4917
        %v4919 = vpop.f32.mrb[0].mxu0
        %4920 = vmatprep.mubr.f32.mxu0 %v4783
        %4921 = vmatmul.mubr.f32.gmra.mrb[0].mxu0 %v4782
        %v4922 = vpop.f32.mrb[0].mxu0
        %v4923 = vadd.f32 0.0, %v4922
        %v4924 = vpop.f32.mrb[0].mxu0
        %4925 = vmatprep.mubr.f32.mxu0 %v4785
        %4926 = vmatmul.mubr.f32.gmra.mrb[0].mxu0 %v4784
        %v4927 = vpop.f32.mrb[0].mxu0
        %v4928 = vadd.f32 0.0, %v4927
        %v4929 = vpop.f32.mrb[0].mxu0
        %4930 = vmatprep.mubr.f32.mxu0 %v4787
        %4931 = vmatmul.mubr.f32.gmra.mrb[0].mxu0 %v4786
        %v4932 = vpop.f32.mrb[0].mxu0
        %v4933 = vadd.f32 0.0, %v4932
        %v4934 = vpop.f32.mrb[0].mxu0
        %4935 = vmatprep.mubr.f32.mxu0 %v4789
        %4936 = vmatmul.mubr.f32.gmra.mrb[0].mxu0 %v4788
        %v4937 = vpop.f32.mrb[0].mxu0
        %v4938 = vadd.f32 0.0, %v4937
        %v4939 = vpop.f32.mrb[0].mxu0
        %4940 = vmatprep.mubr.f32.mxu0 %v4791
        %4941 = vmatmul.mubr.f32.gmra.mrb[0].mxu0 %v4790
        %v4942 = vpop.f32.mrb[0].mxu0
        %v4943 = vadd.f32 0.0, %v4942
        %v4944 = vpop.f32.mrb[0].mxu0
        %4945 = vmatprep.mubr.f32.mxu0 %v4793
        %4946 = vmatmul.mubr.f32.gmra.mrb[0].mxu0 %v4792
        %v4947 = vpop.f32.mrb[0].mxu0
        %v4948 = vadd.f32 0.0, %v4947
        %v4949 = vpop.f32.mrb[0].mxu0
        %4950 = vmatprep.mubr.f32.mxu0 %v4795
        %4951 = vmatmul.mubr.f32.gmra.mrb[0].mxu0 %v4794
        %v4952 = vpop.f32.mrb[0].mxu0
        %v4953 = vadd.f32 0.0, %v4952
        %v4954 = vpop.f32.mrb[0].mxu0
        %4955 = vmatprep.mubr.f32.mxu0 %v4797
        %4956 = vmatmul.mubr.f32.gmra.mrb[0].mxu0 %v4796
        %v4957 = vpop.f32.mrb[0].mxu0
        %v4958 = vadd.f32 0.0, %v4957
        %v4959 = vpop.f32.mrb[0].mxu0
        %4960 = vmatprep.mubr.f32.mxu0 %v4799
        %4961 = vmatmul.mubr.f32.gmra.mrb[0].mxu0 %v4798
        %v4962 = vpop.f32.mrb[0].mxu0
        %v4963 = vadd.f32 0.0, %v4962
        %v4964 = vpop.f32.mrb[0].mxu0
        %4965 = vmatprep.mubr.f32.mxu0 %v4801
        %4966 = vmatmul.mubr.f32.gmra.mrb[0].mxu0 %v4800
        %v4967 = vpop.f32.mrb[0].mxu0
        %v4968 = vadd.f32 0.0, %v4967
        %v4969 = vpop.f32.mrb[0].mxu0
        %4970 = vmatprep.mubr.f32.mxu0 %v4803
        %4971 = vmatmul.mubr.f32.gmra.mrb[0].mxu0 %v4802
        %v4972 = vpop.f32.mrb[0].mxu0
        %v4973 = vadd.f32 0.0, %v4972
        %v4974 = vpop.f32.mrb[0].mxu0
        %4975 = vmatprep.mubr.f32.mxu0 %v4805
        %4976 = vmatmul.mubr.f32.gmra.mrb[0].mxu0 %v4804
        %v4977 = vpop.f32.mrb[0].mxu0
        %v4978 = vadd.f32 0.0, %v4977
        %v4979 = vpop.f32.mrb[0].mxu0
        %4980 = vmatprep.mubr.f32.mxu0 %v4807
        %4981 = vmatmul.mubr.f32.gmra.mrb[0].mxu0 %v4806
        %v4982 = vpop.f32.mrb[0].mxu0
        %v4983 = vadd.f32 0.0, %v4982
        %v4984 = vpop.f32.mrb[0].mxu0
        %4985 = vmatprep.mubr.f32.mxu0 %v4809
        %4986 = vmatmul.mubr.f32.gmra.mrb[0].mxu0 %v4808
        %v4987 = vpop.f32.mrb[0].mxu0
        %v4988 = vadd.f32 0.0, %v4987
        %v4989 = vpop.f32.mrb[0].mxu0
        %4990 = vmatprep.mubr.f32.mxu0 %v4811
        %4991 = vmatmul.mubr.f32.gmra.mrb[0].mxu0 %v4810
        %v4992 = vpop.f32.mrb[0].mxu0
        %v4993 = vadd.f32 0.0, %v4992
        %v4994 = vpop.f32.mrb[0].mxu0
        %4995 = vmatprep.mubr.f32.mxu0 %v4813
        %4996 = vmatmul.mubr.f32.gmra.mrb[0].mxu0 %v4812
        %v4997 = vpop.f32.mrb[0].mxu0
        %v4998 = vadd.f32 0.0, %v4997
        %v4999 = vpop.f32.mrb[0].mxu0
        %5000 = vmatprep.mubr.f32.mxu0 %v4815
        %5001 = vmatmul.mubr.f32.gmra.mrb[0].mxu0 %v4814
        %v5002 = vpop.f32.mrb[0].mxu0
        %v5003 = vadd.f32 0.0, %v5002
        %v5004 = vpop.f32.mrb[0].mxu0
        %5005 = vdwg.mxu0
        %s5006 = scalar_lea.vmem %s2, 64
        %v5007 = vld [vmem:[%s5006] sm:$0xff]
        %v5009 = vsel %vm1036, %v4883, 0
        %v5012 = vsel %vm1036, %v4888, 0
        %v5015 = vsel %vm1036, %v4893, 0
        %v5018 = vsel %vm1036, %v4898, 0
        %v5021 = vsel %vm1036, %v4903, 0
        %v5024 = vsel %vm1036, %v4908, 0
        %v5027 = vsel %vm1036, %v4913, 0
        %v5030 = vsel %vm1036, %v4918, 0
        %v5033 = vsel %vm1036, %v4923, 0
        %v5036 = vsel %vm1036, %v4928, 0
        %v5039 = vsel %vm1036, %v4933, 0
        %v5042 = vsel %vm1036, %v4938, 0
        %v5045 = vsel %vm1036, %v4943, 0
        %v5048 = vsel %vm1036, %v4948, 0
        %v5051 = vsel %vm1036, %v4953, 0
        %v5054 = vsel %vm1036, %v4958, 0
        %v5057 = vsel %vm1036, %v4963, 0
        %v5060 = vsel %vm1036, %v4968, 0
        %v5063 = vsel %vm1036, %v4973, 0
        %v5066 = vsel %vm1036, %v4978, 0
        %v5069 = vsel %vm1036, %v4983, 0
        %v5072 = vsel %vm1036, %v4988, 0
        %v5075 = vsel %vm1036, %v4993, 0
        %v5078 = vsel %vm1036, %v4998, 0
        %v5081 = vsel %vm1036, %v5003, 0
        %5083 = vmatprep.subr.mxu0 0.0
        %5084 = vmatpush1.msra.mxu0 %v5007
        %5085 = vmatprep.subr.mxu0 0.0
        %5086 = vmatpush1.msra.mxu0 0.0
        %5087 = vmatprep.subr.mxu0 0.0
        %5088 = vmatpush1.msra.mxu0 0.0
        %5089 = vmatprep.subr.mxu0 0.0
        %5090 = vmatpush1.msra.mxu0 0.0
        %5091 = vmatprep.subr.mxu0 0.0
        %5092 = vmatpush1.msra.mxu0 0.0
        %5093 = vmatprep.subr.mxu0 0.0
        %5094 = vmatpush1.msra.mxu0 0.0
        %5095 = vmatprep.subr.mxu0 0.0
        %5096 = vmatpush1.msra.mxu0 0.0
        %5097 = vmatprep.subr.mxu0 0.0
        %5098 = vmatpush1.msra.mxu0 0.0
        %5099 = vmatprep.subr.mxu0 0.0
        %5100 = vmatpush1.msra.mxu0 0.0
        %5101 = vmatprep.subr.mxu0 0.0
        %5102 = vmatpush1.msra.mxu0 0.0
        %5103 = vmatprep.subr.mxu0 0.0
        %5104 = vmatpush1.msra.mxu0 0.0
        %5105 = vmatprep.subr.mxu0 0.0
        %5106 = vmatpush1.msra.mxu0 0.0
        %5107 = vmatprep.subr.mxu0 0.0
        %5108 = vmatpush1.msra.mxu0 0.0
        %5109 = vmatprep.subr.mxu0 0.0
        %5110 = vmatpush1.msra.mxu0 0.0
        %5111 = vmatprep.subr.mxu0 0.0
        %5112 = vmatpush1.msra.mxu0 0.0
        %5113 = vmatprep.subr.mxu0 0.0
        %5114 = vmatpush1.msra.mxu0 0.0
        %5115 = vmatprep.subr.mxu0 0.0
        %5116 = vmatpush1.msra.mxu0 0.0
        %5117 = vmatprep.subr.mxu0 0.0
        %5118 = vmatpush1.msra.mxu0 0.0
        %5119 = vmatprep.subr.mxu0 0.0
        %5120 = vmatpush1.msra.mxu0 0.0
        %5121 = vmatprep.subr.mxu0 0.0
        %5122 = vmatpush1.msra.mxu0 0.0
        %5123 = vmatprep.subr.mxu0 0.0
        %5124 = vmatpush1.msra.mxu0 0.0
        %5125 = vmatprep.subr.mxu0 0.0
        %5126 = vmatpush1.msra.mxu0 0.0
        %5127 = vmatprep.subr.mxu0 0.0
        %5128 = vmatpush1.msra.mxu0 0.0
        %5129 = vmatprep.subr.mxu0 0.0
        %5130 = vmatpush1.msra.mxu0 0.0
        %5131 = vmatprep.subr.mxu0 0.0
        %5132 = vmatpush1.msra.mxu0 0.0
        %5133 = vmatprep.subr.mxu0 0.0
        %5134 = vmatpush1.msra.mxu0 0.0
        %5135 = vmatprep.subr.mxu0 0.0
        %5136 = vmatpush1.msra.mxu0 0.0
        %5137 = vmatprep.subr.mxu0 0.0
        %5138 = vmatpush1.msra.mxu0 0.0
        %5139 = vmatprep.subr.mxu0 0.0
        %5140 = vmatpush1.msra.mxu0 0.0
        %5141 = vmatprep.subr.mxu0 0.0
        %5142 = vmatpush1.msra.mxu0 0.0
        %5143 = vmatprep.subr.mxu0 0.0
        %5144 = vmatpush1.msra.mxu0 0.0
        %5145 = vmatprep.subr.mxu0 0.0
        %5146 = vmatpush1.msra.mxu0 0.0
        %5147 = vmatprep.mubr.f32.mxu0 0.0
        %5148 = vmatmul.mubr.f32.gmra.mrb[0].mxu0 %v5009
        %v5149 = vpop.f32.mrb[0].mxu0
        %v5150 = vadd.f32 0.0, %v5149
        %v5151 = vpop.f32.mrb[0].mxu0
        %5152 = vmatprep.mubr.f32.mxu0 0.0
        %5153 = vmatmul.mubr.f32.gmra.mrb[0].mxu0 %v5012
        %v5154 = vpop.f32.mrb[0].mxu0
        %v5155 = vadd.f32 0.0, %v5154
        %v5156 = vpop.f32.mrb[0].mxu0
        %5157 = vmatprep.mubr.f32.mxu0 0.0
        %5158 = vmatmul.mubr.f32.gmra.mrb[0].mxu0 %v5015
        %v5159 = vpop.f32.mrb[0].mxu0
        %v5160 = vadd.f32 0.0, %v5159
        %v5161 = vpop.f32.mrb[0].mxu0
        %5162 = vmatprep.mubr.f32.mxu0 0.0
        %5163 = vmatmul.mubr.f32.gmra.mrb[0].mxu0 %v5018
        %v5164 = vpop.f32.mrb[0].mxu0
        %v5165 = vadd.f32 0.0, %v5164
        %v5166 = vpop.f32.mrb[0].mxu0
        %5167 = vmatprep.mubr.f32.mxu0 0.0
        %5168 = vmatmul.mubr.f32.gmra.mrb[0].mxu0 %v5021
        %v5169 = vpop.f32.mrb[0].mxu0
        %v5170 = vadd.f32 0.0, %v5169
        %v5171 = vpop.f32.mrb[0].mxu0
        %5172 = vmatprep.mubr.f32.mxu0 0.0
        %5173 = vmatmul.mubr.f32.gmra.mrb[0].mxu0 %v5024
        %v5174 = vpop.f32.mrb[0].mxu0
        %v5175 = vadd.f32 0.0, %v5174
        %v5176 = vpop.f32.mrb[0].mxu0
        %5177 = vmatprep.mubr.f32.mxu0 0.0
        %5178 = vmatmul.mubr.f32.gmra.mrb[0].mxu0 %v5027
        %v5179 = vpop.f32.mrb[0].mxu0
        %v5180 = vadd.f32 0.0, %v5179
        %v5181 = vpop.f32.mrb[0].mxu0
        %5182 = vmatprep.mubr.f32.mxu0 0.0
        %5183 = vmatmul.mubr.f32.gmra.mrb[0].mxu0 %v5030
        %v5184 = vpop.f32.mrb[0].mxu0
        %v5185 = vadd.f32 0.0, %v5184
        %v5186 = vpop.f32.mrb[0].mxu0
        %5187 = vmatprep.mubr.f32.mxu0 0.0
        %5188 = vmatmul.mubr.f32.gmra.mrb[0].mxu0 %v5033
        %v5189 = vpop.f32.mrb[0].mxu0
        %v5190 = vadd.f32 0.0, %v5189
        %v5191 = vpop.f32.mrb[0].mxu0
        %5192 = vmatprep.mubr.f32.mxu0 0.0
        %5193 = vmatmul.mubr.f32.gmra.mrb[0].mxu0 %v5036
        %v5194 = vpop.f32.mrb[0].mxu0
        %v5195 = vadd.f32 0.0, %v5194
        %v5196 = vpop.f32.mrb[0].mxu0
        %5197 = vmatprep.mubr.f32.mxu0 0.0
        %5198 = vmatmul.mubr.f32.gmra.mrb[0].mxu0 %v5039
        %v5199 = vpop.f32.mrb[0].mxu0
        %v5200 = vadd.f32 0.0, %v5199
        %v5201 = vpop.f32.mrb[0].mxu0
        %5202 = vmatprep.mubr.f32.mxu0 0.0
        %5203 = vmatmul.mubr.f32.gmra.mrb[0].mxu0 %v5042
        %v5204 = vpop.f32.mrb[0].mxu0
        %v5205 = vadd.f32 0.0, %v5204
        %v5206 = vpop.f32.mrb[0].mxu0
        %5207 = vmatprep.mubr.f32.mxu0 0.0
        %5208 = vmatmul.mubr.f32.gmra.mrb[0].mxu0 %v5045
        %v5209 = vpop.f32.mrb[0].mxu0
        %v5210 = vadd.f32 0.0, %v5209
        %v5211 = vpop.f32.mrb[0].mxu0
        %5212 = vmatprep.mubr.f32.mxu0 0.0
        %5213 = vmatmul.mubr.f32.gmra.mrb[0].mxu0 %v5048
        %v5214 = vpop.f32.mrb[0].mxu0
        %v5215 = vadd.f32 0.0, %v5214
        %v5216 = vpop.f32.mrb[0].mxu0
        %5217 = vmatprep.mubr.f32.mxu0 0.0
        %5218 = vmatmul.mubr.f32.gmra.mrb[0].mxu0 %v5051
        %v5219 = vpop.f32.mrb[0].mxu0
        %v5220 = vadd.f32 0.0, %v5219
        %v5221 = vpop.f32.mrb[0].mxu0
        %5222 = vmatprep.mubr.f32.mxu0 0.0
        %5223 = vmatmul.mubr.f32.gmra.mrb[0].mxu0 %v5054
        %v5224 = vpop.f32.mrb[0].mxu0
        %v5225 = vadd.f32 0.0, %v5224
        %v5226 = vpop.f32.mrb[0].mxu0
        %5227 = vmatprep.mubr.f32.mxu0 0.0
        %5228 = vmatmul.mubr.f32.gmra.mrb[0].mxu0 %v5057
        %v5229 = vpop.f32.mrb[0].mxu0
        %v5230 = vadd.f32 0.0, %v5229
        %v5231 = vpop.f32.mrb[0].mxu0
        %5232 = vmatprep.mubr.f32.mxu0 0.0
        %5233 = vmatmul.mubr.f32.gmra.mrb[0].mxu0 %v5060
        %v5234 = vpop.f32.mrb[0].mxu0
        %v5235 = vadd.f32 0.0, %v5234
        %v5236 = vpop.f32.mrb[0].mxu0
        %5237 = vmatprep.mubr.f32.mxu0 0.0
        %5238 = vmatmul.mubr.f32.gmra.mrb[0].mxu0 %v5063
        %v5239 = vpop.f32.mrb[0].mxu0
        %v5240 = vadd.f32 0.0, %v5239
        %v5241 = vpop.f32.mrb[0].mxu0
        %5242 = vmatprep.mubr.f32.mxu0 0.0
        %5243 = vmatmul.mubr.f32.gmra.mrb[0].mxu0 %v5066
        %v5244 = vpop.f32.mrb[0].mxu0
        %v5245 = vadd.f32 0.0, %v5244
        %v5246 = vpop.f32.mrb[0].mxu0
        %5247 = vmatprep.mubr.f32.mxu0 0.0
        %5248 = vmatmul.mubr.f32.gmra.mrb[0].mxu0 %v5069
        %v5249 = vpop.f32.mrb[0].mxu0
        %v5250 = vadd.f32 0.0, %v5249
        %v5251 = vpop.f32.mrb[0].mxu0
        %5252 = vmatprep.mubr.f32.mxu0 0.0
        %5253 = vmatmul.mubr.f32.gmra.mrb[0].mxu0 %v5072
        %v5254 = vpop.f32.mrb[0].mxu0
        %v5255 = vadd.f32 0.0, %v5254
        %v5256 = vpop.f32.mrb[0].mxu0
        %5257 = vmatprep.mubr.f32.mxu0 0.0
        %5258 = vmatmul.mubr.f32.gmra.mrb[0].mxu0 %v5075
        %v5259 = vpop.f32.mrb[0].mxu0
        %v5260 = vadd.f32 0.0, %v5259
        %v5261 = vpop.f32.mrb[0].mxu0
        %5262 = vmatprep.mubr.f32.mxu0 0.0
        %5263 = vmatmul.mubr.f32.gmra.mrb[0].mxu0 %v5078
        %v5264 = vpop.f32.mrb[0].mxu0
        %v5265 = vadd.f32 0.0, %v5264
        %v5266 = vpop.f32.mrb[0].mxu0
        %5267 = vmatprep.mubr.f32.mxu0 0.0
        %5268 = vmatmul.mubr.f32.gmra.mrb[0].mxu0 %v5081
        %v5269 = vpop.f32.mrb[0].mxu0
        %v5270 = vadd.f32 0.0, %v5269
        %v5271 = vpop.f32.mrb[0].mxu0
        %5272 = vdwg.mxu0
        %v5273 = vadd.f32 %v4740, %v5150
        %v5274 = vadd.f32 %v4741, %v5155
        %v5275 = vadd.f32 %v4742, %v5160
        %v5276 = vadd.f32 %v4743, %v5165
        %v5277 = vadd.f32 %v4744, %v5170
        %v5278 = vadd.f32 %v4745, %v5175
        %v5279 = vadd.f32 %v4746, %v5180
        %v5280 = vadd.f32 %v4747, %v5185
        %v5281 = vadd.f32 %v4748, %v5190
        %v5282 = vadd.f32 %v4749, %v5195
        %v5283 = vadd.f32 %v4750, %v5200
        %v5284 = vadd.f32 %v4751, %v5205
        %v5285 = vadd.f32 %v4752, %v5210
        %v5286 = vadd.f32 %v4753, %v5215
        %v5287 = vadd.f32 %v4754, %v5220
        %v5288 = vadd.f32 %v4755, %v5225
        %v5289 = vadd.f32 %v4756, %v5230
        %v5290 = vadd.f32 %v4757, %v5235
        %v5291 = vadd.f32 %v4758, %v5240
        %v5292 = vadd.f32 %v4759, %v5245
        %v5293 = vadd.f32 %v4760, %v5250
        %v5294 = vadd.f32 %v4761, %v5255
        %v5295 = vadd.f32 %v4762, %v5260
        %v5296 = vadd.f32 %v4763, %v5265
        %v5297 = vadd.f32 %v4764, %v5270
        %v5298 = vld [vmem:[#allocation5] sm:$0x1]
        %v5300 = vlaneseq
        %v5301 = vshrl.u32 %v5300, 7
        %v5302 = vsub.s32 0, %v5301
        %v5303 = vrot.slane %v5298, %v5302
        %v5305 = vadd.f32 %v5273, %v5303
        %v5306 = vadd.f32 %v5274, %v5303
        %v5307 = vadd.f32 %v5275, %v5303
        %v5308 = vadd.f32 %v5276, %v5303
        %v5309 = vadd.f32 %v5277, %v5303
        %v5310 = vadd.f32 %v5278, %v5303
        %v5311 = vadd.f32 %v5279, %v5303
        %v5312 = vadd.f32 %v5280, %v5303
        %v5313 = vadd.f32 %v5281, %v5303
        %v5314 = vadd.f32 %v5282, %v5303
        %v5315 = vadd.f32 %v5283, %v5303
        %v5316 = vadd.f32 %v5284, %v5303
        %v5317 = vadd.f32 %v5285, %v5303
        %v5318 = vadd.f32 %v5286, %v5303
        %v5319 = vadd.f32 %v5287, %v5303
        %v5320 = vadd.f32 %v5288, %v5303
        %v5321 = vadd.f32 %v5289, %v5303
        %v5322 = vadd.f32 %v5290, %v5303
        %v5323 = vadd.f32 %v5291, %v5303
        %v5324 = vadd.f32 %v5292, %v5303
        %v5325 = vadd.f32 %v5293, %v5303
        %v5326 = vadd.f32 %v5294, %v5303
        %v5327 = vadd.f32 %v5295, %v5303
        %v5328 = vadd.f32 %v5296, %v5303
        %v5329 = vadd.f32 %v5297, %v5303
        %v5330 = vmax.f32 %v5305, 0.0
        %v5331 = vmax.f32 %v5306, 0.0
        %v5332 = vmax.f32 %v5307, 0.0
        %v5333 = vmax.f32 %v5308, 0.0
        %v5334 = vmax.f32 %v5309, 0.0
        %v5335 = vmax.f32 %v5310, 0.0
        %v5336 = vmax.f32 %v5311, 0.0
        %v5337 = vmax.f32 %v5312, 0.0
        %v5338 = vmax.f32 %v5313, 0.0
        %v5339 = vmax.f32 %v5314, 0.0
        %v5340 = vmax.f32 %v5315, 0.0
        %v5341 = vmax.f32 %v5316, 0.0
        %v5342 = vmax.f32 %v5317, 0.0
        %v5343 = vmax.f32 %v5318, 0.0
        %v5344 = vmax.f32 %v5319, 0.0
        %v5345 = vmax.f32 %v5320, 0.0
        %v5346 = vmax.f32 %v5321, 0.0
        %v5347 = vmax.f32 %v5322, 0.0
        %v5348 = vmax.f32 %v5323, 0.0
        %v5349 = vmax.f32 %v5324, 0.0
        %v5350 = vmax.f32 %v5325, 0.0
        %v5351 = vmax.f32 %v5326, 0.0
        %v5352 = vmax.f32 %v5327, 0.0
        %v5353 = vmax.f32 %v5328, 0.0
        %v5354 = vmax.f32 %v5329, 0.0
        %v5355 = vld [vmem:[%s4] sm:$0xff]
        %v5356 = vld [vmem:[%s4 + $0x8] sm:$0xff]
        %v5357 = vld [vmem:[%s4 + $0x10] sm:$0xff]
        %v5358 = vld [vmem:[%s4 + $0x18] sm:$0xff]
        %v5359 = vld [vmem:[%s4 + $0x20] sm:$0xff]
        %v5360 = vld [vmem:[%s4 + $0x28] sm:$0xff]
        %v5361 = vld [vmem:[%s4 + $0x30] sm:$0xff]
        %v5362 = vld [vmem:[%s4 + $0x38] sm:$0xff]
        %v5363 = vld [vmem:[%s4 + $0x40] sm:$0xff]
        %v5364 = vld [vmem:[%s4 + $0x48] sm:$0xff]
        %v5365 = vld [vmem:[%s4 + $0x50] sm:$0xff]
        %v5366 = vld [vmem:[%s4 + $0x58] sm:$0xff]
        %v5367 = vld [vmem:[%s4 + $0x60] sm:$0x1]
        %v5368 = vld [vmem:[%s4 + $0x68] sm:$0x1]
        %vm5369 = vcmask 556032
        %v5371 = vsel %vm5369, %v5356, 0
        %v5374 = vsel %vm5369, %v5358, 0
        %v5377 = vsel %vm5369, %v5360, 0
        %v5380 = vsel %vm5369, %v5362, 0
        %v5383 = vsel %vm5369, %v5364, 0
        %v5386 = vsel %vm5369, %v5366, 0
        %v5389 = vsel %vm5369, %v5368, 0
        %vm5391 = vcmask 1043456
        %v5393 = vsel %vm5391, %v5354, 0
        %5395 = vmatprep.subr.mxu0 0.0
        %5396 = vmatpush1.msra.mxu0 %v5330
        %5397 = vmatprep.subr.mxu0 0.0
        %5398 = vmatpush1.msra.mxu0 %v5331
        %5399 = vmatprep.subr.mxu0 0.0
        %5400 = vmatpush1.msra.mxu0 %v5332
        %5401 = vmatprep.subr.mxu0 0.0
        %5402 = vmatpush1.msra.mxu0 %v5333
        %5403 = vmatprep.subr.mxu0 0.0
        %5404 = vmatpush1.msra.mxu0 %v5334
        %5405 = vmatprep.subr.mxu0 0.0
        %5406 = vmatpush1.msra.mxu0 %v5335
        %5407 = vmatprep.subr.mxu0 0.0
        %5408 = vmatpush1.msra.mxu0 %v5336
        %5409 = vmatprep.subr.mxu0 0.0
        %5410 = vmatpush1.msra.mxu0 %v5337
        %5411 = vmatprep.subr.mxu0 0.0
        %5412 = vmatpush1.msra.mxu0 %v5338
        %5413 = vmatprep.subr.mxu0 0.0
        %5414 = vmatpush1.msra.mxu0 %v5339
        %5415 = vmatprep.subr.mxu0 0.0
        %5416 = vmatpush1.msra.mxu0 %v5340
        %5417 = vmatprep.subr.mxu0 0.0
        %5418 = vmatpush1.msra.mxu0 %v5341
        %5419 = vmatprep.subr.mxu0 0.0
        %5420 = vmatpush1.msra.mxu0 %v5342
        %5421 = vmatprep.subr.mxu0 0.0
        %5422 = vmatpush1.msra.mxu0 %v5343
        %5423 = vmatprep.subr.mxu0 0.0
        %5424 = vmatpush1.msra.mxu0 %v5344
        %5425 = vmatprep.subr.mxu0 0.0
        %5426 = vmatpush1.msra.mxu0 %v5345
        %5427 = vmatprep.subr.mxu0 0.0
        %5428 = vmatpush1.msra.mxu0 %v5346
        %5429 = vmatprep.subr.mxu0 0.0
        %5430 = vmatpush1.msra.mxu0 %v5347
        %5431 = vmatprep.subr.mxu0 0.0
        %5432 = vmatpush1.msra.mxu0 %v5348
        %5433 = vmatprep.subr.mxu0 0.0
        %5434 = vmatpush1.msra.mxu0 %v5349
        %5435 = vmatprep.subr.mxu0 0.0
        %5436 = vmatpush1.msra.mxu0 %v5350
        %5437 = vmatprep.subr.mxu0 0.0
        %5438 = vmatpush1.msra.mxu0 %v5351
        %5439 = vmatprep.subr.mxu0 0.0
        %5440 = vmatpush1.msra.mxu0 %v5352
        %5441 = vmatprep.subr.mxu0 0.0
        %5442 = vmatpush1.msra.mxu0 %v5353
        %5443 = vmatprep.subr.mxu0 0.0
        %5444 = vmatpush1.msra.mxu0 %v5393
        %5445 = vmatprep.subr.mxu0 0.0
        %5446 = vmatpush1.msra.mxu0 0.0
        %5447 = vmatprep.subr.mxu0 0.0
        %5448 = vmatpush1.msra.mxu0 0.0
        %5449 = vmatprep.subr.mxu0 0.0
        %5450 = vmatpush1.msra.mxu0 0.0
        %5451 = vmatprep.subr.mxu0 0.0
        %5452 = vmatpush1.msra.mxu0 0.0
        %5453 = vmatprep.subr.mxu0 0.0
        %5454 = vmatpush1.msra.mxu0 0.0
        %5455 = vmatprep.subr.mxu0 0.0
        %5456 = vmatpush1.msra.mxu0 0.0
        %5457 = vmatprep.subr.mxu0 0.0
        %5458 = vmatpush1.msra.mxu0 0.0
        %5459 = vmatprep.mubr.f32.mxu0 %v5371
        %5460 = vmatmul.mubr.f32.gmra.mrb[0].mxu0 %v5355
        %v5461 = vpop.f32.mrb[0].mxu0
        %v5462 = vadd.f32 0.0, %v5461
        %v5463 = vpop.f32.mrb[0].mxu0
        %5464 = vmatprep.mubr.f32.mxu0 %v5374
        %5465 = vmatmul.mubr.f32.gmra.mrb[0].mxu0 %v5357
        %v5466 = vpop.f32.mrb[0].mxu0
        %v5467 = vadd.f32 0.0, %v5466
        %v5468 = vpop.f32.mrb[0].mxu0
        %5469 = vmatprep.mubr.f32.mxu0 %v5377
        %5470 = vmatmul.mubr.f32.gmra.mrb[0].mxu0 %v5359
        %v5471 = vpop.f32.mrb[0].mxu0
        %v5472 = vadd.f32 0.0, %v5471
        %v5473 = vpop.f32.mrb[0].mxu0
        %5474 = vmatprep.mubr.f32.mxu0 %v5380
        %5475 = vmatmul.mubr.f32.gmra.mrb[0].mxu0 %v5361
        %v5476 = vpop.f32.mrb[0].mxu0
        %v5477 = vadd.f32 0.0, %v5476
        %v5478 = vpop.f32.mrb[0].mxu0
        %5479 = vmatprep.mubr.f32.mxu0 %v5383
        %5480 = vmatmul.mubr.f32.gmra.mrb[0].mxu0 %v5363
        %v5481 = vpop.f32.mrb[0].mxu0
        %v5482 = vadd.f32 0.0, %v5481
        %v5483 = vpop.f32.mrb[0].mxu0
        %5484 = vmatprep.mubr.f32.mxu0 %v5386
        %5485 = vmatmul.mubr.f32.gmra.mrb[0].mxu0 %v5365
        %v5486 = vpop.f32.mrb[0].mxu0
        %v5487 = vadd.f32 0.0, %v5486
        %v5488 = vpop.f32.mrb[0].mxu0
        %5489 = vmatprep.mubr.f32.mxu0 %v5389
        %5490 = vmatmul.mubr.f32.gmra.mrb[0].mxu0 %v5367
        %v5491 = vpop.f32.mrb[0].mxu0
        %v5492 = vadd.f32 0.0, %v5491
        %v5493 = vpop.f32.mrb[0].mxu0
        %5494 = vdwg.mxu0
        %v5495 = vld [vmem:[#allocation7] sm:$0xff]
        %s5496 = scalar_lea.vmem %s4, 112
        %v5497 = vld [vmem:[%s5496] sm:$0xff]
        %v5498 = vld [vmem:[%s5496 + $0x8] sm:$0xff]
        %v5499 = vld [vmem:[%s5496 + $0x10] sm:$0xff]
        %v5500 = vld [vmem:[%s5496 + $0x18] sm:$0xff]
        %v5501 = vld [vmem:[%s5496 + $0x20] sm:$0xff]
        %v5502 = vld [vmem:[%s5496 + $0x28] sm:$0xff]
        %v5503 = vld [vmem:[%s5496 + $0x30] sm:$0xff]
        %v5504 = vld [vmem:[%s5496 + $0x38] sm:$0xff]
        %v5505 = vld [vmem:[%s5496 + $0x40] sm:$0xff]
        %v5506 = vld [vmem:[%s5496 + $0x48] sm:$0xff]
        %v5507 = vld [vmem:[%s5496 + $0x50] sm:$0xff]
        %v5508 = vld [vmem:[%s5496 + $0x58] sm:$0xff]
        %v5509 = vld [vmem:[%s5496 + $0x60] sm:$0x1]
        %v5510 = vld [vmem:[%s5496 + $0x68] sm:$0x1]
        %v5512 = vsel %vm5369, %v5498, 0
        %v5515 = vsel %vm5369, %v5500, 0
        %v5518 = vsel %vm5369, %v5502, 0
        %v5521 = vsel %vm5369, %v5504, 0
        %v5524 = vsel %vm5369, %v5506, 0
        %v5527 = vsel %vm5369, %v5508, 0
        %v5530 = vsel %vm5369, %v5510, 0
        %5532 = vmatprep.subr.mxu0 0.0
        %5533 = vmatpush1.msra.mxu0 %v5330
        %5534 = vmatprep.subr.mxu0 0.0
        %5535 = vmatpush1.msra.mxu0 %v5331
        %5536 = vmatprep.subr.mxu0 0.0
        %5537 = vmatpush1.msra.mxu0 %v5332
        %5538 = vmatprep.subr.mxu0 0.0
        %5539 = vmatpush1.msra.mxu0 %v5333
        %5540 = vmatprep.subr.mxu0 0.0
        %5541 = vmatpush1.msra.mxu0 %v5334
        %5542 = vmatprep.subr.mxu0 0.0
        %5543 = vmatpush1.msra.mxu0 %v5335
        %5544 = vmatprep.subr.mxu0 0.0
        %5545 = vmatpush1.msra.mxu0 %v5336
        %5546 = vmatprep.subr.mxu0 0.0
        %5547 = vmatpush1.msra.mxu0 %v5337
        %5548 = vmatprep.subr.mxu0 0.0
        %5549 = vmatpush1.msra.mxu0 %v5338
        %5550 = vmatprep.subr.mxu0 0.0
        %5551 = vmatpush1.msra.mxu0 %v5339
        %5552 = vmatprep.subr.mxu0 0.0
        %5553 = vmatpush1.msra.mxu0 %v5340
        %5554 = vmatprep.subr.mxu0 0.0
        %5555 = vmatpush1.msra.mxu0 %v5341
        %5556 = vmatprep.subr.mxu0 0.0
        %5557 = vmatpush1.msra.mxu0 %v5342
        %5558 = vmatprep.subr.mxu0 0.0
        %5559 = vmatpush1.msra.mxu0 %v5343
        %5560 = vmatprep.subr.mxu0 0.0
        %5561 = vmatpush1.msra.mxu0 %v5344
        %5562 = vmatprep.subr.mxu0 0.0
        %5563 = vmatpush1.msra.mxu0 %v5345
        %5564 = vmatprep.subr.mxu0 0.0
        %5565 = vmatpush1.msra.mxu0 %v5346
        %5566 = vmatprep.subr.mxu0 0.0
        %5567 = vmatpush1.msra.mxu0 %v5347
        %5568 = vmatprep.subr.mxu0 0.0
        %5569 = vmatpush1.msra.mxu0 %v5348
        %5570 = vmatprep.subr.mxu0 0.0
        %5571 = vmatpush1.msra.mxu0 %v5349
        %5572 = vmatprep.subr.mxu0 0.0
        %5573 = vmatpush1.msra.mxu0 %v5350
        %5574 = vmatprep.subr.mxu0 0.0
        %5575 = vmatpush1.msra.mxu0 %v5351
        %5576 = vmatprep.subr.mxu0 0.0
        %5577 = vmatpush1.msra.mxu0 %v5352
        %5578 = vmatprep.subr.mxu0 0.0
        %5579 = vmatpush1.msra.mxu0 %v5353
        %5580 = vmatprep.subr.mxu0 0.0
        %5581 = vmatpush1.msra.mxu0 %v5393
        %5582 = vmatprep.subr.mxu0 0.0
        %5583 = vmatpush1.msra.mxu0 0.0
        %5584 = vmatprep.subr.mxu0 0.0
        %5585 = vmatpush1.msra.mxu0 0.0
        %5586 = vmatprep.subr.mxu0 0.0
        %5587 = vmatpush1.msra.mxu0 0.0
        %5588 = vmatprep.subr.mxu0 0.0
        %5589 = vmatpush1.msra.mxu0 0.0
        %5590 = vmatprep.subr.mxu0 0.0
        %5591 = vmatpush1.msra.mxu0 0.0
        %5592 = vmatprep.subr.mxu0 0.0
        %5593 = vmatpush1.msra.mxu0 0.0
        %5594 = vmatprep.subr.mxu0 0.0
        %5595 = vmatpush1.msra.mxu0 0.0
        %5596 = vmatprep.mubr.f32.mxu0 %v5512
        %5597 = vmatmul.mubr.f32.gmra.mrb[0].mxu0 %v5497
        %v5598 = vpop.f32.mrb[0].mxu0
        %v5599 = vadd.f32 0.0, %v5598
        %v5600 = vpop.f32.mrb[0].mxu0
        %5601 = vmatprep.mubr.f32.mxu0 %v5515
        %5602 = vmatmul.mubr.f32.gmra.mrb[0].mxu0 %v5499
        %v5603 = vpop.f32.mrb[0].mxu0
        %v5604 = vadd.f32 0.0, %v5603
        %v5605 = vpop.f32.mrb[0].mxu0
        %5606 = vmatprep.mubr.f32.mxu0 %v5518
        %5607 = vmatmul.mubr.f32.gmra.mrb[0].mxu0 %v5501
        %v5608 = vpop.f32.mrb[0].mxu0
        %v5609 = vadd.f32 0.0, %v5608
        %v5610 = vpop.f32.mrb[0].mxu0
        %5611 = vmatprep.mubr.f32.mxu0 %v5521
        %5612 = vmatmul.mubr.f32.gmra.mrb[0].mxu0 %v5503
        %v5613 = vpop.f32.mrb[0].mxu0
        %v5614 = vadd.f32 0.0, %v5613
        %v5615 = vpop.f32.mrb[0].mxu0
        %5616 = vmatprep.mubr.f32.mxu0 %v5524
        %5617 = vmatmul.mubr.f32.gmra.mrb[0].mxu0 %v5505
        %v5618 = vpop.f32.mrb[0].mxu0
        %v5619 = vadd.f32 0.0, %v5618
        %v5620 = vpop.f32.mrb[0].mxu0
        %5621 = vmatprep.mubr.f32.mxu0 %v5527
        %5622 = vmatmul.mubr.f32.gmra.mrb[0].mxu0 %v5507
        %v5623 = vpop.f32.mrb[0].mxu0
        %v5624 = vadd.f32 0.0, %v5623
        %v5625 = vpop.f32.mrb[0].mxu0
        %5626 = vmatprep.mubr.f32.mxu0 %v5530
        %5627 = vmatmul.mubr.f32.gmra.mrb[0].mxu0 %v5509
        %v5628 = vpop.f32.mrb[0].mxu0
        %v5629 = vadd.f32 0.0, %v5628
        %v5630 = vpop.f32.mrb[0].mxu0
        %5631 = vdwg.mxu0
        %s5632 = scalar_lea.vmem [#allocation7], 8
        %v5633 = vld [vmem:[%s5632] sm:$0xff]
        %v5635 = vsel %vm1036, %v5599, 0
        %v5638 = vsel %vm1036, %v5604, 0
        %v5641 = vsel %vm1036, %v5609, 0
        %v5644 = vsel %vm1036, %v5614, 0
        %v5647 = vsel %vm1036, %v5619, 0
        %v5650 = vsel %vm1036, %v5624, 0
        %v5653 = vsel %vm1036, %v5629, 0
        %5655 = vmatprep.subr.mxu0 0.0
        %5656 = vmatpush1.msra.mxu0 %v5633
        %5657 = vmatprep.subr.mxu0 0.0
        %5658 = vmatpush1.msra.mxu0 0.0
        %5659 = vmatprep.subr.mxu0 0.0
        %5660 = vmatpush1.msra.mxu0 0.0
        %5661 = vmatprep.subr.mxu0 0.0
        %5662 = vmatpush1.msra.mxu0 0.0
        %5663 = vmatprep.subr.mxu0 0.0
        %5664 = vmatpush1.msra.mxu0 0.0
        %5665 = vmatprep.subr.mxu0 0.0
        %5666 = vmatpush1.msra.mxu0 0.0
        %5667 = vmatprep.subr.mxu0 0.0
        %5668 = vmatpush1.msra.mxu0 0.0
        %5669 = vmatprep.subr.mxu0 0.0
        %5670 = vmatpush1.msra.mxu0 0.0
        %5671 = vmatprep.subr.mxu0 0.0
        %5672 = vmatpush1.msra.mxu0 0.0
        %5673 = vmatprep.subr.mxu0 0.0
        %5674 = vmatpush1.msra.mxu0 0.0
        %5675 = vmatprep.subr.mxu0 0.0
        %5676 = vmatpush1.msra.mxu0 0.0
        %5677 = vmatprep.subr.mxu0 0.0
        %5678 = vmatpush1.msra.mxu0 0.0
        %5679 = vmatprep.subr.mxu0 0.0
        %5680 = vmatpush1.msra.mxu0 0.0
        %5681 = vmatprep.subr.mxu0 0.0
        %5682 = vmatpush1.msra.mxu0 0.0
        %5683 = vmatprep.subr.mxu0 0.0
        %5684 = vmatpush1.msra.mxu0 0.0
        %5685 = vmatprep.subr.mxu0 0.0
        %5686 = vmatpush1.msra.mxu0 0.0
        %5687 = vmatprep.subr.mxu0 0.0
        %5688 = vmatpush1.msra.mxu0 0.0
        %5689 = vmatprep.subr.mxu0 0.0
        %5690 = vmatpush1.msra.mxu0 0.0
        %5691 = vmatprep.subr.mxu0 0.0
        %5692 = vmatpush1.msra.mxu0 0.0
        %5693 = vmatprep.subr.mxu0 0.0
        %5694 = vmatpush1.msra.mxu0 0.0
        %5695 = vmatprep.subr.mxu0 0.0
        %5696 = vmatpush1.msra.mxu0 0.0
        %5697 = vmatprep.subr.mxu0 0.0
        %5698 = vmatpush1.msra.mxu0 0.0
        %5699 = vmatprep.subr.mxu0 0.0
        %5700 = vmatpush1.msra.mxu0 0.0
        %5701 = vmatprep.subr.mxu0 0.0
        %5702 = vmatpush1.msra.mxu0 0.0
        %5703 = vmatprep.subr.mxu0 0.0
        %5704 = vmatpush1.msra.mxu0 0.0
        %5705 = vmatprep.subr.mxu0 0.0
        %5706 = vmatpush1.msra.mxu0 0.0
        %5707 = vmatprep.subr.mxu0 0.0
        %5708 = vmatpush1.msra.mxu0 0.0
        %5709 = vmatprep.subr.mxu0 0.0
        %5710 = vmatpush1.msra.mxu0 0.0
        %5711 = vmatprep.subr.mxu0 0.0
        %5712 = vmatpush1.msra.mxu0 0.0
        %5713 = vmatprep.subr.mxu0 0.0
        %5714 = vmatpush1.msra.mxu0 0.0
        %5715 = vmatprep.subr.mxu0 0.0
        %5716 = vmatpush1.msra.mxu0 0.0
        %5717 = vmatprep.subr.mxu0 0.0
        %5718 = vmatpush1.msra.mxu0 0.0
        %5719 = vmatprep.mubr.f32.mxu0 0.0
        %5720 = vmatmul.mubr.f32.gmra.mrb[0].mxu0 %v5635
        %v5721 = vpop.f32.mrb[0].mxu0
        %v5722 = vadd.f32 0.0, %v5721
        %v5723 = vpop.f32.mrb[0].mxu0
        %5724 = vmatprep.mubr.f32.mxu0 0.0
        %5725 = vmatmul.mubr.f32.gmra.mrb[0].mxu0 %v5638
        %v5726 = vpop.f32.mrb[0].mxu0
        %v5727 = vadd.f32 0.0, %v5726
        %v5728 = vpop.f32.mrb[0].mxu0
        %5729 = vmatprep.mubr.f32.mxu0 0.0
        %5730 = vmatmul.mubr.f32.gmra.mrb[0].mxu0 %v5641
        %v5731 = vpop.f32.mrb[0].mxu0
        %v5732 = vadd.f32 0.0, %v5731
        %v5733 = vpop.f32.mrb[0].mxu0
        %5734 = vmatprep.mubr.f32.mxu0 0.0
        %5735 = vmatmul.mubr.f32.gmra.mrb[0].mxu0 %v5644
        %v5736 = vpop.f32.mrb[0].mxu0
        %v5737 = vadd.f32 0.0, %v5736
        %v5738 = vpop.f32.mrb[0].mxu0
        %5739 = vmatprep.mubr.f32.mxu0 0.0
        %5740 = vmatmul.mubr.f32.gmra.mrb[0].mxu0 %v5647
        %v5741 = vpop.f32.mrb[0].mxu0
        %v5742 = vadd.f32 0.0, %v5741
        %v5743 = vpop.f32.mrb[0].mxu0
        %5744 = vmatprep.mubr.f32.mxu0 0.0
        %5745 = vmatmul.mubr.f32.gmra.mrb[0].mxu0 %v5650
        %v5746 = vpop.f32.mrb[0].mxu0
        %v5747 = vadd.f32 0.0, %v5746
        %v5748 = vpop.f32.mrb[0].mxu0
        %5749 = vmatprep.mubr.f32.mxu0 0.0
        %5750 = vmatmul.mubr.f32.gmra.mrb[0].mxu0 %v5653
        %v5751 = vpop.f32.mrb[0].mxu0
        %v5752 = vadd.f32 0.0, %v5751
        %v5753 = vpop.f32.mrb[0].mxu0
        %5754 = vdwg.mxu0
        %v5756 = vsel %vm1036, %v5462, 0
        %v5759 = vsel %vm1036, %v5467, 0
        %v5762 = vsel %vm1036, %v5472, 0
        %v5765 = vsel %vm1036, %v5477, 0
        %v5768 = vsel %vm1036, %v5482, 0
        %v5771 = vsel %vm1036, %v5487, 0
        %v5774 = vsel %vm1036, %v5492, 0
        %5776 = vmatprep.subr.mxu0 0.0
        %5777 = vmatpush1.msra.mxu0 %v5495
        %5778 = vmatprep.subr.mxu0 0.0
        %5779 = vmatpush1.msra.mxu0 0.0
        %5780 = vmatprep.subr.mxu0 0.0
        %5781 = vmatpush1.msra.mxu0 0.0
        %5782 = vmatprep.subr.mxu0 0.0
        %5783 = vmatpush1.msra.mxu0 0.0
        %5784 = vmatprep.subr.mxu0 0.0
        %5785 = vmatpush1.msra.mxu0 0.0
        %5786 = vmatprep.subr.mxu0 0.0
        %5787 = vmatpush1.msra.mxu0 0.0
        %5788 = vmatprep.subr.mxu0 0.0
        %5789 = vmatpush1.msra.mxu0 0.0
        %5790 = vmatprep.subr.mxu0 0.0
        %5791 = vmatpush1.msra.mxu0 0.0
        %5792 = vmatprep.subr.mxu0 0.0
        %5793 = vmatpush1.msra.mxu0 0.0
        %5794 = vmatprep.subr.mxu0 0.0
        %5795 = vmatpush1.msra.mxu0 0.0
        %5796 = vmatprep.subr.mxu0 0.0
        %5797 = vmatpush1.msra.mxu0 0.0
        %5798 = vmatprep.subr.mxu0 0.0
        %5799 = vmatpush1.msra.mxu0 0.0
        %5800 = vmatprep.subr.mxu0 0.0
        %5801 = vmatpush1.msra.mxu0 0.0
        %5802 = vmatprep.subr.mxu0 0.0
        %5803 = vmatpush1.msra.mxu0 0.0
        %5804 = vmatprep.subr.mxu0 0.0
        %5805 = vmatpush1.msra.mxu0 0.0
        %5806 = vmatprep.subr.mxu0 0.0
        %5807 = vmatpush1.msra.mxu0 0.0
        %5808 = vmatprep.subr.mxu0 0.0
        %5809 = vmatpush1.msra.mxu0 0.0
        %5810 = vmatprep.subr.mxu0 0.0
        %5811 = vmatpush1.msra.mxu0 0.0
        %5812 = vmatprep.subr.mxu0 0.0
        %5813 = vmatpush1.msra.mxu0 0.0
        %5814 = vmatprep.subr.mxu0 0.0
        %5815 = vmatpush1.msra.mxu0 0.0
        %5816 = vmatprep.subr.mxu0 0.0
        %5817 = vmatpush1.msra.mxu0 0.0
        %5818 = vmatprep.subr.mxu0 0.0
        %5819 = vmatpush1.msra.mxu0 0.0
        %5820 = vmatprep.subr.mxu0 0.0
        %5821 = vmatpush1.msra.mxu0 0.0
        %5822 = vmatprep.subr.mxu0 0.0
        %5823 = vmatpush1.msra.mxu0 0.0
        %5824 = vmatprep.subr.mxu0 0.0
        %5825 = vmatpush1.msra.mxu0 0.0
        %5826 = vmatprep.subr.mxu0 0.0
        %5827 = vmatpush1.msra.mxu0 0.0
        %5828 = vmatprep.subr.mxu0 0.0
        %5829 = vmatpush1.msra.mxu0 0.0
        %5830 = vmatprep.subr.mxu0 0.0
        %5831 = vmatpush1.msra.mxu0 0.0
        %5832 = vmatprep.subr.mxu0 0.0
        %5833 = vmatpush1.msra.mxu0 0.0
        %5834 = vmatprep.subr.mxu0 0.0
        %5835 = vmatpush1.msra.mxu0 0.0
        %5836 = vmatprep.subr.mxu0 0.0
        %5837 = vmatpush1.msra.mxu0 0.0
        %5838 = vmatprep.subr.mxu0 0.0
        %5839 = vmatpush1.msra.mxu0 0.0
        %5840 = vmatprep.mubr.f32.mxu0 0.0
        %5841 = vmatmul.mubr.f32.gmra.mrb[0].mxu0 %v5756
        %v5842 = vpop.f32.mrb[0].mxu0
        %v5843 = vadd.f32 %v5722, %v5842
        %v5844 = vpop.f32.mrb[0].mxu0
        %5845 = vmatprep.mubr.f32.mxu0 0.0
        %5846 = vmatmul.mubr.f32.gmra.mrb[0].mxu0 %v5759
        %v5847 = vpop.f32.mrb[0].mxu0
        %v5848 = vadd.f32 %v5727, %v5847
        %v5849 = vpop.f32.mrb[0].mxu0
        %5850 = vmatprep.mubr.f32.mxu0 0.0
        %5851 = vmatmul.mubr.f32.gmra.mrb[0].mxu0 %v5762
        %v5852 = vpop.f32.mrb[0].mxu0
        %v5853 = vadd.f32 %v5732, %v5852
        %v5854 = vpop.f32.mrb[0].mxu0
        %5855 = vmatprep.mubr.f32.mxu0 0.0
        %5856 = vmatmul.mubr.f32.gmra.mrb[0].mxu0 %v5765
        %v5857 = vpop.f32.mrb[0].mxu0
        %v5858 = vadd.f32 %v5737, %v5857
        %v5859 = vpop.f32.mrb[0].mxu0
        %5860 = vmatprep.mubr.f32.mxu0 0.0
        %5861 = vmatmul.mubr.f32.gmra.mrb[0].mxu0 %v5768
        %v5862 = vpop.f32.mrb[0].mxu0
        %v5863 = vadd.f32 %v5742, %v5862
        %v5864 = vpop.f32.mrb[0].mxu0
        %5865 = vmatprep.mubr.f32.mxu0 0.0
        %5866 = vmatmul.mubr.f32.gmra.mrb[0].mxu0 %v5771
        %v5867 = vpop.f32.mrb[0].mxu0
        %v5868 = vadd.f32 %v5747, %v5867
        %v5869 = vpop.f32.mrb[0].mxu0
        %5870 = vmatprep.mubr.f32.mxu0 0.0
        %5871 = vmatmul.mubr.f32.gmra.mrb[0].mxu0 %v5774
        %v5872 = vpop.f32.mrb[0].mxu0
        %v5873 = vadd.f32 %v5752, %v5872
        %v5874 = vpop.f32.mrb[0].mxu0
        %5875 = vdwg.mxu0
        %s5876 = scalar_lea.vmem %s4, 224
        %v5877 = vld [vmem:[%s5876] sm:$0xff]
        %v5878 = vld [vmem:[%s5876 + $0x8] sm:$0xff]
        %v5879 = vld [vmem:[%s5876 + $0x10] sm:$0xff]
        %v5880 = vld [vmem:[%s5876 + $0x18] sm:$0xff]
        %v5881 = vld [vmem:[%s5876 + $0x20] sm:$0xff]
        %v5882 = vld [vmem:[%s5876 + $0x28] sm:$0xff]
        %v5883 = vld [vmem:[%s5876 + $0x30] sm:$0xff]
        %v5884 = vld [vmem:[%s5876 + $0x38] sm:$0xff]
        %v5885 = vld [vmem:[%s5876 + $0x40] sm:$0xff]
        %v5886 = vld [vmem:[%s5876 + $0x48] sm:$0xff]
        %v5887 = vld [vmem:[%s5876 + $0x50] sm:$0xff]
        %v5888 = vld [vmem:[%s5876 + $0x58] sm:$0xff]
        %v5889 = vld [vmem:[%s5876 + $0x60] sm:$0x1]
        %v5890 = vld [vmem:[%s5876 + $0x68] sm:$0x1]
        %v5892 = vsel %vm5369, %v5878, 0
        %v5895 = vsel %vm5369, %v5880, 0
        %v5898 = vsel %vm5369, %v5882, 0
        %v5901 = vsel %vm5369, %v5884, 0
        %v5904 = vsel %vm5369, %v5886, 0
        %v5907 = vsel %vm5369, %v5888, 0
        %v5910 = vsel %vm5369, %v5890, 0
        %5912 = vmatprep.subr.mxu0 0.0
        %5913 = vmatpush1.msra.mxu0 %v5330
        %5914 = vmatprep.subr.mxu0 0.0
        %5915 = vmatpush1.msra.mxu0 %v5331
        %5916 = vmatprep.subr.mxu0 0.0
        %5917 = vmatpush1.msra.mxu0 %v5332
        %5918 = vmatprep.subr.mxu0 0.0
        %5919 = vmatpush1.msra.mxu0 %v5333
        %5920 = vmatprep.subr.mxu0 0.0
        %5921 = vmatpush1.msra.mxu0 %v5334
        %5922 = vmatprep.subr.mxu0 0.0
        %5923 = vmatpush1.msra.mxu0 %v5335
        %5924 = vmatprep.subr.mxu0 0.0
        %5925 = vmatpush1.msra.mxu0 %v5336
        %5926 = vmatprep.subr.mxu0 0.0
        %5927 = vmatpush1.msra.mxu0 %v5337
        %5928 = vmatprep.subr.mxu0 0.0
        %5929 = vmatpush1.msra.mxu0 %v5338
        %5930 = vmatprep.subr.mxu0 0.0
        %5931 = vmatpush1.msra.mxu0 %v5339
        %5932 = vmatprep.subr.mxu0 0.0
        %5933 = vmatpush1.msra.mxu0 %v5340
        %5934 = vmatprep.subr.mxu0 0.0
        %5935 = vmatpush1.msra.mxu0 %v5341
        %5936 = vmatprep.subr.mxu0 0.0
        %5937 = vmatpush1.msra.mxu0 %v5342
        %5938 = vmatprep.subr.mxu0 0.0
        %5939 = vmatpush1.msra.mxu0 %v5343
        %5940 = vmatprep.subr.mxu0 0.0
        %5941 = vmatpush1.msra.mxu0 %v5344
        %5942 = vmatprep.subr.mxu0 0.0
        %5943 = vmatpush1.msra.mxu0 %v5345
        %5944 = vmatprep.subr.mxu0 0.0
        %5945 = vmatpush1.msra.mxu0 %v5346
        %5946 = vmatprep.subr.mxu0 0.0
        %5947 = vmatpush1.msra.mxu0 %v5347
        %5948 = vmatprep.subr.mxu0 0.0
        %5949 = vmatpush1.msra.mxu0 %v5348
        %5950 = vmatprep.subr.mxu0 0.0
        %5951 = vmatpush1.msra.mxu0 %v5349
        %5952 = vmatprep.subr.mxu0 0.0
        %5953 = vmatpush1.msra.mxu0 %v5350
        %5954 = vmatprep.subr.mxu0 0.0
        %5955 = vmatpush1.msra.mxu0 %v5351
        %5956 = vmatprep.subr.mxu0 0.0
        %5957 = vmatpush1.msra.mxu0 %v5352
        %5958 = vmatprep.subr.mxu0 0.0
        %5959 = vmatpush1.msra.mxu0 %v5353
        %5960 = vmatprep.subr.mxu0 0.0
        %5961 = vmatpush1.msra.mxu0 %v5393
        %5962 = vmatprep.subr.mxu0 0.0
        %5963 = vmatpush1.msra.mxu0 0.0
        %5964 = vmatprep.subr.mxu0 0.0
        %5965 = vmatpush1.msra.mxu0 0.0
        %5966 = vmatprep.subr.mxu0 0.0
        %5967 = vmatpush1.msra.mxu0 0.0
        %5968 = vmatprep.subr.mxu0 0.0
        %5969 = vmatpush1.msra.mxu0 0.0
        %5970 = vmatprep.subr.mxu0 0.0
        %5971 = vmatpush1.msra.mxu0 0.0
        %5972 = vmatprep.subr.mxu0 0.0
        %5973 = vmatpush1.msra.mxu0 0.0
        %5974 = vmatprep.subr.mxu0 0.0
        %5975 = vmatpush1.msra.mxu0 0.0
        %5976 = vmatprep.mubr.f32.mxu0 %v5892
        %5977 = vmatmul.mubr.f32.gmra.mrb[0].mxu0 %v5877
        %v5978 = vpop.f32.mrb[0].mxu0
        %v5979 = vadd.f32 0.0, %v5978
        %v5980 = vpop.f32.mrb[0].mxu0
        %5981 = vmatprep.mubr.f32.mxu0 %v5895
        %5982 = vmatmul.mubr.f32.gmra.mrb[0].mxu0 %v5879
        %v5983 = vpop.f32.mrb[0].mxu0
        %v5984 = vadd.f32 0.0, %v5983
        %v5985 = vpop.f32.mrb[0].mxu0
        %5986 = vmatprep.mubr.f32.mxu0 %v5898
        %5987 = vmatmul.mubr.f32.gmra.mrb[0].mxu0 %v5881
        %v5988 = vpop.f32.mrb[0].mxu0
        %v5989 = vadd.f32 0.0, %v5988
        %v5990 = vpop.f32.mrb[0].mxu0
        %5991 = vmatprep.mubr.f32.mxu0 %v5901
        %5992 = vmatmul.mubr.f32.gmra.mrb[0].mxu0 %v5883
        %v5993 = vpop.f32.mrb[0].mxu0
        %v5994 = vadd.f32 0.0, %v5993
        %v5995 = vpop.f32.mrb[0].mxu0
        %5996 = vmatprep.mubr.f32.mxu0 %v5904
        %5997 = vmatmul.mubr.f32.gmra.mrb[0].mxu0 %v5885
        %v5998 = vpop.f32.mrb[0].mxu0
        %v5999 = vadd.f32 0.0, %v5998
        %v6000 = vpop.f32.mrb[0].mxu0
        %6001 = vmatprep.mubr.f32.mxu0 %v5907
        %6002 = vmatmul.mubr.f32.gmra.mrb[0].mxu0 %v5887
        %v6003 = vpop.f32.mrb[0].mxu0
        %v6004 = vadd.f32 0.0, %v6003
        %v6005 = vpop.f32.mrb[0].mxu0
        %6006 = vmatprep.mubr.f32.mxu0 %v5910
        %6007 = vmatmul.mubr.f32.gmra.mrb[0].mxu0 %v5889
        %v6008 = vpop.f32.mrb[0].mxu0
        %v6009 = vadd.f32 0.0, %v6008
        %v6010 = vpop.f32.mrb[0].mxu0
        %6011 = vdwg.mxu0
        %s6012 = scalar_lea.vmem [#allocation7], 16
        %v6013 = vld [vmem:[%s6012] sm:$0xff]
        %v6015 = vsel %vm1036, %v5979, 0
        %v6018 = vsel %vm1036, %v5984, 0
        %v6021 = vsel %vm1036, %v5989, 0
        %v6024 = vsel %vm1036, %v5994, 0
        %v6027 = vsel %vm1036, %v5999, 0
        %v6030 = vsel %vm1036, %v6004, 0
        %v6033 = vsel %vm1036, %v6009, 0
        %6035 = vmatprep.subr.mxu0 0.0
        %6036 = vmatpush1.msra.mxu0 %v6013
        %6037 = vmatprep.subr.mxu0 0.0
        %6038 = vmatpush1.msra.mxu0 0.0
        %6039 = vmatprep.subr.mxu0 0.0
        %6040 = vmatpush1.msra.mxu0 0.0
        %6041 = vmatprep.subr.mxu0 0.0
        %6042 = vmatpush1.msra.mxu0 0.0
        %6043 = vmatprep.subr.mxu0 0.0
        %6044 = vmatpush1.msra.mxu0 0.0
        %6045 = vmatprep.subr.mxu0 0.0
        %6046 = vmatpush1.msra.mxu0 0.0
        %6047 = vmatprep.subr.mxu0 0.0
        %6048 = vmatpush1.msra.mxu0 0.0
        %6049 = vmatprep.subr.mxu0 0.0
        %6050 = vmatpush1.msra.mxu0 0.0
        %6051 = vmatprep.subr.mxu0 0.0
        %6052 = vmatpush1.msra.mxu0 0.0
        %6053 = vmatprep.subr.mxu0 0.0
        %6054 = vmatpush1.msra.mxu0 0.0
        %6055 = vmatprep.subr.mxu0 0.0
        %6056 = vmatpush1.msra.mxu0 0.0
        %6057 = vmatprep.subr.mxu0 0.0
        %6058 = vmatpush1.msra.mxu0 0.0
        %6059 = vmatprep.subr.mxu0 0.0
        %6060 = vmatpush1.msra.mxu0 0.0
        %6061 = vmatprep.subr.mxu0 0.0
        %6062 = vmatpush1.msra.mxu0 0.0
        %6063 = vmatprep.subr.mxu0 0.0
        %6064 = vmatpush1.msra.mxu0 0.0
        %6065 = vmatprep.subr.mxu0 0.0
        %6066 = vmatpush1.msra.mxu0 0.0
        %6067 = vmatprep.subr.mxu0 0.0
        %6068 = vmatpush1.msra.mxu0 0.0
        %6069 = vmatprep.subr.mxu0 0.0
        %6070 = vmatpush1.msra.mxu0 0.0
        %6071 = vmatprep.subr.mxu0 0.0
        %6072 = vmatpush1.msra.mxu0 0.0
        %6073 = vmatprep.subr.mxu0 0.0
        %6074 = vmatpush1.msra.mxu0 0.0
        %6075 = vmatprep.subr.mxu0 0.0
        %6076 = vmatpush1.msra.mxu0 0.0
        %6077 = vmatprep.subr.mxu0 0.0
        %6078 = vmatpush1.msra.mxu0 0.0
        %6079 = vmatprep.subr.mxu0 0.0
        %6080 = vmatpush1.msra.mxu0 0.0
        %6081 = vmatprep.subr.mxu0 0.0
        %6082 = vmatpush1.msra.mxu0 0.0
        %6083 = vmatprep.subr.mxu0 0.0
        %6084 = vmatpush1.msra.mxu0 0.0
        %6085 = vmatprep.subr.mxu0 0.0
        %6086 = vmatpush1.msra.mxu0 0.0
        %6087 = vmatprep.subr.mxu0 0.0
        %6088 = vmatpush1.msra.mxu0 0.0
        %6089 = vmatprep.subr.mxu0 0.0
        %6090 = vmatpush1.msra.mxu0 0.0
        %6091 = vmatprep.subr.mxu0 0.0
        %6092 = vmatpush1.msra.mxu0 0.0
        %6093 = vmatprep.subr.mxu0 0.0
        %6094 = vmatpush1.msra.mxu0 0.0
        %6095 = vmatprep.subr.mxu0 0.0
        %6096 = vmatpush1.msra.mxu0 0.0
        %6097 = vmatprep.subr.mxu0 0.0
        %6098 = vmatpush1.msra.mxu0 0.0
        %6099 = vmatprep.mubr.f32.mxu0 0.0
        %6100 = vmatmul.mubr.f32.gmra.mrb[0].mxu0 %v6015
        %v6101 = vpop.f32.mrb[0].mxu0
        %v6102 = vadd.f32 0.0, %v6101
        %v6103 = vpop.f32.mrb[0].mxu0
        %6104 = vmatprep.mubr.f32.mxu0 0.0
        %6105 = vmatmul.mubr.f32.gmra.mrb[0].mxu0 %v6018
        %v6106 = vpop.f32.mrb[0].mxu0
        %v6107 = vadd.f32 0.0, %v6106
        %v6108 = vpop.f32.mrb[0].mxu0
        %6109 = vmatprep.mubr.f32.mxu0 0.0
        %6110 = vmatmul.mubr.f32.gmra.mrb[0].mxu0 %v6021
        %v6111 = vpop.f32.mrb[0].mxu0
        %v6112 = vadd.f32 0.0, %v6111
        %v6113 = vpop.f32.mrb[0].mxu0
        %6114 = vmatprep.mubr.f32.mxu0 0.0
        %6115 = vmatmul.mubr.f32.gmra.mrb[0].mxu0 %v6024
        %v6116 = vpop.f32.mrb[0].mxu0
        %v6117 = vadd.f32 0.0, %v6116
        %v6118 = vpop.f32.mrb[0].mxu0
        %6119 = vmatprep.mubr.f32.mxu0 0.0
        %6120 = vmatmul.mubr.f32.gmra.mrb[0].mxu0 %v6027
        %v6121 = vpop.f32.mrb[0].mxu0
        %v6122 = vadd.f32 0.0, %v6121
        %v6123 = vpop.f32.mrb[0].mxu0
        %6124 = vmatprep.mubr.f32.mxu0 0.0
        %6125 = vmatmul.mubr.f32.gmra.mrb[0].mxu0 %v6030
        %v6126 = vpop.f32.mrb[0].mxu0
        %v6127 = vadd.f32 0.0, %v6126
        %v6128 = vpop.f32.mrb[0].mxu0
        %6129 = vmatprep.mubr.f32.mxu0 0.0
        %6130 = vmatmul.mubr.f32.gmra.mrb[0].mxu0 %v6033
        %v6131 = vpop.f32.mrb[0].mxu0
        %v6132 = vadd.f32 0.0, %v6131
        %v6133 = vpop.f32.mrb[0].mxu0
        %6134 = vdwg.mxu0
        %v6135 = vadd.f32 %v5843, %v6102
        %v6136 = vadd.f32 %v5848, %v6107
        %v6137 = vadd.f32 %v5853, %v6112
        %v6138 = vadd.f32 %v5858, %v6117
        %v6139 = vadd.f32 %v5863, %v6122
        %v6140 = vadd.f32 %v5868, %v6127
        %v6141 = vadd.f32 %v5873, %v6132
        %s6142 = scalar_lea.vmem %s4, 336
        %v6143 = vld [vmem:[%s6142] sm:$0xff]
        %v6144 = vld [vmem:[%s6142 + $0x8] sm:$0xff]
        %v6145 = vld [vmem:[%s6142 + $0x10] sm:$0xff]
        %v6146 = vld [vmem:[%s6142 + $0x18] sm:$0xff]
        %v6147 = vld [vmem:[%s6142 + $0x20] sm:$0xff]
        %v6148 = vld [vmem:[%s6142 + $0x28] sm:$0xff]
        %v6149 = vld [vmem:[%s6142 + $0x30] sm:$0xff]
        %v6150 = vld [vmem:[%s6142 + $0x38] sm:$0xff]
        %v6151 = vld [vmem:[%s6142 + $0x40] sm:$0xff]
        %v6152 = vld [vmem:[%s6142 + $0x48] sm:$0xff]
        %v6153 = vld [vmem:[%s6142 + $0x50] sm:$0xff]
        %v6154 = vld [vmem:[%s6142 + $0x58] sm:$0xff]
        %v6155 = vld [vmem:[%s6142 + $0x60] sm:$0x1]
        %v6156 = vld [vmem:[%s6142 + $0x68] sm:$0x1]
        %v6158 = vsel %vm5369, %v6144, 0
        %v6161 = vsel %vm5369, %v6146, 0
        %v6164 = vsel %vm5369, %v6148, 0
        %v6167 = vsel %vm5369, %v6150, 0
        %v6170 = vsel %vm5369, %v6152, 0
        %v6173 = vsel %vm5369, %v6154, 0
        %v6176 = vsel %vm5369, %v6156, 0
        %6178 = vmatprep.subr.mxu0 0.0
        %6179 = vmatpush1.msra.mxu0 %v5330
        %6180 = vmatprep.subr.mxu0 0.0
        %6181 = vmatpush1.msra.mxu0 %v5331
        %6182 = vmatprep.subr.mxu0 0.0
        %6183 = vmatpush1.msra.mxu0 %v5332
        %6184 = vmatprep.subr.mxu0 0.0
        %6185 = vmatpush1.msra.mxu0 %v5333
        %6186 = vmatprep.subr.mxu0 0.0
        %6187 = vmatpush1.msra.mxu0 %v5334
        %6188 = vmatprep.subr.mxu0 0.0
        %6189 = vmatpush1.msra.mxu0 %v5335
        %6190 = vmatprep.subr.mxu0 0.0
        %6191 = vmatpush1.msra.mxu0 %v5336
        %6192 = vmatprep.subr.mxu0 0.0
        %6193 = vmatpush1.msra.mxu0 %v5337
        %6194 = vmatprep.subr.mxu0 0.0
        %6195 = vmatpush1.msra.mxu0 %v5338
        %6196 = vmatprep.subr.mxu0 0.0
        %6197 = vmatpush1.msra.mxu0 %v5339
        %6198 = vmatprep.subr.mxu0 0.0
        %6199 = vmatpush1.msra.mxu0 %v5340
        %6200 = vmatprep.subr.mxu0 0.0
        %6201 = vmatpush1.msra.mxu0 %v5341
        %6202 = vmatprep.subr.mxu0 0.0
        %6203 = vmatpush1.msra.mxu0 %v5342
        %6204 = vmatprep.subr.mxu0 0.0
        %6205 = vmatpush1.msra.mxu0 %v5343
        %6206 = vmatprep.subr.mxu0 0.0
        %6207 = vmatpush1.msra.mxu0 %v5344
        %6208 = vmatprep.subr.mxu0 0.0
        %6209 = vmatpush1.msra.mxu0 %v5345
        %6210 = vmatprep.subr.mxu0 0.0
        %6211 = vmatpush1.msra.mxu0 %v5346
        %6212 = vmatprep.subr.mxu0 0.0
        %6213 = vmatpush1.msra.mxu0 %v5347
        %6214 = vmatprep.subr.mxu0 0.0
        %6215 = vmatpush1.msra.mxu0 %v5348
        %6216 = vmatprep.subr.mxu0 0.0
        %6217 = vmatpush1.msra.mxu0 %v5349
        %6218 = vmatprep.subr.mxu0 0.0
        %6219 = vmatpush1.msra.mxu0 %v5350
        %6220 = vmatprep.subr.mxu0 0.0
        %6221 = vmatpush1.msra.mxu0 %v5351
        %6222 = vmatprep.subr.mxu0 0.0
        %6223 = vmatpush1.msra.mxu0 %v5352
        %6224 = vmatprep.subr.mxu0 0.0
        %6225 = vmatpush1.msra.mxu0 %v5353
        %6226 = vmatprep.subr.mxu0 0.0
        %6227 = vmatpush1.msra.mxu0 %v5393
        %6228 = vmatprep.subr.mxu0 0.0
        %6229 = vmatpush1.msra.mxu0 0.0
        %6230 = vmatprep.subr.mxu0 0.0
        %6231 = vmatpush1.msra.mxu0 0.0
        %6232 = vmatprep.subr.mxu0 0.0
        %6233 = vmatpush1.msra.mxu0 0.0
        %6234 = vmatprep.subr.mxu0 0.0
        %6235 = vmatpush1.msra.mxu0 0.0
        %6236 = vmatprep.subr.mxu0 0.0
        %6237 = vmatpush1.msra.mxu0 0.0
        %6238 = vmatprep.subr.mxu0 0.0
        %6239 = vmatpush1.msra.mxu0 0.0
        %6240 = vmatprep.subr.mxu0 0.0
        %6241 = vmatpush1.msra.mxu0 0.0
        %6242 = vmatprep.mubr.f32.mxu0 %v6158
        %6243 = vmatmul.mubr.f32.gmra.mrb[0].mxu0 %v6143
        %v6244 = vpop.f32.mrb[0].mxu0
        %v6245 = vadd.f32 0.0, %v6244
        %v6246 = vpop.f32.mrb[0].mxu0
        %6247 = vmatprep.mubr.f32.mxu0 %v6161
        %6248 = vmatmul.mubr.f32.gmra.mrb[0].mxu0 %v6145
        %v6249 = vpop.f32.mrb[0].mxu0
        %v6250 = vadd.f32 0.0, %v6249
        %v6251 = vpop.f32.mrb[0].mxu0
        %6252 = vmatprep.mubr.f32.mxu0 %v6164
        %6253 = vmatmul.mubr.f32.gmra.mrb[0].mxu0 %v6147
        %v6254 = vpop.f32.mrb[0].mxu0
        %v6255 = vadd.f32 0.0, %v6254
        %v6256 = vpop.f32.mrb[0].mxu0
        %6257 = vmatprep.mubr.f32.mxu0 %v6167
        %6258 = vmatmul.mubr.f32.gmra.mrb[0].mxu0 %v6149
        %v6259 = vpop.f32.mrb[0].mxu0
        %v6260 = vadd.f32 0.0, %v6259
        %v6261 = vpop.f32.mrb[0].mxu0
        %6262 = vmatprep.mubr.f32.mxu0 %v6170
        %6263 = vmatmul.mubr.f32.gmra.mrb[0].mxu0 %v6151
        %v6264 = vpop.f32.mrb[0].mxu0
        %v6265 = vadd.f32 0.0, %v6264
        %v6266 = vpop.f32.mrb[0].mxu0
        %6267 = vmatprep.mubr.f32.mxu0 %v6173
        %6268 = vmatmul.mubr.f32.gmra.mrb[0].mxu0 %v6153
        %v6269 = vpop.f32.mrb[0].mxu0
        %v6270 = vadd.f32 0.0, %v6269
        %v6271 = vpop.f32.mrb[0].mxu0
        %6272 = vmatprep.mubr.f32.mxu0 %v6176
        %6273 = vmatmul.mubr.f32.gmra.mrb[0].mxu0 %v6155
        %v6274 = vpop.f32.mrb[0].mxu0
        %v6275 = vadd.f32 0.0, %v6274
        %v6276 = vpop.f32.mrb[0].mxu0
        %6277 = vdwg.mxu0
        %s6278 = scalar_lea.vmem [#allocation7], 24
        %v6279 = vld [vmem:[%s6278] sm:$0xff]
        %v6281 = vsel %vm1036, %v6245, 0
        %v6284 = vsel %vm1036, %v6250, 0
        %v6287 = vsel %vm1036, %v6255, 0
        %v6290 = vsel %vm1036, %v6260, 0
        %v6293 = vsel %vm1036, %v6265, 0
        %v6296 = vsel %vm1036, %v6270, 0
        %v6299 = vsel %vm1036, %v6275, 0
        %6301 = vmatprep.subr.mxu0 0.0
        %6302 = vmatpush1.msra.mxu0 %v6279
        %6303 = vmatprep.subr.mxu0 0.0
        %6304 = vmatpush1.msra.mxu0 0.0
        %6305 = vmatprep.subr.mxu0 0.0
        %6306 = vmatpush1.msra.mxu0 0.0
        %6307 = vmatprep.subr.mxu0 0.0
        %6308 = vmatpush1.msra.mxu0 0.0
        %6309 = vmatprep.subr.mxu0 0.0
        %6310 = vmatpush1.msra.mxu0 0.0
        %6311 = vmatprep.subr.mxu0 0.0
        %6312 = vmatpush1.msra.mxu0 0.0
        %6313 = vmatprep.subr.mxu0 0.0
        %6314 = vmatpush1.msra.mxu0 0.0
        %6315 = vmatprep.subr.mxu0 0.0
        %6316 = vmatpush1.msra.mxu0 0.0
        %6317 = vmatprep.subr.mxu0 0.0
        %6318 = vmatpush1.msra.mxu0 0.0
        %6319 = vmatprep.subr.mxu0 0.0
        %6320 = vmatpush1.msra.mxu0 0.0
        %6321 = vmatprep.subr.mxu0 0.0
        %6322 = vmatpush1.msra.mxu0 0.0
        %6323 = vmatprep.subr.mxu0 0.0
        %6324 = vmatpush1.msra.mxu0 0.0
        %6325 = vmatprep.subr.mxu0 0.0
        %6326 = vmatpush1.msra.mxu0 0.0
        %6327 = vmatprep.subr.mxu0 0.0
        %6328 = vmatpush1.msra.mxu0 0.0
        %6329 = vmatprep.subr.mxu0 0.0
        %6330 = vmatpush1.msra.mxu0 0.0
        %6331 = vmatprep.subr.mxu0 0.0
        %6332 = vmatpush1.msra.mxu0 0.0
        %6333 = vmatprep.subr.mxu0 0.0
        %6334 = vmatpush1.msra.mxu0 0.0
        %6335 = vmatprep.subr.mxu0 0.0
        %6336 = vmatpush1.msra.mxu0 0.0
        %6337 = vmatprep.subr.mxu0 0.0
        %6338 = vmatpush1.msra.mxu0 0.0
        %6339 = vmatprep.subr.mxu0 0.0
        %6340 = vmatpush1.msra.mxu0 0.0
        %6341 = vmatprep.subr.mxu0 0.0
        %6342 = vmatpush1.msra.mxu0 0.0
        %6343 = vmatprep.subr.mxu0 0.0
        %6344 = vmatpush1.msra.mxu0 0.0
        %6345 = vmatprep.subr.mxu0 0.0
        %6346 = vmatpush1.msra.mxu0 0.0
        %6347 = vmatprep.subr.mxu0 0.0
        %6348 = vmatpush1.msra.mxu0 0.0
        %6349 = vmatprep.subr.mxu0 0.0
        %6350 = vmatpush1.msra.mxu0 0.0
        %6351 = vmatprep.subr.mxu0 0.0
        %6352 = vmatpush1.msra.mxu0 0.0
        %6353 = vmatprep.subr.mxu0 0.0
        %6354 = vmatpush1.msra.mxu0 0.0
        %6355 = vmatprep.subr.mxu0 0.0
        %6356 = vmatpush1.msra.mxu0 0.0
        %6357 = vmatprep.subr.mxu0 0.0
        %6358 = vmatpush1.msra.mxu0 0.0
        %6359 = vmatprep.subr.mxu0 0.0
        %6360 = vmatpush1.msra.mxu0 0.0
        %6361 = vmatprep.subr.mxu0 0.0
        %6362 = vmatpush1.msra.mxu0 0.0
        %6363 = vmatprep.subr.mxu0 0.0
        %6364 = vmatpush1.msra.mxu0 0.0
        %6365 = vmatprep.mubr.f32.mxu0 0.0
        %6366 = vmatmul.mubr.f32.gmra.mrb[0].mxu0 %v6281
        %v6367 = vpop.f32.mrb[0].mxu0
        %v6368 = vadd.f32 0.0, %v6367
        %v6369 = vpop.f32.mrb[0].mxu0
        %6370 = vmatprep.mubr.f32.mxu0 0.0
        %6371 = vmatmul.mubr.f32.gmra.mrb[0].mxu0 %v6284
        %v6372 = vpop.f32.mrb[0].mxu0
        %v6373 = vadd.f32 0.0, %v6372
        %v6374 = vpop.f32.mrb[0].mxu0
        %6375 = vmatprep.mubr.f32.mxu0 0.0
        %6376 = vmatmul.mubr.f32.gmra.mrb[0].mxu0 %v6287
        %v6377 = vpop.f32.mrb[0].mxu0
        %v6378 = vadd.f32 0.0, %v6377
        %v6379 = vpop.f32.mrb[0].mxu0
        %6380 = vmatprep.mubr.f32.mxu0 0.0
        %6381 = vmatmul.mubr.f32.gmra.mrb[0].mxu0 %v6290
        %v6382 = vpop.f32.mrb[0].mxu0
        %v6383 = vadd.f32 0.0, %v6382
        %v6384 = vpop.f32.mrb[0].mxu0
        %6385 = vmatprep.mubr.f32.mxu0 0.0
        %6386 = vmatmul.mubr.f32.gmra.mrb[0].mxu0 %v6293
        %v6387 = vpop.f32.mrb[0].mxu0
        %v6388 = vadd.f32 0.0, %v6387
        %v6389 = vpop.f32.mrb[0].mxu0
        %6390 = vmatprep.mubr.f32.mxu0 0.0
        %6391 = vmatmul.mubr.f32.gmra.mrb[0].mxu0 %v6296
        %v6392 = vpop.f32.mrb[0].mxu0
        %v6393 = vadd.f32 0.0, %v6392
        %v6394 = vpop.f32.mrb[0].mxu0
        %6395 = vmatprep.mubr.f32.mxu0 0.0
        %6396 = vmatmul.mubr.f32.gmra.mrb[0].mxu0 %v6299
        %v6397 = vpop.f32.mrb[0].mxu0
        %v6398 = vadd.f32 0.0, %v6397
        %v6399 = vpop.f32.mrb[0].mxu0
        %6400 = vdwg.mxu0
        %v6401 = vadd.f32 %v6135, %v6368
        %v6402 = vadd.f32 %v6136, %v6373
        %v6403 = vadd.f32 %v6137, %v6378
        %v6404 = vadd.f32 %v6138, %v6383
        %v6405 = vadd.f32 %v6139, %v6388
        %v6406 = vadd.f32 %v6140, %v6393
        %v6407 = vadd.f32 %v6141, %v6398
        %v6408 = vld [vmem:[#allocation8] sm:$0x1]
        %v6410 = vlaneseq
        %v6411 = vshrl.u32 %v6410, 7
        %v6412 = vsub.s32 0, %v6411
        %v6413 = vrot.slane %v6408, %v6412
        %v6415 = vadd.f32 %v6401, %v6413
        %v6416 = vadd.f32 %v6402, %v6413
        %v6417 = vadd.f32 %v6403, %v6413
        %v6418 = vadd.f32 %v6404, %v6413
        %v6419 = vadd.f32 %v6405, %v6413
        %v6420 = vadd.f32 %v6406, %v6413
        %v6421 = vadd.f32 %v6407, %v6413
        %v6422 = vmax.f32 %v6415, 0.0
        %v6423 = vmax.f32 %v6416, 0.0
        %v6424 = vmax.f32 %v6417, 0.0
        %v6425 = vmax.f32 %v6418, 0.0
        %v6426 = vmax.f32 %v6419, 0.0
        %v6427 = vmax.f32 %v6420, 0.0
        %v6428 = vmax.f32 %v6421, 0.0
        %v6429 = vld [vmem:[%s7] sm:$0xff]
        %v6430 = vld [vmem:[%s7 + $0x8] sm:$0xff]
        %v6431 = vld [vmem:[%s7 + $0x10] sm:$0xff]
        %v6432 = vld [vmem:[%s7 + $0x18] sm:$0xff]
        %v6433 = vld [vmem:[%s7 + $0x20] sm:$0xf]
        %vm6434 = vcmask 400384
        %v6436 = vsel %vm6434, %v6429, 0
        %v6439 = vsel %vm6434, %v6430, 0
        %v6442 = vsel %vm6434, %v6431, 0
        %v6445 = vsel %vm6434, %v6432, 0
        %v6448 = vsel %vm6434, %v6433, 0
        %vm6450 = vcmask 1040384
        %v6452 = vsel %vm6450, %v6428, 0
        %6454 = vmatprep.subr.mxu0 0.0
        %6455 = vmatpush1.msra.mxu0 %v6422
        %6456 = vmatprep.subr.mxu0 0.0
        %6457 = vmatpush1.msra.mxu0 %v6423
        %6458 = vmatprep.subr.mxu0 0.0
        %6459 = vmatpush1.msra.mxu0 %v6424
        %6460 = vmatprep.subr.mxu0 0.0
        %6461 = vmatpush1.msra.mxu0 %v6425
        %6462 = vmatprep.subr.mxu0 0.0
        %6463 = vmatpush1.msra.mxu0 %v6426
        %6464 = vmatprep.subr.mxu0 0.0
        %6465 = vmatpush1.msra.mxu0 %v6427
        %6466 = vmatprep.subr.mxu0 0.0
        %6467 = vmatpush1.msra.mxu0 %v6452
        %6468 = vmatprep.subr.mxu0 0.0
        %6469 = vmatpush1.msra.mxu0 0.0
        %6470 = vmatprep.subr.mxu0 0.0
        %6471 = vmatpush1.msra.mxu0 0.0
        %6472 = vmatprep.subr.mxu0 0.0
        %6473 = vmatpush1.msra.mxu0 0.0
        %6474 = vmatprep.subr.mxu0 0.0
        %6475 = vmatpush1.msra.mxu0 0.0
        %6476 = vmatprep.subr.mxu0 0.0
        %6477 = vmatpush1.msra.mxu0 0.0
        %6478 = vmatprep.subr.mxu0 0.0
        %6479 = vmatpush1.msra.mxu0 0.0
        %6480 = vmatprep.subr.mxu0 0.0
        %6481 = vmatpush1.msra.mxu0 0.0
        %6482 = vmatprep.subr.mxu0 0.0
        %6483 = vmatpush1.msra.mxu0 0.0
        %6484 = vmatprep.subr.mxu0 0.0
        %6485 = vmatpush1.msra.mxu0 0.0
        %6486 = vmatprep.subr.mxu0 0.0
        %6487 = vmatpush1.msra.mxu0 0.0
        %6488 = vmatprep.subr.mxu0 0.0
        %6489 = vmatpush1.msra.mxu0 0.0
        %6490 = vmatprep.subr.mxu0 0.0
        %6491 = vmatpush1.msra.mxu0 0.0
        %6492 = vmatprep.subr.mxu0 0.0
        %6493 = vmatpush1.msra.mxu0 0.0
        %6494 = vmatprep.subr.mxu0 0.0
        %6495 = vmatpush1.msra.mxu0 0.0
        %6496 = vmatprep.subr.mxu0 0.0
        %6497 = vmatpush1.msra.mxu0 0.0
        %6498 = vmatprep.subr.mxu0 0.0
        %6499 = vmatpush1.msra.mxu0 0.0
        %6500 = vmatprep.subr.mxu0 0.0
        %6501 = vmatpush1.msra.mxu0 0.0
        %6502 = vmatprep.subr.mxu0 0.0
        %6503 = vmatpush1.msra.mxu0 0.0
        %6504 = vmatprep.subr.mxu0 0.0
        %6505 = vmatpush1.msra.mxu0 0.0
        %6506 = vmatprep.subr.mxu0 0.0
        %6507 = vmatpush1.msra.mxu0 0.0
        %6508 = vmatprep.subr.mxu0 0.0
        %6509 = vmatpush1.msra.mxu0 0.0
        %6510 = vmatprep.subr.mxu0 0.0
        %6511 = vmatpush1.msra.mxu0 0.0
        %6512 = vmatprep.subr.mxu0 0.0
        %6513 = vmatpush1.msra.mxu0 0.0
        %6514 = vmatprep.subr.mxu0 0.0
        %6515 = vmatpush1.msra.mxu0 0.0
        %6516 = vmatprep.subr.mxu0 0.0
        %6517 = vmatpush1.msra.mxu0 0.0
        %6518 = vmatprep.mubr.f32.mxu0 0.0
        %6519 = vmatmul.mubr.f32.gmra.mrb[0].mxu0 %v6436
        %v6520 = vpop.f32.mrb[0].mxu0
        %v6521 = vadd.f32 0.0, %v6520
        %v6522 = vpop.f32.mrb[0].mxu0
        %6523 = vmatprep.mubr.f32.mxu0 0.0
        %6524 = vmatmul.mubr.f32.gmra.mrb[0].mxu0 %v6439
        %v6525 = vpop.f32.mrb[0].mxu0
        %v6526 = vadd.f32 0.0, %v6525
        %v6527 = vpop.f32.mrb[0].mxu0
        %6528 = vmatprep.mubr.f32.mxu0 0.0
        %6529 = vmatmul.mubr.f32.gmra.mrb[0].mxu0 %v6442
        %v6530 = vpop.f32.mrb[0].mxu0
        %v6531 = vadd.f32 0.0, %v6530
        %v6532 = vpop.f32.mrb[0].mxu0
        %6533 = vmatprep.mubr.f32.mxu0 0.0
        %6534 = vmatmul.mubr.f32.gmra.mrb[0].mxu0 %v6445
        %v6535 = vpop.f32.mrb[0].mxu0
        %v6536 = vadd.f32 0.0, %v6535
        %v6537 = vpop.f32.mrb[0].mxu0
        %6538 = vmatprep.mubr.f32.mxu0 0.0
        %6539 = vmatmul.mubr.f32.gmra.mrb[0].mxu0 %v6448
        %v6540 = vpop.f32.mrb[0].mxu0
        %v6541 = vadd.f32 0.0, %v6540
        %v6542 = vpop.f32.mrb[0].mxu0
        %6543 = vdwg.mxu0
        %v6544 = vld [vmem:[#allocation10] sm:$0xff]
        %v6545 = vld [vmem:[#allocation10 + $0x8] sm:$0xff]
        %s6546 = scalar_lea.vmem %s7, 40
        %v6547 = vld [vmem:[%s6546] sm:$0xff]
        %v6548 = vld [vmem:[%s6546 + $0x8] sm:$0xff]
        %v6549 = vld [vmem:[%s6546 + $0x10] sm:$0xff]
        %v6550 = vld [vmem:[%s6546 + $0x18] sm:$0xff]
        %v6551 = vld [vmem:[%s6546 + $0x20] sm:$0xf]
        %v6553 = vsel %vm6434, %v6547, 0
        %v6556 = vsel %vm6434, %v6548, 0
        %v6559 = vsel %vm6434, %v6549, 0
        %v6562 = vsel %vm6434, %v6550, 0
        %v6565 = vsel %vm6434, %v6551, 0
        %6567 = vmatprep.subr.mxu0 0.0
        %6568 = vmatpush1.msra.mxu0 %v6422
        %6569 = vmatprep.subr.mxu0 0.0
        %6570 = vmatpush1.msra.mxu0 %v6423
        %6571 = vmatprep.subr.mxu0 0.0
        %6572 = vmatpush1.msra.mxu0 %v6424
        %6573 = vmatprep.subr.mxu0 0.0
        %6574 = vmatpush1.msra.mxu0 %v6425
        %6575 = vmatprep.subr.mxu0 0.0
        %6576 = vmatpush1.msra.mxu0 %v6426
        %6577 = vmatprep.subr.mxu0 0.0
        %6578 = vmatpush1.msra.mxu0 %v6427
        %6579 = vmatprep.subr.mxu0 0.0
        %6580 = vmatpush1.msra.mxu0 %v6452
        %6581 = vmatprep.subr.mxu0 0.0
        %6582 = vmatpush1.msra.mxu0 0.0
        %6583 = vmatprep.subr.mxu0 0.0
        %6584 = vmatpush1.msra.mxu0 0.0
        %6585 = vmatprep.subr.mxu0 0.0
        %6586 = vmatpush1.msra.mxu0 0.0
        %6587 = vmatprep.subr.mxu0 0.0
        %6588 = vmatpush1.msra.mxu0 0.0
        %6589 = vmatprep.subr.mxu0 0.0
        %6590 = vmatpush1.msra.mxu0 0.0
        %6591 = vmatprep.subr.mxu0 0.0
        %6592 = vmatpush1.msra.mxu0 0.0
        %6593 = vmatprep.subr.mxu0 0.0
        %6594 = vmatpush1.msra.mxu0 0.0
        %6595 = vmatprep.subr.mxu0 0.0
        %6596 = vmatpush1.msra.mxu0 0.0
        %6597 = vmatprep.subr.mxu0 0.0
        %6598 = vmatpush1.msra.mxu0 0.0
        %6599 = vmatprep.subr.mxu0 0.0
        %6600 = vmatpush1.msra.mxu0 0.0
        %6601 = vmatprep.subr.mxu0 0.0
        %6602 = vmatpush1.msra.mxu0 0.0
        %6603 = vmatprep.subr.mxu0 0.0
        %6604 = vmatpush1.msra.mxu0 0.0
        %6605 = vmatprep.subr.mxu0 0.0
        %6606 = vmatpush1.msra.mxu0 0.0
        %6607 = vmatprep.subr.mxu0 0.0
        %6608 = vmatpush1.msra.mxu0 0.0
        %6609 = vmatprep.subr.mxu0 0.0
        %6610 = vmatpush1.msra.mxu0 0.0
        %6611 = vmatprep.subr.mxu0 0.0
        %6612 = vmatpush1.msra.mxu0 0.0
        %6613 = vmatprep.subr.mxu0 0.0
        %6614 = vmatpush1.msra.mxu0 0.0
        %6615 = vmatprep.subr.mxu0 0.0
        %6616 = vmatpush1.msra.mxu0 0.0
        %6617 = vmatprep.subr.mxu0 0.0
        %6618 = vmatpush1.msra.mxu0 0.0
        %6619 = vmatprep.subr.mxu0 0.0
        %6620 = vmatpush1.msra.mxu0 0.0
        %6621 = vmatprep.subr.mxu0 0.0
        %6622 = vmatpush1.msra.mxu0 0.0
        %6623 = vmatprep.subr.mxu0 0.0
        %6624 = vmatpush1.msra.mxu0 0.0
        %6625 = vmatprep.subr.mxu0 0.0
        %6626 = vmatpush1.msra.mxu0 0.0
        %6627 = vmatprep.subr.mxu0 0.0
        %6628 = vmatpush1.msra.mxu0 0.0
        %6629 = vmatprep.subr.mxu0 0.0
        %6630 = vmatpush1.msra.mxu0 0.0
        %6631 = vmatprep.mubr.f32.mxu0 0.0
        %6632 = vmatmul.mubr.f32.gmra.mrb[0].mxu0 %v6553
        %v6633 = vpop.f32.mrb[0].mxu0
        %v6634 = vadd.f32 0.0, %v6633
        %v6635 = vpop.f32.mrb[0].mxu0
        %6636 = vmatprep.mubr.f32.mxu0 0.0
        %6637 = vmatmul.mubr.f32.gmra.mrb[0].mxu0 %v6556
        %v6638 = vpop.f32.mrb[0].mxu0
        %v6639 = vadd.f32 0.0, %v6638
        %v6640 = vpop.f32.mrb[0].mxu0
        %6641 = vmatprep.mubr.f32.mxu0 0.0
        %6642 = vmatmul.mubr.f32.gmra.mrb[0].mxu0 %v6559
        %v6643 = vpop.f32.mrb[0].mxu0
        %v6644 = vadd.f32 0.0, %v6643
        %v6645 = vpop.f32.mrb[0].mxu0
        %6646 = vmatprep.mubr.f32.mxu0 0.0
        %6647 = vmatmul.mubr.f32.gmra.mrb[0].mxu0 %v6562
        %v6648 = vpop.f32.mrb[0].mxu0
        %v6649 = vadd.f32 0.0, %v6648
        %v6650 = vpop.f32.mrb[0].mxu0
        %6651 = vmatprep.mubr.f32.mxu0 0.0
        %6652 = vmatmul.mubr.f32.gmra.mrb[0].mxu0 %v6565
        %v6653 = vpop.f32.mrb[0].mxu0
        %v6654 = vadd.f32 0.0, %v6653
        %v6655 = vpop.f32.mrb[0].mxu0
        %6656 = vdwg.mxu0
        %s6657 = scalar_lea.vmem [#allocation10], 16
        %v6658 = vld [vmem:[%s6657] sm:$0xff]
        %v6659 = vld [vmem:[%s6657 + $0x8] sm:$0xff]
        %vm6660 = vcmask 130048
        %v6662 = vsel %vm6660, %v6634, 0
        %v6665 = vsel %vm6660, %v6639, 0
        %v6668 = vsel %vm6660, %v6644, 0
        %v6671 = vsel %vm6660, %v6649, 0
        %v6674 = vsel %vm6660, %v6654, 0
        %6676 = vmatprep.subr.mxu0 0.0
        %6677 = vmatpush1.msra.mxu0 %v6658
        %6678 = vmatprep.subr.mxu0 0.0
        %6679 = vmatpush1.msra.mxu0 %v6659
        %6680 = vmatprep.subr.mxu0 0.0
        %6681 = vmatpush1.msra.mxu0 0.0
        %6682 = vmatprep.subr.mxu0 0.0
        %6683 = vmatpush1.msra.mxu0 0.0
        %6684 = vmatprep.subr.mxu0 0.0
        %6685 = vmatpush1.msra.mxu0 0.0
        %6686 = vmatprep.subr.mxu0 0.0
        %6687 = vmatpush1.msra.mxu0 0.0
        %6688 = vmatprep.subr.mxu0 0.0
        %6689 = vmatpush1.msra.mxu0 0.0
        %6690 = vmatprep.subr.mxu0 0.0
        %6691 = vmatpush1.msra.mxu0 0.0
        %6692 = vmatprep.subr.mxu0 0.0
        %6693 = vmatpush1.msra.mxu0 0.0
        %6694 = vmatprep.subr.mxu0 0.0
        %6695 = vmatpush1.msra.mxu0 0.0
        %6696 = vmatprep.subr.mxu0 0.0
        %6697 = vmatpush1.msra.mxu0 0.0
        %6698 = vmatprep.subr.mxu0 0.0
        %6699 = vmatpush1.msra.mxu0 0.0
        %6700 = vmatprep.subr.mxu0 0.0
        %6701 = vmatpush1.msra.mxu0 0.0
        %6702 = vmatprep.subr.mxu0 0.0
        %6703 = vmatpush1.msra.mxu0 0.0
        %6704 = vmatprep.subr.mxu0 0.0
        %6705 = vmatpush1.msra.mxu0 0.0
        %6706 = vmatprep.subr.mxu0 0.0
        %6707 = vmatpush1.msra.mxu0 0.0
        %6708 = vmatprep.subr.mxu0 0.0
        %6709 = vmatpush1.msra.mxu0 0.0
        %6710 = vmatprep.subr.mxu0 0.0
        %6711 = vmatpush1.msra.mxu0 0.0
        %6712 = vmatprep.subr.mxu0 0.0
        %6713 = vmatpush1.msra.mxu0 0.0
        %6714 = vmatprep.subr.mxu0 0.0
        %6715 = vmatpush1.msra.mxu0 0.0
        %6716 = vmatprep.subr.mxu0 0.0
        %6717 = vmatpush1.msra.mxu0 0.0
        %6718 = vmatprep.subr.mxu0 0.0
        %6719 = vmatpush1.msra.mxu0 0.0
        %6720 = vmatprep.subr.mxu0 0.0
        %6721 = vmatpush1.msra.mxu0 0.0
        %6722 = vmatprep.subr.mxu0 0.0
        %6723 = vmatpush1.msra.mxu0 0.0
        %6724 = vmatprep.subr.mxu0 0.0
        %6725 = vmatpush1.msra.mxu0 0.0
        %6726 = vmatprep.subr.mxu0 0.0
        %6727 = vmatpush1.msra.mxu0 0.0
        %6728 = vmatprep.subr.mxu0 0.0
        %6729 = vmatpush1.msra.mxu0 0.0
        %6730 = vmatprep.subr.mxu0 0.0
        %6731 = vmatpush1.msra.mxu0 0.0
        %6732 = vmatprep.subr.mxu0 0.0
        %6733 = vmatpush1.msra.mxu0 0.0
        %6734 = vmatprep.subr.mxu0 0.0
        %6735 = vmatpush1.msra.mxu0 0.0
        %6736 = vmatprep.subr.mxu0 0.0
        %6737 = vmatpush1.msra.mxu0 0.0
        %6738 = vmatprep.subr.mxu0 0.0
        %6739 = vmatpush1.msra.mxu0 0.0
        %6740 = vmatprep.mubr.f32.mxu0 0.0
        %6741 = vmatmul.mubr.f32.gmra.mrb[0].mxu0 %v6662
        %v6742 = vpop.f32.mrb[0].mxu0
        %v6743 = vadd.f32 0.0, %v6742
        %v6744 = vpop.f32.mrb[0].mxu0
        %6745 = vmatprep.mubr.f32.mxu0 0.0
        %6746 = vmatmul.mubr.f32.gmra.mrb[0].mxu0 %v6665
        %v6747 = vpop.f32.mrb[0].mxu0
        %v6748 = vadd.f32 0.0, %v6747
        %v6749 = vpop.f32.mrb[0].mxu0
        %6750 = vmatprep.mubr.f32.mxu0 0.0
        %6751 = vmatmul.mubr.f32.gmra.mrb[0].mxu0 %v6668
        %v6752 = vpop.f32.mrb[0].mxu0
        %v6753 = vadd.f32 0.0, %v6752
        %v6754 = vpop.f32.mrb[0].mxu0
        %6755 = vmatprep.mubr.f32.mxu0 0.0
        %6756 = vmatmul.mubr.f32.gmra.mrb[0].mxu0 %v6671
        %v6757 = vpop.f32.mrb[0].mxu0
        %v6758 = vadd.f32 0.0, %v6757
        %v6759 = vpop.f32.mrb[0].mxu0
        %6760 = vmatprep.mubr.f32.mxu0 0.0
        %6761 = vmatmul.mubr.f32.gmra.mrb[0].mxu0 %v6674
        %v6762 = vpop.f32.mrb[0].mxu0
        %v6763 = vadd.f32 0.0, %v6762
        %v6764 = vpop.f32.mrb[0].mxu0
        %6765 = vdwg.mxu0
        %v6767 = vsel %vm6660, %v6521, 0
        %v6770 = vsel %vm6660, %v6526, 0
        %v6773 = vsel %vm6660, %v6531, 0
        %v6776 = vsel %vm6660, %v6536, 0
        %v6779 = vsel %vm6660, %v6541, 0
        %6781 = vmatprep.subr.mxu0 0.0
        %6782 = vmatpush1.msra.mxu0 %v6544
        %6783 = vmatprep.subr.mxu0 0.0
        %6784 = vmatpush1.msra.mxu0 %v6545
        %6785 = vmatprep.subr.mxu0 0.0
        %6786 = vmatpush1.msra.mxu0 0.0
        %6787 = vmatprep.subr.mxu0 0.0
        %6788 = vmatpush1.msra.mxu0 0.0
        %6789 = vmatprep.subr.mxu0 0.0
        %6790 = vmatpush1.msra.mxu0 0.0
        %6791 = vmatprep.subr.mxu0 0.0
        %6792 = vmatpush1.msra.mxu0 0.0
        %6793 = vmatprep.subr.mxu0 0.0
        %6794 = vmatpush1.msra.mxu0 0.0
        %6795 = vmatprep.subr.mxu0 0.0
        %6796 = vmatpush1.msra.mxu0 0.0
        %6797 = vmatprep.subr.mxu0 0.0
        %6798 = vmatpush1.msra.mxu0 0.0
        %6799 = vmatprep.subr.mxu0 0.0
        %6800 = vmatpush1.msra.mxu0 0.0
        %6801 = vmatprep.subr.mxu0 0.0
        %6802 = vmatpush1.msra.mxu0 0.0
        %6803 = vmatprep.subr.mxu0 0.0
        %6804 = vmatpush1.msra.mxu0 0.0
        %6805 = vmatprep.subr.mxu0 0.0
        %6806 = vmatpush1.msra.mxu0 0.0
        %6807 = vmatprep.subr.mxu0 0.0
        %6808 = vmatpush1.msra.mxu0 0.0
        %6809 = vmatprep.subr.mxu0 0.0
        %6810 = vmatpush1.msra.mxu0 0.0
        %6811 = vmatprep.subr.mxu0 0.0
        %6812 = vmatpush1.msra.mxu0 0.0
        %6813 = vmatprep.subr.mxu0 0.0
        %6814 = vmatpush1.msra.mxu0 0.0
        %6815 = vmatprep.subr.mxu0 0.0
        %6816 = vmatpush1.msra.mxu0 0.0
        %6817 = vmatprep.subr.mxu0 0.0
        %6818 = vmatpush1.msra.mxu0 0.0
        %6819 = vmatprep.subr.mxu0 0.0
        %6820 = vmatpush1.msra.mxu0 0.0
        %6821 = vmatprep.subr.mxu0 0.0
        %6822 = vmatpush1.msra.mxu0 0.0
        %6823 = vmatprep.subr.mxu0 0.0
        %6824 = vmatpush1.msra.mxu0 0.0
        %6825 = vmatprep.subr.mxu0 0.0
        %6826 = vmatpush1.msra.mxu0 0.0
        %6827 = vmatprep.subr.mxu0 0.0
        %6828 = vmatpush1.msra.mxu0 0.0
        %6829 = vmatprep.subr.mxu0 0.0
        %6830 = vmatpush1.msra.mxu0 0.0
        %6831 = vmatprep.subr.mxu0 0.0
        %6832 = vmatpush1.msra.mxu0 0.0
        %6833 = vmatprep.subr.mxu0 0.0
        %6834 = vmatpush1.msra.mxu0 0.0
        %6835 = vmatprep.subr.mxu0 0.0
        %6836 = vmatpush1.msra.mxu0 0.0
        %6837 = vmatprep.subr.mxu0 0.0
        %6838 = vmatpush1.msra.mxu0 0.0
        %6839 = vmatprep.subr.mxu0 0.0
        %6840 = vmatpush1.msra.mxu0 0.0
        %6841 = vmatprep.subr.mxu0 0.0
        %6842 = vmatpush1.msra.mxu0 0.0
        %6843 = vmatprep.subr.mxu0 0.0
        %6844 = vmatpush1.msra.mxu0 0.0
        %6845 = vmatprep.mubr.f32.mxu0 0.0
        %6846 = vmatmul.mubr.f32.gmra.mrb[0].mxu0 %v6767
        %v6847 = vpop.f32.mrb[0].mxu0
        %v6848 = vadd.f32 %v6743, %v6847
        %v6849 = vpop.f32.mrb[0].mxu0
        %6850 = vmatprep.mubr.f32.mxu0 0.0
        %6851 = vmatmul.mubr.f32.gmra.mrb[0].mxu0 %v6770
        %v6852 = vpop.f32.mrb[0].mxu0
        %v6853 = vadd.f32 %v6748, %v6852
        %v6854 = vpop.f32.mrb[0].mxu0
        %6855 = vmatprep.mubr.f32.mxu0 0.0
        %6856 = vmatmul.mubr.f32.gmra.mrb[0].mxu0 %v6773
        %v6857 = vpop.f32.mrb[0].mxu0
        %v6858 = vadd.f32 %v6753, %v6857
        %v6859 = vpop.f32.mrb[0].mxu0
        %6860 = vmatprep.mubr.f32.mxu0 0.0
        %6861 = vmatmul.mubr.f32.gmra.mrb[0].mxu0 %v6776
        %v6862 = vpop.f32.mrb[0].mxu0
        %v6863 = vadd.f32 %v6758, %v6862
        %v6864 = vpop.f32.mrb[0].mxu0
        %6865 = vmatprep.mubr.f32.mxu0 0.0
        %6866 = vmatmul.mubr.f32.gmra.mrb[0].mxu0 %v6779
        %v6867 = vpop.f32.mrb[0].mxu0
        %v6868 = vadd.f32 %v6763, %v6867
        %v6869 = vpop.f32.mrb[0].mxu0
        %6870 = vdwg.mxu0
        %s6871 = scalar_lea.vmem %s7, 80
        %v6872 = vld [vmem:[%s6871] sm:$0xff]
        %v6873 = vld [vmem:[%s6871 + $0x8] sm:$0xff]
        %v6874 = vld [vmem:[%s6871 + $0x10] sm:$0xff]
        %v6875 = vld [vmem:[%s6871 + $0x18] sm:$0xff]
        %v6876 = vld [vmem:[%s6871 + $0x20] sm:$0xf]
        %v6878 = vsel %vm6434, %v6872, 0
        %v6881 = vsel %vm6434, %v6873, 0
        %v6884 = vsel %vm6434, %v6874, 0
        %v6887 = vsel %vm6434, %v6875, 0
        %v6890 = vsel %vm6434, %v6876, 0
        %6892 = vmatprep.subr.mxu0 0.0
        %6893 = vmatpush1.msra.mxu0 %v6422
        %6894 = vmatprep.subr.mxu0 0.0
        %6895 = vmatpush1.msra.mxu0 %v6423
        %6896 = vmatprep.subr.mxu0 0.0
        %6897 = vmatpush1.msra.mxu0 %v6424
        %6898 = vmatprep.subr.mxu0 0.0
        %6899 = vmatpush1.msra.mxu0 %v6425
        %6900 = vmatprep.subr.mxu0 0.0
        %6901 = vmatpush1.msra.mxu0 %v6426
        %6902 = vmatprep.subr.mxu0 0.0
        %6903 = vmatpush1.msra.mxu0 %v6427
        %6904 = vmatprep.subr.mxu0 0.0
        %6905 = vmatpush1.msra.mxu0 %v6452
        %6906 = vmatprep.subr.mxu0 0.0
        %6907 = vmatpush1.msra.mxu0 0.0
        %6908 = vmatprep.subr.mxu0 0.0
        %6909 = vmatpush1.msra.mxu0 0.0
        %6910 = vmatprep.subr.mxu0 0.0
        %6911 = vmatpush1.msra.mxu0 0.0
        %6912 = vmatprep.subr.mxu0 0.0
        %6913 = vmatpush1.msra.mxu0 0.0
        %6914 = vmatprep.subr.mxu0 0.0
        %6915 = vmatpush1.msra.mxu0 0.0
        %6916 = vmatprep.subr.mxu0 0.0
        %6917 = vmatpush1.msra.mxu0 0.0
        %6918 = vmatprep.subr.mxu0 0.0
        %6919 = vmatpush1.msra.mxu0 0.0
        %6920 = vmatprep.subr.mxu0 0.0
        %6921 = vmatpush1.msra.mxu0 0.0
        %6922 = vmatprep.subr.mxu0 0.0
        %6923 = vmatpush1.msra.mxu0 0.0
        %6924 = vmatprep.subr.mxu0 0.0
        %6925 = vmatpush1.msra.mxu0 0.0
        %6926 = vmatprep.subr.mxu0 0.0
        %6927 = vmatpush1.msra.mxu0 0.0
        %6928 = vmatprep.subr.mxu0 0.0
        %6929 = vmatpush1.msra.mxu0 0.0
        %6930 = vmatprep.subr.mxu0 0.0
        %6931 = vmatpush1.msra.mxu0 0.0
        %6932 = vmatprep.subr.mxu0 0.0
        %6933 = vmatpush1.msra.mxu0 0.0
        %6934 = vmatprep.subr.mxu0 0.0
        %6935 = vmatpush1.msra.mxu0 0.0
        %6936 = vmatprep.subr.mxu0 0.0
        %6937 = vmatpush1.msra.mxu0 0.0
        %6938 = vmatprep.subr.mxu0 0.0
        %6939 = vmatpush1.msra.mxu0 0.0
        %6940 = vmatprep.subr.mxu0 0.0
        %6941 = vmatpush1.msra.mxu0 0.0
        %6942 = vmatprep.subr.mxu0 0.0
        %6943 = vmatpush1.msra.mxu0 0.0
        %6944 = vmatprep.subr.mxu0 0.0
        %6945 = vmatpush1.msra.mxu0 0.0
        %6946 = vmatprep.subr.mxu0 0.0
        %6947 = vmatpush1.msra.mxu0 0.0
        %6948 = vmatprep.subr.mxu0 0.0
        %6949 = vmatpush1.msra.mxu0 0.0
        %6950 = vmatprep.subr.mxu0 0.0
        %6951 = vmatpush1.msra.mxu0 0.0
        %6952 = vmatprep.subr.mxu0 0.0
        %6953 = vmatpush1.msra.mxu0 0.0
        %6954 = vmatprep.subr.mxu0 0.0
        %6955 = vmatpush1.msra.mxu0 0.0
        %6956 = vmatprep.mubr.f32.mxu0 0.0
        %6957 = vmatmul.mubr.f32.gmra.mrb[0].mxu0 %v6878
        %v6958 = vpop.f32.mrb[0].mxu0
        %v6959 = vadd.f32 0.0, %v6958
        %v6960 = vpop.f32.mrb[0].mxu0
        %6961 = vmatprep.mubr.f32.mxu0 0.0
        %6962 = vmatmul.mubr.f32.gmra.mrb[0].mxu0 %v6881
        %v6963 = vpop.f32.mrb[0].mxu0
        %v6964 = vadd.f32 0.0, %v6963
        %v6965 = vpop.f32.mrb[0].mxu0
        %6966 = vmatprep.mubr.f32.mxu0 0.0
        %6967 = vmatmul.mubr.f32.gmra.mrb[0].mxu0 %v6884
        %v6968 = vpop.f32.mrb[0].mxu0
        %v6969 = vadd.f32 0.0, %v6968
        %v6970 = vpop.f32.mrb[0].mxu0
        %6971 = vmatprep.mubr.f32.mxu0 0.0
        %6972 = vmatmul.mubr.f32.gmra.mrb[0].mxu0 %v6887
        %v6973 = vpop.f32.mrb[0].mxu0
        %v6974 = vadd.f32 0.0, %v6973
        %v6975 = vpop.f32.mrb[0].mxu0
        %6976 = vmatprep.mubr.f32.mxu0 0.0
        %6977 = vmatmul.mubr.f32.gmra.mrb[0].mxu0 %v6890
        %v6978 = vpop.f32.mrb[0].mxu0
        %v6979 = vadd.f32 0.0, %v6978
        %v6980 = vpop.f32.mrb[0].mxu0
        %6981 = vdwg.mxu0
        %s6982 = scalar_lea.vmem [#allocation10], 32
        %v6983 = vld [vmem:[%s6982] sm:$0xff]
        %v6984 = vld [vmem:[%s6982 + $0x8] sm:$0xff]
        %v6986 = vsel %vm6660, %v6959, 0
        %v6989 = vsel %vm6660, %v6964, 0
        %v6992 = vsel %vm6660, %v6969, 0
        %v6995 = vsel %vm6660, %v6974, 0
        %v6998 = vsel %vm6660, %v6979, 0
        %7000 = vmatprep.subr.mxu0 0.0
        %7001 = vmatpush1.msra.mxu0 %v6983
        %7002 = vmatprep.subr.mxu0 0.0
        %7003 = vmatpush1.msra.mxu0 %v6984
        %7004 = vmatprep.subr.mxu0 0.0
        %7005 = vmatpush1.msra.mxu0 0.0
        %7006 = vmatprep.subr.mxu0 0.0
        %7007 = vmatpush1.msra.mxu0 0.0
        %7008 = vmatprep.subr.mxu0 0.0
        %7009 = vmatpush1.msra.mxu0 0.0
        %7010 = vmatprep.subr.mxu0 0.0
        %7011 = vmatpush1.msra.mxu0 0.0
        %7012 = vmatprep.subr.mxu0 0.0
        %7013 = vmatpush1.msra.mxu0 0.0
        %7014 = vmatprep.subr.mxu0 0.0
        %7015 = vmatpush1.msra.mxu0 0.0
        %7016 = vmatprep.subr.mxu0 0.0
        %7017 = vmatpush1.msra.mxu0 0.0
        %7018 = vmatprep.subr.mxu0 0.0
        %7019 = vmatpush1.msra.mxu0 0.0
        %7020 = vmatprep.subr.mxu0 0.0
        %7021 = vmatpush1.msra.mxu0 0.0
        %7022 = vmatprep.subr.mxu0 0.0
        %7023 = vmatpush1.msra.mxu0 0.0
        %7024 = vmatprep.subr.mxu0 0.0
        %7025 = vmatpush1.msra.mxu0 0.0
        %7026 = vmatprep.subr.mxu0 0.0
        %7027 = vmatpush1.msra.mxu0 0.0
        %7028 = vmatprep.subr.mxu0 0.0
        %7029 = vmatpush1.msra.mxu0 0.0
        %7030 = vmatprep.subr.mxu0 0.0
        %7031 = vmatpush1.msra.mxu0 0.0
        %7032 = vmatprep.subr.mxu0 0.0
        %7033 = vmatpush1.msra.mxu0 0.0
        %7034 = vmatprep.subr.mxu0 0.0
        %7035 = vmatpush1.msra.mxu0 0.0
        %7036 = vmatprep.subr.mxu0 0.0
        %7037 = vmatpush1.msra.mxu0 0.0
        %7038 = vmatprep.subr.mxu0 0.0
        %7039 = vmatpush1.msra.mxu0 0.0
        %7040 = vmatprep.subr.mxu0 0.0
        %7041 = vmatpush1.msra.mxu0 0.0
        %7042 = vmatprep.subr.mxu0 0.0
        %7043 = vmatpush1.msra.mxu0 0.0
        %7044 = vmatprep.subr.mxu0 0.0
        %7045 = vmatpush1.msra.mxu0 0.0
        %7046 = vmatprep.subr.mxu0 0.0
        %7047 = vmatpush1.msra.mxu0 0.0
        %7048 = vmatprep.subr.mxu0 0.0
        %7049 = vmatpush1.msra.mxu0 0.0
        %7050 = vmatprep.subr.mxu0 0.0
        %7051 = vmatpush1.msra.mxu0 0.0
        %7052 = vmatprep.subr.mxu0 0.0
        %7053 = vmatpush1.msra.mxu0 0.0
        %7054 = vmatprep.subr.mxu0 0.0
        %7055 = vmatpush1.msra.mxu0 0.0
        %7056 = vmatprep.subr.mxu0 0.0
        %7057 = vmatpush1.msra.mxu0 0.0
        %7058 = vmatprep.subr.mxu0 0.0
        %7059 = vmatpush1.msra.mxu0 0.0
        %7060 = vmatprep.subr.mxu0 0.0
        %7061 = vmatpush1.msra.mxu0 0.0
        %7062 = vmatprep.subr.mxu0 0.0
        %7063 = vmatpush1.msra.mxu0 0.0
        %7064 = vmatprep.mubr.f32.mxu0 0.0
        %7065 = vmatmul.mubr.f32.gmra.mrb[0].mxu0 %v6986
        %v7066 = vpop.f32.mrb[0].mxu0
        %v7067 = vadd.f32 0.0, %v7066
        %v7068 = vpop.f32.mrb[0].mxu0
        %7069 = vmatprep.mubr.f32.mxu0 0.0
        %7070 = vmatmul.mubr.f32.gmra.mrb[0].mxu0 %v6989
        %v7071 = vpop.f32.mrb[0].mxu0
        %v7072 = vadd.f32 0.0, %v7071
        %v7073 = vpop.f32.mrb[0].mxu0
        %7074 = vmatprep.mubr.f32.mxu0 0.0
        %7075 = vmatmul.mubr.f32.gmra.mrb[0].mxu0 %v6992
        %v7076 = vpop.f32.mrb[0].mxu0
        %v7077 = vadd.f32 0.0, %v7076
        %v7078 = vpop.f32.mrb[0].mxu0
        %7079 = vmatprep.mubr.f32.mxu0 0.0
        %7080 = vmatmul.mubr.f32.gmra.mrb[0].mxu0 %v6995
        %v7081 = vpop.f32.mrb[0].mxu0
        %v7082 = vadd.f32 0.0, %v7081
        %v7083 = vpop.f32.mrb[0].mxu0
        %7084 = vmatprep.mubr.f32.mxu0 0.0
        %7085 = vmatmul.mubr.f32.gmra.mrb[0].mxu0 %v6998
        %v7086 = vpop.f32.mrb[0].mxu0
        %v7087 = vadd.f32 0.0, %v7086
        %v7088 = vpop.f32.mrb[0].mxu0
        %7089 = vdwg.mxu0
        %v7090 = vadd.f32 %v6848, %v7067
        %v7091 = vadd.f32 %v6853, %v7072
        %v7092 = vadd.f32 %v6858, %v7077
        %v7093 = vadd.f32 %v6863, %v7082
        %v7094 = vadd.f32 %v6868, %v7087
        %s7095 = scalar_lea.vmem %s7, 120
        %v7096 = vld [vmem:[%s7095] sm:$0xff]
        %v7097 = vld [vmem:[%s7095 + $0x8] sm:$0xff]
        %v7098 = vld [vmem:[%s7095 + $0x10] sm:$0xff]
        %v7099 = vld [vmem:[%s7095 + $0x18] sm:$0xff]
        %v7100 = vld [vmem:[%s7095 + $0x20] sm:$0xf]
        %v7102 = vsel %vm6434, %v7096, 0
        %v7105 = vsel %vm6434, %v7097, 0
        %v7108 = vsel %vm6434, %v7098, 0
        %v7111 = vsel %vm6434, %v7099, 0
        %v7114 = vsel %vm6434, %v7100, 0
        %7116 = vmatprep.subr.mxu0 0.0
        %7117 = vmatpush1.msra.mxu0 %v6422
        %7118 = vmatprep.subr.mxu0 0.0
        %7119 = vmatpush1.msra.mxu0 %v6423
        %7120 = vmatprep.subr.mxu0 0.0
        %7121 = vmatpush1.msra.mxu0 %v6424
        %7122 = vmatprep.subr.mxu0 0.0
        %7123 = vmatpush1.msra.mxu0 %v6425
        %7124 = vmatprep.subr.mxu0 0.0
        %7125 = vmatpush1.msra.mxu0 %v6426
        %7126 = vmatprep.subr.mxu0 0.0
        %7127 = vmatpush1.msra.mxu0 %v6427
        %7128 = vmatprep.subr.mxu0 0.0
        %7129 = vmatpush1.msra.mxu0 %v6452
        %7130 = vmatprep.subr.mxu0 0.0
        %7131 = vmatpush1.msra.mxu0 0.0
        %7132 = vmatprep.subr.mxu0 0.0
        %7133 = vmatpush1.msra.mxu0 0.0
        %7134 = vmatprep.subr.mxu0 0.0
        %7135 = vmatpush1.msra.mxu0 0.0
        %7136 = vmatprep.subr.mxu0 0.0
        %7137 = vmatpush1.msra.mxu0 0.0
        %7138 = vmatprep.subr.mxu0 0.0
        %7139 = vmatpush1.msra.mxu0 0.0
        %7140 = vmatprep.subr.mxu0 0.0
        %7141 = vmatpush1.msra.mxu0 0.0
        %7142 = vmatprep.subr.mxu0 0.0
        %7143 = vmatpush1.msra.mxu0 0.0
        %7144 = vmatprep.subr.mxu0 0.0
        %7145 = vmatpush1.msra.mxu0 0.0
        %7146 = vmatprep.subr.mxu0 0.0
        %7147 = vmatpush1.msra.mxu0 0.0
        %7148 = vmatprep.subr.mxu0 0.0
        %7149 = vmatpush1.msra.mxu0 0.0
        %7150 = vmatprep.subr.mxu0 0.0
        %7151 = vmatpush1.msra.mxu0 0.0
        %7152 = vmatprep.subr.mxu0 0.0
        %7153 = vmatpush1.msra.mxu0 0.0
        %7154 = vmatprep.subr.mxu0 0.0
        %7155 = vmatpush1.msra.mxu0 0.0
        %7156 = vmatprep.subr.mxu0 0.0
        %7157 = vmatpush1.msra.mxu0 0.0
        %7158 = vmatprep.subr.mxu0 0.0
        %7159 = vmatpush1.msra.mxu0 0.0
        %7160 = vmatprep.subr.mxu0 0.0
        %7161 = vmatpush1.msra.mxu0 0.0
        %7162 = vmatprep.subr.mxu0 0.0
        %7163 = vmatpush1.msra.mxu0 0.0
        %7164 = vmatprep.subr.mxu0 0.0
        %7165 = vmatpush1.msra.mxu0 0.0
        %7166 = vmatprep.subr.mxu0 0.0
        %7167 = vmatpush1.msra.mxu0 0.0
        %7168 = vmatprep.subr.mxu0 0.0
        %7169 = vmatpush1.msra.mxu0 0.0
        %7170 = vmatprep.subr.mxu0 0.0
        %7171 = vmatpush1.msra.mxu0 0.0
        %7172 = vmatprep.subr.mxu0 0.0
        %7173 = vmatpush1.msra.mxu0 0.0
        %7174 = vmatprep.subr.mxu0 0.0
        %7175 = vmatpush1.msra.mxu0 0.0
        %7176 = vmatprep.subr.mxu0 0.0
        %7177 = vmatpush1.msra.mxu0 0.0
        %7178 = vmatprep.subr.mxu0 0.0
        %7179 = vmatpush1.msra.mxu0 0.0
        %7180 = vmatprep.mubr.f32.mxu0 0.0
        %7181 = vmatmul.mubr.f32.gmra.mrb[0].mxu0 %v7102
        %v7182 = vpop.f32.mrb[0].mxu0
        %v7183 = vadd.f32 0.0, %v7182
        %v7184 = vpop.f32.mrb[0].mxu0
        %7185 = vmatprep.mubr.f32.mxu0 0.0
        %7186 = vmatmul.mubr.f32.gmra.mrb[0].mxu0 %v7105
        %v7187 = vpop.f32.mrb[0].mxu0
        %v7188 = vadd.f32 0.0, %v7187
        %v7189 = vpop.f32.mrb[0].mxu0
        %7190 = vmatprep.mubr.f32.mxu0 0.0
        %7191 = vmatmul.mubr.f32.gmra.mrb[0].mxu0 %v7108
        %v7192 = vpop.f32.mrb[0].mxu0
        %v7193 = vadd.f32 0.0, %v7192
        %v7194 = vpop.f32.mrb[0].mxu0
        %7195 = vmatprep.mubr.f32.mxu0 0.0
        %7196 = vmatmul.mubr.f32.gmra.mrb[0].mxu0 %v7111
        %v7197 = vpop.f32.mrb[0].mxu0
        %v7198 = vadd.f32 0.0, %v7197
        %v7199 = vpop.f32.mrb[0].mxu0
        %7200 = vmatprep.mubr.f32.mxu0 0.0
        %7201 = vmatmul.mubr.f32.gmra.mrb[0].mxu0 %v7114
        %v7202 = vpop.f32.mrb[0].mxu0
        %v7203 = vadd.f32 0.0, %v7202
        %v7204 = vpop.f32.mrb[0].mxu0
        %7205 = vdwg.mxu0
        %s7206 = scalar_lea.vmem [#allocation10], 48
        %v7207 = vld [vmem:[%s7206] sm:$0xff]
        %v7208 = vld [vmem:[%s7206 + $0x8] sm:$0xff]
        %v7210 = vsel %vm6660, %v7183, 0
        %v7213 = vsel %vm6660, %v7188, 0
        %v7216 = vsel %vm6660, %v7193, 0
        %v7219 = vsel %vm6660, %v7198, 0
        %v7222 = vsel %vm6660, %v7203, 0
        %7224 = vmatprep.subr.mxu0 0.0
        %7225 = vmatpush1.msra.mxu0 %v7207
        %7226 = vmatprep.subr.mxu0 0.0
        %7227 = vmatpush1.msra.mxu0 %v7208
        %7228 = vmatprep.subr.mxu0 0.0
        %7229 = vmatpush1.msra.mxu0 0.0
        %7230 = vmatprep.subr.mxu0 0.0
        %7231 = vmatpush1.msra.mxu0 0.0
        %7232 = vmatprep.subr.mxu0 0.0
        %7233 = vmatpush1.msra.mxu0 0.0
        %7234 = vmatprep.subr.mxu0 0.0
        %7235 = vmatpush1.msra.mxu0 0.0
        %7236 = vmatprep.subr.mxu0 0.0
        %7237 = vmatpush1.msra.mxu0 0.0
        %7238 = vmatprep.subr.mxu0 0.0
        %7239 = vmatpush1.msra.mxu0 0.0
        %7240 = vmatprep.subr.mxu0 0.0
        %7241 = vmatpush1.msra.mxu0 0.0
        %7242 = vmatprep.subr.mxu0 0.0
        %7243 = vmatpush1.msra.mxu0 0.0
        %7244 = vmatprep.subr.mxu0 0.0
        %7245 = vmatpush1.msra.mxu0 0.0
        %7246 = vmatprep.subr.mxu0 0.0
        %7247 = vmatpush1.msra.mxu0 0.0
        %7248 = vmatprep.subr.mxu0 0.0
        %7249 = vmatpush1.msra.mxu0 0.0
        %7250 = vmatprep.subr.mxu0 0.0
        %7251 = vmatpush1.msra.mxu0 0.0
        %7252 = vmatprep.subr.mxu0 0.0
        %7253 = vmatpush1.msra.mxu0 0.0
        %7254 = vmatprep.subr.mxu0 0.0
        %7255 = vmatpush1.msra.mxu0 0.0
        %7256 = vmatprep.subr.mxu0 0.0
        %7257 = vmatpush1.msra.mxu0 0.0
        %7258 = vmatprep.subr.mxu0 0.0
        %7259 = vmatpush1.msra.mxu0 0.0
        %7260 = vmatprep.subr.mxu0 0.0
        %7261 = vmatpush1.msra.mxu0 0.0
        %7262 = vmatprep.subr.mxu0 0.0
        %7263 = vmatpush1.msra.mxu0 0.0
        %7264 = vmatprep.subr.mxu0 0.0
        %7265 = vmatpush1.msra.mxu0 0.0
        %7266 = vmatprep.subr.mxu0 0.0
        %7267 = vmatpush1.msra.mxu0 0.0
        %7268 = vmatprep.subr.mxu0 0.0
        %7269 = vmatpush1.msra.mxu0 0.0
        %7270 = vmatprep.subr.mxu0 0.0
        %7271 = vmatpush1.msra.mxu0 0.0
        %7272 = vmatprep.subr.mxu0 0.0
        %7273 = vmatpush1.msra.mxu0 0.0
        %7274 = vmatprep.subr.mxu0 0.0
        %7275 = vmatpush1.msra.mxu0 0.0
        %7276 = vmatprep.subr.mxu0 0.0
        %7277 = vmatpush1.msra.mxu0 0.0
        %7278 = vmatprep.subr.mxu0 0.0
        %7279 = vmatpush1.msra.mxu0 0.0
        %7280 = vmatprep.subr.mxu0 0.0
        %7281 = vmatpush1.msra.mxu0 0.0
        %7282 = vmatprep.subr.mxu0 0.0
        %7283 = vmatpush1.msra.mxu0 0.0
        %7284 = vmatprep.subr.mxu0 0.0
        %7285 = vmatpush1.msra.mxu0 0.0
        %7286 = vmatprep.subr.mxu0 0.0
        %7287 = vmatpush1.msra.mxu0 0.0
        %7288 = vmatprep.mubr.f32.mxu0 0.0
        %7289 = vmatmul.mubr.f32.gmra.mrb[0].mxu0 %v7210
        %v7290 = vpop.f32.mrb[0].mxu0
        %v7291 = vadd.f32 0.0, %v7290
        %v7292 = vpop.f32.mrb[0].mxu0
        %7293 = vmatprep.mubr.f32.mxu0 0.0
        %7294 = vmatmul.mubr.f32.gmra.mrb[0].mxu0 %v7213
        %v7295 = vpop.f32.mrb[0].mxu0
        %v7296 = vadd.f32 0.0, %v7295
        %v7297 = vpop.f32.mrb[0].mxu0
        %7298 = vmatprep.mubr.f32.mxu0 0.0
        %7299 = vmatmul.mubr.f32.gmra.mrb[0].mxu0 %v7216
        %v7300 = vpop.f32.mrb[0].mxu0
        %v7301 = vadd.f32 0.0, %v7300
        %v7302 = vpop.f32.mrb[0].mxu0
        %7303 = vmatprep.mubr.f32.mxu0 0.0
        %7304 = vmatmul.mubr.f32.gmra.mrb[0].mxu0 %v7219
        %v7305 = vpop.f32.mrb[0].mxu0
        %v7306 = vadd.f32 0.0, %v7305
        %v7307 = vpop.f32.mrb[0].mxu0
        %7308 = vmatprep.mubr.f32.mxu0 0.0
        %7309 = vmatmul.mubr.f32.gmra.mrb[0].mxu0 %v7222
        %v7310 = vpop.f32.mrb[0].mxu0
        %v7311 = vadd.f32 0.0, %v7310
        %v7312 = vpop.f32.mrb[0].mxu0
        %7313 = vdwg.mxu0
        %v7314 = vadd.f32 %v7090, %v7291
        %v7315 = vadd.f32 %v7091, %v7296
        %v7316 = vadd.f32 %v7092, %v7301
        %v7317 = vadd.f32 %v7093, %v7306
        %v7318 = vadd.f32 %v7094, %v7311
        %v7319 = vld [vmem:[#allocation11] sm:$0x1]
        %v7321 = vlaneseq
        %v7322 = vshrl.u32 %v7321, 7
        %v7323 = vsub.s32 0, %v7322
        %v7324 = vrot.slane %v7319, %v7323
        %v7326 = vadd.f32 %v7314, %v7324
        %v7327 = vadd.f32 %v7315, %v7324
        %v7328 = vadd.f32 %v7316, %v7324
        %v7329 = vadd.f32 %v7317, %v7324
        %v7330 = vadd.f32 %v7318, %v7324
        %v7331 = vmax.f32 %v7326, 0.0
        %v7332 = vmax.f32 %v7327, 0.0
        %v7333 = vmax.f32 %v7328, 0.0
        %v7334 = vmax.f32 %v7329, 0.0
        %v7335 = vmax.f32 %v7330, 0.0
        %v7336 = vld [vmem:[#allocation14] sm:$0x1]
        %v7338 = vrot.slane %v7331, 1
        %v7340 = vmax.f32 %v7331, %v7338
        %vm7342 = vcmask 1041408
        %v7343 = vrot.slane %v7331, 6
        %v7344 = vrot.slane %v7332, 6
        %v7345 = vsel %vm7342, %v7343, %v7344
        %v7347 = vmax.f32 %v7340, %v7345
        %v7348 = vrot.slane %v7331, 7
        %v7349 = vrot.slane %v7332, 7
        %v7350 = vsel %vm6450, %v7348, %v7349
        %v7352 = vmax.f32 %v7347, %v7350
        %v7353 = vld [vmem:[#allocation13] sm:$0xff]
        %v7354 = vld [vmem:[#allocation13 + $0x8] sm:$0xff]
        %v7355 = vld [vmem:[#allocation13 + $0x10] sm:$0xff]
        %v7356 = vld [vmem:[#allocation13 + $0x18] sm:$0xff]
        %vm7357 = vcmask 261120
        %v7359 = vsel %vm7357, %v7352, 0
        %7361 = vmatprep.subr.mxu0 0.0
        %7362 = vmatpush1.msra.mxu0 %v7353
        %7363 = vmatprep.subr.mxu0 0.0
        %7364 = vmatpush1.msra.mxu0 %v7354
        %7365 = vmatprep.subr.mxu0 0.0
        %7366 = vmatpush1.msra.mxu0 %v7355
        %7367 = vmatprep.subr.mxu0 0.0
        %7368 = vmatpush1.msra.mxu0 %v7356
        %7369 = vmatprep.subr.mxu0 0.0
        %7370 = vmatpush1.msra.mxu0 0.0
        %7371 = vmatprep.subr.mxu0 0.0
        %7372 = vmatpush1.msra.mxu0 0.0
        %7373 = vmatprep.subr.mxu0 0.0
        %7374 = vmatpush1.msra.mxu0 0.0
        %7375 = vmatprep.subr.mxu0 0.0
        %7376 = vmatpush1.msra.mxu0 0.0
        %7377 = vmatprep.subr.mxu0 0.0
        %7378 = vmatpush1.msra.mxu0 0.0
        %7379 = vmatprep.subr.mxu0 0.0
        %7380 = vmatpush1.msra.mxu0 0.0
        %7381 = vmatprep.subr.mxu0 0.0
        %7382 = vmatpush1.msra.mxu0 0.0
        %7383 = vmatprep.subr.mxu0 0.0
        %7384 = vmatpush1.msra.mxu0 0.0
        %7385 = vmatprep.subr.mxu0 0.0
        %7386 = vmatpush1.msra.mxu0 0.0
        %7387 = vmatprep.subr.mxu0 0.0
        %7388 = vmatpush1.msra.mxu0 0.0
        %7389 = vmatprep.subr.mxu0 0.0
        %7390 = vmatpush1.msra.mxu0 0.0
        %7391 = vmatprep.subr.mxu0 0.0
        %7392 = vmatpush1.msra.mxu0 0.0
        %7393 = vmatprep.subr.mxu0 0.0
        %7394 = vmatpush1.msra.mxu0 0.0
        %7395 = vmatprep.subr.mxu0 0.0
        %7396 = vmatpush1.msra.mxu0 0.0
        %7397 = vmatprep.subr.mxu0 0.0
        %7398 = vmatpush1.msra.mxu0 0.0
        %7399 = vmatprep.subr.mxu0 0.0
        %7400 = vmatpush1.msra.mxu0 0.0
        %7401 = vmatprep.subr.mxu0 0.0
        %7402 = vmatpush1.msra.mxu0 0.0
        %7403 = vmatprep.subr.mxu0 0.0
        %7404 = vmatpush1.msra.mxu0 0.0
        %7405 = vmatprep.subr.mxu0 0.0
        %7406 = vmatpush1.msra.mxu0 0.0
        %7407 = vmatprep.subr.mxu0 0.0
        %7408 = vmatpush1.msra.mxu0 0.0
        %7409 = vmatprep.subr.mxu0 0.0
        %7410 = vmatpush1.msra.mxu0 0.0
        %7411 = vmatprep.subr.mxu0 0.0
        %7412 = vmatpush1.msra.mxu0 0.0
        %7413 = vmatprep.subr.mxu0 0.0
        %7414 = vmatpush1.msra.mxu0 0.0
        %7415 = vmatprep.subr.mxu0 0.0
        %7416 = vmatpush1.msra.mxu0 0.0
        %7417 = vmatprep.subr.mxu0 0.0
        %7418 = vmatpush1.msra.mxu0 0.0
        %7419 = vmatprep.subr.mxu0 0.0
        %7420 = vmatpush1.msra.mxu0 0.0
        %7421 = vmatprep.subr.mxu0 0.0
        %7422 = vmatpush1.msra.mxu0 0.0
        %7423 = vmatprep.subr.mxu0 0.0
        %7424 = vmatpush1.msra.mxu0 0.0
        %7425 = vmatprep.mubr.f32.mxu0 0.0
        %7426 = vmatmul.mubr.f32.gmra.mrb[0].mxu0 %v7359
        %v7427 = vpop.f32.mrb[0].mxu0
        %v7428 = vadd.f32 0.0, %v7427
        %v7429 = vpop.f32.mrb[0].mxu0
        %7430 = vdwg.mxu0
        %v7431 = vadd.f32 %v7336, %v7428
        %s7432 = scalar_lea.vmem [#allocation13], 32
        %v7433 = vld [vmem:[%s7432] sm:$0xff]
        %v7434 = vld [vmem:[%s7432 + $0x8] sm:$0xff]
        %v7435 = vld [vmem:[%s7432 + $0x10] sm:$0xff]
        %v7436 = vld [vmem:[%s7432 + $0x18] sm:$0xff]
        %v7437 = vrot.slane %v7352, 1
        %v7438 = vsel %vm7357, %v7437, 0
        %7440 = vmatprep.subr.mxu0 0.0
        %7441 = vmatpush1.msra.mxu0 %v7433
        %7442 = vmatprep.subr.mxu0 0.0
        %7443 = vmatpush1.msra.mxu0 %v7434
        %7444 = vmatprep.subr.mxu0 0.0
        %7445 = vmatpush1.msra.mxu0 %v7435
        %7446 = vmatprep.subr.mxu0 0.0
        %7447 = vmatpush1.msra.mxu0 %v7436
        %7448 = vmatprep.subr.mxu0 0.0
        %7449 = vmatpush1.msra.mxu0 0.0
        %7450 = vmatprep.subr.mxu0 0.0
        %7451 = vmatpush1.msra.mxu0 0.0
        %7452 = vmatprep.subr.mxu0 0.0
        %7453 = vmatpush1.msra.mxu0 0.0
        %7454 = vmatprep.subr.mxu0 0.0
        %7455 = vmatpush1.msra.mxu0 0.0
        %7456 = vmatprep.subr.mxu0 0.0
        %7457 = vmatpush1.msra.mxu0 0.0
        %7458 = vmatprep.subr.mxu0 0.0
        %7459 = vmatpush1.msra.mxu0 0.0
        %7460 = vmatprep.subr.mxu0 0.0
        %7461 = vmatpush1.msra.mxu0 0.0
        %7462 = vmatprep.subr.mxu0 0.0
        %7463 = vmatpush1.msra.mxu0 0.0
        %7464 = vmatprep.subr.mxu0 0.0
        %7465 = vmatpush1.msra.mxu0 0.0
        %7466 = vmatprep.subr.mxu0 0.0
        %7467 = vmatpush1.msra.mxu0 0.0
        %7468 = vmatprep.subr.mxu0 0.0
        %7469 = vmatpush1.msra.mxu0 0.0
        %7470 = vmatprep.subr.mxu0 0.0
        %7471 = vmatpush1.msra.mxu0 0.0
        %7472 = vmatprep.subr.mxu0 0.0
        %7473 = vmatpush1.msra.mxu0 0.0
        %7474 = vmatprep.subr.mxu0 0.0
        %7475 = vmatpush1.msra.mxu0 0.0
        %7476 = vmatprep.subr.mxu0 0.0
        %7477 = vmatpush1.msra.mxu0 0.0
        %7478 = vmatprep.subr.mxu0 0.0
        %7479 = vmatpush1.msra.mxu0 0.0
        %7480 = vmatprep.subr.mxu0 0.0
        %7481 = vmatpush1.msra.mxu0 0.0
        %7482 = vmatprep.subr.mxu0 0.0
        %7483 = vmatpush1.msra.mxu0 0.0
        %7484 = vmatprep.subr.mxu0 0.0
        %7485 = vmatpush1.msra.mxu0 0.0
        %7486 = vmatprep.subr.mxu0 0.0
        %7487 = vmatpush1.msra.mxu0 0.0
        %7488 = vmatprep.subr.mxu0 0.0
        %7489 = vmatpush1.msra.mxu0 0.0
        %7490 = vmatprep.subr.mxu0 0.0
        %7491 = vmatpush1.msra.mxu0 0.0
        %7492 = vmatprep.subr.mxu0 0.0
        %7493 = vmatpush1.msra.mxu0 0.0
        %7494 = vmatprep.subr.mxu0 0.0
        %7495 = vmatpush1.msra.mxu0 0.0
        %7496 = vmatprep.subr.mxu0 0.0
        %7497 = vmatpush1.msra.mxu0 0.0
        %7498 = vmatprep.subr.mxu0 0.0
        %7499 = vmatpush1.msra.mxu0 0.0
        %7500 = vmatprep.subr.mxu0 0.0
        %7501 = vmatpush1.msra.mxu0 0.0
        %7502 = vmatprep.subr.mxu0 0.0
        %7503 = vmatpush1.msra.mxu0 0.0
        %7504 = vmatprep.mubr.f32.mxu0 0.0
        %7505 = vmatmul.mubr.f32.gmra.mrb[0].mxu0 %v7438
        %v7506 = vpop.f32.mrb[0].mxu0
        %v7507 = vadd.f32 0.0, %v7506
        %v7508 = vpop.f32.mrb[0].mxu0
        %7509 = vdwg.mxu0
        %v7510 = vadd.f32 %v7431, %v7507
        %s7511 = scalar_lea.vmem [#allocation13], 64
        %v7512 = vld [vmem:[%s7511] sm:$0xff]
        %v7513 = vld [vmem:[%s7511 + $0x8] sm:$0xff]
        %v7514 = vld [vmem:[%s7511 + $0x10] sm:$0xff]
        %v7515 = vld [vmem:[%s7511 + $0x18] sm:$0xff]
        %v7516 = vrot.slane %v7352, 2
        %v7517 = vsel %vm7357, %v7516, 0
        %7519 = vmatprep.subr.mxu0 0.0
        %7520 = vmatpush1.msra.mxu0 %v7512
        %7521 = vmatprep.subr.mxu0 0.0
        %7522 = vmatpush1.msra.mxu0 %v7513
        %7523 = vmatprep.subr.mxu0 0.0
        %7524 = vmatpush1.msra.mxu0 %v7514
        %7525 = vmatprep.subr.mxu0 0.0
        %7526 = vmatpush1.msra.mxu0 %v7515
        %7527 = vmatprep.subr.mxu0 0.0
        %7528 = vmatpush1.msra.mxu0 0.0
        %7529 = vmatprep.subr.mxu0 0.0
        %7530 = vmatpush1.msra.mxu0 0.0
        %7531 = vmatprep.subr.mxu0 0.0
        %7532 = vmatpush1.msra.mxu0 0.0
        %7533 = vmatprep.subr.mxu0 0.0
        %7534 = vmatpush1.msra.mxu0 0.0
        %7535 = vmatprep.subr.mxu0 0.0
        %7536 = vmatpush1.msra.mxu0 0.0
        %7537 = vmatprep.subr.mxu0 0.0
        %7538 = vmatpush1.msra.mxu0 0.0
        %7539 = vmatprep.subr.mxu0 0.0
        %7540 = vmatpush1.msra.mxu0 0.0
        %7541 = vmatprep.subr.mxu0 0.0
        %7542 = vmatpush1.msra.mxu0 0.0
        %7543 = vmatprep.subr.mxu0 0.0
        %7544 = vmatpush1.msra.mxu0 0.0
        %7545 = vmatprep.subr.mxu0 0.0
        %7546 = vmatpush1.msra.mxu0 0.0
        %7547 = vmatprep.subr.mxu0 0.0
        %7548 = vmatpush1.msra.mxu0 0.0
        %7549 = vmatprep.subr.mxu0 0.0
        %7550 = vmatpush1.msra.mxu0 0.0
        %7551 = vmatprep.subr.mxu0 0.0
        %7552 = vmatpush1.msra.mxu0 0.0
        %7553 = vmatprep.subr.mxu0 0.0
        %7554 = vmatpush1.msra.mxu0 0.0
        %7555 = vmatprep.subr.mxu0 0.0
        %7556 = vmatpush1.msra.mxu0 0.0
        %7557 = vmatprep.subr.mxu0 0.0
        %7558 = vmatpush1.msra.mxu0 0.0
        %7559 = vmatprep.subr.mxu0 0.0
        %7560 = vmatpush1.msra.mxu0 0.0
        %7561 = vmatprep.subr.mxu0 0.0
        %7562 = vmatpush1.msra.mxu0 0.0
        %7563 = vmatprep.subr.mxu0 0.0
        %7564 = vmatpush1.msra.mxu0 0.0
        %7565 = vmatprep.subr.mxu0 0.0
        %7566 = vmatpush1.msra.mxu0 0.0
        %7567 = vmatprep.subr.mxu0 0.0
        %7568 = vmatpush1.msra.mxu0 0.0
        %7569 = vmatprep.subr.mxu0 0.0
        %7570 = vmatpush1.msra.mxu0 0.0
        %7571 = vmatprep.subr.mxu0 0.0
        %7572 = vmatpush1.msra.mxu0 0.0
        %7573 = vmatprep.subr.mxu0 0.0
        %7574 = vmatpush1.msra.mxu0 0.0
        %7575 = vmatprep.subr.mxu0 0.0
        %7576 = vmatpush1.msra.mxu0 0.0
        %7577 = vmatprep.subr.mxu0 0.0
        %7578 = vmatpush1.msra.mxu0 0.0
        %7579 = vmatprep.subr.mxu0 0.0
        %7580 = vmatpush1.msra.mxu0 0.0
        %7581 = vmatprep.subr.mxu0 0.0
        %7582 = vmatpush1.msra.mxu0 0.0
        %7583 = vmatprep.mubr.f32.mxu0 0.0
        %7584 = vmatmul.mubr.f32.gmra.mrb[0].mxu0 %v7517
        %v7585 = vpop.f32.mrb[0].mxu0
        %v7586 = vadd.f32 0.0, %v7585
        %v7587 = vpop.f32.mrb[0].mxu0
        %7588 = vdwg.mxu0
        %v7589 = vadd.f32 %v7510, %v7586
        %s7590 = scalar_lea.vmem [#allocation13], 96
        %v7591 = vld [vmem:[%s7590] sm:$0xff]
        %v7592 = vld [vmem:[%s7590 + $0x8] sm:$0xff]
        %v7593 = vld [vmem:[%s7590 + $0x10] sm:$0xff]
        %v7594 = vld [vmem:[%s7590 + $0x18] sm:$0xff]
        %v7595 = vrot.slane %v7352, 3
        %v7596 = vsel %vm7357, %v7595, 0
        %7598 = vmatprep.subr.mxu0 0.0
        %7599 = vmatpush1.msra.mxu0 %v7591
        %7600 = vmatprep.subr.mxu0 0.0
        %7601 = vmatpush1.msra.mxu0 %v7592
        %7602 = vmatprep.subr.mxu0 0.0
        %7603 = vmatpush1.msra.mxu0 %v7593
        %7604 = vmatprep.subr.mxu0 0.0
        %7605 = vmatpush1.msra.mxu0 %v7594
        %7606 = vmatprep.subr.mxu0 0.0
        %7607 = vmatpush1.msra.mxu0 0.0
        %7608 = vmatprep.subr.mxu0 0.0
        %7609 = vmatpush1.msra.mxu0 0.0
        %7610 = vmatprep.subr.mxu0 0.0
        %7611 = vmatpush1.msra.mxu0 0.0
        %7612 = vmatprep.subr.mxu0 0.0
        %7613 = vmatpush1.msra.mxu0 0.0
        %7614 = vmatprep.subr.mxu0 0.0
        %7615 = vmatpush1.msra.mxu0 0.0
        %7616 = vmatprep.subr.mxu0 0.0
        %7617 = vmatpush1.msra.mxu0 0.0
        %7618 = vmatprep.subr.mxu0 0.0
        %7619 = vmatpush1.msra.mxu0 0.0
        %7620 = vmatprep.subr.mxu0 0.0
        %7621 = vmatpush1.msra.mxu0 0.0
        %7622 = vmatprep.subr.mxu0 0.0
        %7623 = vmatpush1.msra.mxu0 0.0
        %7624 = vmatprep.subr.mxu0 0.0
        %7625 = vmatpush1.msra.mxu0 0.0
        %7626 = vmatprep.subr.mxu0 0.0
        %7627 = vmatpush1.msra.mxu0 0.0
        %7628 = vmatprep.subr.mxu0 0.0
        %7629 = vmatpush1.msra.mxu0 0.0
        %7630 = vmatprep.subr.mxu0 0.0
        %7631 = vmatpush1.msra.mxu0 0.0
        %7632 = vmatprep.subr.mxu0 0.0
        %7633 = vmatpush1.msra.mxu0 0.0
        %7634 = vmatprep.subr.mxu0 0.0
        %7635 = vmatpush1.msra.mxu0 0.0
        %7636 = vmatprep.subr.mxu0 0.0
        %7637 = vmatpush1.msra.mxu0 0.0
        %7638 = vmatprep.subr.mxu0 0.0
        %7639 = vmatpush1.msra.mxu0 0.0
        %7640 = vmatprep.subr.mxu0 0.0
        %7641 = vmatpush1.msra.mxu0 0.0
        %7642 = vmatprep.subr.mxu0 0.0
        %7643 = vmatpush1.msra.mxu0 0.0
        %7644 = vmatprep.subr.mxu0 0.0
        %7645 = vmatpush1.msra.mxu0 0.0
        %7646 = vmatprep.subr.mxu0 0.0
        %7647 = vmatpush1.msra.mxu0 0.0
        %7648 = vmatprep.subr.mxu0 0.0
        %7649 = vmatpush1.msra.mxu0 0.0
        %7650 = vmatprep.subr.mxu0 0.0
        %7651 = vmatpush1.msra.mxu0 0.0
        %7652 = vmatprep.subr.mxu0 0.0
        %7653 = vmatpush1.msra.mxu0 0.0
        %7654 = vmatprep.subr.mxu0 0.0
        %7655 = vmatpush1.msra.mxu0 0.0
        %7656 = vmatprep.subr.mxu0 0.0
        %7657 = vmatpush1.msra.mxu0 0.0
        %7658 = vmatprep.subr.mxu0 0.0
        %7659 = vmatpush1.msra.mxu0 0.0
        %7660 = vmatprep.subr.mxu0 0.0
        %7661 = vmatpush1.msra.mxu0 0.0
        %7662 = vmatprep.mubr.f32.mxu0 0.0
        %7663 = vmatmul.mubr.f32.gmra.mrb[0].mxu0 %v7596
        %v7664 = vpop.f32.mrb[0].mxu0
        %v7665 = vadd.f32 0.0, %v7664
        %v7666 = vpop.f32.mrb[0].mxu0
        %7667 = vdwg.mxu0
        %v7668 = vadd.f32 %v7589, %v7665
        %s7669 = scalar_lea.vmem [#allocation13], 128
        %v7670 = vld [vmem:[%s7669] sm:$0xff]
        %v7671 = vld [vmem:[%s7669 + $0x8] sm:$0xff]
        %v7672 = vld [vmem:[%s7669 + $0x10] sm:$0xff]
        %v7673 = vld [vmem:[%s7669 + $0x18] sm:$0xff]
        %v7674 = vrot.slane %v7352, 4
        %v7675 = vsel %vm7357, %v7674, 0
        %7677 = vmatprep.subr.mxu0 0.0
        %7678 = vmatpush1.msra.mxu0 %v7670
        %7679 = vmatprep.subr.mxu0 0.0
        %7680 = vmatpush1.msra.mxu0 %v7671
        %7681 = vmatprep.subr.mxu0 0.0
        %7682 = vmatpush1.msra.mxu0 %v7672
        %7683 = vmatprep.subr.mxu0 0.0
        %7684 = vmatpush1.msra.mxu0 %v7673
        %7685 = vmatprep.subr.mxu0 0.0
        %7686 = vmatpush1.msra.mxu0 0.0
        %7687 = vmatprep.subr.mxu0 0.0
        %7688 = vmatpush1.msra.mxu0 0.0
        %7689 = vmatprep.subr.mxu0 0.0
        %7690 = vmatpush1.msra.mxu0 0.0
        %7691 = vmatprep.subr.mxu0 0.0
        %7692 = vmatpush1.msra.mxu0 0.0
        %7693 = vmatprep.subr.mxu0 0.0
        %7694 = vmatpush1.msra.mxu0 0.0
        %7695 = vmatprep.subr.mxu0 0.0
        %7696 = vmatpush1.msra.mxu0 0.0
        %7697 = vmatprep.subr.mxu0 0.0
        %7698 = vmatpush1.msra.mxu0 0.0
        %7699 = vmatprep.subr.mxu0 0.0
        %7700 = vmatpush1.msra.mxu0 0.0
        %7701 = vmatprep.subr.mxu0 0.0
        %7702 = vmatpush1.msra.mxu0 0.0
        %7703 = vmatprep.subr.mxu0 0.0
        %7704 = vmatpush1.msra.mxu0 0.0
        %7705 = vmatprep.subr.mxu0 0.0
        %7706 = vmatpush1.msra.mxu0 0.0
        %7707 = vmatprep.subr.mxu0 0.0
        %7708 = vmatpush1.msra.mxu0 0.0
        %7709 = vmatprep.subr.mxu0 0.0
        %7710 = vmatpush1.msra.mxu0 0.0
        %7711 = vmatprep.subr.mxu0 0.0
        %7712 = vmatpush1.msra.mxu0 0.0
        %7713 = vmatprep.subr.mxu0 0.0
        %7714 = vmatpush1.msra.mxu0 0.0
        %7715 = vmatprep.subr.mxu0 0.0
        %7716 = vmatpush1.msra.mxu0 0.0
        %7717 = vmatprep.subr.mxu0 0.0
        %7718 = vmatpush1.msra.mxu0 0.0
        %7719 = vmatprep.subr.mxu0 0.0
        %7720 = vmatpush1.msra.mxu0 0.0
        %7721 = vmatprep.subr.mxu0 0.0
        %7722 = vmatpush1.msra.mxu0 0.0
        %7723 = vmatprep.subr.mxu0 0.0
        %7724 = vmatpush1.msra.mxu0 0.0
        %7725 = vmatprep.subr.mxu0 0.0
        %7726 = vmatpush1.msra.mxu0 0.0
        %7727 = vmatprep.subr.mxu0 0.0
        %7728 = vmatpush1.msra.mxu0 0.0
        %7729 = vmatprep.subr.mxu0 0.0
        %7730 = vmatpush1.msra.mxu0 0.0
        %7731 = vmatprep.subr.mxu0 0.0
        %7732 = vmatpush1.msra.mxu0 0.0
        %7733 = vmatprep.subr.mxu0 0.0
        %7734 = vmatpush1.msra.mxu0 0.0
        %7735 = vmatprep.subr.mxu0 0.0
        %7736 = vmatpush1.msra.mxu0 0.0
        %7737 = vmatprep.subr.mxu0 0.0
        %7738 = vmatpush1.msra.mxu0 0.0
        %7739 = vmatprep.subr.mxu0 0.0
        %7740 = vmatpush1.msra.mxu0 0.0
        %7741 = vmatprep.mubr.f32.mxu0 0.0
        %7742 = vmatmul.mubr.f32.gmra.mrb[0].mxu0 %v7675
        %v7743 = vpop.f32.mrb[0].mxu0
        %v7744 = vadd.f32 0.0, %v7743
        %v7745 = vpop.f32.mrb[0].mxu0
        %7746 = vdwg.mxu0
        %v7747 = vadd.f32 %v7668, %v7744
        %vm7748 = vcmask 1046528
        %v7749 = vrot.slane %v7332, 1
        %v7750 = vsel %vm7748, %v7338, %v7749
        %v7753 = vmax.f32 %v7331, %v7750
        %v7754 = vmax.f32 %v7332, %v7749
        %v7756 = vrot.slane %v7333, 6
        %v7757 = vsel %vm7342, %v7344, %v7756
        %v7760 = vmax.f32 %v7753, %v7344
        %v7761 = vmax.f32 %v7754, %v7757
        %v7762 = vrot.slane %v7333, 7
        %v7763 = vsel %vm6450, %v7349, %v7762
        %v7766 = vmax.f32 %v7760, %v7349
        %v7767 = vmax.f32 %v7761, %v7763
        %s7768 = scalar_lea.vmem [#allocation13], 160
        %v7769 = vld [vmem:[%s7768] sm:$0xff]
        %v7770 = vld [vmem:[%s7768 + $0x8] sm:$0xff]
        %v7771 = vld [vmem:[%s7768 + $0x10] sm:$0xff]
        %v7772 = vld [vmem:[%s7768 + $0x18] sm:$0xff]
        %v7774 = vrot.slane %v7766, 6
        %v7775 = vsel %vm7357, %v7774, 0
        %7777 = vmatprep.subr.mxu0 0.0
        %7778 = vmatpush1.msra.mxu0 %v7769
        %7779 = vmatprep.subr.mxu0 0.0
        %7780 = vmatpush1.msra.mxu0 %v7770
        %7781 = vmatprep.subr.mxu0 0.0
        %7782 = vmatpush1.msra.mxu0 %v7771
        %7783 = vmatprep.subr.mxu0 0.0
        %7784 = vmatpush1.msra.mxu0 %v7772
        %7785 = vmatprep.subr.mxu0 0.0
        %7786 = vmatpush1.msra.mxu0 0.0
        %7787 = vmatprep.subr.mxu0 0.0
        %7788 = vmatpush1.msra.mxu0 0.0
        %7789 = vmatprep.subr.mxu0 0.0
        %7790 = vmatpush1.msra.mxu0 0.0
        %7791 = vmatprep.subr.mxu0 0.0
        %7792 = vmatpush1.msra.mxu0 0.0
        %7793 = vmatprep.subr.mxu0 0.0
        %7794 = vmatpush1.msra.mxu0 0.0
        %7795 = vmatprep.subr.mxu0 0.0
        %7796 = vmatpush1.msra.mxu0 0.0
        %7797 = vmatprep.subr.mxu0 0.0
        %7798 = vmatpush1.msra.mxu0 0.0
        %7799 = vmatprep.subr.mxu0 0.0
        %7800 = vmatpush1.msra.mxu0 0.0
        %7801 = vmatprep.subr.mxu0 0.0
        %7802 = vmatpush1.msra.mxu0 0.0
        %7803 = vmatprep.subr.mxu0 0.0
        %7804 = vmatpush1.msra.mxu0 0.0
        %7805 = vmatprep.subr.mxu0 0.0
        %7806 = vmatpush1.msra.mxu0 0.0
        %7807 = vmatprep.subr.mxu0 0.0
        %7808 = vmatpush1.msra.mxu0 0.0
        %7809 = vmatprep.subr.mxu0 0.0
        %7810 = vmatpush1.msra.mxu0 0.0
        %7811 = vmatprep.subr.mxu0 0.0
        %7812 = vmatpush1.msra.mxu0 0.0
        %7813 = vmatprep.subr.mxu0 0.0
        %7814 = vmatpush1.msra.mxu0 0.0
        %7815 = vmatprep.subr.mxu0 0.0
        %7816 = vmatpush1.msra.mxu0 0.0
        %7817 = vmatprep.subr.mxu0 0.0
        %7818 = vmatpush1.msra.mxu0 0.0
        %7819 = vmatprep.subr.mxu0 0.0
        %7820 = vmatpush1.msra.mxu0 0.0
        %7821 = vmatprep.subr.mxu0 0.0
        %7822 = vmatpush1.msra.mxu0 0.0
        %7823 = vmatprep.subr.mxu0 0.0
        %7824 = vmatpush1.msra.mxu0 0.0
        %7825 = vmatprep.subr.mxu0 0.0
        %7826 = vmatpush1.msra.mxu0 0.0
        %7827 = vmatprep.subr.mxu0 0.0
        %7828 = vmatpush1.msra.mxu0 0.0
        %7829 = vmatprep.subr.mxu0 0.0
        %7830 = vmatpush1.msra.mxu0 0.0
        %7831 = vmatprep.subr.mxu0 0.0
        %7832 = vmatpush1.msra.mxu0 0.0
        %7833 = vmatprep.subr.mxu0 0.0
        %7834 = vmatpush1.msra.mxu0 0.0
        %7835 = vmatprep.subr.mxu0 0.0
        %7836 = vmatpush1.msra.mxu0 0.0
        %7837 = vmatprep.subr.mxu0 0.0
        %7838 = vmatpush1.msra.mxu0 0.0
        %7839 = vmatprep.subr.mxu0 0.0
        %7840 = vmatpush1.msra.mxu0 0.0
        %7841 = vmatprep.mubr.f32.mxu0 0.0
        %7842 = vmatmul.mubr.f32.gmra.mrb[0].mxu0 %v7775
        %v7843 = vpop.f32.mrb[0].mxu0
        %v7844 = vadd.f32 0.0, %v7843
        %v7845 = vpop.f32.mrb[0].mxu0
        %7846 = vdwg.mxu0
        %v7847 = vadd.f32 %v7747, %v7844
        %s7848 = scalar_lea.vmem [#allocation13], 192
        %v7849 = vld [vmem:[%s7848] sm:$0xff]
        %v7850 = vld [vmem:[%s7848 + $0x8] sm:$0xff]
        %v7851 = vld [vmem:[%s7848 + $0x10] sm:$0xff]
        %v7852 = vld [vmem:[%s7848 + $0x18] sm:$0xff]
        %v7853 = vrot.slane %v7766, 7
        %v7854 = vsel %vm7357, %v7853, 0
        %7856 = vmatprep.subr.mxu0 0.0
        %7857 = vmatpush1.msra.mxu0 %v7849
        %7858 = vmatprep.subr.mxu0 0.0
        %7859 = vmatpush1.msra.mxu0 %v7850
        %7860 = vmatprep.subr.mxu0 0.0
        %7861 = vmatpush1.msra.mxu0 %v7851
        %7862 = vmatprep.subr.mxu0 0.0
        %7863 = vmatpush1.msra.mxu0 %v7852
        %7864 = vmatprep.subr.mxu0 0.0
        %7865 = vmatpush1.msra.mxu0 0.0
        %7866 = vmatprep.subr.mxu0 0.0
        %7867 = vmatpush1.msra.mxu0 0.0
        %7868 = vmatprep.subr.mxu0 0.0
        %7869 = vmatpush1.msra.mxu0 0.0
        %7870 = vmatprep.subr.mxu0 0.0
        %7871 = vmatpush1.msra.mxu0 0.0
        %7872 = vmatprep.subr.mxu0 0.0
        %7873 = vmatpush1.msra.mxu0 0.0
        %7874 = vmatprep.subr.mxu0 0.0
        %7875 = vmatpush1.msra.mxu0 0.0
        %7876 = vmatprep.subr.mxu0 0.0
        %7877 = vmatpush1.msra.mxu0 0.0
        %7878 = vmatprep.subr.mxu0 0.0
        %7879 = vmatpush1.msra.mxu0 0.0
        %7880 = vmatprep.subr.mxu0 0.0
        %7881 = vmatpush1.msra.mxu0 0.0
        %7882 = vmatprep.subr.mxu0 0.0
        %7883 = vmatpush1.msra.mxu0 0.0
        %7884 = vmatprep.subr.mxu0 0.0
        %7885 = vmatpush1.msra.mxu0 0.0
        %7886 = vmatprep.subr.mxu0 0.0
        %7887 = vmatpush1.msra.mxu0 0.0
        %7888 = vmatprep.subr.mxu0 0.0
        %7889 = vmatpush1.msra.mxu0 0.0
        %7890 = vmatprep.subr.mxu0 0.0
        %7891 = vmatpush1.msra.mxu0 0.0
        %7892 = vmatprep.subr.mxu0 0.0
        %7893 = vmatpush1.msra.mxu0 0.0
        %7894 = vmatprep.subr.mxu0 0.0
        %7895 = vmatpush1.msra.mxu0 0.0
        %7896 = vmatprep.subr.mxu0 0.0
        %7897 = vmatpush1.msra.mxu0 0.0
        %7898 = vmatprep.subr.mxu0 0.0
        %7899 = vmatpush1.msra.mxu0 0.0
        %7900 = vmatprep.subr.mxu0 0.0
        %7901 = vmatpush1.msra.mxu0 0.0
        %7902 = vmatprep.subr.mxu0 0.0
        %7903 = vmatpush1.msra.mxu0 0.0
        %7904 = vmatprep.subr.mxu0 0.0
        %7905 = vmatpush1.msra.mxu0 0.0
        %7906 = vmatprep.subr.mxu0 0.0
        %7907 = vmatpush1.msra.mxu0 0.0
        %7908 = vmatprep.subr.mxu0 0.0
        %7909 = vmatpush1.msra.mxu0 0.0
        %7910 = vmatprep.subr.mxu0 0.0
        %7911 = vmatpush1.msra.mxu0 0.0
        %7912 = vmatprep.subr.mxu0 0.0
        %7913 = vmatpush1.msra.mxu0 0.0
        %7914 = vmatprep.subr.mxu0 0.0
        %7915 = vmatpush1.msra.mxu0 0.0
        %7916 = vmatprep.subr.mxu0 0.0
        %7917 = vmatpush1.msra.mxu0 0.0
        %7918 = vmatprep.subr.mxu0 0.0
        %7919 = vmatpush1.msra.mxu0 0.0
        %7920 = vmatprep.mubr.f32.mxu0 0.0
        %7921 = vmatmul.mubr.f32.gmra.mrb[0].mxu0 %v7854
        %v7922 = vpop.f32.mrb[0].mxu0
        %v7923 = vadd.f32 0.0, %v7922
        %v7924 = vpop.f32.mrb[0].mxu0
        %7925 = vdwg.mxu0
        %v7926 = vadd.f32 %v7847, %v7923
        %s7927 = scalar_lea.vmem [#allocation13], 224
        %v7928 = vld [vmem:[%s7927] sm:$0xff]
        %v7929 = vld [vmem:[%s7927 + $0x8] sm:$0xff]
        %v7930 = vld [vmem:[%s7927 + $0x10] sm:$0xff]
        %v7931 = vld [vmem:[%s7927 + $0x18] sm:$0xff]
        %v7933 = vsel %vm7357, %v7767, 0
        %7935 = vmatprep.subr.mxu0 0.0
        %7936 = vmatpush1.msra.mxu0 %v7928
        %7937 = vmatprep.subr.mxu0 0.0
        %7938 = vmatpush1.msra.mxu0 %v7929
        %7939 = vmatprep.subr.mxu0 0.0
        %7940 = vmatpush1.msra.mxu0 %v7930
        %7941 = vmatprep.subr.mxu0 0.0
        %7942 = vmatpush1.msra.mxu0 %v7931
        %7943 = vmatprep.subr.mxu0 0.0
        %7944 = vmatpush1.msra.mxu0 0.0
        %7945 = vmatprep.subr.mxu0 0.0
        %7946 = vmatpush1.msra.mxu0 0.0
        %7947 = vmatprep.subr.mxu0 0.0
        %7948 = vmatpush1.msra.mxu0 0.0
        %7949 = vmatprep.subr.mxu0 0.0
        %7950 = vmatpush1.msra.mxu0 0.0
        %7951 = vmatprep.subr.mxu0 0.0
        %7952 = vmatpush1.msra.mxu0 0.0
        %7953 = vmatprep.subr.mxu0 0.0
        %7954 = vmatpush1.msra.mxu0 0.0
        %7955 = vmatprep.subr.mxu0 0.0
        %7956 = vmatpush1.msra.mxu0 0.0
        %7957 = vmatprep.subr.mxu0 0.0
        %7958 = vmatpush1.msra.mxu0 0.0
        %7959 = vmatprep.subr.mxu0 0.0
        %7960 = vmatpush1.msra.mxu0 0.0
        %7961 = vmatprep.subr.mxu0 0.0
        %7962 = vmatpush1.msra.mxu0 0.0
        %7963 = vmatprep.subr.mxu0 0.0
        %7964 = vmatpush1.msra.mxu0 0.0
        %7965 = vmatprep.subr.mxu0 0.0
        %7966 = vmatpush1.msra.mxu0 0.0
        %7967 = vmatprep.subr.mxu0 0.0
        %7968 = vmatpush1.msra.mxu0 0.0
        %7969 = vmatprep.subr.mxu0 0.0
        %7970 = vmatpush1.msra.mxu0 0.0
        %7971 = vmatprep.subr.mxu0 0.0
        %7972 = vmatpush1.msra.mxu0 0.0
        %7973 = vmatprep.subr.mxu0 0.0
        %7974 = vmatpush1.msra.mxu0 0.0
        %7975 = vmatprep.subr.mxu0 0.0
        %7976 = vmatpush1.msra.mxu0 0.0
        %7977 = vmatprep.subr.mxu0 0.0
        %7978 = vmatpush1.msra.mxu0 0.0
        %7979 = vmatprep.subr.mxu0 0.0
        %7980 = vmatpush1.msra.mxu0 0.0
        %7981 = vmatprep.subr.mxu0 0.0
        %7982 = vmatpush1.msra.mxu0 0.0
        %7983 = vmatprep.subr.mxu0 0.0
        %7984 = vmatpush1.msra.mxu0 0.0
        %7985 = vmatprep.subr.mxu0 0.0
        %7986 = vmatpush1.msra.mxu0 0.0
        %7987 = vmatprep.subr.mxu0 0.0
        %7988 = vmatpush1.msra.mxu0 0.0
        %7989 = vmatprep.subr.mxu0 0.0
        %7990 = vmatpush1.msra.mxu0 0.0
        %7991 = vmatprep.subr.mxu0 0.0
        %7992 = vmatpush1.msra.mxu0 0.0
        %7993 = vmatprep.subr.mxu0 0.0
        %7994 = vmatpush1.msra.mxu0 0.0
        %7995 = vmatprep.subr.mxu0 0.0
        %7996 = vmatpush1.msra.mxu0 0.0
        %7997 = vmatprep.subr.mxu0 0.0
        %7998 = vmatpush1.msra.mxu0 0.0
        %7999 = vmatprep.mubr.f32.mxu0 0.0
        %8000 = vmatmul.mubr.f32.gmra.mrb[0].mxu0 %v7933
        %v8001 = vpop.f32.mrb[0].mxu0
        %v8002 = vadd.f32 0.0, %v8001
        %v8003 = vpop.f32.mrb[0].mxu0
        %8004 = vdwg.mxu0
        %v8005 = vadd.f32 %v7926, %v8002
        %s8006 = scalar_lea.vmem [#allocation13], 256
        %v8007 = vld [vmem:[%s8006] sm:$0xff]
        %v8008 = vld [vmem:[%s8006 + $0x8] sm:$0xff]
        %v8009 = vld [vmem:[%s8006 + $0x10] sm:$0xff]
        %v8010 = vld [vmem:[%s8006 + $0x18] sm:$0xff]
        %v8011 = vrot.slane %v7767, 1
        %v8012 = vsel %vm7357, %v8011, 0
        %8014 = vmatprep.subr.mxu0 0.0
        %8015 = vmatpush1.msra.mxu0 %v8007
        %8016 = vmatprep.subr.mxu0 0.0
        %8017 = vmatpush1.msra.mxu0 %v8008
        %8018 = vmatprep.subr.mxu0 0.0
        %8019 = vmatpush1.msra.mxu0 %v8009
        %8020 = vmatprep.subr.mxu0 0.0
        %8021 = vmatpush1.msra.mxu0 %v8010
        %8022 = vmatprep.subr.mxu0 0.0
        %8023 = vmatpush1.msra.mxu0 0.0
        %8024 = vmatprep.subr.mxu0 0.0
        %8025 = vmatpush1.msra.mxu0 0.0
        %8026 = vmatprep.subr.mxu0 0.0
        %8027 = vmatpush1.msra.mxu0 0.0
        %8028 = vmatprep.subr.mxu0 0.0
        %8029 = vmatpush1.msra.mxu0 0.0
        %8030 = vmatprep.subr.mxu0 0.0
        %8031 = vmatpush1.msra.mxu0 0.0
        %8032 = vmatprep.subr.mxu0 0.0
        %8033 = vmatpush1.msra.mxu0 0.0
        %8034 = vmatprep.subr.mxu0 0.0
        %8035 = vmatpush1.msra.mxu0 0.0
        %8036 = vmatprep.subr.mxu0 0.0
        %8037 = vmatpush1.msra.mxu0 0.0
        %8038 = vmatprep.subr.mxu0 0.0
        %8039 = vmatpush1.msra.mxu0 0.0
        %8040 = vmatprep.subr.mxu0 0.0
        %8041 = vmatpush1.msra.mxu0 0.0
        %8042 = vmatprep.subr.mxu0 0.0
        %8043 = vmatpush1.msra.mxu0 0.0
        %8044 = vmatprep.subr.mxu0 0.0
        %8045 = vmatpush1.msra.mxu0 0.0
        %8046 = vmatprep.subr.mxu0 0.0
        %8047 = vmatpush1.msra.mxu0 0.0
        %8048 = vmatprep.subr.mxu0 0.0
        %8049 = vmatpush1.msra.mxu0 0.0
        %8050 = vmatprep.subr.mxu0 0.0
        %8051 = vmatpush1.msra.mxu0 0.0
        %8052 = vmatprep.subr.mxu0 0.0
        %8053 = vmatpush1.msra.mxu0 0.0
        %8054 = vmatprep.subr.mxu0 0.0
        %8055 = vmatpush1.msra.mxu0 0.0
        %8056 = vmatprep.subr.mxu0 0.0
        %8057 = vmatpush1.msra.mxu0 0.0
        %8058 = vmatprep.subr.mxu0 0.0
        %8059 = vmatpush1.msra.mxu0 0.0
        %8060 = vmatprep.subr.mxu0 0.0
        %8061 = vmatpush1.msra.mxu0 0.0
        %8062 = vmatprep.subr.mxu0 0.0
        %8063 = vmatpush1.msra.mxu0 0.0
        %8064 = vmatprep.subr.mxu0 0.0
        %8065 = vmatpush1.msra.mxu0 0.0
        %8066 = vmatprep.subr.mxu0 0.0
        %8067 = vmatpush1.msra.mxu0 0.0
        %8068 = vmatprep.subr.mxu0 0.0
        %8069 = vmatpush1.msra.mxu0 0.0
        %8070 = vmatprep.subr.mxu0 0.0
        %8071 = vmatpush1.msra.mxu0 0.0
        %8072 = vmatprep.subr.mxu0 0.0
        %8073 = vmatpush1.msra.mxu0 0.0
        %8074 = vmatprep.subr.mxu0 0.0
        %8075 = vmatpush1.msra.mxu0 0.0
        %8076 = vmatprep.subr.mxu0 0.0
        %8077 = vmatpush1.msra.mxu0 0.0
        %8078 = vmatprep.mubr.f32.mxu0 0.0
        %8079 = vmatmul.mubr.f32.gmra.mrb[0].mxu0 %v8012
        %v8080 = vpop.f32.mrb[0].mxu0
        %v8081 = vadd.f32 0.0, %v8080
        %v8082 = vpop.f32.mrb[0].mxu0
        %8083 = vdwg.mxu0
        %v8084 = vadd.f32 %v8005, %v8081
        %s8085 = scalar_lea.vmem [#allocation13], 288
        %v8086 = vld [vmem:[%s8085] sm:$0xff]
        %v8087 = vld [vmem:[%s8085 + $0x8] sm:$0xff]
        %v8088 = vld [vmem:[%s8085 + $0x10] sm:$0xff]
        %v8089 = vld [vmem:[%s8085 + $0x18] sm:$0xff]
        %v8090 = vrot.slane %v7767, 2
        %v8091 = vsel %vm7357, %v8090, 0
        %8093 = vmatprep.subr.mxu0 0.0
        %8094 = vmatpush1.msra.mxu0 %v8086
        %8095 = vmatprep.subr.mxu0 0.0
        %8096 = vmatpush1.msra.mxu0 %v8087
        %8097 = vmatprep.subr.mxu0 0.0
        %8098 = vmatpush1.msra.mxu0 %v8088
        %8099 = vmatprep.subr.mxu0 0.0
        %8100 = vmatpush1.msra.mxu0 %v8089
        %8101 = vmatprep.subr.mxu0 0.0
        %8102 = vmatpush1.msra.mxu0 0.0
        %8103 = vmatprep.subr.mxu0 0.0
        %8104 = vmatpush1.msra.mxu0 0.0
        %8105 = vmatprep.subr.mxu0 0.0
        %8106 = vmatpush1.msra.mxu0 0.0
        %8107 = vmatprep.subr.mxu0 0.0
        %8108 = vmatpush1.msra.mxu0 0.0
        %8109 = vmatprep.subr.mxu0 0.0
        %8110 = vmatpush1.msra.mxu0 0.0
        %8111 = vmatprep.subr.mxu0 0.0
        %8112 = vmatpush1.msra.mxu0 0.0
        %8113 = vmatprep.subr.mxu0 0.0
        %8114 = vmatpush1.msra.mxu0 0.0
        %8115 = vmatprep.subr.mxu0 0.0
        %8116 = vmatpush1.msra.mxu0 0.0
        %8117 = vmatprep.subr.mxu0 0.0
        %8118 = vmatpush1.msra.mxu0 0.0
        %8119 = vmatprep.subr.mxu0 0.0
        %8120 = vmatpush1.msra.mxu0 0.0
        %8121 = vmatprep.subr.mxu0 0.0
        %8122 = vmatpush1.msra.mxu0 0.0
        %8123 = vmatprep.subr.mxu0 0.0
        %8124 = vmatpush1.msra.mxu0 0.0
        %8125 = vmatprep.subr.mxu0 0.0
        %8126 = vmatpush1.msra.mxu0 0.0
        %8127 = vmatprep.subr.mxu0 0.0
        %8128 = vmatpush1.msra.mxu0 0.0
        %8129 = vmatprep.subr.mxu0 0.0
        %8130 = vmatpush1.msra.mxu0 0.0
        %8131 = vmatprep.subr.mxu0 0.0
        %8132 = vmatpush1.msra.mxu0 0.0
        %8133 = vmatprep.subr.mxu0 0.0
        %8134 = vmatpush1.msra.mxu0 0.0
        %8135 = vmatprep.subr.mxu0 0.0
        %8136 = vmatpush1.msra.mxu0 0.0
        %8137 = vmatprep.subr.mxu0 0.0
        %8138 = vmatpush1.msra.mxu0 0.0
        %8139 = vmatprep.subr.mxu0 0.0
        %8140 = vmatpush1.msra.mxu0 0.0
        %8141 = vmatprep.subr.mxu0 0.0
        %8142 = vmatpush1.msra.mxu0 0.0
        %8143 = vmatprep.subr.mxu0 0.0
        %8144 = vmatpush1.msra.mxu0 0.0
        %8145 = vmatprep.subr.mxu0 0.0
        %8146 = vmatpush1.msra.mxu0 0.0
        %8147 = vmatprep.subr.mxu0 0.0
        %8148 = vmatpush1.msra.mxu0 0.0
        %8149 = vmatprep.subr.mxu0 0.0
        %8150 = vmatpush1.msra.mxu0 0.0
        %8151 = vmatprep.subr.mxu0 0.0
        %8152 = vmatpush1.msra.mxu0 0.0
        %8153 = vmatprep.subr.mxu0 0.0
        %8154 = vmatpush1.msra.mxu0 0.0
        %8155 = vmatprep.subr.mxu0 0.0
        %8156 = vmatpush1.msra.mxu0 0.0
        %8157 = vmatprep.mubr.f32.mxu0 0.0
        %8158 = vmatmul.mubr.f32.gmra.mrb[0].mxu0 %v8091
        %v8159 = vpop.f32.mrb[0].mxu0
        %v8160 = vadd.f32 0.0, %v8159
        %v8161 = vpop.f32.mrb[0].mxu0
        %8162 = vdwg.mxu0
        %v8163 = vadd.f32 %v8084, %v8160
        %v8164 = vrot.slane %v7333, 1
        %v8165 = vsel %vm7748, %v7749, %v8164
        %v8168 = vmax.f32 %v7332, %v8165
        %v8169 = vmax.f32 %v7333, %v8164
        %v8171 = vmax.f32 %v8168, %v7756
        %v8172 = vmax.f32 %v8169, %v7756
        %v8174 = vmax.f32 %v8171, %v7762
        %v8175 = vmax.f32 %v8172, %v7762
        %s8176 = scalar_lea.vmem [#allocation13], 320
        %v8177 = vld [vmem:[%s8176] sm:$0xff]
        %v8178 = vld [vmem:[%s8176 + $0x8] sm:$0xff]
        %v8179 = vld [vmem:[%s8176 + $0x10] sm:$0xff]
        %v8180 = vld [vmem:[%s8176 + $0x18] sm:$0xff]
        %v8182 = vrot.slane %v8174, 4
        %v8183 = vsel %vm7357, %v8182, 0
        %8185 = vmatprep.subr.mxu0 0.0
        %8186 = vmatpush1.msra.mxu0 %v8177
        %8187 = vmatprep.subr.mxu0 0.0
        %8188 = vmatpush1.msra.mxu0 %v8178
        %8189 = vmatprep.subr.mxu0 0.0
        %8190 = vmatpush1.msra.mxu0 %v8179
        %8191 = vmatprep.subr.mxu0 0.0
        %8192 = vmatpush1.msra.mxu0 %v8180
        %8193 = vmatprep.subr.mxu0 0.0
        %8194 = vmatpush1.msra.mxu0 0.0
        %8195 = vmatprep.subr.mxu0 0.0
        %8196 = vmatpush1.msra.mxu0 0.0
        %8197 = vmatprep.subr.mxu0 0.0
        %8198 = vmatpush1.msra.mxu0 0.0
        %8199 = vmatprep.subr.mxu0 0.0
        %8200 = vmatpush1.msra.mxu0 0.0
        %8201 = vmatprep.subr.mxu0 0.0
        %8202 = vmatpush1.msra.mxu0 0.0
        %8203 = vmatprep.subr.mxu0 0.0
        %8204 = vmatpush1.msra.mxu0 0.0
        %8205 = vmatprep.subr.mxu0 0.0
        %8206 = vmatpush1.msra.mxu0 0.0
        %8207 = vmatprep.subr.mxu0 0.0
        %8208 = vmatpush1.msra.mxu0 0.0
        %8209 = vmatprep.subr.mxu0 0.0
        %8210 = vmatpush1.msra.mxu0 0.0
        %8211 = vmatprep.subr.mxu0 0.0
        %8212 = vmatpush1.msra.mxu0 0.0
        %8213 = vmatprep.subr.mxu0 0.0
        %8214 = vmatpush1.msra.mxu0 0.0
        %8215 = vmatprep.subr.mxu0 0.0
        %8216 = vmatpush1.msra.mxu0 0.0
        %8217 = vmatprep.subr.mxu0 0.0
        %8218 = vmatpush1.msra.mxu0 0.0
        %8219 = vmatprep.subr.mxu0 0.0
        %8220 = vmatpush1.msra.mxu0 0.0
        %8221 = vmatprep.subr.mxu0 0.0
        %8222 = vmatpush1.msra.mxu0 0.0
        %8223 = vmatprep.subr.mxu0 0.0
        %8224 = vmatpush1.msra.mxu0 0.0
        %8225 = vmatprep.subr.mxu0 0.0
        %8226 = vmatpush1.msra.mxu0 0.0
        %8227 = vmatprep.subr.mxu0 0.0
        %8228 = vmatpush1.msra.mxu0 0.0
        %8229 = vmatprep.subr.mxu0 0.0
        %8230 = vmatpush1.msra.mxu0 0.0
        %8231 = vmatprep.subr.mxu0 0.0
        %8232 = vmatpush1.msra.mxu0 0.0
        %8233 = vmatprep.subr.mxu0 0.0
        %8234 = vmatpush1.msra.mxu0 0.0
        %8235 = vmatprep.subr.mxu0 0.0
        %8236 = vmatpush1.msra.mxu0 0.0
        %8237 = vmatprep.subr.mxu0 0.0
        %8238 = vmatpush1.msra.mxu0 0.0
        %8239 = vmatprep.subr.mxu0 0.0
        %8240 = vmatpush1.msra.mxu0 0.0
        %8241 = vmatprep.subr.mxu0 0.0
        %8242 = vmatpush1.msra.mxu0 0.0
        %8243 = vmatprep.subr.mxu0 0.0
        %8244 = vmatpush1.msra.mxu0 0.0
        %8245 = vmatprep.subr.mxu0 0.0
        %8246 = vmatpush1.msra.mxu0 0.0
        %8247 = vmatprep.subr.mxu0 0.0
        %8248 = vmatpush1.msra.mxu0 0.0
        %8249 = vmatprep.mubr.f32.mxu0 0.0
        %8250 = vmatmul.mubr.f32.gmra.mrb[0].mxu0 %v8183
        %v8251 = vpop.f32.mrb[0].mxu0
        %v8252 = vadd.f32 0.0, %v8251
        %v8253 = vpop.f32.mrb[0].mxu0
        %8254 = vdwg.mxu0
        %v8255 = vadd.f32 %v8163, %v8252
        %s8256 = scalar_lea.vmem [#allocation13], 352
        %v8257 = vld [vmem:[%s8256] sm:$0xff]
        %v8258 = vld [vmem:[%s8256 + $0x8] sm:$0xff]
        %v8259 = vld [vmem:[%s8256 + $0x10] sm:$0xff]
        %v8260 = vld [vmem:[%s8256 + $0x18] sm:$0xff]
        %v8261 = vrot.slane %v8174, 5
        %v8262 = vsel %vm7357, %v8261, 0
        %8264 = vmatprep.subr.mxu0 0.0
        %8265 = vmatpush1.msra.mxu0 %v8257
        %8266 = vmatprep.subr.mxu0 0.0
        %8267 = vmatpush1.msra.mxu0 %v8258
        %8268 = vmatprep.subr.mxu0 0.0
        %8269 = vmatpush1.msra.mxu0 %v8259
        %8270 = vmatprep.subr.mxu0 0.0
        %8271 = vmatpush1.msra.mxu0 %v8260
        %8272 = vmatprep.subr.mxu0 0.0
        %8273 = vmatpush1.msra.mxu0 0.0
        %8274 = vmatprep.subr.mxu0 0.0
        %8275 = vmatpush1.msra.mxu0 0.0
        %8276 = vmatprep.subr.mxu0 0.0
        %8277 = vmatpush1.msra.mxu0 0.0
        %8278 = vmatprep.subr.mxu0 0.0
        %8279 = vmatpush1.msra.mxu0 0.0
        %8280 = vmatprep.subr.mxu0 0.0
        %8281 = vmatpush1.msra.mxu0 0.0
        %8282 = vmatprep.subr.mxu0 0.0
        %8283 = vmatpush1.msra.mxu0 0.0
        %8284 = vmatprep.subr.mxu0 0.0
        %8285 = vmatpush1.msra.mxu0 0.0
        %8286 = vmatprep.subr.mxu0 0.0
        %8287 = vmatpush1.msra.mxu0 0.0
        %8288 = vmatprep.subr.mxu0 0.0
        %8289 = vmatpush1.msra.mxu0 0.0
        %8290 = vmatprep.subr.mxu0 0.0
        %8291 = vmatpush1.msra.mxu0 0.0
        %8292 = vmatprep.subr.mxu0 0.0
        %8293 = vmatpush1.msra.mxu0 0.0
        %8294 = vmatprep.subr.mxu0 0.0
        %8295 = vmatpush1.msra.mxu0 0.0
        %8296 = vmatprep.subr.mxu0 0.0
        %8297 = vmatpush1.msra.mxu0 0.0
        %8298 = vmatprep.subr.mxu0 0.0
        %8299 = vmatpush1.msra.mxu0 0.0
        %8300 = vmatprep.subr.mxu0 0.0
        %8301 = vmatpush1.msra.mxu0 0.0
        %8302 = vmatprep.subr.mxu0 0.0
        %8303 = vmatpush1.msra.mxu0 0.0
        %8304 = vmatprep.subr.mxu0 0.0
        %8305 = vmatpush1.msra.mxu0 0.0
        %8306 = vmatprep.subr.mxu0 0.0
        %8307 = vmatpush1.msra.mxu0 0.0
        %8308 = vmatprep.subr.mxu0 0.0
        %8309 = vmatpush1.msra.mxu0 0.0
        %8310 = vmatprep.subr.mxu0 0.0
        %8311 = vmatpush1.msra.mxu0 0.0
        %8312 = vmatprep.subr.mxu0 0.0
        %8313 = vmatpush1.msra.mxu0 0.0
        %8314 = vmatprep.subr.mxu0 0.0
        %8315 = vmatpush1.msra.mxu0 0.0
        %8316 = vmatprep.subr.mxu0 0.0
        %8317 = vmatpush1.msra.mxu0 0.0
        %8318 = vmatprep.subr.mxu0 0.0
        %8319 = vmatpush1.msra.mxu0 0.0
        %8320 = vmatprep.subr.mxu0 0.0
        %8321 = vmatpush1.msra.mxu0 0.0
        %8322 = vmatprep.subr.mxu0 0.0
        %8323 = vmatpush1.msra.mxu0 0.0
        %8324 = vmatprep.subr.mxu0 0.0
        %8325 = vmatpush1.msra.mxu0 0.0
        %8326 = vmatprep.subr.mxu0 0.0
        %8327 = vmatpush1.msra.mxu0 0.0
        %8328 = vmatprep.mubr.f32.mxu0 0.0
        %8329 = vmatmul.mubr.f32.gmra.mrb[0].mxu0 %v8262
        %v8330 = vpop.f32.mrb[0].mxu0
        %v8331 = vadd.f32 0.0, %v8330
        %v8332 = vpop.f32.mrb[0].mxu0
        %8333 = vdwg.mxu0
        %v8334 = vadd.f32 %v8255, %v8331
        %s8335 = scalar_lea.vmem [#allocation13], 384
        %v8336 = vld [vmem:[%s8335] sm:$0xff]
        %v8337 = vld [vmem:[%s8335 + $0x8] sm:$0xff]
        %v8338 = vld [vmem:[%s8335 + $0x10] sm:$0xff]
        %v8339 = vld [vmem:[%s8335 + $0x18] sm:$0xff]
        %v8340 = vrot.slane %v8174, 6
        %v8341 = vsel %vm7357, %v8340, 0
        %8343 = vmatprep.subr.mxu0 0.0
        %8344 = vmatpush1.msra.mxu0 %v8336
        %8345 = vmatprep.subr.mxu0 0.0
        %8346 = vmatpush1.msra.mxu0 %v8337
        %8347 = vmatprep.subr.mxu0 0.0
        %8348 = vmatpush1.msra.mxu0 %v8338
        %8349 = vmatprep.subr.mxu0 0.0
        %8350 = vmatpush1.msra.mxu0 %v8339
        %8351 = vmatprep.subr.mxu0 0.0
        %8352 = vmatpush1.msra.mxu0 0.0
        %8353 = vmatprep.subr.mxu0 0.0
        %8354 = vmatpush1.msra.mxu0 0.0
        %8355 = vmatprep.subr.mxu0 0.0
        %8356 = vmatpush1.msra.mxu0 0.0
        %8357 = vmatprep.subr.mxu0 0.0
        %8358 = vmatpush1.msra.mxu0 0.0
        %8359 = vmatprep.subr.mxu0 0.0
        %8360 = vmatpush1.msra.mxu0 0.0
        %8361 = vmatprep.subr.mxu0 0.0
        %8362 = vmatpush1.msra.mxu0 0.0
        %8363 = vmatprep.subr.mxu0 0.0
        %8364 = vmatpush1.msra.mxu0 0.0
        %8365 = vmatprep.subr.mxu0 0.0
        %8366 = vmatpush1.msra.mxu0 0.0
        %8367 = vmatprep.subr.mxu0 0.0
        %8368 = vmatpush1.msra.mxu0 0.0
        %8369 = vmatprep.subr.mxu0 0.0
        %8370 = vmatpush1.msra.mxu0 0.0
        %8371 = vmatprep.subr.mxu0 0.0
        %8372 = vmatpush1.msra.mxu0 0.0
        %8373 = vmatprep.subr.mxu0 0.0
        %8374 = vmatpush1.msra.mxu0 0.0
        %8375 = vmatprep.subr.mxu0 0.0
        %8376 = vmatpush1.msra.mxu0 0.0
        %8377 = vmatprep.subr.mxu0 0.0
        %8378 = vmatpush1.msra.mxu0 0.0
        %8379 = vmatprep.subr.mxu0 0.0
        %8380 = vmatpush1.msra.mxu0 0.0
        %8381 = vmatprep.subr.mxu0 0.0
        %8382 = vmatpush1.msra.mxu0 0.0
        %8383 = vmatprep.subr.mxu0 0.0
        %8384 = vmatpush1.msra.mxu0 0.0
        %8385 = vmatprep.subr.mxu0 0.0
        %8386 = vmatpush1.msra.mxu0 0.0
        %8387 = vmatprep.subr.mxu0 0.0
        %8388 = vmatpush1.msra.mxu0 0.0
        %8389 = vmatprep.subr.mxu0 0.0
        %8390 = vmatpush1.msra.mxu0 0.0
        %8391 = vmatprep.subr.mxu0 0.0
        %8392 = vmatpush1.msra.mxu0 0.0
        %8393 = vmatprep.subr.mxu0 0.0
        %8394 = vmatpush1.msra.mxu0 0.0
        %8395 = vmatprep.subr.mxu0 0.0
        %8396 = vmatpush1.msra.mxu0 0.0
        %8397 = vmatprep.subr.mxu0 0.0
        %8398 = vmatpush1.msra.mxu0 0.0
        %8399 = vmatprep.subr.mxu0 0.0
        %8400 = vmatpush1.msra.mxu0 0.0
        %8401 = vmatprep.subr.mxu0 0.0
        %8402 = vmatpush1.msra.mxu0 0.0
        %8403 = vmatprep.subr.mxu0 0.0
        %8404 = vmatpush1.msra.mxu0 0.0
        %8405 = vmatprep.subr.mxu0 0.0
        %8406 = vmatpush1.msra.mxu0 0.0
        %8407 = vmatprep.mubr.f32.mxu0 0.0
        %8408 = vmatmul.mubr.f32.gmra.mrb[0].mxu0 %v8341
        %v8409 = vpop.f32.mrb[0].mxu0
        %v8410 = vadd.f32 0.0, %v8409
        %v8411 = vpop.f32.mrb[0].mxu0
        %8412 = vdwg.mxu0
        %v8413 = vadd.f32 %v8334, %v8410
        %s8414 = scalar_lea.vmem [#allocation13], 416
        %v8415 = vld [vmem:[%s8414] sm:$0xff]
        %v8416 = vld [vmem:[%s8414 + $0x8] sm:$0xff]
        %v8417 = vld [vmem:[%s8414 + $0x10] sm:$0xff]
        %v8418 = vld [vmem:[%s8414 + $0x18] sm:$0xff]
        %v8419 = vrot.slane %v8174, 7
        %v8420 = vsel %vm7357, %v8419, 0
        %8422 = vmatprep.subr.mxu0 0.0
        %8423 = vmatpush1.msra.mxu0 %v8415
        %8424 = vmatprep.subr.mxu0 0.0
        %8425 = vmatpush1.msra.mxu0 %v8416
        %8426 = vmatprep.subr.mxu0 0.0
        %8427 = vmatpush1.msra.mxu0 %v8417
        %8428 = vmatprep.subr.mxu0 0.0
        %8429 = vmatpush1.msra.mxu0 %v8418
        %8430 = vmatprep.subr.mxu0 0.0
        %8431 = vmatpush1.msra.mxu0 0.0
        %8432 = vmatprep.subr.mxu0 0.0
        %8433 = vmatpush1.msra.mxu0 0.0
        %8434 = vmatprep.subr.mxu0 0.0
        %8435 = vmatpush1.msra.mxu0 0.0
        %8436 = vmatprep.subr.mxu0 0.0
        %8437 = vmatpush1.msra.mxu0 0.0
        %8438 = vmatprep.subr.mxu0 0.0
        %8439 = vmatpush1.msra.mxu0 0.0
        %8440 = vmatprep.subr.mxu0 0.0
        %8441 = vmatpush1.msra.mxu0 0.0
        %8442 = vmatprep.subr.mxu0 0.0
        %8443 = vmatpush1.msra.mxu0 0.0
        %8444 = vmatprep.subr.mxu0 0.0
        %8445 = vmatpush1.msra.mxu0 0.0
        %8446 = vmatprep.subr.mxu0 0.0
        %8447 = vmatpush1.msra.mxu0 0.0
        %8448 = vmatprep.subr.mxu0 0.0
        %8449 = vmatpush1.msra.mxu0 0.0
        %8450 = vmatprep.subr.mxu0 0.0
        %8451 = vmatpush1.msra.mxu0 0.0
        %8452 = vmatprep.subr.mxu0 0.0
        %8453 = vmatpush1.msra.mxu0 0.0
        %8454 = vmatprep.subr.mxu0 0.0
        %8455 = vmatpush1.msra.mxu0 0.0
        %8456 = vmatprep.subr.mxu0 0.0
        %8457 = vmatpush1.msra.mxu0 0.0
        %8458 = vmatprep.subr.mxu0 0.0
        %8459 = vmatpush1.msra.mxu0 0.0
        %8460 = vmatprep.subr.mxu0 0.0
        %8461 = vmatpush1.msra.mxu0 0.0
        %8462 = vmatprep.subr.mxu0 0.0
        %8463 = vmatpush1.msra.mxu0 0.0
        %8464 = vmatprep.subr.mxu0 0.0
        %8465 = vmatpush1.msra.mxu0 0.0
        %8466 = vmatprep.subr.mxu0 0.0
        %8467 = vmatpush1.msra.mxu0 0.0
        %8468 = vmatprep.subr.mxu0 0.0
        %8469 = vmatpush1.msra.mxu0 0.0
        %8470 = vmatprep.subr.mxu0 0.0
        %8471 = vmatpush1.msra.mxu0 0.0
        %8472 = vmatprep.subr.mxu0 0.0
        %8473 = vmatpush1.msra.mxu0 0.0
        %8474 = vmatprep.subr.mxu0 0.0
        %8475 = vmatpush1.msra.mxu0 0.0
        %8476 = vmatprep.subr.mxu0 0.0
        %8477 = vmatpush1.msra.mxu0 0.0
        %8478 = vmatprep.subr.mxu0 0.0
        %8479 = vmatpush1.msra.mxu0 0.0
        %8480 = vmatprep.subr.mxu0 0.0
        %8481 = vmatpush1.msra.mxu0 0.0
        %8482 = vmatprep.subr.mxu0 0.0
        %8483 = vmatpush1.msra.mxu0 0.0
        %8484 = vmatprep.subr.mxu0 0.0
        %8485 = vmatpush1.msra.mxu0 0.0
        %8486 = vmatprep.mubr.f32.mxu0 0.0
        %8487 = vmatmul.mubr.f32.gmra.mrb[0].mxu0 %v8420
        %v8488 = vpop.f32.mrb[0].mxu0
        %v8489 = vadd.f32 0.0, %v8488
        %v8490 = vpop.f32.mrb[0].mxu0
        %8491 = vdwg.mxu0
        %v8492 = vadd.f32 %v8413, %v8489
        %s8493 = scalar_lea.vmem [#allocation13], 448
        %v8494 = vld [vmem:[%s8493] sm:$0xff]
        %v8495 = vld [vmem:[%s8493 + $0x8] sm:$0xff]
        %v8496 = vld [vmem:[%s8493 + $0x10] sm:$0xff]
        %v8497 = vld [vmem:[%s8493 + $0x18] sm:$0xff]
        %v8499 = vsel %vm7357, %v8175, 0
        %8501 = vmatprep.subr.mxu0 0.0
        %8502 = vmatpush1.msra.mxu0 %v8494
        %8503 = vmatprep.subr.mxu0 0.0
        %8504 = vmatpush1.msra.mxu0 %v8495
        %8505 = vmatprep.subr.mxu0 0.0
        %8506 = vmatpush1.msra.mxu0 %v8496
        %8507 = vmatprep.subr.mxu0 0.0
        %8508 = vmatpush1.msra.mxu0 %v8497
        %8509 = vmatprep.subr.mxu0 0.0
        %8510 = vmatpush1.msra.mxu0 0.0
        %8511 = vmatprep.subr.mxu0 0.0
        %8512 = vmatpush1.msra.mxu0 0.0
        %8513 = vmatprep.subr.mxu0 0.0
        %8514 = vmatpush1.msra.mxu0 0.0
        %8515 = vmatprep.subr.mxu0 0.0
        %8516 = vmatpush1.msra.mxu0 0.0
        %8517 = vmatprep.subr.mxu0 0.0
        %8518 = vmatpush1.msra.mxu0 0.0
        %8519 = vmatprep.subr.mxu0 0.0
        %8520 = vmatpush1.msra.mxu0 0.0
        %8521 = vmatprep.subr.mxu0 0.0
        %8522 = vmatpush1.msra.mxu0 0.0
        %8523 = vmatprep.subr.mxu0 0.0
        %8524 = vmatpush1.msra.mxu0 0.0
        %8525 = vmatprep.subr.mxu0 0.0
        %8526 = vmatpush1.msra.mxu0 0.0
        %8527 = vmatprep.subr.mxu0 0.0
        %8528 = vmatpush1.msra.mxu0 0.0
        %8529 = vmatprep.subr.mxu0 0.0
        %8530 = vmatpush1.msra.mxu0 0.0
        %8531 = vmatprep.subr.mxu0 0.0
        %8532 = vmatpush1.msra.mxu0 0.0
        %8533 = vmatprep.subr.mxu0 0.0
        %8534 = vmatpush1.msra.mxu0 0.0
        %8535 = vmatprep.subr.mxu0 0.0
        %8536 = vmatpush1.msra.mxu0 0.0
        %8537 = vmatprep.subr.mxu0 0.0
        %8538 = vmatpush1.msra.mxu0 0.0
        %8539 = vmatprep.subr.mxu0 0.0
        %8540 = vmatpush1.msra.mxu0 0.0
        %8541 = vmatprep.subr.mxu0 0.0
        %8542 = vmatpush1.msra.mxu0 0.0
        %8543 = vmatprep.subr.mxu0 0.0
        %8544 = vmatpush1.msra.mxu0 0.0
        %8545 = vmatprep.subr.mxu0 0.0
        %8546 = vmatpush1.msra.mxu0 0.0
        %8547 = vmatprep.subr.mxu0 0.0
        %8548 = vmatpush1.msra.mxu0 0.0
        %8549 = vmatprep.subr.mxu0 0.0
        %8550 = vmatpush1.msra.mxu0 0.0
        %8551 = vmatprep.subr.mxu0 0.0
        %8552 = vmatpush1.msra.mxu0 0.0
        %8553 = vmatprep.subr.mxu0 0.0
        %8554 = vmatpush1.msra.mxu0 0.0
        %8555 = vmatprep.subr.mxu0 0.0
        %8556 = vmatpush1.msra.mxu0 0.0
        %8557 = vmatprep.subr.mxu0 0.0
        %8558 = vmatpush1.msra.mxu0 0.0
        %8559 = vmatprep.subr.mxu0 0.0
        %8560 = vmatpush1.msra.mxu0 0.0
        %8561 = vmatprep.subr.mxu0 0.0
        %8562 = vmatpush1.msra.mxu0 0.0
        %8563 = vmatprep.subr.mxu0 0.0
        %8564 = vmatpush1.msra.mxu0 0.0
        %8565 = vmatprep.mubr.f32.mxu0 0.0
        %8566 = vmatmul.mubr.f32.gmra.mrb[0].mxu0 %v8499
        %v8567 = vpop.f32.mrb[0].mxu0
        %v8568 = vadd.f32 0.0, %v8567
        %v8569 = vpop.f32.mrb[0].mxu0
        %8570 = vdwg.mxu0
        %v8571 = vadd.f32 %v8492, %v8568
        %v8573 = vrot.slane %v7334, 6
        %v8575 = vmax.f32 %v8169, %v8573
        %v8576 = vrot.slane %v7334, 7
        %v8578 = vmax.f32 %v8575, %v8576
        %s8579 = scalar_lea.vmem [#allocation13], 480
        %v8580 = vld [vmem:[%s8579] sm:$0xff]
        %v8581 = vld [vmem:[%s8579 + $0x8] sm:$0xff]
        %v8582 = vld [vmem:[%s8579 + $0x10] sm:$0xff]
        %v8583 = vld [vmem:[%s8579 + $0x18] sm:$0xff]
        %v8585 = vrot.slane %v8578, 2
        %v8586 = vsel %vm7357, %v8585, 0
        %8588 = vmatprep.subr.mxu0 0.0
        %8589 = vmatpush1.msra.mxu0 %v8580
        %8590 = vmatprep.subr.mxu0 0.0
        %8591 = vmatpush1.msra.mxu0 %v8581
        %8592 = vmatprep.subr.mxu0 0.0
        %8593 = vmatpush1.msra.mxu0 %v8582
        %8594 = vmatprep.subr.mxu0 0.0
        %8595 = vmatpush1.msra.mxu0 %v8583
        %8596 = vmatprep.subr.mxu0 0.0
        %8597 = vmatpush1.msra.mxu0 0.0
        %8598 = vmatprep.subr.mxu0 0.0
        %8599 = vmatpush1.msra.mxu0 0.0
        %8600 = vmatprep.subr.mxu0 0.0
        %8601 = vmatpush1.msra.mxu0 0.0
        %8602 = vmatprep.subr.mxu0 0.0
        %8603 = vmatpush1.msra.mxu0 0.0
        %8604 = vmatprep.subr.mxu0 0.0
        %8605 = vmatpush1.msra.mxu0 0.0
        %8606 = vmatprep.subr.mxu0 0.0
        %8607 = vmatpush1.msra.mxu0 0.0
        %8608 = vmatprep.subr.mxu0 0.0
        %8609 = vmatpush1.msra.mxu0 0.0
        %8610 = vmatprep.subr.mxu0 0.0
        %8611 = vmatpush1.msra.mxu0 0.0
        %8612 = vmatprep.subr.mxu0 0.0
        %8613 = vmatpush1.msra.mxu0 0.0
        %8614 = vmatprep.subr.mxu0 0.0
        %8615 = vmatpush1.msra.mxu0 0.0
        %8616 = vmatprep.subr.mxu0 0.0
        %8617 = vmatpush1.msra.mxu0 0.0
        %8618 = vmatprep.subr.mxu0 0.0
        %8619 = vmatpush1.msra.mxu0 0.0
        %8620 = vmatprep.subr.mxu0 0.0
        %8621 = vmatpush1.msra.mxu0 0.0
        %8622 = vmatprep.subr.mxu0 0.0
        %8623 = vmatpush1.msra.mxu0 0.0
        %8624 = vmatprep.subr.mxu0 0.0
        %8625 = vmatpush1.msra.mxu0 0.0
        %8626 = vmatprep.subr.mxu0 0.0
        %8627 = vmatpush1.msra.mxu0 0.0
        %8628 = vmatprep.subr.mxu0 0.0
        %8629 = vmatpush1.msra.mxu0 0.0
        %8630 = vmatprep.subr.mxu0 0.0
        %8631 = vmatpush1.msra.mxu0 0.0
        %8632 = vmatprep.subr.mxu0 0.0
        %8633 = vmatpush1.msra.mxu0 0.0
        %8634 = vmatprep.subr.mxu0 0.0
        %8635 = vmatpush1.msra.mxu0 0.0
        %8636 = vmatprep.subr.mxu0 0.0
        %8637 = vmatpush1.msra.mxu0 0.0
        %8638 = vmatprep.subr.mxu0 0.0
        %8639 = vmatpush1.msra.mxu0 0.0
        %8640 = vmatprep.subr.mxu0 0.0
        %8641 = vmatpush1.msra.mxu0 0.0
        %8642 = vmatprep.subr.mxu0 0.0
        %8643 = vmatpush1.msra.mxu0 0.0
        %8644 = vmatprep.subr.mxu0 0.0
        %8645 = vmatpush1.msra.mxu0 0.0
        %8646 = vmatprep.subr.mxu0 0.0
        %8647 = vmatpush1.msra.mxu0 0.0
        %8648 = vmatprep.subr.mxu0 0.0
        %8649 = vmatpush1.msra.mxu0 0.0
        %8650 = vmatprep.subr.mxu0 0.0
        %8651 = vmatpush1.msra.mxu0 0.0
        %8652 = vmatprep.mubr.f32.mxu0 0.0
        %8653 = vmatmul.mubr.f32.gmra.mrb[0].mxu0 %v8586
        %v8654 = vpop.f32.mrb[0].mxu0
        %v8655 = vadd.f32 0.0, %v8654
        %v8656 = vpop.f32.mrb[0].mxu0
        %8657 = vdwg.mxu0
        %v8658 = vadd.f32 %v8571, %v8655
        %s8659 = scalar_lea.vmem [#allocation13], 512
        %v8660 = vld [vmem:[%s8659] sm:$0xff]
        %v8661 = vld [vmem:[%s8659 + $0x8] sm:$0xff]
        %v8662 = vld [vmem:[%s8659 + $0x10] sm:$0xff]
        %v8663 = vld [vmem:[%s8659 + $0x18] sm:$0xff]
        %v8664 = vrot.slane %v8578, 3
        %v8665 = vsel %vm7357, %v8664, 0
        %8667 = vmatprep.subr.mxu0 0.0
        %8668 = vmatpush1.msra.mxu0 %v8660
        %8669 = vmatprep.subr.mxu0 0.0
        %8670 = vmatpush1.msra.mxu0 %v8661
        %8671 = vmatprep.subr.mxu0 0.0
        %8672 = vmatpush1.msra.mxu0 %v8662
        %8673 = vmatprep.subr.mxu0 0.0
        %8674 = vmatpush1.msra.mxu0 %v8663
        %8675 = vmatprep.subr.mxu0 0.0
        %8676 = vmatpush1.msra.mxu0 0.0
        %8677 = vmatprep.subr.mxu0 0.0
        %8678 = vmatpush1.msra.mxu0 0.0
        %8679 = vmatprep.subr.mxu0 0.0
        %8680 = vmatpush1.msra.mxu0 0.0
        %8681 = vmatprep.subr.mxu0 0.0
        %8682 = vmatpush1.msra.mxu0 0.0
        %8683 = vmatprep.subr.mxu0 0.0
        %8684 = vmatpush1.msra.mxu0 0.0
        %8685 = vmatprep.subr.mxu0 0.0
        %8686 = vmatpush1.msra.mxu0 0.0
        %8687 = vmatprep.subr.mxu0 0.0
        %8688 = vmatpush1.msra.mxu0 0.0
        %8689 = vmatprep.subr.mxu0 0.0
        %8690 = vmatpush1.msra.mxu0 0.0
        %8691 = vmatprep.subr.mxu0 0.0
        %8692 = vmatpush1.msra.mxu0 0.0
        %8693 = vmatprep.subr.mxu0 0.0
        %8694 = vmatpush1.msra.mxu0 0.0
        %8695 = vmatprep.subr.mxu0 0.0
        %8696 = vmatpush1.msra.mxu0 0.0
        %8697 = vmatprep.subr.mxu0 0.0
        %8698 = vmatpush1.msra.mxu0 0.0
        %8699 = vmatprep.subr.mxu0 0.0
        %8700 = vmatpush1.msra.mxu0 0.0
        %8701 = vmatprep.subr.mxu0 0.0
        %8702 = vmatpush1.msra.mxu0 0.0
        %8703 = vmatprep.subr.mxu0 0.0
        %8704 = vmatpush1.msra.mxu0 0.0
        %8705 = vmatprep.subr.mxu0 0.0
        %8706 = vmatpush1.msra.mxu0 0.0
        %8707 = vmatprep.subr.mxu0 0.0
        %8708 = vmatpush1.msra.mxu0 0.0
        %8709 = vmatprep.subr.mxu0 0.0
        %8710 = vmatpush1.msra.mxu0 0.0
        %8711 = vmatprep.subr.mxu0 0.0
        %8712 = vmatpush1.msra.mxu0 0.0
        %8713 = vmatprep.subr.mxu0 0.0
        %8714 = vmatpush1.msra.mxu0 0.0
        %8715 = vmatprep.subr.mxu0 0.0
        %8716 = vmatpush1.msra.mxu0 0.0
        %8717 = vmatprep.subr.mxu0 0.0
        %8718 = vmatpush1.msra.mxu0 0.0
        %8719 = vmatprep.subr.mxu0 0.0
        %8720 = vmatpush1.msra.mxu0 0.0
        %8721 = vmatprep.subr.mxu0 0.0
        %8722 = vmatpush1.msra.mxu0 0.0
        %8723 = vmatprep.subr.mxu0 0.0
        %8724 = vmatpush1.msra.mxu0 0.0
        %8725 = vmatprep.subr.mxu0 0.0
        %8726 = vmatpush1.msra.mxu0 0.0
        %8727 = vmatprep.subr.mxu0 0.0
        %8728 = vmatpush1.msra.mxu0 0.0
        %8729 = vmatprep.subr.mxu0 0.0
        %8730 = vmatpush1.msra.mxu0 0.0
        %8731 = vmatprep.mubr.f32.mxu0 0.0
        %8732 = vmatmul.mubr.f32.gmra.mrb[0].mxu0 %v8665
        %v8733 = vpop.f32.mrb[0].mxu0
        %v8734 = vadd.f32 0.0, %v8733
        %v8735 = vpop.f32.mrb[0].mxu0
        %8736 = vdwg.mxu0
        %v8737 = vadd.f32 %v8658, %v8734
        %s8738 = scalar_lea.vmem [#allocation13], 544
        %v8739 = vld [vmem:[%s8738] sm:$0xff]
        %v8740 = vld [vmem:[%s8738 + $0x8] sm:$0xff]
        %v8741 = vld [vmem:[%s8738 + $0x10] sm:$0xff]
        %v8742 = vld [vmem:[%s8738 + $0x18] sm:$0xff]
        %v8743 = vrot.slane %v8578, 4
        %v8744 = vsel %vm7357, %v8743, 0
        %8746 = vmatprep.subr.mxu0 0.0
        %8747 = vmatpush1.msra.mxu0 %v8739
        %8748 = vmatprep.subr.mxu0 0.0
        %8749 = vmatpush1.msra.mxu0 %v8740
        %8750 = vmatprep.subr.mxu0 0.0
        %8751 = vmatpush1.msra.mxu0 %v8741
        %8752 = vmatprep.subr.mxu0 0.0
        %8753 = vmatpush1.msra.mxu0 %v8742
        %8754 = vmatprep.subr.mxu0 0.0
        %8755 = vmatpush1.msra.mxu0 0.0
        %8756 = vmatprep.subr.mxu0 0.0
        %8757 = vmatpush1.msra.mxu0 0.0
        %8758 = vmatprep.subr.mxu0 0.0
        %8759 = vmatpush1.msra.mxu0 0.0
        %8760 = vmatprep.subr.mxu0 0.0
        %8761 = vmatpush1.msra.mxu0 0.0
        %8762 = vmatprep.subr.mxu0 0.0
        %8763 = vmatpush1.msra.mxu0 0.0
        %8764 = vmatprep.subr.mxu0 0.0
        %8765 = vmatpush1.msra.mxu0 0.0
        %8766 = vmatprep.subr.mxu0 0.0
        %8767 = vmatpush1.msra.mxu0 0.0
        %8768 = vmatprep.subr.mxu0 0.0
        %8769 = vmatpush1.msra.mxu0 0.0
        %8770 = vmatprep.subr.mxu0 0.0
        %8771 = vmatpush1.msra.mxu0 0.0
        %8772 = vmatprep.subr.mxu0 0.0
        %8773 = vmatpush1.msra.mxu0 0.0
        %8774 = vmatprep.subr.mxu0 0.0
        %8775 = vmatpush1.msra.mxu0 0.0
        %8776 = vmatprep.subr.mxu0 0.0
        %8777 = vmatpush1.msra.mxu0 0.0
        %8778 = vmatprep.subr.mxu0 0.0
        %8779 = vmatpush1.msra.mxu0 0.0
        %8780 = vmatprep.subr.mxu0 0.0
        %8781 = vmatpush1.msra.mxu0 0.0
        %8782 = vmatprep.subr.mxu0 0.0
        %8783 = vmatpush1.msra.mxu0 0.0
        %8784 = vmatprep.subr.mxu0 0.0
        %8785 = vmatpush1.msra.mxu0 0.0
        %8786 = vmatprep.subr.mxu0 0.0
        %8787 = vmatpush1.msra.mxu0 0.0
        %8788 = vmatprep.subr.mxu0 0.0
        %8789 = vmatpush1.msra.mxu0 0.0
        %8790 = vmatprep.subr.mxu0 0.0
        %8791 = vmatpush1.msra.mxu0 0.0
        %8792 = vmatprep.subr.mxu0 0.0
        %8793 = vmatpush1.msra.mxu0 0.0
        %8794 = vmatprep.subr.mxu0 0.0
        %8795 = vmatpush1.msra.mxu0 0.0
        %8796 = vmatprep.subr.mxu0 0.0
        %8797 = vmatpush1.msra.mxu0 0.0
        %8798 = vmatprep.subr.mxu0 0.0
        %8799 = vmatpush1.msra.mxu0 0.0
        %8800 = vmatprep.subr.mxu0 0.0
        %8801 = vmatpush1.msra.mxu0 0.0
        %8802 = vmatprep.subr.mxu0 0.0
        %8803 = vmatpush1.msra.mxu0 0.0
        %8804 = vmatprep.subr.mxu0 0.0
        %8805 = vmatpush1.msra.mxu0 0.0
        %8806 = vmatprep.subr.mxu0 0.0
        %8807 = vmatpush1.msra.mxu0 0.0
        %8808 = vmatprep.subr.mxu0 0.0
        %8809 = vmatpush1.msra.mxu0 0.0
        %8810 = vmatprep.mubr.f32.mxu0 0.0
        %8811 = vmatmul.mubr.f32.gmra.mrb[0].mxu0 %v8744
        %v8812 = vpop.f32.mrb[0].mxu0
        %v8813 = vadd.f32 0.0, %v8812
        %v8814 = vpop.f32.mrb[0].mxu0
        %8815 = vdwg.mxu0
        %v8816 = vadd.f32 %v8737, %v8813
        %s8817 = scalar_lea.vmem [#allocation13], 576
        %v8818 = vld [vmem:[%s8817] sm:$0xff]
        %v8819 = vld [vmem:[%s8817 + $0x8] sm:$0xff]
        %v8820 = vld [vmem:[%s8817 + $0x10] sm:$0xff]
        %v8821 = vld [vmem:[%s8817 + $0x18] sm:$0xff]
        %v8822 = vrot.slane %v8578, 5
        %v8823 = vsel %vm7357, %v8822, 0
        %8825 = vmatprep.subr.mxu0 0.0
        %8826 = vmatpush1.msra.mxu0 %v8818
        %8827 = vmatprep.subr.mxu0 0.0
        %8828 = vmatpush1.msra.mxu0 %v8819
        %8829 = vmatprep.subr.mxu0 0.0
        %8830 = vmatpush1.msra.mxu0 %v8820
        %8831 = vmatprep.subr.mxu0 0.0
        %8832 = vmatpush1.msra.mxu0 %v8821
        %8833 = vmatprep.subr.mxu0 0.0
        %8834 = vmatpush1.msra.mxu0 0.0
        %8835 = vmatprep.subr.mxu0 0.0
        %8836 = vmatpush1.msra.mxu0 0.0
        %8837 = vmatprep.subr.mxu0 0.0
        %8838 = vmatpush1.msra.mxu0 0.0
        %8839 = vmatprep.subr.mxu0 0.0
        %8840 = vmatpush1.msra.mxu0 0.0
        %8841 = vmatprep.subr.mxu0 0.0
        %8842 = vmatpush1.msra.mxu0 0.0
        %8843 = vmatprep.subr.mxu0 0.0
        %8844 = vmatpush1.msra.mxu0 0.0
        %8845 = vmatprep.subr.mxu0 0.0
        %8846 = vmatpush1.msra.mxu0 0.0
        %8847 = vmatprep.subr.mxu0 0.0
        %8848 = vmatpush1.msra.mxu0 0.0
        %8849 = vmatprep.subr.mxu0 0.0
        %8850 = vmatpush1.msra.mxu0 0.0
        %8851 = vmatprep.subr.mxu0 0.0
        %8852 = vmatpush1.msra.mxu0 0.0
        %8853 = vmatprep.subr.mxu0 0.0
        %8854 = vmatpush1.msra.mxu0 0.0
        %8855 = vmatprep.subr.mxu0 0.0
        %8856 = vmatpush1.msra.mxu0 0.0
        %8857 = vmatprep.subr.mxu0 0.0
        %8858 = vmatpush1.msra.mxu0 0.0
        %8859 = vmatprep.subr.mxu0 0.0
        %8860 = vmatpush1.msra.mxu0 0.0
        %8861 = vmatprep.subr.mxu0 0.0
        %8862 = vmatpush1.msra.mxu0 0.0
        %8863 = vmatprep.subr.mxu0 0.0
        %8864 = vmatpush1.msra.mxu0 0.0
        %8865 = vmatprep.subr.mxu0 0.0
        %8866 = vmatpush1.msra.mxu0 0.0
        %8867 = vmatprep.subr.mxu0 0.0
        %8868 = vmatpush1.msra.mxu0 0.0
        %8869 = vmatprep.subr.mxu0 0.0
        %8870 = vmatpush1.msra.mxu0 0.0
        %8871 = vmatprep.subr.mxu0 0.0
        %8872 = vmatpush1.msra.mxu0 0.0
        %8873 = vmatprep.subr.mxu0 0.0
        %8874 = vmatpush1.msra.mxu0 0.0
        %8875 = vmatprep.subr.mxu0 0.0
        %8876 = vmatpush1.msra.mxu0 0.0
        %8877 = vmatprep.subr.mxu0 0.0
        %8878 = vmatpush1.msra.mxu0 0.0
        %8879 = vmatprep.subr.mxu0 0.0
        %8880 = vmatpush1.msra.mxu0 0.0
        %8881 = vmatprep.subr.mxu0 0.0
        %8882 = vmatpush1.msra.mxu0 0.0
        %8883 = vmatprep.subr.mxu0 0.0
        %8884 = vmatpush1.msra.mxu0 0.0
        %8885 = vmatprep.subr.mxu0 0.0
        %8886 = vmatpush1.msra.mxu0 0.0
        %8887 = vmatprep.subr.mxu0 0.0
        %8888 = vmatpush1.msra.mxu0 0.0
        %8889 = vmatprep.mubr.f32.mxu0 0.0
        %8890 = vmatmul.mubr.f32.gmra.mrb[0].mxu0 %v8823
        %v8891 = vpop.f32.mrb[0].mxu0
        %v8892 = vadd.f32 0.0, %v8891
        %v8893 = vpop.f32.mrb[0].mxu0
        %8894 = vdwg.mxu0
        %v8895 = vadd.f32 %v8816, %v8892
        %s8896 = scalar_lea.vmem [#allocation13], 608
        %v8897 = vld [vmem:[%s8896] sm:$0xff]
        %v8898 = vld [vmem:[%s8896 + $0x8] sm:$0xff]
        %v8899 = vld [vmem:[%s8896 + $0x10] sm:$0xff]
        %v8900 = vld [vmem:[%s8896 + $0x18] sm:$0xff]
        %v8901 = vrot.slane %v8578, 6
        %v8902 = vsel %vm7357, %v8901, 0
        %8904 = vmatprep.subr.mxu0 0.0
        %8905 = vmatpush1.msra.mxu0 %v8897
        %8906 = vmatprep.subr.mxu0 0.0
        %8907 = vmatpush1.msra.mxu0 %v8898
        %8908 = vmatprep.subr.mxu0 0.0
        %8909 = vmatpush1.msra.mxu0 %v8899
        %8910 = vmatprep.subr.mxu0 0.0
        %8911 = vmatpush1.msra.mxu0 %v8900
        %8912 = vmatprep.subr.mxu0 0.0
        %8913 = vmatpush1.msra.mxu0 0.0
        %8914 = vmatprep.subr.mxu0 0.0
        %8915 = vmatpush1.msra.mxu0 0.0
        %8916 = vmatprep.subr.mxu0 0.0
        %8917 = vmatpush1.msra.mxu0 0.0
        %8918 = vmatprep.subr.mxu0 0.0
        %8919 = vmatpush1.msra.mxu0 0.0
        %8920 = vmatprep.subr.mxu0 0.0
        %8921 = vmatpush1.msra.mxu0 0.0
        %8922 = vmatprep.subr.mxu0 0.0
        %8923 = vmatpush1.msra.mxu0 0.0
        %8924 = vmatprep.subr.mxu0 0.0
        %8925 = vmatpush1.msra.mxu0 0.0
        %8926 = vmatprep.subr.mxu0 0.0
        %8927 = vmatpush1.msra.mxu0 0.0
        %8928 = vmatprep.subr.mxu0 0.0
        %8929 = vmatpush1.msra.mxu0 0.0
        %8930 = vmatprep.subr.mxu0 0.0
        %8931 = vmatpush1.msra.mxu0 0.0
        %8932 = vmatprep.subr.mxu0 0.0
        %8933 = vmatpush1.msra.mxu0 0.0
        %8934 = vmatprep.subr.mxu0 0.0
        %8935 = vmatpush1.msra.mxu0 0.0
        %8936 = vmatprep.subr.mxu0 0.0
        %8937 = vmatpush1.msra.mxu0 0.0
        %8938 = vmatprep.subr.mxu0 0.0
        %8939 = vmatpush1.msra.mxu0 0.0
        %8940 = vmatprep.subr.mxu0 0.0
        %8941 = vmatpush1.msra.mxu0 0.0
        %8942 = vmatprep.subr.mxu0 0.0
        %8943 = vmatpush1.msra.mxu0 0.0
        %8944 = vmatprep.subr.mxu0 0.0
        %8945 = vmatpush1.msra.mxu0 0.0
        %8946 = vmatprep.subr.mxu0 0.0
        %8947 = vmatpush1.msra.mxu0 0.0
        %8948 = vmatprep.subr.mxu0 0.0
        %8949 = vmatpush1.msra.mxu0 0.0
        %8950 = vmatprep.subr.mxu0 0.0
        %8951 = vmatpush1.msra.mxu0 0.0
        %8952 = vmatprep.subr.mxu0 0.0
        %8953 = vmatpush1.msra.mxu0 0.0
        %8954 = vmatprep.subr.mxu0 0.0
        %8955 = vmatpush1.msra.mxu0 0.0
        %8956 = vmatprep.subr.mxu0 0.0
        %8957 = vmatpush1.msra.mxu0 0.0
        %8958 = vmatprep.subr.mxu0 0.0
        %8959 = vmatpush1.msra.mxu0 0.0
        %8960 = vmatprep.subr.mxu0 0.0
        %8961 = vmatpush1.msra.mxu0 0.0
        %8962 = vmatprep.subr.mxu0 0.0
        %8963 = vmatpush1.msra.mxu0 0.0
        %8964 = vmatprep.subr.mxu0 0.0
        %8965 = vmatpush1.msra.mxu0 0.0
        %8966 = vmatprep.subr.mxu0 0.0
        %8967 = vmatpush1.msra.mxu0 0.0
        %8968 = vmatprep.mubr.f32.mxu0 0.0
        %8969 = vmatmul.mubr.f32.gmra.mrb[0].mxu0 %v8902
        %v8970 = vpop.f32.mrb[0].mxu0
        %v8971 = vadd.f32 0.0, %v8970
        %v8972 = vpop.f32.mrb[0].mxu0
        %8973 = vdwg.mxu0
        %v8974 = vadd.f32 %v8895, %v8971
        %v8975 = vrot.slane %v7334, 1
        %v8977 = vmax.f32 %v7334, %v8975
        %v8979 = vrot.slane %v7335, 6
        %v8980 = vsel %vm7342, %v8573, %v8979
        %v8982 = vmax.f32 %v8977, %v8980
        %v8983 = vrot.slane %v7335, 7
        %v8984 = vsel %vm6450, %v8576, %v8983
        %v8986 = vmax.f32 %v8982, %v8984
        %s8987 = scalar_lea.vmem [#allocation13], 640
        %v8988 = vld [vmem:[%s8987] sm:$0xff]
        %v8989 = vld [vmem:[%s8987 + $0x8] sm:$0xff]
        %v8990 = vld [vmem:[%s8987 + $0x10] sm:$0xff]
        %v8991 = vld [vmem:[%s8987 + $0x18] sm:$0xff]
        %v8993 = vsel %vm7357, %v8986, 0
        %8995 = vmatprep.subr.mxu0 0.0
        %8996 = vmatpush1.msra.mxu0 %v8988
        %8997 = vmatprep.subr.mxu0 0.0
        %8998 = vmatpush1.msra.mxu0 %v8989
        %8999 = vmatprep.subr.mxu0 0.0
        %9000 = vmatpush1.msra.mxu0 %v8990
        %9001 = vmatprep.subr.mxu0 0.0
        %9002 = vmatpush1.msra.mxu0 %v8991
        %9003 = vmatprep.subr.mxu0 0.0
        %9004 = vmatpush1.msra.mxu0 0.0
        %9005 = vmatprep.subr.mxu0 0.0
        %9006 = vmatpush1.msra.mxu0 0.0
        %9007 = vmatprep.subr.mxu0 0.0
        %9008 = vmatpush1.msra.mxu0 0.0
        %9009 = vmatprep.subr.mxu0 0.0
        %9010 = vmatpush1.msra.mxu0 0.0
        %9011 = vmatprep.subr.mxu0 0.0
        %9012 = vmatpush1.msra.mxu0 0.0
        %9013 = vmatprep.subr.mxu0 0.0
        %9014 = vmatpush1.msra.mxu0 0.0
        %9015 = vmatprep.subr.mxu0 0.0
        %9016 = vmatpush1.msra.mxu0 0.0
        %9017 = vmatprep.subr.mxu0 0.0
        %9018 = vmatpush1.msra.mxu0 0.0
        %9019 = vmatprep.subr.mxu0 0.0
        %9020 = vmatpush1.msra.mxu0 0.0
        %9021 = vmatprep.subr.mxu0 0.0
        %9022 = vmatpush1.msra.mxu0 0.0
        %9023 = vmatprep.subr.mxu0 0.0
        %9024 = vmatpush1.msra.mxu0 0.0
        %9025 = vmatprep.subr.mxu0 0.0
        %9026 = vmatpush1.msra.mxu0 0.0
        %9027 = vmatprep.subr.mxu0 0.0
        %9028 = vmatpush1.msra.mxu0 0.0
        %9029 = vmatprep.subr.mxu0 0.0
        %9030 = vmatpush1.msra.mxu0 0.0
        %9031 = vmatprep.subr.mxu0 0.0
        %9032 = vmatpush1.msra.mxu0 0.0
        %9033 = vmatprep.subr.mxu0 0.0
        %9034 = vmatpush1.msra.mxu0 0.0
        %9035 = vmatprep.subr.mxu0 0.0
        %9036 = vmatpush1.msra.mxu0 0.0
        %9037 = vmatprep.subr.mxu0 0.0
        %9038 = vmatpush1.msra.mxu0 0.0
        %9039 = vmatprep.subr.mxu0 0.0
        %9040 = vmatpush1.msra.mxu0 0.0
        %9041 = vmatprep.subr.mxu0 0.0
        %9042 = vmatpush1.msra.mxu0 0.0
        %9043 = vmatprep.subr.mxu0 0.0
        %9044 = vmatpush1.msra.mxu0 0.0
        %9045 = vmatprep.subr.mxu0 0.0
        %9046 = vmatpush1.msra.mxu0 0.0
        %9047 = vmatprep.subr.mxu0 0.0
        %9048 = vmatpush1.msra.mxu0 0.0
        %9049 = vmatprep.subr.mxu0 0.0
        %9050 = vmatpush1.msra.mxu0 0.0
        %9051 = vmatprep.subr.mxu0 0.0
        %9052 = vmatpush1.msra.mxu0 0.0
        %9053 = vmatprep.subr.mxu0 0.0
        %9054 = vmatpush1.msra.mxu0 0.0
        %9055 = vmatprep.subr.mxu0 0.0
        %9056 = vmatpush1.msra.mxu0 0.0
        %9057 = vmatprep.subr.mxu0 0.0
        %9058 = vmatpush1.msra.mxu0 0.0
        %9059 = vmatprep.mubr.f32.mxu0 0.0
        %9060 = vmatmul.mubr.f32.gmra.mrb[0].mxu0 %v8993
        %v9061 = vpop.f32.mrb[0].mxu0
        %v9062 = vadd.f32 0.0, %v9061
        %v9063 = vpop.f32.mrb[0].mxu0
        %9064 = vdwg.mxu0
        %v9065 = vadd.f32 %v8974, %v9062
        %s9066 = scalar_lea.vmem [#allocation13], 672
        %v9067 = vld [vmem:[%s9066] sm:$0xff]
        %v9068 = vld [vmem:[%s9066 + $0x8] sm:$0xff]
        %v9069 = vld [vmem:[%s9066 + $0x10] sm:$0xff]
        %v9070 = vld [vmem:[%s9066 + $0x18] sm:$0xff]
        %v9071 = vrot.slane %v8986, 1
        %v9072 = vsel %vm7357, %v9071, 0
        %9074 = vmatprep.subr.mxu0 0.0
        %9075 = vmatpush1.msra.mxu0 %v9067
        %9076 = vmatprep.subr.mxu0 0.0
        %9077 = vmatpush1.msra.mxu0 %v9068
        %9078 = vmatprep.subr.mxu0 0.0
        %9079 = vmatpush1.msra.mxu0 %v9069
        %9080 = vmatprep.subr.mxu0 0.0
        %9081 = vmatpush1.msra.mxu0 %v9070
        %9082 = vmatprep.subr.mxu0 0.0
        %9083 = vmatpush1.msra.mxu0 0.0
        %9084 = vmatprep.subr.mxu0 0.0
        %9085 = vmatpush1.msra.mxu0 0.0
        %9086 = vmatprep.subr.mxu0 0.0
        %9087 = vmatpush1.msra.mxu0 0.0
        %9088 = vmatprep.subr.mxu0 0.0
        %9089 = vmatpush1.msra.mxu0 0.0
        %9090 = vmatprep.subr.mxu0 0.0
        %9091 = vmatpush1.msra.mxu0 0.0
        %9092 = vmatprep.subr.mxu0 0.0
        %9093 = vmatpush1.msra.mxu0 0.0
        %9094 = vmatprep.subr.mxu0 0.0
        %9095 = vmatpush1.msra.mxu0 0.0
        %9096 = vmatprep.subr.mxu0 0.0
        %9097 = vmatpush1.msra.mxu0 0.0
        %9098 = vmatprep.subr.mxu0 0.0
        %9099 = vmatpush1.msra.mxu0 0.0
        %9100 = vmatprep.subr.mxu0 0.0
        %9101 = vmatpush1.msra.mxu0 0.0
        %9102 = vmatprep.subr.mxu0 0.0
        %9103 = vmatpush1.msra.mxu0 0.0
        %9104 = vmatprep.subr.mxu0 0.0
        %9105 = vmatpush1.msra.mxu0 0.0
        %9106 = vmatprep.subr.mxu0 0.0
        %9107 = vmatpush1.msra.mxu0 0.0
        %9108 = vmatprep.subr.mxu0 0.0
        %9109 = vmatpush1.msra.mxu0 0.0
        %9110 = vmatprep.subr.mxu0 0.0
        %9111 = vmatpush1.msra.mxu0 0.0
        %9112 = vmatprep.subr.mxu0 0.0
        %9113 = vmatpush1.msra.mxu0 0.0
        %9114 = vmatprep.subr.mxu0 0.0
        %9115 = vmatpush1.msra.mxu0 0.0
        %9116 = vmatprep.subr.mxu0 0.0
        %9117 = vmatpush1.msra.mxu0 0.0
        %9118 = vmatprep.subr.mxu0 0.0
        %9119 = vmatpush1.msra.mxu0 0.0
        %9120 = vmatprep.subr.mxu0 0.0
        %9121 = vmatpush1.msra.mxu0 0.0
        %9122 = vmatprep.subr.mxu0 0.0
        %9123 = vmatpush1.msra.mxu0 0.0
        %9124 = vmatprep.subr.mxu0 0.0
        %9125 = vmatpush1.msra.mxu0 0.0
        %9126 = vmatprep.subr.mxu0 0.0
        %9127 = vmatpush1.msra.mxu0 0.0
        %9128 = vmatprep.subr.mxu0 0.0
        %9129 = vmatpush1.msra.mxu0 0.0
        %9130 = vmatprep.subr.mxu0 0.0
        %9131 = vmatpush1.msra.mxu0 0.0
        %9132 = vmatprep.subr.mxu0 0.0
        %9133 = vmatpush1.msra.mxu0 0.0
        %9134 = vmatprep.subr.mxu0 0.0
        %9135 = vmatpush1.msra.mxu0 0.0
        %9136 = vmatprep.subr.mxu0 0.0
        %9137 = vmatpush1.msra.mxu0 0.0
        %9138 = vmatprep.mubr.f32.mxu0 0.0
        %9139 = vmatmul.mubr.f32.gmra.mrb[0].mxu0 %v9072
        %v9140 = vpop.f32.mrb[0].mxu0
        %v9141 = vadd.f32 0.0, %v9140
        %v9142 = vpop.f32.mrb[0].mxu0
        %9143 = vdwg.mxu0
        %v9144 = vadd.f32 %v9065, %v9141
        %s9145 = scalar_lea.vmem [#allocation13], 704
        %v9146 = vld [vmem:[%s9145] sm:$0xff]
        %v9147 = vld [vmem:[%s9145 + $0x8] sm:$0xff]
        %v9148 = vld [vmem:[%s9145 + $0x10] sm:$0xff]
        %v9149 = vld [vmem:[%s9145 + $0x18] sm:$0xff]
        %v9150 = vrot.slane %v8986, 2
        %v9151 = vsel %vm7357, %v9150, 0
        %9153 = vmatprep.subr.mxu0 0.0
        %9154 = vmatpush1.msra.mxu0 %v9146
        %9155 = vmatprep.subr.mxu0 0.0
        %9156 = vmatpush1.msra.mxu0 %v9147
        %9157 = vmatprep.subr.mxu0 0.0
        %9158 = vmatpush1.msra.mxu0 %v9148
        %9159 = vmatprep.subr.mxu0 0.0
        %9160 = vmatpush1.msra.mxu0 %v9149
        %9161 = vmatprep.subr.mxu0 0.0
        %9162 = vmatpush1.msra.mxu0 0.0
        %9163 = vmatprep.subr.mxu0 0.0
        %9164 = vmatpush1.msra.mxu0 0.0
        %9165 = vmatprep.subr.mxu0 0.0
        %9166 = vmatpush1.msra.mxu0 0.0
        %9167 = vmatprep.subr.mxu0 0.0
        %9168 = vmatpush1.msra.mxu0 0.0
        %9169 = vmatprep.subr.mxu0 0.0
        %9170 = vmatpush1.msra.mxu0 0.0
        %9171 = vmatprep.subr.mxu0 0.0
        %9172 = vmatpush1.msra.mxu0 0.0
        %9173 = vmatprep.subr.mxu0 0.0
        %9174 = vmatpush1.msra.mxu0 0.0
        %9175 = vmatprep.subr.mxu0 0.0
        %9176 = vmatpush1.msra.mxu0 0.0
        %9177 = vmatprep.subr.mxu0 0.0
        %9178 = vmatpush1.msra.mxu0 0.0
        %9179 = vmatprep.subr.mxu0 0.0
        %9180 = vmatpush1.msra.mxu0 0.0
        %9181 = vmatprep.subr.mxu0 0.0
        %9182 = vmatpush1.msra.mxu0 0.0
        %9183 = vmatprep.subr.mxu0 0.0
        %9184 = vmatpush1.msra.mxu0 0.0
        %9185 = vmatprep.subr.mxu0 0.0
        %9186 = vmatpush1.msra.mxu0 0.0
        %9187 = vmatprep.subr.mxu0 0.0
        %9188 = vmatpush1.msra.mxu0 0.0
        %9189 = vmatprep.subr.mxu0 0.0
        %9190 = vmatpush1.msra.mxu0 0.0
        %9191 = vmatprep.subr.mxu0 0.0
        %9192 = vmatpush1.msra.mxu0 0.0
        %9193 = vmatprep.subr.mxu0 0.0
        %9194 = vmatpush1.msra.mxu0 0.0
        %9195 = vmatprep.subr.mxu0 0.0
        %9196 = vmatpush1.msra.mxu0 0.0
        %9197 = vmatprep.subr.mxu0 0.0
        %9198 = vmatpush1.msra.mxu0 0.0
        %9199 = vmatprep.subr.mxu0 0.0
        %9200 = vmatpush1.msra.mxu0 0.0
        %9201 = vmatprep.subr.mxu0 0.0
        %9202 = vmatpush1.msra.mxu0 0.0
        %9203 = vmatprep.subr.mxu0 0.0
        %9204 = vmatpush1.msra.mxu0 0.0
        %9205 = vmatprep.subr.mxu0 0.0
        %9206 = vmatpush1.msra.mxu0 0.0
        %9207 = vmatprep.subr.mxu0 0.0
        %9208 = vmatpush1.msra.mxu0 0.0
        %9209 = vmatprep.subr.mxu0 0.0
        %9210 = vmatpush1.msra.mxu0 0.0
        %9211 = vmatprep.subr.mxu0 0.0
        %9212 = vmatpush1.msra.mxu0 0.0
        %9213 = vmatprep.subr.mxu0 0.0
        %9214 = vmatpush1.msra.mxu0 0.0
        %9215 = vmatprep.subr.mxu0 0.0
        %9216 = vmatpush1.msra.mxu0 0.0
        %9217 = vmatprep.mubr.f32.mxu0 0.0
        %9218 = vmatmul.mubr.f32.gmra.mrb[0].mxu0 %v9151
        %v9219 = vpop.f32.mrb[0].mxu0
        %v9220 = vadd.f32 0.0, %v9219
        %v9221 = vpop.f32.mrb[0].mxu0
        %9222 = vdwg.mxu0
        %v9223 = vadd.f32 %v9144, %v9220
        %s9224 = scalar_lea.vmem [#allocation13], 736
        %v9225 = vld [vmem:[%s9224] sm:$0xff]
        %v9226 = vld [vmem:[%s9224 + $0x8] sm:$0xff]
        %v9227 = vld [vmem:[%s9224 + $0x10] sm:$0xff]
        %v9228 = vld [vmem:[%s9224 + $0x18] sm:$0xff]
        %v9229 = vrot.slane %v8986, 3
        %v9230 = vsel %vm7357, %v9229, 0
        %9232 = vmatprep.subr.mxu0 0.0
        %9233 = vmatpush1.msra.mxu0 %v9225
        %9234 = vmatprep.subr.mxu0 0.0
        %9235 = vmatpush1.msra.mxu0 %v9226
        %9236 = vmatprep.subr.mxu0 0.0
        %9237 = vmatpush1.msra.mxu0 %v9227
        %9238 = vmatprep.subr.mxu0 0.0
        %9239 = vmatpush1.msra.mxu0 %v9228
        %9240 = vmatprep.subr.mxu0 0.0
        %9241 = vmatpush1.msra.mxu0 0.0
        %9242 = vmatprep.subr.mxu0 0.0
        %9243 = vmatpush1.msra.mxu0 0.0
        %9244 = vmatprep.subr.mxu0 0.0
        %9245 = vmatpush1.msra.mxu0 0.0
        %9246 = vmatprep.subr.mxu0 0.0
        %9247 = vmatpush1.msra.mxu0 0.0
        %9248 = vmatprep.subr.mxu0 0.0
        %9249 = vmatpush1.msra.mxu0 0.0
        %9250 = vmatprep.subr.mxu0 0.0
        %9251 = vmatpush1.msra.mxu0 0.0
        %9252 = vmatprep.subr.mxu0 0.0
        %9253 = vmatpush1.msra.mxu0 0.0
        %9254 = vmatprep.subr.mxu0 0.0
        %9255 = vmatpush1.msra.mxu0 0.0
        %9256 = vmatprep.subr.mxu0 0.0
        %9257 = vmatpush1.msra.mxu0 0.0
        %9258 = vmatprep.subr.mxu0 0.0
        %9259 = vmatpush1.msra.mxu0 0.0
        %9260 = vmatprep.subr.mxu0 0.0
        %9261 = vmatpush1.msra.mxu0 0.0
        %9262 = vmatprep.subr.mxu0 0.0
        %9263 = vmatpush1.msra.mxu0 0.0
        %9264 = vmatprep.subr.mxu0 0.0
        %9265 = vmatpush1.msra.mxu0 0.0
        %9266 = vmatprep.subr.mxu0 0.0
        %9267 = vmatpush1.msra.mxu0 0.0
        %9268 = vmatprep.subr.mxu0 0.0
        %9269 = vmatpush1.msra.mxu0 0.0
        %9270 = vmatprep.subr.mxu0 0.0
        %9271 = vmatpush1.msra.mxu0 0.0
        %9272 = vmatprep.subr.mxu0 0.0
        %9273 = vmatpush1.msra.mxu0 0.0
        %9274 = vmatprep.subr.mxu0 0.0
        %9275 = vmatpush1.msra.mxu0 0.0
        %9276 = vmatprep.subr.mxu0 0.0
        %9277 = vmatpush1.msra.mxu0 0.0
        %9278 = vmatprep.subr.mxu0 0.0
        %9279 = vmatpush1.msra.mxu0 0.0
        %9280 = vmatprep.subr.mxu0 0.0
        %9281 = vmatpush1.msra.mxu0 0.0
        %9282 = vmatprep.subr.mxu0 0.0
        %9283 = vmatpush1.msra.mxu0 0.0
        %9284 = vmatprep.subr.mxu0 0.0
        %9285 = vmatpush1.msra.mxu0 0.0
        %9286 = vmatprep.subr.mxu0 0.0
        %9287 = vmatpush1.msra.mxu0 0.0
        %9288 = vmatprep.subr.mxu0 0.0
        %9289 = vmatpush1.msra.mxu0 0.0
        %9290 = vmatprep.subr.mxu0 0.0
        %9291 = vmatpush1.msra.mxu0 0.0
        %9292 = vmatprep.subr.mxu0 0.0
        %9293 = vmatpush1.msra.mxu0 0.0
        %9294 = vmatprep.subr.mxu0 0.0
        %9295 = vmatpush1.msra.mxu0 0.0
        %9296 = vmatprep.mubr.f32.mxu0 0.0
        %9297 = vmatmul.mubr.f32.gmra.mrb[0].mxu0 %v9230
        %v9298 = vpop.f32.mrb[0].mxu0
        %v9299 = vadd.f32 0.0, %v9298
        %v9300 = vpop.f32.mrb[0].mxu0
        %9301 = vdwg.mxu0
        %v9302 = vadd.f32 %v9223, %v9299
        %s9303 = scalar_lea.vmem [#allocation13], 768
        %v9304 = vld [vmem:[%s9303] sm:$0xff]
        %v9305 = vld [vmem:[%s9303 + $0x8] sm:$0xff]
        %v9306 = vld [vmem:[%s9303 + $0x10] sm:$0xff]
        %v9307 = vld [vmem:[%s9303 + $0x18] sm:$0xff]
        %v9308 = vrot.slane %v8986, 4
        %v9309 = vsel %vm7357, %v9308, 0
        %9311 = vmatprep.subr.mxu0 0.0
        %9312 = vmatpush1.msra.mxu0 %v9304
        %9313 = vmatprep.subr.mxu0 0.0
        %9314 = vmatpush1.msra.mxu0 %v9305
        %9315 = vmatprep.subr.mxu0 0.0
        %9316 = vmatpush1.msra.mxu0 %v9306
        %9317 = vmatprep.subr.mxu0 0.0
        %9318 = vmatpush1.msra.mxu0 %v9307
        %9319 = vmatprep.subr.mxu0 0.0
        %9320 = vmatpush1.msra.mxu0 0.0
        %9321 = vmatprep.subr.mxu0 0.0
        %9322 = vmatpush1.msra.mxu0 0.0
        %9323 = vmatprep.subr.mxu0 0.0
        %9324 = vmatpush1.msra.mxu0 0.0
        %9325 = vmatprep.subr.mxu0 0.0
        %9326 = vmatpush1.msra.mxu0 0.0
        %9327 = vmatprep.subr.mxu0 0.0
        %9328 = vmatpush1.msra.mxu0 0.0
        %9329 = vmatprep.subr.mxu0 0.0
        %9330 = vmatpush1.msra.mxu0 0.0
        %9331 = vmatprep.subr.mxu0 0.0
        %9332 = vmatpush1.msra.mxu0 0.0
        %9333 = vmatprep.subr.mxu0 0.0
        %9334 = vmatpush1.msra.mxu0 0.0
        %9335 = vmatprep.subr.mxu0 0.0
        %9336 = vmatpush1.msra.mxu0 0.0
        %9337 = vmatprep.subr.mxu0 0.0
        %9338 = vmatpush1.msra.mxu0 0.0
        %9339 = vmatprep.subr.mxu0 0.0
        %9340 = vmatpush1.msra.mxu0 0.0
        %9341 = vmatprep.subr.mxu0 0.0
        %9342 = vmatpush1.msra.mxu0 0.0
        %9343 = vmatprep.subr.mxu0 0.0
        %9344 = vmatpush1.msra.mxu0 0.0
        %9345 = vmatprep.subr.mxu0 0.0
        %9346 = vmatpush1.msra.mxu0 0.0
        %9347 = vmatprep.subr.mxu0 0.0
        %9348 = vmatpush1.msra.mxu0 0.0
        %9349 = vmatprep.subr.mxu0 0.0
        %9350 = vmatpush1.msra.mxu0 0.0
        %9351 = vmatprep.subr.mxu0 0.0
        %9352 = vmatpush1.msra.mxu0 0.0
        %9353 = vmatprep.subr.mxu0 0.0
        %9354 = vmatpush1.msra.mxu0 0.0
        %9355 = vmatprep.subr.mxu0 0.0
        %9356 = vmatpush1.msra.mxu0 0.0
        %9357 = vmatprep.subr.mxu0 0.0
        %9358 = vmatpush1.msra.mxu0 0.0
        %9359 = vmatprep.subr.mxu0 0.0
        %9360 = vmatpush1.msra.mxu0 0.0
        %9361 = vmatprep.subr.mxu0 0.0
        %9362 = vmatpush1.msra.mxu0 0.0
        %9363 = vmatprep.subr.mxu0 0.0
        %9364 = vmatpush1.msra.mxu0 0.0
        %9365 = vmatprep.subr.mxu0 0.0
        %9366 = vmatpush1.msra.mxu0 0.0
        %9367 = vmatprep.subr.mxu0 0.0
        %9368 = vmatpush1.msra.mxu0 0.0
        %9369 = vmatprep.subr.mxu0 0.0
        %9370 = vmatpush1.msra.mxu0 0.0
        %9371 = vmatprep.subr.mxu0 0.0
        %9372 = vmatpush1.msra.mxu0 0.0
        %9373 = vmatprep.subr.mxu0 0.0
        %9374 = vmatpush1.msra.mxu0 0.0
        %9375 = vmatprep.mubr.f32.mxu0 0.0
        %9376 = vmatmul.mubr.f32.gmra.mrb[0].mxu0 %v9309
        %v9377 = vpop.f32.mrb[0].mxu0
        %v9378 = vadd.f32 0.0, %v9377
        %v9379 = vpop.f32.mrb[0].mxu0
        %9380 = vdwg.mxu0
        %v9381 = vadd.f32 %v9302, %v9378
        %9382 = vst [vmem:[%s514] sm:$0x1] %v9381
        %s9383 = sand.u32 %s296, 1
        %s9384 = scalar_lea.sflag [#allocation4], %s9383
        %s9385 = sand.u32 %s296, 1
        %s9386 = scalar_lea.vmem [#allocation16], %s9385
        // Predicated region
        $region101: #{cnn_model_forward_prepared.1} parent=67 // pred_check
          %p9387 = pneg %p306
        $region102: #{cnn_model_forward_prepared.1} parent=67 // pred_check_branch
          %9389 = sbr.rel (%p9387) target = $region104
        $region103: #{cnn_model_forward_prepared.1} parent=67 // pred_region
          %s9391 = ssub.s32 16, 16
          %9392 = vsyncadd %s9384, %s9391
          %s9393 = smul.addr %s31, 16
          %s9394 = scalar_lea.hbm %s12, %s9393
          %s9396 = sshll.u32 %s9386, 4
          %s9397 = int_to_ptr.vmem [resolvable:$true] %s9396
          %9399 = dma.vmem_to_hbm [thread:$0]  %s9397, 16, %s9394, %s9384
        $region104: #{cnn_model_forward_prepared.1} parent=67 // pred_fallthru
          _
      $region68: #{cnn_model_forward_prepared.1} parent=5 // pred_fallthru
        _
      %p9400 = scmp.le.s32.totalorder 2, %s26
      // Predicated region
      $region105: #{cnn_model_forward_prepared.1} parent=5 // pred_check
        %p9401 = pneg %p9400
      $region106: #{cnn_model_forward_prepared.1} parent=5 // pred_check_branch
        %9403 = sbr.rel (%p9401) target = $region108
      $region107: #{cnn_model_forward_prepared.1} parent=5 // pred_region
        %s9404 = ssub.s32 %s26, 2
        // Predicated region
        $region109: #{cnn_model_forward_prepared.1} parent=107 // pred_check
          %p9405 = pneg %p312
        $region110: #{cnn_model_forward_prepared.1} parent=107 // pred_check_branch
          %9407 = sbr.rel (%p9405) target = $region112
        $region111: #{cnn_model_forward_prepared.1} parent=107 // pred_region
          %s9408 = sand.u32 %s297, 1
          %s9409 = scalar_lea.sflag [#allocation4], %s9408
          %s9410 = sand.u32 %s297, 1
          %s9411 = scalar_lea.vmem [#allocation16], %s9410
          %9412 = dma.done %s9409, 16
        $region112: #{cnn_model_forward_prepared.1} parent=107 // pred_fallthru
          _
      $region108: #{cnn_model_forward_prepared.1} parent=5 // pred_fallthru
        _
    $region6: #{cnn_model_forward_prepared.1} parent=1 // loop_footer
      %s30 = sadd.s32 1, %s26
    $region7: #{cnn_model_forward_prepared.1} parent=1 // loop_footer_branch
      %25 = sbr.rel target = $region3
    $region8: #{cnn_model_forward_prepared.1} parent=1 // loop_exit
      _
    %9413 = vsyncpa [#allocation3], 1
    %s9414 = scalar_lea.sflag [#allocation3], 1
    %9415 = vsyncpa %s9414, 1
    %9416 = vsyncpa [#allocation6], 1
    %9417 = vsyncpa [#allocation9], 1
    %9418 = vsyncpa [#allocation12], 1
    %9419 = vsyncpa [#allocation15], 1
    %9420 = vsyncpa [#allocation4], 1
    %s9421 = scalar_lea.sflag [#allocation4], 1
    %9422 = vsyncpa %s9421, 1

</llo_original>
